<compile_context>
chip_gen: v6e
topology: v6e:2x2x1
jax: 0.10.0
libtpu: 0.0.40
codegen_flags: <defaults>
</compile_context>

<pallas_src>
import numpy as np

import jax
import jax.numpy as jnp
from jax.experimental import pallas as pl
from jax.experimental.pallas import tpu as pltpu

# ----------------------------- small synthetic Swin config -----------------------------
C_IN = 3                      # input channels
IMG = 16                      # input spatial size
P = 4                         # patch size
HP = WP = IMG // P            # 4x4 patch grid
L = HP * WP                   # 16 tokens / image
C = 32                        # embed dim ("hidden_size")
HEADS = 4
HEAD_DIM = C // HEADS         # 8
WS = 4                        # window size (covers the whole 4x4 grid)
# HF Swin: shift is disabled when window_size >= feature-map resolution.
SHIFT = WS // 2 if min(HP, WP) > WS else 0          # == 0 for this config
DEPTH = 2                     # one stage of 2 blocks
MLP_HIDDEN = 4 * C            # 128
NUM_CLASSES = 10
CLS_PAD = 128                 # lane-dense classifier output padding
EPS = 1e-5

TB = 8                        # images per grid step -> 128-row token slab (fills a v5e
                              # 128x128 MXU pass; bump to 16 on v6e/v7x for 256-row slabs)
ROWS = TB * L                 # 128
PATCH_DIM = C_IN * P * P      # 48
NEG_INF = -1e9

# packed small-vector constant: row layout
_VC_PATCH_B = 0
_VC_EMB_G = 1
_VC_EMB_B = 2
_VC_FIN_G = 3
_VC_FIN_B = 4
_VC_CLS_B = 5
_VC_BLOCK_BASE = 6
_VC_PER_BLOCK = 10            # ln1_g, ln1_b, q_b, k_b, v_b, proj_b, ln2_g, ln2_b, fc1_b, fc2_b

_PER_BLOCK_REFS = 5           # qkv_w[3,C,C], proj_w, fc1_w, fc2_w, attn_bias[H,ROWS,ROWS]


# ------------------------------ static helpers (host, numpy) ------------------------------
def _rel_pos_index(ws):
    coords = np.stack(np.meshgrid(np.arange(ws), np.arange(ws), indexing="ij"))
    flat = coords.reshape(2, -1)
    rel = (flat[:, :, None] - flat[:, None, :]).transpose(1, 2, 0).astype(np.int64)
    rel[:, :, 0] += ws - 1
    rel[:, :, 1] += ws - 1
    rel[:, :, 0] *= 2 * ws - 1
    return rel.sum(-1)                                    # [ws*ws, ws*ws]


_REL_INDEX = _rel_pos_index(WS)                           # static numpy index table
# cross-image mask for the batched slab: -1e9 everywhere except the TB diagonal L x L blocks
_OFF_DIAG_MASK = ((1.0 - np.kron(np.eye(TB), np.ones((L, L)))) * NEG_INF).astype(np.float32)
# per-image mean pooling as a block-averaging matmul: [TB, TB*L]
_POOL_MAT = np.kron(np.eye(TB), np.full((1, L), 1.0 / L)).astype(np.float32)


# --------------------------------- fused Pallas kernel ---------------------------------
def _swin_fused_kernel(*refs):
    """One grid step == TB images: patch-embed -> Swin blocks -> LN -> pool -> classifier."""
    xp_ref, patch_w_ref, vc_ref, pool_ref, cls_w_ref = refs[:5]
    block_refs = []
    idx = 5
    for _ in range(DEPTH):
        block_refs.append(refs[idx:idx + _PER_BLOCK_REFS])
        idx += _PER_BLOCK_REFS
    out_ref = refs[idx]

    def ln(x, g, b):
        mu = jnp.mean(x, axis=-1, keepdims=True)
        var = jnp.mean((x - mu) ** 2, axis=-1, keepdims=True)
        return (x - mu) * jax.lax.rsqrt(var + EPS) * g + b

    def gelu(y):
        # TODO(synk): HF Swin uses exact erf-GELU; tanh approximation used for Mosaic-safe lowering.
        c = jnp.float32(np.sqrt(2.0 / np.pi))
        return 0.5 * y * (1.0 + jnp.tanh(c * (y + 0.044715 * y * y * y)))

    scale = jnp.float32(HEAD_DIM ** -0.5)

    # per-head lane masks (head-major layout: head h owns lanes [h*D, (h+1)*D))
    lane = jax.lax.broadcasted_iota(jnp.int32, (1, C), 1)
    head_masks = [
        ((lane >= hd * HEAD_DIM) & (lane < (hd + 1) * HEAD_DIM)).astype(jnp.float32)
        for hd in range(HEADS)
    ]

    # ---- patch embedding (stride-P conv == per-patch matmul) + embed LN, whole TB slab ----
    h = (jnp.dot(xp_ref[...], patch_w_ref[...], preferred_element_type=jnp.float32)
         + vc_ref[_VC_PATCH_B:_VC_PATCH_B + 1, :C])                        # [ROWS, C]
    h = ln(h, vc_ref[_VC_EMB_G:_VC_EMB_G + 1, :C], vc_ref[_VC_EMB_B:_VC_EMB_B + 1, :C])

    for blk in range(DEPTH):
        qkv_w, proj_w, fc1_w, fc2_w, bias = block_refs[blk]
        base = _VC_BLOCK_BASE + blk * _VC_PER_BLOCK
        ln1_g = vc_ref[base + 0:base + 1, :C]
        ln1_b = vc_ref[base + 1:base + 2, :C]
        q_b = vc_ref[base + 2:base + 3, :C]
        k_b = vc_ref[base + 3:base + 4, :C]
        v_b = vc_ref[base + 4:base + 5, :C]
        proj_b = vc_ref[base + 5:base + 6, :C]
        ln2_g = vc_ref[base + 6:base + 7, :C]
        ln2_b = vc_ref[base + 7:base + 8, :C]
        fc1_b = vc_ref[base + 8:base + 9, :MLP_HIDDEN]
        fc2_b = vc_ref[base + 9:base + 10, :C]

        # ---- window multi-head self-attention on the batched slab ----
        # Cross-image isolation + relative-position bias are pre-folded into `bias`
        # ([H, ROWS, ROWS], block-diagonal); with window >= grid HF disables the cyclic shift.
        shortcut = h
        hn = ln(h, ln1_g, ln1_b)
        q = (jnp.dot(hn, qkv_w[0], preferred_element_type=jnp.float32) + q_b) * scale
        k = jnp.dot(hn, qkv_w[1], preferred_element_type=jnp.float32) + k_b
        v = jnp.dot(hn, qkv_w[2], preferred_element_type=jnp.float32) + v_b

        ctx = jnp.zeros((ROWS, C), jnp.float32)
        for hd in range(HEADS):
            m = head_masks[hd]
            # masked q -> contraction over all C lanes equals the head-hd 8-lane contraction
            s = jax.lax.dot_general(q * m, k, (((1,), (1,)), ((), ())),
                                    preferred_element_type=jnp.float32)    # [ROWS, ROWS]
            s = s + bias[hd]
            s = s - jnp.max(s, axis=-1, keepdims=True)
            p = jnp.exp(s)
            p = p * pl.reciprocal(jnp.sum(p, axis=-1, keepdims=True), approx=True)
            # masked v -> result lands head-major in lanes [hd*D, (hd+1)*D); accumulate
            ctx = ctx + jnp.dot(p, v * m, preferred_element_type=jnp.float32)
        attn = jnp.dot(ctx, proj_w[...], preferred_element_type=jnp.float32) + proj_b
        h = shortcut + attn

        # ---- MLP ----
        shortcut = h
        hn = ln(h, ln2_g, ln2_b)
        hn = gelu(jnp.dot(hn, fc1_w[...], preferred_element_type=jnp.float32) + fc1_b)
        hn = jnp.dot(hn, fc2_w[...], preferred_element_type=jnp.float32) + fc2_b
        h = shortcut + hn

    # ---- final LN -> per-image mean pool (block-averaging matmul) -> classifier ----
    h = ln(h, vc_ref[_VC_FIN_G:_VC_FIN_G + 1, :C], vc_ref[_VC_FIN_B:_VC_FIN_B + 1, :C])
    pooled = jnp.dot(pool_ref[...], h, preferred_element_type=jnp.float32)            # [TB, C]
    logits = (jnp.dot(pooled, cls_w_ref[...], preferred_element_type=jnp.float32)
              + vc_ref[_VC_CLS_B:_VC_CLS_B + 1, :])                                   # [TB, CLS_PAD]
    out_ref[...] = logits                                   # dense (8,128) unmasked store


# ------------------------------------ parameters ------------------------------------
def init_params(key):
    # TODO(synk): from_pretrained('./swin_base_model') cannot be read here; weights are random.
    keys = iter(jax.random.split(key, 128))

    def nrm(shape, scale=0.02):
        return (scale * jax.random.normal(next(keys), shape)).astype(jnp.float32)

    params = {
        "patch_w": nrm((PATCH_DIM, C)),
        "patch_b": jnp.zeros((C,), jnp.float32),
        "embed_ln_g": jnp.ones((C,), jnp.float32),
        "embed_ln_b": jnp.zeros((C,), jnp.float32),
        "final_ln_g": jnp.ones((C,), jnp.float32),
        "final_ln_b": jnp.zeros((C,), jnp.float32),
        "cls_w": nrm((C, NUM_CLASSES)),
        "cls_b": jnp.zeros((NUM_CLASSES,), jnp.float32),
        "blocks": [],
    }
    for _ in range(DEPTH):
        params["blocks"].append(
            {
                "ln1_g": jnp.ones((C,), jnp.float32),
                "ln1_b": jnp.zeros((C,), jnp.float32),
                "q_w": nrm((C, C)), "q_b": jnp.zeros((C,), jnp.float32),
                "k_w": nrm((C, C)), "k_b": jnp.zeros((C,), jnp.float32),
                "v_w": nrm((C, C)), "v_b": jnp.zeros((C,), jnp.float32),
                "rel_table": nrm(((2 * WS - 1) ** 2, HEADS)),
                "proj_w": nrm((C, C)),
                "proj_b": jnp.zeros((C,), jnp.float32),
                "ln2_g": jnp.ones((C,), jnp.float32),
                "ln2_b": jnp.zeros((C,), jnp.float32),
                "fc1_w": nrm((C, MLP_HIDDEN)),
                "fc1_b": jnp.zeros((MLP_HIDDEN,), jnp.float32),
                "fc2_w": nrm((MLP_HIDDEN, C)),
                "fc2_b": jnp.zeros((C,), jnp.float32),
            }
        )
    return params


# ------------------------------------ forward ------------------------------------
def swin_forward(x, params):
    B = x.shape[0]
    x = x.astype(jnp.float32)

    # patch extraction (pure layout): NCHW -> flat [B*L, C_in*P*P] token slab
    xp = (x.reshape(B, C_IN, HP, P, WP, P)
            .transpose(0, 2, 4, 1, 3, 5)
            .reshape(B * L, PATCH_DIM))
    n_tiles = pl.cdiv(B, TB)
    b_pad = n_tiles * TB
    if b_pad != B:                                   # pad batch up to a whole TB tile
        xp = jnp.pad(xp, ((0, (b_pad - B) * L), (0, 0)))

    def pad_row(v):
        v = jnp.asarray(v, jnp.float32).reshape(1, -1)
        return jnp.pad(v, ((0, 0), (0, CLS_PAD - v.shape[-1])))

    # pack all small bias / LayerNorm vectors into ONE [NV, 128] constant input
    vec_rows = [
        pad_row(params["patch_b"]),
        pad_row(params["embed_ln_g"]), pad_row(params["embed_ln_b"]),
        pad_row(params["final_ln_g"]), pad_row(params["final_ln_b"]),
        pad_row(params["cls_b"]),
    ]
    for bp in params["blocks"]:
        vec_rows += [
            pad_row(bp["ln1_g"]), pad_row(bp["ln1_b"]),
            pad_row(bp["q_b"]), pad_row(bp["k_b"]), pad_row(bp["v_b"]),
            pad_row(bp["proj_b"]),
            pad_row(bp["ln2_g"]), pad_row(bp["ln2_b"]),
            pad_row(bp["fc1_b"]), pad_row(bp["fc2_b"]),
        ]
    vc = jnp.concatenate(vec_rows, axis=0)           # [6 + 10*DEPTH, 128]

    cls_w_pad = jnp.zeros((C, CLS_PAD), jnp.float32).at[:, :NUM_CLASSES].set(params["cls_w"])
    pool_mat = jnp.asarray(_POOL_MAT)                # [TB, ROWS]
    off_diag = jnp.asarray(_OFF_DIAG_MASK)           # [ROWS, ROWS]

    inputs = [xp]
    in_specs = [pl.BlockSpec((ROWS, PATCH_DIM), lambda t: (t, 0))]

    def add_const(arr):
        # full-array block, constant index -> stays VMEM-resident across the batch-tile grid
        inputs.append(arr)
        in_specs.append(pl.BlockSpec(arr.shape, lambda t, nd=arr.ndim: (0,) * nd))

    add_const(params["patch_w"])
    add_const(vc)
    add_const(pool_mat)
    add_const(cls_w_pad)

    for blk_idx in range(DEPTH):
        bp = params["blocks"][blk_idx]
        rel = jnp.transpose(bp["rel_table"][_REL_INDEX], (2, 0, 1))        # [H, L, L]
        # TODO(synk): for configs with min(HP,WP) > WS, the odd-block cyclic shift + window
        # partition would be folded into this additive bias as a permuted block mask; HF Swin
        # sets shift_size=0 when the window covers the whole grid (this config), so no shift.
        bias = jnp.stack(
            [jnp.kron(jnp.eye(TB, dtype=jnp.float32), rel[hd]) for hd in range(HEADS)],
            axis=0,
        ) + off_diag[None]                                                 # [H, ROWS, ROWS]
        qkv_w = jnp.stack([bp["q_w"], bp["k_w"], bp["v_w"]], axis=0)       # [3, C, C]

        add_const(qkv_w)
        add_const(bp["proj_w"])
        add_const(bp["fc1_w"])
        add_const(bp["fc2_w"])
        add_const(bias)

    out = pl.pallas_call(
        _swin_fused_kernel,
        out_shape=jax.ShapeDtypeStruct((b_pad, CLS_PAD), jnp.float32),
        grid=(n_tiles,),
        in_specs=in_specs,
        out_specs=pl.BlockSpec((TB, CLS_PAD), lambda t: (t, 0)),
        compiler_params=pltpu.CompilerParams(dimension_semantics=("parallel",)),
    )(*inputs)

    return out[:B, :NUM_CLASSES]                     # [B, num_classes]


if __name__ == "__main__":
    params = init_params(jax.random.PRNGKey(42))
    fwd = jax.jit(lambda xx: swin_forward(xx, params))

    # main run: 2 grid steps of TB=8 images each (keeps both v7x TensorCores busy)
    x = jax.random.normal(jax.random.PRNGKey(0), (16, C_IN, IMG, IMG), jnp.float32)
    logits = fwd(x)
    jax.block_until_ready(logits)
    assert logits.shape == (16, NUM_CLASSES) and logits.dtype == jnp.float32

    # small-batch path: batch is zero-padded up to one TB tile inside the wrapper
    x_small = jax.random.normal(jax.random.PRNGKey(0), (2, C_IN, IMG, IMG), jnp.float32)
    logits_small = jax.jit(lambda xx: swin_forward(xx, params))(x_small)
    jax.block_until_ready(logits_small)
    assert logits_small.shape == (2, NUM_CLASSES)

    print("KERNEL_OK")
</pallas_src>

<mosaic_0001>
module attributes {stable_mosaic.version = 11 : i64} {
  func.func @_swin_fused_kernel(%arg0: i32, %arg1: memref<128x48xf32, #tpu.memory_space<vmem>>, %arg2: memref<48x32xf32, #tpu.memory_space<vmem>>, %arg3: memref<26x128xf32, #tpu.memory_space<vmem>>, %arg4: memref<8x128xf32, #tpu.memory_space<vmem>>, %arg5: memref<32x128xf32, #tpu.memory_space<vmem>>, %arg6: memref<3x32x32xf32, #tpu.memory_space<vmem>>, %arg7: memref<32x32xf32, #tpu.memory_space<vmem>>, %arg8: memref<32x128xf32, #tpu.memory_space<vmem>>, %arg9: memref<128x32xf32, #tpu.memory_space<vmem>>, %arg10: memref<4x128x128xf32, #tpu.memory_space<vmem>>, %arg11: memref<3x32x32xf32, #tpu.memory_space<vmem>>, %arg12: memref<32x32xf32, #tpu.memory_space<vmem>>, %arg13: memref<32x128xf32, #tpu.memory_space<vmem>>, %arg14: memref<128x32xf32, #tpu.memory_space<vmem>>, %arg15: memref<4x128x128xf32, #tpu.memory_space<vmem>>, %arg16: memref<8x128xf32, #tpu.memory_space<vmem>>) attributes {dimension_semantics = [#tpu.dimension_semantics<parallel>], iteration_bounds = array<i64: 2>, scalar_prefetch = 0 : i64, scratch_operands = 0 : i64, tpu.core_type = #tpu.core_type<tc>, window_params = [{transform_indices = @transform_0, window_bounds = array<i64: 128, 48>}, {pipeline_mode = #tpu.pipeline_mode<synchronous>, transform_indices = @transform_1, window_bounds = array<i64: 48, 32>}, {pipeline_mode = #tpu.pipeline_mode<synchronous>, transform_indices = @transform_2, window_bounds = array<i64: 26, 128>}, {pipeline_mode = #tpu.pipeline_mode<synchronous>, transform_indices = @transform_3, window_bounds = array<i64: 8, 128>}, {pipeline_mode = #tpu.pipeline_mode<synchronous>, transform_indices = @transform_4, window_bounds = array<i64: 32, 128>}, {pipeline_mode = #tpu.pipeline_mode<synchronous>, transform_indices = @transform_5, window_bounds = array<i64: 3, 32, 32>}, {pipeline_mode = #tpu.pipeline_mode<synchronous>, transform_indices = @transform_6, window_bounds = array<i64: 32, 32>}, {pipeline_mode = #tpu.pipeline_mode<synchronous>, transform_indices = @transform_7, window_bounds = array<i64: 32, 128>}, {pipeline_mode = #tpu.pipeline_mode<synchronous>, transform_indices = @transform_8, window_bounds = array<i64: 128, 32>}, {pipeline_mode = #tpu.pipeline_mode<synchronous>, transform_indices = @transform_9, window_bounds = array<i64: 4, 128, 128>}, {pipeline_mode = #tpu.pipeline_mode<synchronous>, transform_indices = @transform_10, window_bounds = array<i64: 3, 32, 32>}, {pipeline_mode = #tpu.pipeline_mode<synchronous>, transform_indices = @transform_11, window_bounds = array<i64: 32, 32>}, {pipeline_mode = #tpu.pipeline_mode<synchronous>, transform_indices = @transform_12, window_bounds = array<i64: 32, 128>}, {pipeline_mode = #tpu.pipeline_mode<synchronous>, transform_indices = @transform_13, window_bounds = array<i64: 128, 32>}, {pipeline_mode = #tpu.pipeline_mode<synchronous>, transform_indices = @transform_14, window_bounds = array<i64: 4, 128, 128>}, {transform_indices = @transform_15, window_bounds = array<i64: 8, 128>}]} {
    %0 = tpu.iota {dimensions = array<i32: 1>} : vector<1x32xi32>
    %c0_i32 = arith.constant 0 : i32
    %1 = vector.broadcast %c0_i32 : i32 to vector<1x32xi32>
    %2 = arith.cmpi sge, %0, %1 : vector<1x32xi32>
    %c8_i32 = arith.constant 8 : i32
    %3 = vector.broadcast %c8_i32 : i32 to vector<1x32xi32>
    %4 = arith.cmpi slt, %0, %3 : vector<1x32xi32>
    %5 = arith.andi %2, %4 : vector<1x32xi1>
    %6 = arith.extui %5 : vector<1x32xi1> to vector<1x32xi32>
    %7 = arith.sitofp %6 : vector<1x32xi32> to vector<1x32xf32>
    %c8_i32_0 = arith.constant 8 : i32
    %8 = vector.broadcast %c8_i32_0 : i32 to vector<1x32xi32>
    %9 = arith.cmpi sge, %0, %8 : vector<1x32xi32>
    %c16_i32 = arith.constant 16 : i32
    %10 = vector.broadcast %c16_i32 : i32 to vector<1x32xi32>
    %11 = arith.cmpi slt, %0, %10 : vector<1x32xi32>
    %12 = arith.andi %9, %11 : vector<1x32xi1>
    %13 = arith.extui %12 : vector<1x32xi1> to vector<1x32xi32>
    %14 = arith.sitofp %13 : vector<1x32xi32> to vector<1x32xf32>
    %c16_i32_1 = arith.constant 16 : i32
    %15 = vector.broadcast %c16_i32_1 : i32 to vector<1x32xi32>
    %16 = arith.cmpi sge, %0, %15 : vector<1x32xi32>
    %c24_i32 = arith.constant 24 : i32
    %17 = vector.broadcast %c24_i32 : i32 to vector<1x32xi32>
    %18 = arith.cmpi slt, %0, %17 : vector<1x32xi32>
    %19 = arith.andi %16, %18 : vector<1x32xi1>
    %20 = arith.extui %19 : vector<1x32xi1> to vector<1x32xi32>
    %21 = arith.sitofp %20 : vector<1x32xi32> to vector<1x32xf32>
    %c24_i32_2 = arith.constant 24 : i32
    %22 = vector.broadcast %c24_i32_2 : i32 to vector<1x32xi32>
    %23 = arith.cmpi sge, %0, %22 : vector<1x32xi32>
    %c32_i32 = arith.constant 32 : i32
    %24 = vector.broadcast %c32_i32 : i32 to vector<1x32xi32>
    %25 = arith.cmpi slt, %0, %24 : vector<1x32xi32>
    %26 = arith.andi %23, %25 : vector<1x32xi1>
    %27 = arith.extui %26 : vector<1x32xi1> to vector<1x32xi32>
    %28 = arith.sitofp %27 : vector<1x32xi32> to vector<1x32xf32>
    %c0 = arith.constant 0 : index
    %c0_3 = arith.constant 0 : index
    %29 = vector.load %arg1[%c0, %c0_3] : memref<128x48xf32, #tpu.memory_space<vmem>>, vector<128x48xf32>
    %c0_4 = arith.constant 0 : index
    %c0_5 = arith.constant 0 : index
    %30 = vector.load %arg2[%c0_4, %c0_5] : memref<48x32xf32, #tpu.memory_space<vmem>>, vector<48x32xf32>
    %cst = arith.constant dense<0.000000e+00> : vector<128x32xf32>
    %31 = tpu.matmul %29, %30, %cst {dimension_numbers = #tpu.dot_dimension_numbers<[1], [0], [0], [1], [0, 0, 1, 1], [], []>} : vector<128x48xf32>, vector<48x32xf32>, vector<128x32xf32> -> vector<128x32xf32>
    %c0_6 = arith.constant 0 : index
    %c0_7 = arith.constant 0 : index
    %32 = vector.load %arg3[%c0_6, %c0_7] : memref<26x128xf32, #tpu.memory_space<vmem>>, vector<1x32xf32>
    %33 = vector.broadcast %32 : vector<1x32xf32> to vector<128x32xf32>
    %34 = arith.addf %31, %33 : vector<128x32xf32>
    %c1 = arith.constant 1 : index
    %c0_8 = arith.constant 0 : index
    %35 = vector.load %arg3[%c1, %c0_8] : memref<26x128xf32, #tpu.memory_space<vmem>>, vector<1x32xf32>
    %c2 = arith.constant 2 : index
    %c0_9 = arith.constant 0 : index
    %36 = vector.load %arg3[%c2, %c0_9] : memref<26x128xf32, #tpu.memory_space<vmem>>, vector<1x32xf32>
    %cst_10 = arith.constant dense<0.000000e+00> : vector<128xf32>
    %37 = vector.multi_reduction <add>, %34, %cst_10 [1] : vector<128x32xf32> to vector<128xf32>
    %38 = vector.shape_cast %37 : vector<128xf32> to vector<128x1xf32>
    %cst_11 = arith.constant 3.200000e+01 : f32
    %39 = vector.broadcast %cst_11 : f32 to vector<128x1xf32>
    %40 = arith.divf %38, %39 : vector<128x1xf32>
    %41 = vector.broadcast %40 : vector<128x1xf32> to vector<128x32xf32>
    %42 = arith.subf %34, %41 : vector<128x32xf32>
    %43 = arith.mulf %42, %42 : vector<128x32xf32>
    %cst_12 = arith.constant dense<0.000000e+00> : vector<128xf32>
    %44 = vector.multi_reduction <add>, %43, %cst_12 [1] : vector<128x32xf32> to vector<128xf32>
    %45 = vector.shape_cast %44 : vector<128xf32> to vector<128x1xf32>
    %cst_13 = arith.constant 3.200000e+01 : f32
    %46 = vector.broadcast %cst_13 : f32 to vector<128x1xf32>
    %47 = arith.divf %45, %46 : vector<128x1xf32>
    %48 = vector.broadcast %40 : vector<128x1xf32> to vector<128x32xf32>
    %49 = arith.subf %34, %48 : vector<128x32xf32>
    %cst_14 = arith.constant 9.99999974E-6 : f32
    %50 = vector.broadcast %cst_14 : f32 to vector<128x1xf32>
    %51 = arith.addf %47, %50 : vector<128x1xf32>
    %52 = math.rsqrt %51 : vector<128x1xf32>
    %53 = vector.broadcast %52 : vector<128x1xf32> to vector<128x32xf32>
    %54 = arith.mulf %49, %53 : vector<128x32xf32>
    %55 = vector.broadcast %35 : vector<1x32xf32> to vector<128x32xf32>
    %56 = arith.mulf %54, %55 : vector<128x32xf32>
    %57 = vector.broadcast %36 : vector<1x32xf32> to vector<128x32xf32>
    %58 = arith.addf %56, %57 : vector<128x32xf32>
    %c6 = arith.constant 6 : index
    %c0_15 = arith.constant 0 : index
    %59 = vector.load %arg3[%c6, %c0_15] : memref<26x128xf32, #tpu.memory_space<vmem>>, vector<1x32xf32>
    %c7 = arith.constant 7 : index
    %c0_16 = arith.constant 0 : index
    %60 = vector.load %arg3[%c7, %c0_16] : memref<26x128xf32, #tpu.memory_space<vmem>>, vector<1x32xf32>
    %c8 = arith.constant 8 : index
    %c0_17 = arith.constant 0 : index
    %61 = vector.load %arg3[%c8, %c0_17] : memref<26x128xf32, #tpu.memory_space<vmem>>, vector<1x32xf32>
    %c9 = arith.constant 9 : index
    %c0_18 = arith.constant 0 : index
    %62 = vector.load %arg3[%c9, %c0_18] : memref<26x128xf32, #tpu.memory_space<vmem>>, vector<1x32xf32>
    %c10 = arith.constant 10 : index
    %c0_19 = arith.constant 0 : index
    %63 = vector.load %arg3[%c10, %c0_19] : memref<26x128xf32, #tpu.memory_space<vmem>>, vector<1x32xf32>
    %c11 = arith.constant 11 : index
    %c0_20 = arith.constant 0 : index
    %64 = vector.load %arg3[%c11, %c0_20] : memref<26x128xf32, #tpu.memory_space<vmem>>, vector<1x32xf32>
    %c12 = arith.constant 12 : index
    %c0_21 = arith.constant 0 : index
    %65 = vector.load %arg3[%c12, %c0_21] : memref<26x128xf32, #tpu.memory_space<vmem>>, vector<1x32xf32>
    %c13 = arith.constant 13 : index
    %c0_22 = arith.constant 0 : index
    %66 = vector.load %arg3[%c13, %c0_22] : memref<26x128xf32, #tpu.memory_space<vmem>>, vector<1x32xf32>
    %c14 = arith.constant 14 : index
    %c0_23 = arith.constant 0 : index
    %67 = vector.load %arg3[%c14, %c0_23] : memref<26x128xf32, #tpu.memory_space<vmem>>, vector<1x128xf32>
    %c15 = arith.constant 15 : index
    %c0_24 = arith.constant 0 : index
    %68 = vector.load %arg3[%c15, %c0_24] : memref<26x128xf32, #tpu.memory_space<vmem>>, vector<1x32xf32>
    %cst_25 = arith.constant dense<0.000000e+00> : vector<128xf32>
    %69 = vector.multi_reduction <add>, %58, %cst_25 [1] : vector<128x32xf32> to vector<128xf32>
    %70 = vector.shape_cast %69 : vector<128xf32> to vector<128x1xf32>
    %cst_26 = arith.constant 3.200000e+01 : f32
    %71 = vector.broadcast %cst_26 : f32 to vector<128x1xf32>
    %72 = arith.divf %70, %71 : vector<128x1xf32>
    %73 = vector.broadcast %72 : vector<128x1xf32> to vector<128x32xf32>
    %74 = arith.subf %58, %73 : vector<128x32xf32>
    %75 = arith.mulf %74, %74 : vector<128x32xf32>
    %cst_27 = arith.constant dense<0.000000e+00> : vector<128xf32>
    %76 = vector.multi_reduction <add>, %75, %cst_27 [1] : vector<128x32xf32> to vector<128xf32>
    %77 = vector.shape_cast %76 : vector<128xf32> to vector<128x1xf32>
    %cst_28 = arith.constant 3.200000e+01 : f32
    %78 = vector.broadcast %cst_28 : f32 to vector<128x1xf32>
    %79 = arith.divf %77, %78 : vector<128x1xf32>
    %80 = vector.broadcast %72 : vector<128x1xf32> to vector<128x32xf32>
    %81 = arith.subf %58, %80 : vector<128x32xf32>
    %cst_29 = arith.constant 9.99999974E-6 : f32
    %82 = vector.broadcast %cst_29 : f32 to vector<128x1xf32>
    %83 = arith.addf %79, %82 : vector<128x1xf32>
    %84 = math.rsqrt %83 : vector<128x1xf32>
    %85 = vector.broadcast %84 : vector<128x1xf32> to vector<128x32xf32>
    %86 = arith.mulf %81, %85 : vector<128x32xf32>
    %87 = vector.broadcast %59 : vector<1x32xf32> to vector<128x32xf32>
    %88 = arith.mulf %86, %87 : vector<128x32xf32>
    %89 = vector.broadcast %60 : vector<1x32xf32> to vector<128x32xf32>
    %90 = arith.addf %88, %89 : vector<128x32xf32>
    %c0_30 = arith.constant 0 : index
    %c0_31 = arith.constant 0 : index
    %c0_32 = arith.constant 0 : index
    %91 = vector.load %arg6[%c0_30, %c0_31, %c0_32] : memref<3x32x32xf32, #tpu.memory_space<vmem>>, vector<1x32x32xf32>
    %92 = vector.shape_cast %91 : vector<1x32x32xf32> to vector<32x32xf32>
    %cst_33 = arith.constant dense<0.000000e+00> : vector<128x32xf32>
    %93 = tpu.matmul %90, %92, %cst_33 {dimension_numbers = #tpu.dot_dimension_numbers<[1], [0], [0], [1], [0, 0, 1, 1], [], []>} : vector<128x32xf32>, vector<32x32xf32>, vector<128x32xf32> -> vector<128x32xf32>
    %94 = vector.broadcast %61 : vector<1x32xf32> to vector<128x32xf32>
    %95 = arith.addf %93, %94 : vector<128x32xf32>
    %cst_34 = arith.constant 0.353553385 : f32
    %96 = vector.broadcast %cst_34 : f32 to vector<128x32xf32>
    %97 = arith.mulf %95, %96 : vector<128x32xf32>
    %c1_35 = arith.constant 1 : index
    %c0_36 = arith.constant 0 : index
    %c0_37 = arith.constant 0 : index
    %98 = vector.load %arg6[%c1_35, %c0_36, %c0_37] : memref<3x32x32xf32, #tpu.memory_space<vmem>>, vector<1x32x32xf32>
    %99 = vector.shape_cast %98 : vector<1x32x32xf32> to vector<32x32xf32>
    %cst_38 = arith.constant dense<0.000000e+00> : vector<128x32xf32>
    %100 = tpu.matmul %90, %99, %cst_38 {dimension_numbers = #tpu.dot_dimension_numbers<[1], [0], [0], [1], [0, 0, 1, 1], [], []>} : vector<128x32xf32>, vector<32x32xf32>, vector<128x32xf32> -> vector<128x32xf32>
    %101 = vector.broadcast %62 : vector<1x32xf32> to vector<128x32xf32>
    %102 = arith.addf %100, %101 : vector<128x32xf32>
    %c2_39 = arith.constant 2 : index
    %c0_40 = arith.constant 0 : index
    %c0_41 = arith.constant 0 : index
    %103 = vector.load %arg6[%c2_39, %c0_40, %c0_41] : memref<3x32x32xf32, #tpu.memory_space<vmem>>, vector<1x32x32xf32>
    %104 = vector.shape_cast %103 : vector<1x32x32xf32> to vector<32x32xf32>
    %cst_42 = arith.constant dense<0.000000e+00> : vector<128x32xf32>
    %105 = tpu.matmul %90, %104, %cst_42 {dimension_numbers = #tpu.dot_dimension_numbers<[1], [0], [0], [1], [0, 0, 1, 1], [], []>} : vector<128x32xf32>, vector<32x32xf32>, vector<128x32xf32> -> vector<128x32xf32>
    %106 = vector.broadcast %63 : vector<1x32xf32> to vector<128x32xf32>
    %107 = arith.addf %105, %106 : vector<128x32xf32>
    %cst_43 = arith.constant 0.000000e+00 : f32
    %108 = vector.broadcast %cst_43 : f32 to vector<128x32xf32>
    %109 = vector.broadcast %7 : vector<1x32xf32> to vector<128x32xf32>
    %110 = arith.mulf %97, %109 : vector<128x32xf32>
    %cst_44 = arith.constant dense<0.000000e+00> : vector<128x128xf32>
    %111 = tpu.matmul %110, %102, %cst_44 {dimension_numbers = #tpu.dot_dimension_numbers<[1], [1], [0], [0], [0, 0, 1, 0], [], []>} : vector<128x32xf32>, vector<128x32xf32>, vector<128x128xf32> -> vector<128x128xf32>
    %c0_45 = arith.constant 0 : index
    %c0_46 = arith.constant 0 : index
    %c0_47 = arith.constant 0 : index
    %112 = vector.load %arg10[%c0_45, %c0_46, %c0_47] : memref<4x128x128xf32, #tpu.memory_space<vmem>>, vector<1x128x128xf32>
    %113 = vector.shape_cast %112 : vector<1x128x128xf32> to vector<128x128xf32>
    %114 = arith.addf %111, %113 : vector<128x128xf32>
    %cst_48 = arith.constant dense<0xFF800000> : vector<128xf32>
    %115 = vector.multi_reduction <maximumf>, %114, %cst_48 [1] : vector<128x128xf32> to vector<128xf32>
    %116 = vector.shape_cast %115 : vector<128xf32> to vector<128x1xf32>
    %117 = vector.broadcast %116 : vector<128x1xf32> to vector<128x128xf32>
    %118 = arith.subf %114, %117 : vector<128x128xf32>
    %119 = math.exp %118 : vector<128x128xf32>
    %cst_49 = arith.constant dense<0.000000e+00> : vector<128xf32>
    %120 = vector.multi_reduction <add>, %119, %cst_49 [1] : vector<128x128xf32> to vector<128xf32>
    %121 = vector.shape_cast %120 : vector<128xf32> to vector<128x1xf32>
    %122 = tpu.reciprocal %121 {approx = true} : vector<128x1xf32> -> vector<128x1xf32>
    %123 = vector.broadcast %122 : vector<128x1xf32> to vector<128x128xf32>
    %124 = arith.mulf %119, %123 : vector<128x128xf32>
    %125 = vector.broadcast %7 : vector<1x32xf32> to vector<128x32xf32>
    %126 = arith.mulf %107, %125 : vector<128x32xf32>
    %cst_50 = arith.constant dense<0.000000e+00> : vector<128x32xf32>
    %127 = tpu.matmul %124, %126, %cst_50 {dimension_numbers = #tpu.dot_dimension_numbers<[1], [0], [0], [1], [0, 0, 1, 1], [], []>} : vector<128x128xf32>, vector<128x32xf32>, vector<128x32xf32> -> vector<128x32xf32>
    %128 = arith.addf %108, %127 : vector<128x32xf32>
    %129 = vector.broadcast %14 : vector<1x32xf32> to vector<128x32xf32>
    %130 = arith.mulf %97, %129 : vector<128x32xf32>
    %cst_51 = arith.constant dense<0.000000e+00> : vector<128x128xf32>
    %131 = tpu.matmul %130, %102, %cst_51 {dimension_numbers = #tpu.dot_dimension_numbers<[1], [1], [0], [0], [0, 0, 1, 0], [], []>} : vector<128x32xf32>, vector<128x32xf32>, vector<128x128xf32> -> vector<128x128xf32>
    %c1_52 = arith.constant 1 : index
    %c0_53 = arith.constant 0 : index
    %c0_54 = arith.constant 0 : index
    %132 = vector.load %arg10[%c1_52, %c0_53, %c0_54] : memref<4x128x128xf32, #tpu.memory_space<vmem>>, vector<1x128x128xf32>
    %133 = vector.shape_cast %132 : vector<1x128x128xf32> to vector<128x128xf32>
    %134 = arith.addf %131, %133 : vector<128x128xf32>
    %cst_55 = arith.constant dense<0xFF800000> : vector<128xf32>
    %135 = vector.multi_reduction <maximumf>, %134, %cst_55 [1] : vector<128x128xf32> to vector<128xf32>
    %136 = vector.shape_cast %135 : vector<128xf32> to vector<128x1xf32>
    %137 = vector.broadcast %136 : vector<128x1xf32> to vector<128x128xf32>
    %138 = arith.subf %134, %137 : vector<128x128xf32>
    %139 = math.exp %138 : vector<128x128xf32>
    %cst_56 = arith.constant dense<0.000000e+00> : vector<128xf32>
    %140 = vector.multi_reduction <add>, %139, %cst_56 [1] : vector<128x128xf32> to vector<128xf32>
    %141 = vector.shape_cast %140 : vector<128xf32> to vector<128x1xf32>
    %142 = tpu.reciprocal %141 {approx = true} : vector<128x1xf32> -> vector<128x1xf32>
    %143 = vector.broadcast %142 : vector<128x1xf32> to vector<128x128xf32>
    %144 = arith.mulf %139, %143 : vector<128x128xf32>
    %145 = vector.broadcast %14 : vector<1x32xf32> to vector<128x32xf32>
    %146 = arith.mulf %107, %145 : vector<128x32xf32>
    %cst_57 = arith.constant dense<0.000000e+00> : vector<128x32xf32>
    %147 = tpu.matmul %144, %146, %cst_57 {dimension_numbers = #tpu.dot_dimension_numbers<[1], [0], [0], [1], [0, 0, 1, 1], [], []>} : vector<128x128xf32>, vector<128x32xf32>, vector<128x32xf32> -> vector<128x32xf32>
    %148 = arith.addf %128, %147 : vector<128x32xf32>
    %149 = vector.broadcast %21 : vector<1x32xf32> to vector<128x32xf32>
    %150 = arith.mulf %97, %149 : vector<128x32xf32>
    %cst_58 = arith.constant dense<0.000000e+00> : vector<128x128xf32>
    %151 = tpu.matmul %150, %102, %cst_58 {dimension_numbers = #tpu.dot_dimension_numbers<[1], [1], [0], [0], [0, 0, 1, 0], [], []>} : vector<128x32xf32>, vector<128x32xf32>, vector<128x128xf32> -> vector<128x128xf32>
    %c2_59 = arith.constant 2 : index
    %c0_60 = arith.constant 0 : index
    %c0_61 = arith.constant 0 : index
    %152 = vector.load %arg10[%c2_59, %c0_60, %c0_61] : memref<4x128x128xf32, #tpu.memory_space<vmem>>, vector<1x128x128xf32>
    %153 = vector.shape_cast %152 : vector<1x128x128xf32> to vector<128x128xf32>
    %154 = arith.addf %151, %153 : vector<128x128xf32>
    %cst_62 = arith.constant dense<0xFF800000> : vector<128xf32>
    %155 = vector.multi_reduction <maximumf>, %154, %cst_62 [1] : vector<128x128xf32> to vector<128xf32>
    %156 = vector.shape_cast %155 : vector<128xf32> to vector<128x1xf32>
    %157 = vector.broadcast %156 : vector<128x1xf32> to vector<128x128xf32>
    %158 = arith.subf %154, %157 : vector<128x128xf32>
    %159 = math.exp %158 : vector<128x128xf32>
    %cst_63 = arith.constant dense<0.000000e+00> : vector<128xf32>
    %160 = vector.multi_reduction <add>, %159, %cst_63 [1] : vector<128x128xf32> to vector<128xf32>
    %161 = vector.shape_cast %160 : vector<128xf32> to vector<128x1xf32>
    %162 = tpu.reciprocal %161 {approx = true} : vector<128x1xf32> -> vector<128x1xf32>
    %163 = vector.broadcast %162 : vector<128x1xf32> to vector<128x128xf32>
    %164 = arith.mulf %159, %163 : vector<128x128xf32>
    %165 = vector.broadcast %21 : vector<1x32xf32> to vector<128x32xf32>
    %166 = arith.mulf %107, %165 : vector<128x32xf32>
    %cst_64 = arith.constant dense<0.000000e+00> : vector<128x32xf32>
    %167 = tpu.matmul %164, %166, %cst_64 {dimension_numbers = #tpu.dot_dimension_numbers<[1], [0], [0], [1], [0, 0, 1, 1], [], []>} : vector<128x128xf32>, vector<128x32xf32>, vector<128x32xf32> -> vector<128x32xf32>
    %168 = arith.addf %148, %167 : vector<128x32xf32>
    %169 = vector.broadcast %28 : vector<1x32xf32> to vector<128x32xf32>
    %170 = arith.mulf %97, %169 : vector<128x32xf32>
    %cst_65 = arith.constant dense<0.000000e+00> : vector<128x128xf32>
    %171 = tpu.matmul %170, %102, %cst_65 {dimension_numbers = #tpu.dot_dimension_numbers<[1], [1], [0], [0], [0, 0, 1, 0], [], []>} : vector<128x32xf32>, vector<128x32xf32>, vector<128x128xf32> -> vector<128x128xf32>
    %c3 = arith.constant 3 : index
    %c0_66 = arith.constant 0 : index
    %c0_67 = arith.constant 0 : index
    %172 = vector.load %arg10[%c3, %c0_66, %c0_67] : memref<4x128x128xf32, #tpu.memory_space<vmem>>, vector<1x128x128xf32>
    %173 = vector.shape_cast %172 : vector<1x128x128xf32> to vector<128x128xf32>
    %174 = arith.addf %171, %173 : vector<128x128xf32>
    %cst_68 = arith.constant dense<0xFF800000> : vector<128xf32>
    %175 = vector.multi_reduction <maximumf>, %174, %cst_68 [1] : vector<128x128xf32> to vector<128xf32>
    %176 = vector.shape_cast %175 : vector<128xf32> to vector<128x1xf32>
    %177 = vector.broadcast %176 : vector<128x1xf32> to vector<128x128xf32>
    %178 = arith.subf %174, %177 : vector<128x128xf32>
    %179 = math.exp %178 : vector<128x128xf32>
    %cst_69 = arith.constant dense<0.000000e+00> : vector<128xf32>
    %180 = vector.multi_reduction <add>, %179, %cst_69 [1] : vector<128x128xf32> to vector<128xf32>
    %181 = vector.shape_cast %180 : vector<128xf32> to vector<128x1xf32>
    %182 = tpu.reciprocal %181 {approx = true} : vector<128x1xf32> -> vector<128x1xf32>
    %183 = vector.broadcast %182 : vector<128x1xf32> to vector<128x128xf32>
    %184 = arith.mulf %179, %183 : vector<128x128xf32>
    %185 = vector.broadcast %28 : vector<1x32xf32> to vector<128x32xf32>
    %186 = arith.mulf %107, %185 : vector<128x32xf32>
    %cst_70 = arith.constant dense<0.000000e+00> : vector<128x32xf32>
    %187 = tpu.matmul %184, %186, %cst_70 {dimension_numbers = #tpu.dot_dimension_numbers<[1], [0], [0], [1], [0, 0, 1, 1], [], []>} : vector<128x128xf32>, vector<128x32xf32>, vector<128x32xf32> -> vector<128x32xf32>
    %188 = arith.addf %168, %187 : vector<128x32xf32>
    %c0_71 = arith.constant 0 : index
    %c0_72 = arith.constant 0 : index
    %189 = vector.load %arg7[%c0_71, %c0_72] : memref<32x32xf32, #tpu.memory_space<vmem>>, vector<32x32xf32>
    %cst_73 = arith.constant dense<0.000000e+00> : vector<128x32xf32>
    %190 = tpu.matmul %188, %189, %cst_73 {dimension_numbers = #tpu.dot_dimension_numbers<[1], [0], [0], [1], [0, 0, 1, 1], [], []>} : vector<128x32xf32>, vector<32x32xf32>, vector<128x32xf32> -> vector<128x32xf32>
    %191 = vector.broadcast %64 : vector<1x32xf32> to vector<128x32xf32>
    %192 = arith.addf %190, %191 : vector<128x32xf32>
    %193 = arith.addf %58, %192 : vector<128x32xf32>
    %cst_74 = arith.constant dense<0.000000e+00> : vector<128xf32>
    %194 = vector.multi_reduction <add>, %193, %cst_74 [1] : vector<128x32xf32> to vector<128xf32>
    %195 = vector.shape_cast %194 : vector<128xf32> to vector<128x1xf32>
    %cst_75 = arith.constant 3.200000e+01 : f32
    %196 = vector.broadcast %cst_75 : f32 to vector<128x1xf32>
    %197 = arith.divf %195, %196 : vector<128x1xf32>
    %198 = vector.broadcast %197 : vector<128x1xf32> to vector<128x32xf32>
    %199 = arith.subf %193, %198 : vector<128x32xf32>
    %200 = arith.mulf %199, %199 : vector<128x32xf32>
    %cst_76 = arith.constant dense<0.000000e+00> : vector<128xf32>
    %201 = vector.multi_reduction <add>, %200, %cst_76 [1] : vector<128x32xf32> to vector<128xf32>
    %202 = vector.shape_cast %201 : vector<128xf32> to vector<128x1xf32>
    %cst_77 = arith.constant 3.200000e+01 : f32
    %203 = vector.broadcast %cst_77 : f32 to vector<128x1xf32>
    %204 = arith.divf %202, %203 : vector<128x1xf32>
    %205 = vector.broadcast %197 : vector<128x1xf32> to vector<128x32xf32>
    %206 = arith.subf %193, %205 : vector<128x32xf32>
    %cst_78 = arith.constant 9.99999974E-6 : f32
    %207 = vector.broadcast %cst_78 : f32 to vector<128x1xf32>
    %208 = arith.addf %204, %207 : vector<128x1xf32>
    %209 = math.rsqrt %208 : vector<128x1xf32>
    %210 = vector.broadcast %209 : vector<128x1xf32> to vector<128x32xf32>
    %211 = arith.mulf %206, %210 : vector<128x32xf32>
    %212 = vector.broadcast %65 : vector<1x32xf32> to vector<128x32xf32>
    %213 = arith.mulf %211, %212 : vector<128x32xf32>
    %214 = vector.broadcast %66 : vector<1x32xf32> to vector<128x32xf32>
    %215 = arith.addf %213, %214 : vector<128x32xf32>
    %c0_79 = arith.constant 0 : index
    %c0_80 = arith.constant 0 : index
    %216 = vector.load %arg8[%c0_79, %c0_80] : memref<32x128xf32, #tpu.memory_space<vmem>>, vector<32x128xf32>
    %cst_81 = arith.constant dense<0.000000e+00> : vector<128x128xf32>
    %217 = tpu.matmul %215, %216, %cst_81 {dimension_numbers = #tpu.dot_dimension_numbers<[1], [0], [0], [1], [0, 0, 1, 1], [], []>} : vector<128x32xf32>, vector<32x128xf32>, vector<128x128xf32> -> vector<128x128xf32>
    %218 = vector.broadcast %67 : vector<1x128xf32> to vector<128x128xf32>
    %219 = arith.addf %217, %218 : vector<128x128xf32>
    %cst_82 = arith.constant 5.000000e-01 : f32
    %220 = vector.broadcast %cst_82 : f32 to vector<128x128xf32>
    %221 = arith.mulf %220, %219 : vector<128x128xf32>
    %cst_83 = arith.constant 4.471500e-02 : f32
    %222 = vector.broadcast %cst_83 : f32 to vector<128x128xf32>
    %223 = arith.mulf %222, %219 : vector<128x128xf32>
    %224 = arith.mulf %223, %219 : vector<128x128xf32>
    %225 = arith.mulf %224, %219 : vector<128x128xf32>
    %226 = arith.addf %219, %225 : vector<128x128xf32>
    %cst_84 = arith.constant 0.797884583 : f32
    %227 = vector.broadcast %cst_84 : f32 to vector<128x128xf32>
    %228 = arith.mulf %227, %226 : vector<128x128xf32>
    %229 = math.tanh %228 : vector<128x128xf32>
    %cst_85 = arith.constant 1.000000e+00 : f32
    %230 = vector.broadcast %cst_85 : f32 to vector<128x128xf32>
    %231 = arith.addf %230, %229 : vector<128x128xf32>
    %232 = arith.mulf %221, %231 : vector<128x128xf32>
    %c0_86 = arith.constant 0 : index
    %c0_87 = arith.constant 0 : index
    %233 = vector.load %arg9[%c0_86, %c0_87] : memref<128x32xf32, #tpu.memory_space<vmem>>, vector<128x32xf32>
    %cst_88 = arith.constant dense<0.000000e+00> : vector<128x32xf32>
    %234 = tpu.matmul %232, %233, %cst_88 {dimension_numbers = #tpu.dot_dimension_numbers<[1], [0], [0], [1], [0, 0, 1, 1], [], []>} : vector<128x128xf32>, vector<128x32xf32>, vector<128x32xf32> -> vector<128x32xf32>
    %235 = vector.broadcast %68 : vector<1x32xf32> to vector<128x32xf32>
    %236 = arith.addf %234, %235 : vector<128x32xf32>
    %237 = arith.addf %193, %236 : vector<128x32xf32>
    %c16 = arith.constant 16 : index
    %c0_89 = arith.constant 0 : index
    %238 = vector.load %arg3[%c16, %c0_89] : memref<26x128xf32, #tpu.memory_space<vmem>>, vector<1x32xf32>
    %c17 = arith.constant 17 : index
    %c0_90 = arith.constant 0 : index
    %239 = vector.load %arg3[%c17, %c0_90] : memref<26x128xf32, #tpu.memory_space<vmem>>, vector<1x32xf32>
    %c18 = arith.constant 18 : index
    %c0_91 = arith.constant 0 : index
    %240 = vector.load %arg3[%c18, %c0_91] : memref<26x128xf32, #tpu.memory_space<vmem>>, vector<1x32xf32>
    %c19 = arith.constant 19 : index
    %c0_92 = arith.constant 0 : index
    %241 = vector.load %arg3[%c19, %c0_92] : memref<26x128xf32, #tpu.memory_space<vmem>>, vector<1x32xf32>
    %c20 = arith.constant 20 : index
    %c0_93 = arith.constant 0 : index
    %242 = vector.load %arg3[%c20, %c0_93] : memref<26x128xf32, #tpu.memory_space<vmem>>, vector<1x32xf32>
    %c21 = arith.constant 21 : index
    %c0_94 = arith.constant 0 : index
    %243 = vector.load %arg3[%c21, %c0_94] : memref<26x128xf32, #tpu.memory_space<vmem>>, vector<1x32xf32>
    %c22 = arith.constant 22 : index
    %c0_95 = arith.constant 0 : index
    %244 = vector.load %arg3[%c22, %c0_95] : memref<26x128xf32, #tpu.memory_space<vmem>>, vector<1x32xf32>
    %c23 = arith.constant 23 : index
    %c0_96 = arith.constant 0 : index
    %245 = vector.load %arg3[%c23, %c0_96] : memref<26x128xf32, #tpu.memory_space<vmem>>, vector<1x32xf32>
    %c24 = arith.constant 24 : index
    %c0_97 = arith.constant 0 : index
    %246 = vector.load %arg3[%c24, %c0_97] : memref<26x128xf32, #tpu.memory_space<vmem>>, vector<1x128xf32>
    %c25 = arith.constant 25 : index
    %c0_98 = arith.constant 0 : index
    %247 = vector.load %arg3[%c25, %c0_98] : memref<26x128xf32, #tpu.memory_space<vmem>>, vector<1x32xf32>
    %cst_99 = arith.constant dense<0.000000e+00> : vector<128xf32>
    %248 = vector.multi_reduction <add>, %237, %cst_99 [1] : vector<128x32xf32> to vector<128xf32>
    %249 = vector.shape_cast %248 : vector<128xf32> to vector<128x1xf32>
    %cst_100 = arith.constant 3.200000e+01 : f32
    %250 = vector.broadcast %cst_100 : f32 to vector<128x1xf32>
    %251 = arith.divf %249, %250 : vector<128x1xf32>
    %252 = vector.broadcast %251 : vector<128x1xf32> to vector<128x32xf32>
    %253 = arith.subf %237, %252 : vector<128x32xf32>
    %254 = arith.mulf %253, %253 : vector<128x32xf32>
    %cst_101 = arith.constant dense<0.000000e+00> : vector<128xf32>
    %255 = vector.multi_reduction <add>, %254, %cst_101 [1] : vector<128x32xf32> to vector<128xf32>
    %256 = vector.shape_cast %255 : vector<128xf32> to vector<128x1xf32>
    %cst_102 = arith.constant 3.200000e+01 : f32
    %257 = vector.broadcast %cst_102 : f32 to vector<128x1xf32>
    %258 = arith.divf %256, %257 : vector<128x1xf32>
    %259 = vector.broadcast %251 : vector<128x1xf32> to vector<128x32xf32>
    %260 = arith.subf %237, %259 : vector<128x32xf32>
    %cst_103 = arith.constant 9.99999974E-6 : f32
    %261 = vector.broadcast %cst_103 : f32 to vector<128x1xf32>
    %262 = arith.addf %258, %261 : vector<128x1xf32>
    %263 = math.rsqrt %262 : vector<128x1xf32>
    %264 = vector.broadcast %263 : vector<128x1xf32> to vector<128x32xf32>
    %265 = arith.mulf %260, %264 : vector<128x32xf32>
    %266 = vector.broadcast %238 : vector<1x32xf32> to vector<128x32xf32>
    %267 = arith.mulf %265, %266 : vector<128x32xf32>
    %268 = vector.broadcast %239 : vector<1x32xf32> to vector<128x32xf32>
    %269 = arith.addf %267, %268 : vector<128x32xf32>
    %c0_104 = arith.constant 0 : index
    %c0_105 = arith.constant 0 : index
    %c0_106 = arith.constant 0 : index
    %270 = vector.load %arg11[%c0_104, %c0_105, %c0_106] : memref<3x32x32xf32, #tpu.memory_space<vmem>>, vector<1x32x32xf32>
    %271 = vector.shape_cast %270 : vector<1x32x32xf32> to vector<32x32xf32>
    %cst_107 = arith.constant dense<0.000000e+00> : vector<128x32xf32>
    %272 = tpu.matmul %269, %271, %cst_107 {dimension_numbers = #tpu.dot_dimension_numbers<[1], [0], [0], [1], [0, 0, 1, 1], [], []>} : vector<128x32xf32>, vector<32x32xf32>, vector<128x32xf32> -> vector<128x32xf32>
    %273 = vector.broadcast %240 : vector<1x32xf32> to vector<128x32xf32>
    %274 = arith.addf %272, %273 : vector<128x32xf32>
    %cst_108 = arith.constant 0.353553385 : f32
    %275 = vector.broadcast %cst_108 : f32 to vector<128x32xf32>
    %276 = arith.mulf %274, %275 : vector<128x32xf32>
    %c1_109 = arith.constant 1 : index
    %c0_110 = arith.constant 0 : index
    %c0_111 = arith.constant 0 : index
    %277 = vector.load %arg11[%c1_109, %c0_110, %c0_111] : memref<3x32x32xf32, #tpu.memory_space<vmem>>, vector<1x32x32xf32>
    %278 = vector.shape_cast %277 : vector<1x32x32xf32> to vector<32x32xf32>
    %cst_112 = arith.constant dense<0.000000e+00> : vector<128x32xf32>
    %279 = tpu.matmul %269, %278, %cst_112 {dimension_numbers = #tpu.dot_dimension_numbers<[1], [0], [0], [1], [0, 0, 1, 1], [], []>} : vector<128x32xf32>, vector<32x32xf32>, vector<128x32xf32> -> vector<128x32xf32>
    %280 = vector.broadcast %241 : vector<1x32xf32> to vector<128x32xf32>
    %281 = arith.addf %279, %280 : vector<128x32xf32>
    %c2_113 = arith.constant 2 : index
    %c0_114 = arith.constant 0 : index
    %c0_115 = arith.constant 0 : index
    %282 = vector.load %arg11[%c2_113, %c0_114, %c0_115] : memref<3x32x32xf32, #tpu.memory_space<vmem>>, vector<1x32x32xf32>
    %283 = vector.shape_cast %282 : vector<1x32x32xf32> to vector<32x32xf32>
    %cst_116 = arith.constant dense<0.000000e+00> : vector<128x32xf32>
    %284 = tpu.matmul %269, %283, %cst_116 {dimension_numbers = #tpu.dot_dimension_numbers<[1], [0], [0], [1], [0, 0, 1, 1], [], []>} : vector<128x32xf32>, vector<32x32xf32>, vector<128x32xf32> -> vector<128x32xf32>
    %285 = vector.broadcast %242 : vector<1x32xf32> to vector<128x32xf32>
    %286 = arith.addf %284, %285 : vector<128x32xf32>
    %cst_117 = arith.constant 0.000000e+00 : f32
    %287 = vector.broadcast %cst_117 : f32 to vector<128x32xf32>
    %288 = vector.broadcast %7 : vector<1x32xf32> to vector<128x32xf32>
    %289 = arith.mulf %276, %288 : vector<128x32xf32>
    %cst_118 = arith.constant dense<0.000000e+00> : vector<128x128xf32>
    %290 = tpu.matmul %289, %281, %cst_118 {dimension_numbers = #tpu.dot_dimension_numbers<[1], [1], [0], [0], [0, 0, 1, 0], [], []>} : vector<128x32xf32>, vector<128x32xf32>, vector<128x128xf32> -> vector<128x128xf32>
    %c0_119 = arith.constant 0 : index
    %c0_120 = arith.constant 0 : index
    %c0_121 = arith.constant 0 : index
    %291 = vector.load %arg15[%c0_119, %c0_120, %c0_121] : memref<4x128x128xf32, #tpu.memory_space<vmem>>, vector<1x128x128xf32>
    %292 = vector.shape_cast %291 : vector<1x128x128xf32> to vector<128x128xf32>
    %293 = arith.addf %290, %292 : vector<128x128xf32>
    %cst_122 = arith.constant dense<0xFF800000> : vector<128xf32>
    %294 = vector.multi_reduction <maximumf>, %293, %cst_122 [1] : vector<128x128xf32> to vector<128xf32>
    %295 = vector.shape_cast %294 : vector<128xf32> to vector<128x1xf32>
    %296 = vector.broadcast %295 : vector<128x1xf32> to vector<128x128xf32>
    %297 = arith.subf %293, %296 : vector<128x128xf32>
    %298 = math.exp %297 : vector<128x128xf32>
    %cst_123 = arith.constant dense<0.000000e+00> : vector<128xf32>
    %299 = vector.multi_reduction <add>, %298, %cst_123 [1] : vector<128x128xf32> to vector<128xf32>
    %300 = vector.shape_cast %299 : vector<128xf32> to vector<128x1xf32>
    %301 = tpu.reciprocal %300 {approx = true} : vector<128x1xf32> -> vector<128x1xf32>
    %302 = vector.broadcast %301 : vector<128x1xf32> to vector<128x128xf32>
    %303 = arith.mulf %298, %302 : vector<128x128xf32>
    %304 = vector.broadcast %7 : vector<1x32xf32> to vector<128x32xf32>
    %305 = arith.mulf %286, %304 : vector<128x32xf32>
    %cst_124 = arith.constant dense<0.000000e+00> : vector<128x32xf32>
    %306 = tpu.matmul %303, %305, %cst_124 {dimension_numbers = #tpu.dot_dimension_numbers<[1], [0], [0], [1], [0, 0, 1, 1], [], []>} : vector<128x128xf32>, vector<128x32xf32>, vector<128x32xf32> -> vector<128x32xf32>
    %307 = arith.addf %287, %306 : vector<128x32xf32>
    %308 = vector.broadcast %14 : vector<1x32xf32> to vector<128x32xf32>
    %309 = arith.mulf %276, %308 : vector<128x32xf32>
    %cst_125 = arith.constant dense<0.000000e+00> : vector<128x128xf32>
    %310 = tpu.matmul %309, %281, %cst_125 {dimension_numbers = #tpu.dot_dimension_numbers<[1], [1], [0], [0], [0, 0, 1, 0], [], []>} : vector<128x32xf32>, vector<128x32xf32>, vector<128x128xf32> -> vector<128x128xf32>
    %c1_126 = arith.constant 1 : index
    %c0_127 = arith.constant 0 : index
    %c0_128 = arith.constant 0 : index
    %311 = vector.load %arg15[%c1_126, %c0_127, %c0_128] : memref<4x128x128xf32, #tpu.memory_space<vmem>>, vector<1x128x128xf32>
    %312 = vector.shape_cast %311 : vector<1x128x128xf32> to vector<128x128xf32>
    %313 = arith.addf %310, %312 : vector<128x128xf32>
    %cst_129 = arith.constant dense<0xFF800000> : vector<128xf32>
    %314 = vector.multi_reduction <maximumf>, %313, %cst_129 [1] : vector<128x128xf32> to vector<128xf32>
    %315 = vector.shape_cast %314 : vector<128xf32> to vector<128x1xf32>
    %316 = vector.broadcast %315 : vector<128x1xf32> to vector<128x128xf32>
    %317 = arith.subf %313, %316 : vector<128x128xf32>
    %318 = math.exp %317 : vector<128x128xf32>
    %cst_130 = arith.constant dense<0.000000e+00> : vector<128xf32>
    %319 = vector.multi_reduction <add>, %318, %cst_130 [1] : vector<128x128xf32> to vector<128xf32>
    %320 = vector.shape_cast %319 : vector<128xf32> to vector<128x1xf32>
    %321 = tpu.reciprocal %320 {approx = true} : vector<128x1xf32> -> vector<128x1xf32>
    %322 = vector.broadcast %321 : vector<128x1xf32> to vector<128x128xf32>
    %323 = arith.mulf %318, %322 : vector<128x128xf32>
    %324 = vector.broadcast %14 : vector<1x32xf32> to vector<128x32xf32>
    %325 = arith.mulf %286, %324 : vector<128x32xf32>
    %cst_131 = arith.constant dense<0.000000e+00> : vector<128x32xf32>
    %326 = tpu.matmul %323, %325, %cst_131 {dimension_numbers = #tpu.dot_dimension_numbers<[1], [0], [0], [1], [0, 0, 1, 1], [], []>} : vector<128x128xf32>, vector<128x32xf32>, vector<128x32xf32> -> vector<128x32xf32>
    %327 = arith.addf %307, %326 : vector<128x32xf32>
    %328 = vector.broadcast %21 : vector<1x32xf32> to vector<128x32xf32>
    %329 = arith.mulf %276, %328 : vector<128x32xf32>
    %cst_132 = arith.constant dense<0.000000e+00> : vector<128x128xf32>
    %330 = tpu.matmul %329, %281, %cst_132 {dimension_numbers = #tpu.dot_dimension_numbers<[1], [1], [0], [0], [0, 0, 1, 0], [], []>} : vector<128x32xf32>, vector<128x32xf32>, vector<128x128xf32> -> vector<128x128xf32>
    %c2_133 = arith.constant 2 : index
    %c0_134 = arith.constant 0 : index
    %c0_135 = arith.constant 0 : index
    %331 = vector.load %arg15[%c2_133, %c0_134, %c0_135] : memref<4x128x128xf32, #tpu.memory_space<vmem>>, vector<1x128x128xf32>
    %332 = vector.shape_cast %331 : vector<1x128x128xf32> to vector<128x128xf32>
    %333 = arith.addf %330, %332 : vector<128x128xf32>
    %cst_136 = arith.constant dense<0xFF800000> : vector<128xf32>
    %334 = vector.multi_reduction <maximumf>, %333, %cst_136 [1] : vector<128x128xf32> to vector<128xf32>
    %335 = vector.shape_cast %334 : vector<128xf32> to vector<128x1xf32>
    %336 = vector.broadcast %335 : vector<128x1xf32> to vector<128x128xf32>
    %337 = arith.subf %333, %336 : vector<128x128xf32>
    %338 = math.exp %337 : vector<128x128xf32>
    %cst_137 = arith.constant dense<0.000000e+00> : vector<128xf32>
    %339 = vector.multi_reduction <add>, %338, %cst_137 [1] : vector<128x128xf32> to vector<128xf32>
    %340 = vector.shape_cast %339 : vector<128xf32> to vector<128x1xf32>
    %341 = tpu.reciprocal %340 {approx = true} : vector<128x1xf32> -> vector<128x1xf32>
    %342 = vector.broadcast %341 : vector<128x1xf32> to vector<128x128xf32>
    %343 = arith.mulf %338, %342 : vector<128x128xf32>
    %344 = vector.broadcast %21 : vector<1x32xf32> to vector<128x32xf32>
    %345 = arith.mulf %286, %344 : vector<128x32xf32>
    %cst_138 = arith.constant dense<0.000000e+00> : vector<128x32xf32>
    %346 = tpu.matmul %343, %345, %cst_138 {dimension_numbers = #tpu.dot_dimension_numbers<[1], [0], [0], [1], [0, 0, 1, 1], [], []>} : vector<128x128xf32>, vector<128x32xf32>, vector<128x32xf32> -> vector<128x32xf32>
    %347 = arith.addf %327, %346 : vector<128x32xf32>
    %348 = vector.broadcast %28 : vector<1x32xf32> to vector<128x32xf32>
    %349 = arith.mulf %276, %348 : vector<128x32xf32>
    %cst_139 = arith.constant dense<0.000000e+00> : vector<128x128xf32>
    %350 = tpu.matmul %349, %281, %cst_139 {dimension_numbers = #tpu.dot_dimension_numbers<[1], [1], [0], [0], [0, 0, 1, 0], [], []>} : vector<128x32xf32>, vector<128x32xf32>, vector<128x128xf32> -> vector<128x128xf32>
    %c3_140 = arith.constant 3 : index
    %c0_141 = arith.constant 0 : index
    %c0_142 = arith.constant 0 : index
    %351 = vector.load %arg15[%c3_140, %c0_141, %c0_142] : memref<4x128x128xf32, #tpu.memory_space<vmem>>, vector<1x128x128xf32>
    %352 = vector.shape_cast %351 : vector<1x128x128xf32> to vector<128x128xf32>
    %353 = arith.addf %350, %352 : vector<128x128xf32>
    %cst_143 = arith.constant dense<0xFF800000> : vector<128xf32>
    %354 = vector.multi_reduction <maximumf>, %353, %cst_143 [1] : vector<128x128xf32> to vector<128xf32>
    %355 = vector.shape_cast %354 : vector<128xf32> to vector<128x1xf32>
    %356 = vector.broadcast %355 : vector<128x1xf32> to vector<128x128xf32>
    %357 = arith.subf %353, %356 : vector<128x128xf32>
    %358 = math.exp %357 : vector<128x128xf32>
    %cst_144 = arith.constant dense<0.000000e+00> : vector<128xf32>
    %359 = vector.multi_reduction <add>, %358, %cst_144 [1] : vector<128x128xf32> to vector<128xf32>
    %360 = vector.shape_cast %359 : vector<128xf32> to vector<128x1xf32>
    %361 = tpu.reciprocal %360 {approx = true} : vector<128x1xf32> -> vector<128x1xf32>
    %362 = vector.broadcast %361 : vector<128x1xf32> to vector<128x128xf32>
    %363 = arith.mulf %358, %362 : vector<128x128xf32>
    %364 = vector.broadcast %28 : vector<1x32xf32> to vector<128x32xf32>
    %365 = arith.mulf %286, %364 : vector<128x32xf32>
    %cst_145 = arith.constant dense<0.000000e+00> : vector<128x32xf32>
    %366 = tpu.matmul %363, %365, %cst_145 {dimension_numbers = #tpu.dot_dimension_numbers<[1], [0], [0], [1], [0, 0, 1, 1], [], []>} : vector<128x128xf32>, vector<128x32xf32>, vector<128x32xf32> -> vector<128x32xf32>
    %367 = arith.addf %347, %366 : vector<128x32xf32>
    %c0_146 = arith.constant 0 : index
    %c0_147 = arith.constant 0 : index
    %368 = vector.load %arg12[%c0_146, %c0_147] : memref<32x32xf32, #tpu.memory_space<vmem>>, vector<32x32xf32>
    %cst_148 = arith.constant dense<0.000000e+00> : vector<128x32xf32>
    %369 = tpu.matmul %367, %368, %cst_148 {dimension_numbers = #tpu.dot_dimension_numbers<[1], [0], [0], [1], [0, 0, 1, 1], [], []>} : vector<128x32xf32>, vector<32x32xf32>, vector<128x32xf32> -> vector<128x32xf32>
    %370 = vector.broadcast %243 : vector<1x32xf32> to vector<128x32xf32>
    %371 = arith.addf %369, %370 : vector<128x32xf32>
    %372 = arith.addf %237, %371 : vector<128x32xf32>
    %cst_149 = arith.constant dense<0.000000e+00> : vector<128xf32>
    %373 = vector.multi_reduction <add>, %372, %cst_149 [1] : vector<128x32xf32> to vector<128xf32>
    %374 = vector.shape_cast %373 : vector<128xf32> to vector<128x1xf32>
    %cst_150 = arith.constant 3.200000e+01 : f32
    %375 = vector.broadcast %cst_150 : f32 to vector<128x1xf32>
    %376 = arith.divf %374, %375 : vector<128x1xf32>
    %377 = vector.broadcast %376 : vector<128x1xf32> to vector<128x32xf32>
    %378 = arith.subf %372, %377 : vector<128x32xf32>
    %379 = arith.mulf %378, %378 : vector<128x32xf32>
    %cst_151 = arith.constant dense<0.000000e+00> : vector<128xf32>
    %380 = vector.multi_reduction <add>, %379, %cst_151 [1] : vector<128x32xf32> to vector<128xf32>
    %381 = vector.shape_cast %380 : vector<128xf32> to vector<128x1xf32>
    %cst_152 = arith.constant 3.200000e+01 : f32
    %382 = vector.broadcast %cst_152 : f32 to vector<128x1xf32>
    %383 = arith.divf %381, %382 : vector<128x1xf32>
    %384 = vector.broadcast %376 : vector<128x1xf32> to vector<128x32xf32>
    %385 = arith.subf %372, %384 : vector<128x32xf32>
    %cst_153 = arith.constant 9.99999974E-6 : f32
    %386 = vector.broadcast %cst_153 : f32 to vector<128x1xf32>
    %387 = arith.addf %383, %386 : vector<128x1xf32>
    %388 = math.rsqrt %387 : vector<128x1xf32>
    %389 = vector.broadcast %388 : vector<128x1xf32> to vector<128x32xf32>
    %390 = arith.mulf %385, %389 : vector<128x32xf32>
    %391 = vector.broadcast %244 : vector<1x32xf32> to vector<128x32xf32>
    %392 = arith.mulf %390, %391 : vector<128x32xf32>
    %393 = vector.broadcast %245 : vector<1x32xf32> to vector<128x32xf32>
    %394 = arith.addf %392, %393 : vector<128x32xf32>
    %c0_154 = arith.constant 0 : index
    %c0_155 = arith.constant 0 : index
    %395 = vector.load %arg13[%c0_154, %c0_155] : memref<32x128xf32, #tpu.memory_space<vmem>>, vector<32x128xf32>
    %cst_156 = arith.constant dense<0.000000e+00> : vector<128x128xf32>
    %396 = tpu.matmul %394, %395, %cst_156 {dimension_numbers = #tpu.dot_dimension_numbers<[1], [0], [0], [1], [0, 0, 1, 1], [], []>} : vector<128x32xf32>, vector<32x128xf32>, vector<128x128xf32> -> vector<128x128xf32>
    %397 = vector.broadcast %246 : vector<1x128xf32> to vector<128x128xf32>
    %398 = arith.addf %396, %397 : vector<128x128xf32>
    %cst_157 = arith.constant 5.000000e-01 : f32
    %399 = vector.broadcast %cst_157 : f32 to vector<128x128xf32>
    %400 = arith.mulf %399, %398 : vector<128x128xf32>
    %cst_158 = arith.constant 4.471500e-02 : f32
    %401 = vector.broadcast %cst_158 : f32 to vector<128x128xf32>
    %402 = arith.mulf %401, %398 : vector<128x128xf32>
    %403 = arith.mulf %402, %398 : vector<128x128xf32>
    %404 = arith.mulf %403, %398 : vector<128x128xf32>
    %405 = arith.addf %398, %404 : vector<128x128xf32>
    %cst_159 = arith.constant 0.797884583 : f32
    %406 = vector.broadcast %cst_159 : f32 to vector<128x128xf32>
    %407 = arith.mulf %406, %405 : vector<128x128xf32>
    %408 = math.tanh %407 : vector<128x128xf32>
    %cst_160 = arith.constant 1.000000e+00 : f32
    %409 = vector.broadcast %cst_160 : f32 to vector<128x128xf32>
    %410 = arith.addf %409, %408 : vector<128x128xf32>
    %411 = arith.mulf %400, %410 : vector<128x128xf32>
    %c0_161 = arith.constant 0 : index
    %c0_162 = arith.constant 0 : index
    %412 = vector.load %arg14[%c0_161, %c0_162] : memref<128x32xf32, #tpu.memory_space<vmem>>, vector<128x32xf32>
    %cst_163 = arith.constant dense<0.000000e+00> : vector<128x32xf32>
    %413 = tpu.matmul %411, %412, %cst_163 {dimension_numbers = #tpu.dot_dimension_numbers<[1], [0], [0], [1], [0, 0, 1, 1], [], []>} : vector<128x128xf32>, vector<128x32xf32>, vector<128x32xf32> -> vector<128x32xf32>
    %414 = vector.broadcast %247 : vector<1x32xf32> to vector<128x32xf32>
    %415 = arith.addf %413, %414 : vector<128x32xf32>
    %416 = arith.addf %372, %415 : vector<128x32xf32>
    %c3_164 = arith.constant 3 : index
    %c0_165 = arith.constant 0 : index
    %417 = vector.load %arg3[%c3_164, %c0_165] : memref<26x128xf32, #tpu.memory_space<vmem>>, vector<1x32xf32>
    %c4 = arith.constant 4 : index
    %c0_166 = arith.constant 0 : index
    %418 = vector.load %arg3[%c4, %c0_166] : memref<26x128xf32, #tpu.memory_space<vmem>>, vector<1x32xf32>
    %cst_167 = arith.constant dense<0.000000e+00> : vector<128xf32>
    %419 = vector.multi_reduction <add>, %416, %cst_167 [1] : vector<128x32xf32> to vector<128xf32>
    %420 = vector.shape_cast %419 : vector<128xf32> to vector<128x1xf32>
    %cst_168 = arith.constant 3.200000e+01 : f32
    %421 = vector.broadcast %cst_168 : f32 to vector<128x1xf32>
    %422 = arith.divf %420, %421 : vector<128x1xf32>
    %423 = vector.broadcast %422 : vector<128x1xf32> to vector<128x32xf32>
    %424 = arith.subf %416, %423 : vector<128x32xf32>
    %425 = arith.mulf %424, %424 : vector<128x32xf32>
    %cst_169 = arith.constant dense<0.000000e+00> : vector<128xf32>
    %426 = vector.multi_reduction <add>, %425, %cst_169 [1] : vector<128x32xf32> to vector<128xf32>
    %427 = vector.shape_cast %426 : vector<128xf32> to vector<128x1xf32>
    %cst_170 = arith.constant 3.200000e+01 : f32
    %428 = vector.broadcast %cst_170 : f32 to vector<128x1xf32>
    %429 = arith.divf %427, %428 : vector<128x1xf32>
    %430 = vector.broadcast %422 : vector<128x1xf32> to vector<128x32xf32>
    %431 = arith.subf %416, %430 : vector<128x32xf32>
    %cst_171 = arith.constant 9.99999974E-6 : f32
    %432 = vector.broadcast %cst_171 : f32 to vector<128x1xf32>
    %433 = arith.addf %429, %432 : vector<128x1xf32>
    %434 = math.rsqrt %433 : vector<128x1xf32>
    %435 = vector.broadcast %434 : vector<128x1xf32> to vector<128x32xf32>
    %436 = arith.mulf %431, %435 : vector<128x32xf32>
    %437 = vector.broadcast %417 : vector<1x32xf32> to vector<128x32xf32>
    %438 = arith.mulf %436, %437 : vector<128x32xf32>
    %439 = vector.broadcast %418 : vector<1x32xf32> to vector<128x32xf32>
    %440 = arith.addf %438, %439 : vector<128x32xf32>
    %c0_172 = arith.constant 0 : index
    %c0_173 = arith.constant 0 : index
    %441 = vector.load %arg4[%c0_172, %c0_173] : memref<8x128xf32, #tpu.memory_space<vmem>>, vector<8x128xf32>
    %cst_174 = arith.constant dense<0.000000e+00> : vector<8x32xf32>
    %442 = tpu.matmul %441, %440, %cst_174 {dimension_numbers = #tpu.dot_dimension_numbers<[1], [0], [0], [1], [0, 0, 1, 1], [], []>} : vector<8x128xf32>, vector<128x32xf32>, vector<8x32xf32> -> vector<8x32xf32>
    %c0_175 = arith.constant 0 : index
    %c0_176 = arith.constant 0 : index
    %443 = vector.load %arg5[%c0_175, %c0_176] : memref<32x128xf32, #tpu.memory_space<vmem>>, vector<32x128xf32>
    %cst_177 = arith.constant dense<0.000000e+00> : vector<8x128xf32>
    %444 = tpu.matmul %442, %443, %cst_177 {dimension_numbers = #tpu.dot_dimension_numbers<[1], [0], [0], [1], [0, 0, 1, 1], [], []>} : vector<8x32xf32>, vector<32x128xf32>, vector<8x128xf32> -> vector<8x128xf32>
    %c5 = arith.constant 5 : index
    %c0_178 = arith.constant 0 : index
    %445 = vector.load %arg3[%c5, %c0_178] : memref<26x128xf32, #tpu.memory_space<vmem>>, vector<1x128xf32>
    %446 = vector.broadcast %445 : vector<1x128xf32> to vector<8x128xf32>
    %447 = arith.addf %444, %446 : vector<8x128xf32>
    %c0_179 = arith.constant 0 : index
    %c0_180 = arith.constant 0 : index
    %448 = vector.load %arg16[%c0_179, %c0_180] : memref<8x128xf32, #tpu.memory_space<vmem>>, vector<8x128xf32>
    tpu.vector_store %arg16[%c0_179, %c0_180], %447 {strides = array<i32>} : memref<8x128xf32, #tpu.memory_space<vmem>>, vector<8x128xf32>,
    return
  }
  func.func @transform_0(%arg0: i32) -> (i32, i32) {
    %c0_i32 = arith.constant 0 : i32
    %c0_i32_0 = arith.constant 0 : i32
    return %arg0, %c0_i32 : i32, i32
  }
  func.func @transform_1(%arg0: i32) -> (i32, i32) {
    %c0_i32 = arith.constant 0 : i32
    %c0_i32_0 = arith.constant 0 : i32
    %c0_i32_1 = arith.constant 0 : i32
    return %c0_i32, %c0_i32_0 : i32, i32
  }
  func.func @transform_2(%arg0: i32) -> (i32, i32) {
    %c0_i32 = arith.constant 0 : i32
    %c0_i32_0 = arith.constant 0 : i32
    %c0_i32_1 = arith.constant 0 : i32
    return %c0_i32, %c0_i32_0 : i32, i32
  }
  func.func @transform_3(%arg0: i32) -> (i32, i32) {
    %c0_i32 = arith.constant 0 : i32
    %c0_i32_0 = arith.constant 0 : i32
    %c0_i32_1 = arith.constant 0 : i32
    return %c0_i32, %c0_i32_0 : i32, i32
  }
  func.func @transform_4(%arg0: i32) -> (i32, i32) {
    %c0_i32 = arith.constant 0 : i32
    %c0_i32_0 = arith.constant 0 : i32
    %c0_i32_1 = arith.constant 0 : i32
    return %c0_i32, %c0_i32_0 : i32, i32
  }
  func.func @transform_5(%arg0: i32) -> (i32, i32, i32) {
    %c0_i32 = arith.constant 0 : i32
    %c0_i32_0 = arith.constant 0 : i32
    %c0_i32_1 = arith.constant 0 : i32
    %c0_i32_2 = arith.constant 0 : i32
    return %c0_i32, %c0_i32_0, %c0_i32_1 : i32, i32, i32
  }
  func.func @transform_6(%arg0: i32) -> (i32, i32) {
    %c0_i32 = arith.constant 0 : i32
    %c0_i32_0 = arith.constant 0 : i32
    %c0_i32_1 = arith.constant 0 : i32
    return %c0_i32, %c0_i32_0 : i32, i32
  }
  func.func @transform_7(%arg0: i32) -> (i32, i32) {
    %c0_i32 = arith.constant 0 : i32
    %c0_i32_0 = arith.constant 0 : i32
    %c0_i32_1 = arith.constant 0 : i32
    return %c0_i32, %c0_i32_0 : i32, i32
  }
  func.func @transform_8(%arg0: i32) -> (i32, i32) {
    %c0_i32 = arith.constant 0 : i32
    %c0_i32_0 = arith.constant 0 : i32
    %c0_i32_1 = arith.constant 0 : i32
    return %c0_i32, %c0_i32_0 : i32, i32
  }
  func.func @transform_9(%arg0: i32) -> (i32, i32, i32) {
    %c0_i32 = arith.constant 0 : i32
    %c0_i32_0 = arith.constant 0 : i32
    %c0_i32_1 = arith.constant 0 : i32
    %c0_i32_2 = arith.constant 0 : i32
    return %c0_i32, %c0_i32_0, %c0_i32_1 : i32, i32, i32
  }
  func.func @transform_10(%arg0: i32) -> (i32, i32, i32) {
    %c0_i32 = arith.constant 0 : i32
    %c0_i32_0 = arith.constant 0 : i32
    %c0_i32_1 = arith.constant 0 : i32
    %c0_i32_2 = arith.constant 0 : i32
    return %c0_i32, %c0_i32_0, %c0_i32_1 : i32, i32, i32
  }
  func.func @transform_11(%arg0: i32) -> (i32, i32) {
    %c0_i32 = arith.constant 0 : i32
    %c0_i32_0 = arith.constant 0 : i32
    %c0_i32_1 = arith.constant 0 : i32
    return %c0_i32, %c0_i32_0 : i32, i32
  }
  func.func @transform_12(%arg0: i32) -> (i32, i32) {
    %c0_i32 = arith.constant 0 : i32
    %c0_i32_0 = arith.constant 0 : i32
    %c0_i32_1 = arith.constant 0 : i32
    return %c0_i32, %c0_i32_0 : i32, i32
  }
  func.func @transform_13(%arg0: i32) -> (i32, i32) {
    %c0_i32 = arith.constant 0 : i32
    %c0_i32_0 = arith.constant 0 : i32
    %c0_i32_1 = arith.constant 0 : i32
    return %c0_i32, %c0_i32_0 : i32, i32
  }
  func.func @transform_14(%arg0: i32) -> (i32, i32, i32) {
    %c0_i32 = arith.constant 0 : i32
    %c0_i32_0 = arith.constant 0 : i32
    %c0_i32_1 = arith.constant 0 : i32
    %c0_i32_2 = arith.constant 0 : i32
    return %c0_i32, %c0_i32_0, %c0_i32_1 : i32, i32, i32
  }
  func.func @transform_15(%arg0: i32) -> (i32, i32) {
    %c0_i32 = arith.constant 0 : i32
    %c0_i32_0 = arith.constant 0 : i32
    return %arg0, %c0_i32 : i32, i32
  }
}

</mosaic_0001>

<llo_original>
// kernel: _lambda_.1
$region0: #{_lambda_.1}
  #allocation0 [shape = 'u32[]', space=smem, size = 0x4, offset = 0x4, fixed_abs, tag = 'smem constant byte address 0x4 - core index']
  #allocation1 [shape = 'u32[144,128]{1,0:T(1,128)}', space=vmem, size = 0x12000, scoped, tag = 'internal scratch']
  %s0 = inlined_call_operand.vmem [shape: f32[256,48], index: 0, kind: input, shape index: {}]
  %s1 = inlined_call_operand.vmem [shape: f32[48,32], index: 1, kind: input, shape index: {}]
  %s2 = inlined_call_operand.vmem [shape: f32[26,128], index: 2, kind: input, shape index: {}]
  %s3 = inlined_call_operand.vmem [shape: f32[8,128], index: 3, kind: input, shape index: {}]
  %s4 = inlined_call_operand.vmem [shape: f32[32,128], index: 4, kind: input, shape index: {}]
  %s5 = inlined_call_operand.vmem [shape: f32[3,32,32], index: 5, kind: input, shape index: {}]
  %s6 = inlined_call_operand.vmem [shape: f32[32,32], index: 6, kind: input, shape index: {}]
  %s7 = inlined_call_operand.vmem [shape: f32[32,128], index: 7, kind: input, shape index: {}]
  %s8 = inlined_call_operand.vmem [shape: f32[128,32], index: 8, kind: input, shape index: {}]
  %s9 = inlined_call_operand.vmem [shape: f32[4,128,128], index: 9, kind: input, shape index: {}]
  %s10 = inlined_call_operand.vmem [shape: f32[3,32,32], index: 10, kind: input, shape index: {}]
  %s11 = inlined_call_operand.vmem [shape: f32[32,32], index: 11, kind: input, shape index: {}]
  %s12 = inlined_call_operand.vmem [shape: f32[32,128], index: 12, kind: input, shape index: {}]
  %s13 = inlined_call_operand.vmem [shape: f32[128,32], index: 13, kind: input, shape index: {}]
  %s14 = inlined_call_operand.vmem [shape: f32[4,128,128], index: 14, kind: input, shape index: {}]
  %s15 = inlined_call_operand.hbm [shape: f32[16,128], index: 15, kind: output, shape index: {}]
  %s16 = sld [smem:[#allocation0]]
  $region93: #{_lambda_.1} parent=0
    _
  %s18 = ssub.s32 1, %s16
  %s19 = scalar_select 0, %s18, %s16
  $region1: #{_lambda_.1} parent=0
    #allocation2 [shape = 'u8[8192]{0}', space=vmem, size = 0x2000, scoped, tag = 'output window, operand 0']
    #allocation3 [shape = 's32[2]{0}', space=sflag, size = 0x8, scoped, tag = 'scoped memory for _lambda_.1']
    %20 = vsyncpa [#allocation3], 0
    %s21 = scalar_lea.sflag [#allocation3], 1
    %22 = vsyncpa %s21, 0
    loop: start=0, step=1, limit=4
    $region2: #{_lambda_.1} parent=1 // loop_pre_header
      _
    $region3: #{_lambda_.1} parent=1 // loop_header
      %s24 = sphi 0, %s28
      %p25 = scmp.ge.s32.totalorder %s24, 4
      %s34 = sphi 0, %s36
      %s37 = sphi 0, %s34
      %s38 = sphi 0, %s37
      %s54 = sphi 0, %s38
      %s58 = sphi 0, %s58
      %s60 = sphi 0, %s58
      %s61 = sphi 0, %s60
      %s75 = sphi 0, %s61
      %s79 = sphi 0, %s79
      %s81 = sphi 0, %s79
      %s82 = sphi 0, %s81
      %s96 = sphi 0, %s82
      %s100 = sphi 0, %s100
      %s102 = sphi 0, %s100
      %s103 = sphi 0, %s102
      %s117 = sphi 0, %s103
      %s121 = sphi 0, %s121
      %s123 = sphi 0, %s121
      %s124 = sphi 0, %s123
      %s138 = sphi 0, %s124
      %s142 = sphi 0, %s142
      %s144 = sphi 0, %s142
      %s145 = sphi 0, %s144
      %s159 = sphi 0, %s145
      %s163 = sphi 0, %s163
      %s165 = sphi 0, %s163
      %s166 = sphi 0, %s165
      %s180 = sphi 0, %s166
      %s184 = sphi 0, %s184
      %s186 = sphi 0, %s184
      %s187 = sphi 0, %s186
      %s201 = sphi 0, %s187
      %s205 = sphi 0, %s205
      %s207 = sphi 0, %s205
      %s208 = sphi 0, %s207
      %s222 = sphi 0, %s208
      %s226 = sphi 0, %s226
      %s228 = sphi 0, %s226
      %s229 = sphi 0, %s228
      %s243 = sphi 0, %s229
      %s247 = sphi 0, %s247
      %s249 = sphi 0, %s247
      %s250 = sphi 0, %s249
      %s264 = sphi 0, %s250
      %s268 = sphi 0, %s268
      %s270 = sphi 0, %s268
      %s271 = sphi 0, %s270
      %s285 = sphi 0, %s271
      %s289 = sphi 0, %s289
      %s291 = sphi 0, %s289
      %s292 = sphi 0, %s291
      %s306 = sphi 0, %s292
      %s310 = sphi 0, %s310
      %s312 = sphi 0, %s310
      %s313 = sphi 0, %s312
      %s327 = sphi 0, %s313
      %s331 = sphi 0, %s331
      %s333 = sphi 0, %s331
      %s334 = sphi 0, %s333
      %s348 = sphi 0, %s334
      %s354 = sphi 0, %s356
      %s357 = sphi 0, %s354
      %s358 = sphi 0, %s357
      %s374 = sphi 0, %s358
    $region4: #{_lambda_.1} parent=1 // loop_header_branch
      %27 = sbr.rel (%p25) target = $region8
    $region5: #{_lambda_.1} parent=1 // loop_body
      %s29 = ssub.s32 %s24, 1
      %s30 = ssub.s32 %s24, 2
      %s31 = sadd.s32 %s24, 1
      %s32 = ssub.s32 %s24, %s31
      %p33 = scmp.eq.s32.totalorder %s32, 0
      %s35 = sadd.s32 %s34, 1
      %s36 = scalar_select %p33, %s34, %s35
      %p39 = pneg %p33
      %p40 = scmp.eq.s32.totalorder %s24, 1
      %p41 = por %p39, %p40
      %p42 = scmp.ne.s32.totalorder %s34, %s37
      %p43 = scmp.eq.s32.totalorder %s24, 0
      %p44 = por %p42, %p43
      %p45 = scmp.ne.s32.totalorder %s34, %s37
      %p46 = scmp.eq.s32.totalorder %s29, 1
      %p47 = por %p45, %p46
      %p48 = scmp.ne.s32.totalorder %s37, %s38
      %p49 = scmp.eq.s32.totalorder %s29, 0
      %p50 = por %p48, %p49
      %p51 = scmp.ne.s32.totalorder %s37, %s38
      %p52 = scmp.eq.s32.totalorder %s30, 1
      %p53 = por %p51, %p52
      %p55 = scmp.ne.s32.totalorder %s38, %s54
      %p56 = scmp.eq.s32.totalorder %s30, 0
      %p57 = por %p55, %p56
      %s59 = sadd.s32 %s58, 1
      %p62 = scmp.eq.s32.totalorder %s24, 1
      %p63 = scmp.ne.s32.totalorder %s58, %s60
      %p64 = scmp.eq.s32.totalorder %s24, 0
      %p65 = por %p63, %p64
      %p66 = scmp.ne.s32.totalorder %s58, %s60
      %p67 = scmp.eq.s32.totalorder %s29, 1
      %p68 = por %p66, %p67
      %p69 = scmp.ne.s32.totalorder %s60, %s61
      %p70 = scmp.eq.s32.totalorder %s29, 0
      %p71 = por %p69, %p70
      %p72 = scmp.ne.s32.totalorder %s60, %s61
      %p73 = scmp.eq.s32.totalorder %s30, 1
      %p74 = por %p72, %p73
      %p76 = scmp.ne.s32.totalorder %s61, %s75
      %p77 = scmp.eq.s32.totalorder %s30, 0
      %p78 = por %p76, %p77
      %s80 = sadd.s32 %s79, 1
      %p83 = scmp.eq.s32.totalorder %s24, 1
      %p84 = scmp.ne.s32.totalorder %s79, %s81
      %p85 = scmp.eq.s32.totalorder %s24, 0
      %p86 = por %p84, %p85
      %p87 = scmp.ne.s32.totalorder %s79, %s81
      %p88 = scmp.eq.s32.totalorder %s29, 1
      %p89 = por %p87, %p88
      %p90 = scmp.ne.s32.totalorder %s81, %s82
      %p91 = scmp.eq.s32.totalorder %s29, 0
      %p92 = por %p90, %p91
      %p93 = scmp.ne.s32.totalorder %s81, %s82
      %p94 = scmp.eq.s32.totalorder %s30, 1
      %p95 = por %p93, %p94
      %p97 = scmp.ne.s32.totalorder %s82, %s96
      %p98 = scmp.eq.s32.totalorder %s30, 0
      %p99 = por %p97, %p98
      %s101 = sadd.s32 %s100, 1
      %p104 = scmp.eq.s32.totalorder %s24, 1
      %p105 = scmp.ne.s32.totalorder %s100, %s102
      %p106 = scmp.eq.s32.totalorder %s24, 0
      %p107 = por %p105, %p106
      %p108 = scmp.ne.s32.totalorder %s100, %s102
      %p109 = scmp.eq.s32.totalorder %s29, 1
      %p110 = por %p108, %p109
      %p111 = scmp.ne.s32.totalorder %s102, %s103
      %p112 = scmp.eq.s32.totalorder %s29, 0
      %p113 = por %p111, %p112
      %p114 = scmp.ne.s32.totalorder %s102, %s103
      %p115 = scmp.eq.s32.totalorder %s30, 1
      %p116 = por %p114, %p115
      %p118 = scmp.ne.s32.totalorder %s103, %s117
      %p119 = scmp.eq.s32.totalorder %s30, 0
      %p120 = por %p118, %p119
      %s122 = sadd.s32 %s121, 1
      %p125 = scmp.eq.s32.totalorder %s24, 1
      %p126 = scmp.ne.s32.totalorder %s121, %s123
      %p127 = scmp.eq.s32.totalorder %s24, 0
      %p128 = por %p126, %p127
      %p129 = scmp.ne.s32.totalorder %s121, %s123
      %p130 = scmp.eq.s32.totalorder %s29, 1
      %p131 = por %p129, %p130
      %p132 = scmp.ne.s32.totalorder %s123, %s124
      %p133 = scmp.eq.s32.totalorder %s29, 0
      %p134 = por %p132, %p133
      %p135 = scmp.ne.s32.totalorder %s123, %s124
      %p136 = scmp.eq.s32.totalorder %s30, 1
      %p137 = por %p135, %p136
      %p139 = scmp.ne.s32.totalorder %s124, %s138
      %p140 = scmp.eq.s32.totalorder %s30, 0
      %p141 = por %p139, %p140
      %s143 = sadd.s32 %s142, 1
      %p146 = scmp.eq.s32.totalorder %s24, 1
      %p147 = scmp.ne.s32.totalorder %s142, %s144
      %p148 = scmp.eq.s32.totalorder %s24, 0
      %p149 = por %p147, %p148
      %p150 = scmp.ne.s32.totalorder %s142, %s144
      %p151 = scmp.eq.s32.totalorder %s29, 1
      %p152 = por %p150, %p151
      %p153 = scmp.ne.s32.totalorder %s144, %s145
      %p154 = scmp.eq.s32.totalorder %s29, 0
      %p155 = por %p153, %p154
      %p156 = scmp.ne.s32.totalorder %s144, %s145
      %p157 = scmp.eq.s32.totalorder %s30, 1
      %p158 = por %p156, %p157
      %p160 = scmp.ne.s32.totalorder %s145, %s159
      %p161 = scmp.eq.s32.totalorder %s30, 0
      %p162 = por %p160, %p161
      %s164 = sadd.s32 %s163, 1
      %p167 = scmp.eq.s32.totalorder %s24, 1
      %p168 = scmp.ne.s32.totalorder %s163, %s165
      %p169 = scmp.eq.s32.totalorder %s24, 0
      %p170 = por %p168, %p169
      %p171 = scmp.ne.s32.totalorder %s163, %s165
      %p172 = scmp.eq.s32.totalorder %s29, 1
      %p173 = por %p171, %p172
      %p174 = scmp.ne.s32.totalorder %s165, %s166
      %p175 = scmp.eq.s32.totalorder %s29, 0
      %p176 = por %p174, %p175
      %p177 = scmp.ne.s32.totalorder %s165, %s166
      %p178 = scmp.eq.s32.totalorder %s30, 1
      %p179 = por %p177, %p178
      %p181 = scmp.ne.s32.totalorder %s166, %s180
      %p182 = scmp.eq.s32.totalorder %s30, 0
      %p183 = por %p181, %p182
      %s185 = sadd.s32 %s184, 1
      %p188 = scmp.eq.s32.totalorder %s24, 1
      %p189 = scmp.ne.s32.totalorder %s184, %s186
      %p190 = scmp.eq.s32.totalorder %s24, 0
      %p191 = por %p189, %p190
      %p192 = scmp.ne.s32.totalorder %s184, %s186
      %p193 = scmp.eq.s32.totalorder %s29, 1
      %p194 = por %p192, %p193
      %p195 = scmp.ne.s32.totalorder %s186, %s187
      %p196 = scmp.eq.s32.totalorder %s29, 0
      %p197 = por %p195, %p196
      %p198 = scmp.ne.s32.totalorder %s186, %s187
      %p199 = scmp.eq.s32.totalorder %s30, 1
      %p200 = por %p198, %p199
      %p202 = scmp.ne.s32.totalorder %s187, %s201
      %p203 = scmp.eq.s32.totalorder %s30, 0
      %p204 = por %p202, %p203
      %s206 = sadd.s32 %s205, 1
      %p209 = scmp.eq.s32.totalorder %s24, 1
      %p210 = scmp.ne.s32.totalorder %s205, %s207
      %p211 = scmp.eq.s32.totalorder %s24, 0
      %p212 = por %p210, %p211
      %p213 = scmp.ne.s32.totalorder %s205, %s207
      %p214 = scmp.eq.s32.totalorder %s29, 1
      %p215 = por %p213, %p214
      %p216 = scmp.ne.s32.totalorder %s207, %s208
      %p217 = scmp.eq.s32.totalorder %s29, 0
      %p218 = por %p216, %p217
      %p219 = scmp.ne.s32.totalorder %s207, %s208
      %p220 = scmp.eq.s32.totalorder %s30, 1
      %p221 = por %p219, %p220
      %p223 = scmp.ne.s32.totalorder %s208, %s222
      %p224 = scmp.eq.s32.totalorder %s30, 0
      %p225 = por %p223, %p224
      %s227 = sadd.s32 %s226, 1
      %p230 = scmp.eq.s32.totalorder %s24, 1
      %p231 = scmp.ne.s32.totalorder %s226, %s228
      %p232 = scmp.eq.s32.totalorder %s24, 0
      %p233 = por %p231, %p232
      %p234 = scmp.ne.s32.totalorder %s226, %s228
      %p235 = scmp.eq.s32.totalorder %s29, 1
      %p236 = por %p234, %p235
      %p237 = scmp.ne.s32.totalorder %s228, %s229
      %p238 = scmp.eq.s32.totalorder %s29, 0
      %p239 = por %p237, %p238
      %p240 = scmp.ne.s32.totalorder %s228, %s229
      %p241 = scmp.eq.s32.totalorder %s30, 1
      %p242 = por %p240, %p241
      %p244 = scmp.ne.s32.totalorder %s229, %s243
      %p245 = scmp.eq.s32.totalorder %s30, 0
      %p246 = por %p244, %p245
      %s248 = sadd.s32 %s247, 1
      %p251 = scmp.eq.s32.totalorder %s24, 1
      %p252 = scmp.ne.s32.totalorder %s247, %s249
      %p253 = scmp.eq.s32.totalorder %s24, 0
      %p254 = por %p252, %p253
      %p255 = scmp.ne.s32.totalorder %s247, %s249
      %p256 = scmp.eq.s32.totalorder %s29, 1
      %p257 = por %p255, %p256
      %p258 = scmp.ne.s32.totalorder %s249, %s250
      %p259 = scmp.eq.s32.totalorder %s29, 0
      %p260 = por %p258, %p259
      %p261 = scmp.ne.s32.totalorder %s249, %s250
      %p262 = scmp.eq.s32.totalorder %s30, 1
      %p263 = por %p261, %p262
      %p265 = scmp.ne.s32.totalorder %s250, %s264
      %p266 = scmp.eq.s32.totalorder %s30, 0
      %p267 = por %p265, %p266
      %s269 = sadd.s32 %s268, 1
      %p272 = scmp.eq.s32.totalorder %s24, 1
      %p273 = scmp.ne.s32.totalorder %s268, %s270
      %p274 = scmp.eq.s32.totalorder %s24, 0
      %p275 = por %p273, %p274
      %p276 = scmp.ne.s32.totalorder %s268, %s270
      %p277 = scmp.eq.s32.totalorder %s29, 1
      %p278 = por %p276, %p277
      %p279 = scmp.ne.s32.totalorder %s270, %s271
      %p280 = scmp.eq.s32.totalorder %s29, 0
      %p281 = por %p279, %p280
      %p282 = scmp.ne.s32.totalorder %s270, %s271
      %p283 = scmp.eq.s32.totalorder %s30, 1
      %p284 = por %p282, %p283
      %p286 = scmp.ne.s32.totalorder %s271, %s285
      %p287 = scmp.eq.s32.totalorder %s30, 0
      %p288 = por %p286, %p287
      %s290 = sadd.s32 %s289, 1
      %p293 = scmp.eq.s32.totalorder %s24, 1
      %p294 = scmp.ne.s32.totalorder %s289, %s291
      %p295 = scmp.eq.s32.totalorder %s24, 0
      %p296 = por %p294, %p295
      %p297 = scmp.ne.s32.totalorder %s289, %s291
      %p298 = scmp.eq.s32.totalorder %s29, 1
      %p299 = por %p297, %p298
      %p300 = scmp.ne.s32.totalorder %s291, %s292
      %p301 = scmp.eq.s32.totalorder %s29, 0
      %p302 = por %p300, %p301
      %p303 = scmp.ne.s32.totalorder %s291, %s292
      %p304 = scmp.eq.s32.totalorder %s30, 1
      %p305 = por %p303, %p304
      %p307 = scmp.ne.s32.totalorder %s292, %s306
      %p308 = scmp.eq.s32.totalorder %s30, 0
      %p309 = por %p307, %p308
      %s311 = sadd.s32 %s310, 1
      %p314 = scmp.eq.s32.totalorder %s24, 1
      %p315 = scmp.ne.s32.totalorder %s310, %s312
      %p316 = scmp.eq.s32.totalorder %s24, 0
      %p317 = por %p315, %p316
      %p318 = scmp.ne.s32.totalorder %s310, %s312
      %p319 = scmp.eq.s32.totalorder %s29, 1
      %p320 = por %p318, %p319
      %p321 = scmp.ne.s32.totalorder %s312, %s313
      %p322 = scmp.eq.s32.totalorder %s29, 0
      %p323 = por %p321, %p322
      %p324 = scmp.ne.s32.totalorder %s312, %s313
      %p325 = scmp.eq.s32.totalorder %s30, 1
      %p326 = por %p324, %p325
      %p328 = scmp.ne.s32.totalorder %s313, %s327
      %p329 = scmp.eq.s32.totalorder %s30, 0
      %p330 = por %p328, %p329
      %s332 = sadd.s32 %s331, 1
      %p335 = scmp.eq.s32.totalorder %s24, 1
      %p336 = scmp.ne.s32.totalorder %s331, %s333
      %p337 = scmp.eq.s32.totalorder %s24, 0
      %p338 = por %p336, %p337
      %p339 = scmp.ne.s32.totalorder %s331, %s333
      %p340 = scmp.eq.s32.totalorder %s29, 1
      %p341 = por %p339, %p340
      %p342 = scmp.ne.s32.totalorder %s333, %s334
      %p343 = scmp.eq.s32.totalorder %s29, 0
      %p344 = por %p342, %p343
      %p345 = scmp.ne.s32.totalorder %s333, %s334
      %p346 = scmp.eq.s32.totalorder %s30, 1
      %p347 = por %p345, %p346
      %p349 = scmp.ne.s32.totalorder %s334, %s348
      %p350 = scmp.eq.s32.totalorder %s30, 0
      %p351 = por %p349, %p350
      %s352 = ssub.s32 %s24, %s31
      %p353 = scmp.eq.s32.totalorder %s352, 0
      %s355 = sadd.s32 %s354, 1
      %s356 = scalar_select %p353, %s354, %s355
      %p359 = pneg %p353
      %p360 = scmp.eq.s32.totalorder %s24, 1
      %p361 = por %p359, %p360
      %p362 = scmp.ne.s32.totalorder %s354, %s357
      %p363 = scmp.eq.s32.totalorder %s24, 0
      %p364 = por %p362, %p363
      %p365 = scmp.ne.s32.totalorder %s354, %s357
      %p366 = scmp.eq.s32.totalorder %s29, 1
      %p367 = por %p365, %p366
      %p368 = scmp.ne.s32.totalorder %s357, %s358
      %p369 = scmp.eq.s32.totalorder %s29, 0
      %p370 = por %p368, %p369
      %p371 = scmp.ne.s32.totalorder %s357, %s358
      %p372 = scmp.eq.s32.totalorder %s30, 1
      %p373 = por %p371, %p372
      %p375 = scmp.ne.s32.totalorder %s358, %s374
      %p376 = scmp.eq.s32.totalorder %s30, 0
      %p377 = por %p375, %p376
      %p378 = scmp.le.s32.totalorder 1, %s24
      %p379 = scmp.lt.s32.totalorder %s24, 3
      %p380 = pnand %p378, %p379
      %p381 = pneg %p380
      // Predicated region
      $region9: #{_lambda_.1} parent=5 // pred_check
        _
      $region10: #{_lambda_.1} parent=5 // pred_check_branch
        %383 = sbr.rel (%p380) target = $region12
      $region11: #{_lambda_.1} parent=5 // pred_region
        %s384 = ssub.s32 %s24, 1
        // Predicated region
        $region13: #{_lambda_.1} parent=11 // pred_check
          %p385 = pneg %p71
        $region14: #{_lambda_.1} parent=11 // pred_check_branch
          %387 = sbr.rel (%p385) target = $region16
        $region15: #{_lambda_.1} parent=11 // pred_region
          _
        $region16: #{_lambda_.1} parent=11 // pred_fallthru
          _
        // Predicated region
        $region17: #{_lambda_.1} parent=11 // pred_check
          %p388 = pneg %p92
        $region18: #{_lambda_.1} parent=11 // pred_check_branch
          %390 = sbr.rel (%p388) target = $region20
        $region19: #{_lambda_.1} parent=11 // pred_region
          _
        $region20: #{_lambda_.1} parent=11 // pred_fallthru
          _
        // Predicated region
        $region21: #{_lambda_.1} parent=11 // pred_check
          %p391 = pneg %p113
        $region22: #{_lambda_.1} parent=11 // pred_check_branch
          %393 = sbr.rel (%p391) target = $region24
        $region23: #{_lambda_.1} parent=11 // pred_region
          _
        $region24: #{_lambda_.1} parent=11 // pred_fallthru
          _
        // Predicated region
        $region25: #{_lambda_.1} parent=11 // pred_check
          %p394 = pneg %p134
        $region26: #{_lambda_.1} parent=11 // pred_check_branch
          %396 = sbr.rel (%p394) target = $region28
        $region27: #{_lambda_.1} parent=11 // pred_region
          _
        $region28: #{_lambda_.1} parent=11 // pred_fallthru
          _
        // Predicated region
        $region29: #{_lambda_.1} parent=11 // pred_check
          %p397 = pneg %p155
        $region30: #{_lambda_.1} parent=11 // pred_check_branch
          %399 = sbr.rel (%p397) target = $region32
        $region31: #{_lambda_.1} parent=11 // pred_region
          _
        $region32: #{_lambda_.1} parent=11 // pred_fallthru
          _
        // Predicated region
        $region33: #{_lambda_.1} parent=11 // pred_check
          %p400 = pneg %p176
        $region34: #{_lambda_.1} parent=11 // pred_check_branch
          %402 = sbr.rel (%p400) target = $region36
        $region35: #{_lambda_.1} parent=11 // pred_region
          _
        $region36: #{_lambda_.1} parent=11 // pred_fallthru
          _
        // Predicated region
        $region37: #{_lambda_.1} parent=11 // pred_check
          %p403 = pneg %p197
        $region38: #{_lambda_.1} parent=11 // pred_check_branch
          %405 = sbr.rel (%p403) target = $region40
        $region39: #{_lambda_.1} parent=11 // pred_region
          _
        $region40: #{_lambda_.1} parent=11 // pred_fallthru
          _
        // Predicated region
        $region41: #{_lambda_.1} parent=11 // pred_check
          %p406 = pneg %p218
        $region42: #{_lambda_.1} parent=11 // pred_check_branch
          %408 = sbr.rel (%p406) target = $region44
        $region43: #{_lambda_.1} parent=11 // pred_region
          _
        $region44: #{_lambda_.1} parent=11 // pred_fallthru
          _
        // Predicated region
        $region45: #{_lambda_.1} parent=11 // pred_check
          %p409 = pneg %p239
        $region46: #{_lambda_.1} parent=11 // pred_check_branch
          %411 = sbr.rel (%p409) target = $region48
        $region47: #{_lambda_.1} parent=11 // pred_region
          _
        $region48: #{_lambda_.1} parent=11 // pred_fallthru
          _
        // Predicated region
        $region49: #{_lambda_.1} parent=11 // pred_check
          %p412 = pneg %p260
        $region50: #{_lambda_.1} parent=11 // pred_check_branch
          %414 = sbr.rel (%p412) target = $region52
        $region51: #{_lambda_.1} parent=11 // pred_region
          _
        $region52: #{_lambda_.1} parent=11 // pred_fallthru
          _
        // Predicated region
        $region53: #{_lambda_.1} parent=11 // pred_check
          %p415 = pneg %p281
        $region54: #{_lambda_.1} parent=11 // pred_check_branch
          %417 = sbr.rel (%p415) target = $region56
        $region55: #{_lambda_.1} parent=11 // pred_region
          _
        $region56: #{_lambda_.1} parent=11 // pred_fallthru
          _
        // Predicated region
        $region57: #{_lambda_.1} parent=11 // pred_check
          %p418 = pneg %p302
        $region58: #{_lambda_.1} parent=11 // pred_check_branch
          %420 = sbr.rel (%p418) target = $region60
        $region59: #{_lambda_.1} parent=11 // pred_region
          _
        $region60: #{_lambda_.1} parent=11 // pred_fallthru
          _
        // Predicated region
        $region61: #{_lambda_.1} parent=11 // pred_check
          %p421 = pneg %p323
        $region62: #{_lambda_.1} parent=11 // pred_check_branch
          %423 = sbr.rel (%p421) target = $region64
        $region63: #{_lambda_.1} parent=11 // pred_region
          _
        $region64: #{_lambda_.1} parent=11 // pred_fallthru
          _
        // Predicated region
        $region65: #{_lambda_.1} parent=11 // pred_check
          %p424 = pneg %p344
        $region66: #{_lambda_.1} parent=11 // pred_check_branch
          %426 = sbr.rel (%p424) target = $region68
        $region67: #{_lambda_.1} parent=11 // pred_region
          _
        $region68: #{_lambda_.1} parent=11 // pred_fallthru
          _
      $region12: #{_lambda_.1} parent=5 // pred_fallthru
        _
      %p427 = scmp.lt.s32.totalorder %s24, 2
      // Predicated region
      $region69: #{_lambda_.1} parent=5 // pred_check
        %p428 = pneg %p427
      $region70: #{_lambda_.1} parent=5 // pred_check_branch
        %430 = sbr.rel (%p428) target = $region72
      $region71: #{_lambda_.1} parent=5 // pred_region
        // Predicated region
        $region73: #{_lambda_.1} parent=71 // pred_check
          %p431 = pneg %p44
        $region74: #{_lambda_.1} parent=71 // pred_check_branch
          %433 = sbr.rel (%p431) target = $region76
        $region75: #{_lambda_.1} parent=71 // pred_region
          %s434 = smul.u32 16, %s24
          %p435 = scmp.lt.s32.totalorder %s434, 31
          %s436 = scalar_select %p435, %s434, 31
          %s437 = smul.addr %s436, 8
          %s438 = scalar_lea.vmem %s0, %s437
          %s439 = smul.u32 16, %s24
        $region76: #{_lambda_.1} parent=71 // pred_fallthru
          _
      $region72: #{_lambda_.1} parent=5 // pred_fallthru
        _
      %p440 = scmp.le.s32.totalorder 1, %s24
      %p441 = scmp.lt.s32.totalorder %s24, 3
      %p442 = pnand %p440, %p441
      %p443 = pneg %p442
      // Predicated region
      $region77: #{_lambda_.1} parent=5 // pred_check
        _
      $region78: #{_lambda_.1} parent=5 // pred_check_branch
        %445 = sbr.rel (%p442) target = $region80
      $region79: #{_lambda_.1} parent=5 // pred_region
        %s446 = ssub.s32 %s24, 1
        %s447 = smul.u32 16, %s29
        %p448 = scmp.lt.s32.totalorder %s447, 31
        %s449 = scalar_select %p448, %s447, 31
        %s450 = smul.addr %s449, 8
        %s451 = scalar_lea.vmem %s0, %s450
        %p452 = pneg %p50
        %p453 = pneg %p47
        %p454 = pneg %p71
        %p455 = pneg %p68
        %p456 = pneg %p92
        %p457 = pneg %p89
        %p458 = pneg %p113
        %p459 = pneg %p110
        %p460 = pneg %p134
        %p461 = pneg %p131
        %p462 = pneg %p155
        %p463 = pneg %p152
        %p464 = pneg %p176
        %p465 = pneg %p173
        %p466 = pneg %p197
        %p467 = pneg %p194
        %p468 = pneg %p218
        %p469 = pneg %p215
        %p470 = pneg %p239
        %p471 = pneg %p236
        %p472 = pneg %p260
        %p473 = pneg %p257
        %p474 = pneg %p281
        %p475 = pneg %p278
        %p476 = pneg %p302
        %p477 = pneg %p299
        %p478 = pneg %p323
        %p479 = pneg %p320
        %p480 = pneg %p344
        %p481 = pneg %p341
        %p482 = pneg %p370
        %p483 = pneg %p367
        %s484 = sand.u32 %s357, 1
        %s485 = scalar_lea.sflag [#allocation3], %s484
        %s486 = sand.u32 %s357, 1
        %s487 = smul.addr %s486, 8
        %s488 = scalar_lea.vmem [#allocation2], %s487
        %s489 = smul.u32 16, %s29
        %p490 = scmp.lt.s32.totalorder %s489, 31
        %s491 = scalar_select %p490, %s489, 31
        %s492 = smul.addr %s491, 8
        %s493 = scalar_lea.vmem %s0, %s492
        %s494 = smul.u32 16, %s29
        %v495 = vlaneseq
        %v496 = vand.u32 %v495, 127
        %vm497 = vcmp.ge.s32.totalorder %v496, 0
        %vm498 = vcmp.lt.s32.totalorder %v496, 8
        %vm499 = vmand %vm497, %vm498
        %v500 = vsel %vm499, 1, 0
        %v501 = vcvt.s32.f32 %v500
        %vm502 = vcmp.ge.s32.totalorder %v496, 8
        %vm503 = vcmp.lt.s32.totalorder %v496, 16
        %vm504 = vmand %vm502, %vm503
        %v505 = vsel %vm504, 1, 0
        %v506 = vcvt.s32.f32 %v505
        %vm507 = vcmp.ge.s32.totalorder %v496, 16
        %vm508 = vcmp.lt.s32.totalorder %v496, 24
        %vm509 = vmand %vm507, %vm508
        %v510 = vsel %vm509, 1, 0
        %v511 = vcvt.s32.f32 %v510
        %vm512 = vcmp.ge.s32.totalorder %v496, 24
        %vm513 = vcmp.lt.s32.totalorder %v496, 32
        %vm514 = vmand %vm512, %vm513
        %v515 = vsel %vm514, 1, 0
        %v516 = vcvt.s32.f32 %v515
        %v517 = vld [vmem:[%s493] sm:$0xff]
        %v518 = vld [vmem:[%s493 + $0x8] sm:$0xff]
        %v519 = vld [vmem:[%s493 + $0x10] sm:$0xff]
        %v520 = vld [vmem:[%s493 + $0x18] sm:$0xff]
        %v521 = vld [vmem:[%s493 + $0x20] sm:$0xff]
        %v522 = vld [vmem:[%s493 + $0x28] sm:$0xff]
        %v523 = vld [vmem:[%s493 + $0x30] sm:$0xff]
        %v524 = vld [vmem:[%s493 + $0x38] sm:$0xff]
        %v525 = vld [vmem:[%s493 + $0x40] sm:$0xff]
        %v526 = vld [vmem:[%s493 + $0x48] sm:$0xff]
        %v527 = vld [vmem:[%s493 + $0x50] sm:$0xff]
        %v528 = vld [vmem:[%s493 + $0x58] sm:$0xff]
        %v529 = vld [vmem:[%s493 + $0x60] sm:$0xff]
        %v530 = vld [vmem:[%s493 + $0x68] sm:$0xff]
        %v531 = vld [vmem:[%s493 + $0x70] sm:$0xff]
        %v532 = vld [vmem:[%s493 + $0x78] sm:$0xff]
        %v533 = vld [vmem:[%s1] sm:$0xff]
        %v534 = vld [vmem:[%s1 + $0x8] sm:$0xff]
        %v535 = vld [vmem:[%s1 + $0x10] sm:$0xff]
        %v536 = vld [vmem:[%s1 + $0x18] sm:$0xff]
        %v537 = vld [vmem:[%s1 + $0x20] sm:$0xff]
        %v538 = vld [vmem:[%s1 + $0x28] sm:$0xff]
        %v539 = vld [vmem:[%s2] sm:$0x1]
        %v540 = vlaneseq
        %v541 = vshrl.u32 %v540, 7
        %v542 = vsub.s32 0, %v541
        %v543 = vrot.slane %v539, %v542
        %vm544 = vcmask 392192
        %v546 = vsel %vm544, %v517, 0
        %v549 = vsel %vm544, %v518, 0
        %v552 = vsel %vm544, %v519, 0
        %v555 = vsel %vm544, %v520, 0
        %v558 = vsel %vm544, %v521, 0
        %v561 = vsel %vm544, %v522, 0
        %v564 = vsel %vm544, %v523, 0
        %v567 = vsel %vm544, %v524, 0
        %v570 = vsel %vm544, %v525, 0
        %v573 = vsel %vm544, %v526, 0
        %v576 = vsel %vm544, %v527, 0
        %v579 = vsel %vm544, %v528, 0
        %v582 = vsel %vm544, %v529, 0
        %v585 = vsel %vm544, %v530, 0
        %v588 = vsel %vm544, %v531, 0
        %v591 = vsel %vm544, %v532, 0
        %593 = vmatprep.subr.mxu0 0.0
        %594 = vmatpush1.msra.mxu0 0.0
        %595 = vmatprep.subr.mxu0 0.0
        %596 = vmatpush1.msra.mxu0 0.0
        %597 = vmatprep.subr.mxu0 0.0
        %598 = vmatpush1.msra.mxu0 0.0
        %599 = vmatprep.subr.mxu0 0.0
        %600 = vmatpush1.msra.mxu0 0.0
        %601 = vmatprep.subr.mxu0 0.0
        %602 = vmatpush1.msra.mxu0 0.0
        %603 = vmatprep.subr.mxu0 0.0
        %604 = vmatpush1.msra.mxu0 0.0
        %605 = vmatprep.subr.mxu0 0.0
        %606 = vmatpush1.msra.mxu0 0.0
        %607 = vmatprep.subr.mxu0 0.0
        %608 = vmatpush1.msra.mxu0 0.0
        %609 = vmatprep.subr.mxu0 0.0
        %610 = vmatpush1.msra.mxu0 0.0
        %611 = vmatprep.subr.mxu0 0.0
        %612 = vmatpush1.msra.mxu0 0.0
        %613 = vmatprep.subr.mxu0 0.0
        %614 = vmatpush1.msra.mxu0 %v538
        %615 = vmatprep.subr.mxu0 0.0
        %616 = vmatpush1.msra.mxu0 %v537
        %617 = vmatprep.subr.mxu0 0.0
        %618 = vmatpush1.msra.mxu0 %v536
        %619 = vmatprep.subr.mxu0 0.0
        %620 = vmatpush1.msra.mxu0 %v535
        %621 = vmatprep.subr.mxu0 0.0
        %622 = vmatpush1.msra.mxu0 %v534
        %623 = vmatprep.subr.mxu0 0.0
        %624 = vmatpush1.msra.mxu0 %v533
        %625 = vmatprep.subr.mxu0 0.0
        %626 = vmatpush2.msra.mxu0 0.0
        %627 = vmatprep.subr.mxu0 0.0
        %628 = vmatpush2.msra.mxu0 0.0
        %629 = vmatprep.subr.mxu0 0.0
        %630 = vmatpush2.msra.mxu0 0.0
        %631 = vmatprep.subr.mxu0 0.0
        %632 = vmatpush2.msra.mxu0 0.0
        %633 = vmatprep.subr.mxu0 0.0
        %634 = vmatpush2.msra.mxu0 0.0
        %635 = vmatprep.subr.mxu0 0.0
        %636 = vmatpush2.msra.mxu0 0.0
        %637 = vmatprep.subr.mxu0 0.0
        %638 = vmatpush2.msra.mxu0 0.0
        %639 = vmatprep.subr.mxu0 0.0
        %640 = vmatpush2.msra.mxu0 0.0
        %641 = vmatprep.subr.mxu0 0.0
        %642 = vmatpush2.msra.mxu0 0.0
        %643 = vmatprep.subr.mxu0 0.0
        %644 = vmatpush2.msra.mxu0 0.0
        %645 = vmatprep.subr.mxu0 0.0
        %646 = vmatpush2.msra.mxu0 0.0
        %647 = vmatprep.subr.mxu0 0.0
        %648 = vmatpush2.msra.mxu0 0.0
        %649 = vmatprep.subr.mxu0 0.0
        %650 = vmatpush2.msra.mxu0 0.0
        %651 = vmatprep.subr.mxu0 0.0
        %652 = vmatpush2.msra.mxu0 0.0
        %653 = vmatprep.subr.mxu0 0.0
        %654 = vmatpush2.msra.mxu0 0.0
        %655 = vmatprep.subr.mxu0 0.0
        %656 = vmatpush2.msra.mxu0 0.0
        %657 = vmatprep.mubr.f32.mxu0 0.0
        %658 = vmatmul.mubr.f32.gmra.mxu0 %v546
        %v659 = vpop.f32.mrf.mxu0
        %v660 = vadd.f32 %v543, %v659
        %v661 = vpop.f32.mrf.mxu0
        %662 = vmatprep.mubr.f32.mxu0 0.0
        %663 = vmatmul.mubr.f32.gmra.mxu0 %v549
        %v664 = vpop.f32.mrf.mxu0
        %v665 = vadd.f32 %v543, %v664
        %v666 = vpop.f32.mrf.mxu0
        %667 = vmatprep.mubr.f32.mxu0 0.0
        %668 = vmatmul.mubr.f32.gmra.mxu0 %v552
        %v669 = vpop.f32.mrf.mxu0
        %v670 = vadd.f32 %v543, %v669
        %v671 = vpop.f32.mrf.mxu0
        %672 = vmatprep.mubr.f32.mxu0 0.0
        %673 = vmatmul.mubr.f32.gmra.mxu0 %v555
        %v674 = vpop.f32.mrf.mxu0
        %v675 = vadd.f32 %v543, %v674
        %v676 = vpop.f32.mrf.mxu0
        %677 = vmatprep.mubr.f32.mxu0 0.0
        %678 = vmatmul.mubr.f32.gmra.mxu0 %v558
        %v679 = vpop.f32.mrf.mxu0
        %v680 = vadd.f32 %v543, %v679
        %v681 = vpop.f32.mrf.mxu0
        %682 = vmatprep.mubr.f32.mxu0 0.0
        %683 = vmatmul.mubr.f32.gmra.mxu0 %v561
        %v684 = vpop.f32.mrf.mxu0
        %v685 = vadd.f32 %v543, %v684
        %v686 = vpop.f32.mrf.mxu0
        %687 = vmatprep.mubr.f32.mxu0 0.0
        %688 = vmatmul.mubr.f32.gmra.mxu0 %v564
        %v689 = vpop.f32.mrf.mxu0
        %v690 = vadd.f32 %v543, %v689
        %v691 = vpop.f32.mrf.mxu0
        %692 = vmatprep.mubr.f32.mxu0 0.0
        %693 = vmatmul.mubr.f32.gmra.mxu0 %v567
        %v694 = vpop.f32.mrf.mxu0
        %v695 = vadd.f32 %v543, %v694
        %v696 = vpop.f32.mrf.mxu0
        %697 = vmatprep.mubr.f32.mxu0 0.0
        %698 = vmatmul.mubr.f32.gmra.mxu0 %v570
        %v699 = vpop.f32.mrf.mxu0
        %v700 = vadd.f32 %v543, %v699
        %v701 = vpop.f32.mrf.mxu0
        %702 = vmatprep.mubr.f32.mxu0 0.0
        %703 = vmatmul.mubr.f32.gmra.mxu0 %v573
        %v704 = vpop.f32.mrf.mxu0
        %v705 = vadd.f32 %v543, %v704
        %v706 = vpop.f32.mrf.mxu0
        %707 = vmatprep.mubr.f32.mxu0 0.0
        %708 = vmatmul.mubr.f32.gmra.mxu0 %v576
        %v709 = vpop.f32.mrf.mxu0
        %v710 = vadd.f32 %v543, %v709
        %v711 = vpop.f32.mrf.mxu0
        %712 = vmatprep.mubr.f32.mxu0 0.0
        %713 = vmatmul.mubr.f32.gmra.mxu0 %v579
        %v714 = vpop.f32.mrf.mxu0
        %v715 = vadd.f32 %v543, %v714
        %v716 = vpop.f32.mrf.mxu0
        %717 = vmatprep.mubr.f32.mxu0 0.0
        %718 = vmatmul.mubr.f32.gmra.mxu0 %v582
        %v719 = vpop.f32.mrf.mxu0
        %v720 = vadd.f32 %v543, %v719
        %v721 = vpop.f32.mrf.mxu0
        %722 = vmatprep.mubr.f32.mxu0 0.0
        %723 = vmatmul.mubr.f32.gmra.mxu0 %v585
        %v724 = vpop.f32.mrf.mxu0
        %v725 = vadd.f32 %v543, %v724
        %v726 = vpop.f32.mrf.mxu0
        %727 = vmatprep.mubr.f32.mxu0 0.0
        %728 = vmatmul.mubr.f32.gmra.mxu0 %v588
        %v729 = vpop.f32.mrf.mxu0
        %v730 = vadd.f32 %v543, %v729
        %v731 = vpop.f32.mrf.mxu0
        %732 = vmatprep.mubr.f32.mxu0 0.0
        %733 = vmatmul.mubr.f32.gmra.mxu0 %v591
        %v734 = vpop.f32.mrf.mxu0
        %v735 = vadd.f32 %v543, %v734
        %v736 = vpop.f32.mrf.mxu0
        %737 = vdwg.mxu0
        %v738 = vld [vmem:[%s2 + $0x1] sm:$0x1]
        %v739 = vld [vmem:[%s2 + $0x2] sm:$0x1]
        %vm740 = vcmask 261120
        %v741 = vsel %vm740, %v660, 0.0
        %742 = vadd.xlane.f32.xlu0 %v741
        %v743 = vpop.xlane.xlu0 %742
        %v744 = vsel %vm740, %v665, 0.0
        %745 = vadd.xlane.f32.xlu0 %v744
        %v746 = vpop.xlane.xlu0 %745
        %v747 = vsel %vm740, %v670, 0.0
        %748 = vadd.xlane.f32.xlu0 %v747
        %v749 = vpop.xlane.xlu0 %748
        %v750 = vsel %vm740, %v675, 0.0
        %751 = vadd.xlane.f32.xlu0 %v750
        %v752 = vpop.xlane.xlu0 %751
        %v753 = vsel %vm740, %v680, 0.0
        %754 = vadd.xlane.f32.xlu0 %v753
        %v755 = vpop.xlane.xlu0 %754
        %v756 = vsel %vm740, %v685, 0.0
        %757 = vadd.xlane.f32.xlu0 %v756
        %v758 = vpop.xlane.xlu0 %757
        %v759 = vsel %vm740, %v690, 0.0
        %760 = vadd.xlane.f32.xlu0 %v759
        %v761 = vpop.xlane.xlu0 %760
        %v762 = vsel %vm740, %v695, 0.0
        %763 = vadd.xlane.f32.xlu0 %v762
        %v764 = vpop.xlane.xlu0 %763
        %v765 = vsel %vm740, %v700, 0.0
        %766 = vadd.xlane.f32.xlu0 %v765
        %v767 = vpop.xlane.xlu0 %766
        %v768 = vsel %vm740, %v705, 0.0
        %769 = vadd.xlane.f32.xlu0 %v768
        %v770 = vpop.xlane.xlu0 %769
        %v771 = vsel %vm740, %v710, 0.0
        %772 = vadd.xlane.f32.xlu0 %v771
        %v773 = vpop.xlane.xlu0 %772
        %v774 = vsel %vm740, %v715, 0.0
        %775 = vadd.xlane.f32.xlu0 %v774
        %v776 = vpop.xlane.xlu0 %775
        %v777 = vsel %vm740, %v720, 0.0
        %778 = vadd.xlane.f32.xlu0 %v777
        %v779 = vpop.xlane.xlu0 %778
        %v780 = vsel %vm740, %v725, 0.0
        %781 = vadd.xlane.f32.xlu0 %v780
        %v782 = vpop.xlane.xlu0 %781
        %v783 = vsel %vm740, %v730, 0.0
        %784 = vadd.xlane.f32.xlu0 %v783
        %v785 = vpop.xlane.xlu0 %784
        %v786 = vsel %vm740, %v735, 0.0
        %787 = vadd.xlane.f32.xlu0 %v786
        %v788 = vpop.xlane.xlu0 %787
        %v789 = vrcp.pop 32.0
        %v790 = vmul.f32 %v743, %v789
        %v791 = vmul.f32 %v746, %v789
        %v792 = vmul.f32 %v749, %v789
        %v793 = vmul.f32 %v752, %v789
        %v794 = vmul.f32 %v755, %v789
        %v795 = vmul.f32 %v758, %v789
        %v796 = vmul.f32 %v761, %v789
        %v797 = vmul.f32 %v764, %v789
        %v798 = vmul.f32 %v767, %v789
        %v799 = vmul.f32 %v770, %v789
        %v800 = vmul.f32 %v773, %v789
        %v801 = vmul.f32 %v776, %v789
        %v802 = vmul.f32 %v779, %v789
        %v803 = vmul.f32 %v782, %v789
        %v804 = vmul.f32 %v785, %v789
        %v805 = vmul.f32 %v788, %v789
        %v806 = vsub.f32 %v660, %v790
        %v807 = vsub.f32 %v665, %v791
        %v808 = vsub.f32 %v670, %v792
        %v809 = vsub.f32 %v675, %v793
        %v810 = vsub.f32 %v680, %v794
        %v811 = vsub.f32 %v685, %v795
        %v812 = vsub.f32 %v690, %v796
        %v813 = vsub.f32 %v695, %v797
        %v814 = vsub.f32 %v700, %v798
        %v815 = vsub.f32 %v705, %v799
        %v816 = vsub.f32 %v710, %v800
        %v817 = vsub.f32 %v715, %v801
        %v818 = vsub.f32 %v720, %v802
        %v819 = vsub.f32 %v725, %v803
        %v820 = vsub.f32 %v730, %v804
        %v821 = vsub.f32 %v735, %v805
        %v822 = vmul.f32 %v806, %v806
        %v823 = vmul.f32 %v807, %v807
        %v824 = vmul.f32 %v808, %v808
        %v825 = vmul.f32 %v809, %v809
        %v826 = vmul.f32 %v810, %v810
        %v827 = vmul.f32 %v811, %v811
        %v828 = vmul.f32 %v812, %v812
        %v829 = vmul.f32 %v813, %v813
        %v830 = vmul.f32 %v814, %v814
        %v831 = vmul.f32 %v815, %v815
        %v832 = vmul.f32 %v816, %v816
        %v833 = vmul.f32 %v817, %v817
        %v834 = vmul.f32 %v818, %v818
        %v835 = vmul.f32 %v819, %v819
        %v836 = vmul.f32 %v820, %v820
        %v837 = vmul.f32 %v821, %v821
        %v838 = vsel %vm740, %v822, 0.0
        %839 = vadd.xlane.f32.xlu0 %v838
        %v840 = vpop.xlane.xlu0 %839
        %v841 = vsel %vm740, %v823, 0.0
        %842 = vadd.xlane.f32.xlu0 %v841
        %v843 = vpop.xlane.xlu0 %842
        %v844 = vsel %vm740, %v824, 0.0
        %845 = vadd.xlane.f32.xlu0 %v844
        %v846 = vpop.xlane.xlu0 %845
        %v847 = vsel %vm740, %v825, 0.0
        %848 = vadd.xlane.f32.xlu0 %v847
        %v849 = vpop.xlane.xlu0 %848
        %v850 = vsel %vm740, %v826, 0.0
        %851 = vadd.xlane.f32.xlu0 %v850
        %v852 = vpop.xlane.xlu0 %851
        %v853 = vsel %vm740, %v827, 0.0
        %854 = vadd.xlane.f32.xlu0 %v853
        %v855 = vpop.xlane.xlu0 %854
        %v856 = vsel %vm740, %v828, 0.0
        %857 = vadd.xlane.f32.xlu0 %v856
        %v858 = vpop.xlane.xlu0 %857
        %v859 = vsel %vm740, %v829, 0.0
        %860 = vadd.xlane.f32.xlu0 %v859
        %v861 = vpop.xlane.xlu0 %860
        %v862 = vsel %vm740, %v830, 0.0
        %863 = vadd.xlane.f32.xlu0 %v862
        %v864 = vpop.xlane.xlu0 %863
        %v865 = vsel %vm740, %v831, 0.0
        %866 = vadd.xlane.f32.xlu0 %v865
        %v867 = vpop.xlane.xlu0 %866
        %v868 = vsel %vm740, %v832, 0.0
        %869 = vadd.xlane.f32.xlu0 %v868
        %v870 = vpop.xlane.xlu0 %869
        %v871 = vsel %vm740, %v833, 0.0
        %872 = vadd.xlane.f32.xlu0 %v871
        %v873 = vpop.xlane.xlu0 %872
        %v874 = vsel %vm740, %v834, 0.0
        %875 = vadd.xlane.f32.xlu0 %v874
        %v876 = vpop.xlane.xlu0 %875
        %v877 = vsel %vm740, %v835, 0.0
        %878 = vadd.xlane.f32.xlu0 %v877
        %v879 = vpop.xlane.xlu0 %878
        %v880 = vsel %vm740, %v836, 0.0
        %881 = vadd.xlane.f32.xlu0 %v880
        %v882 = vpop.xlane.xlu0 %881
        %v883 = vsel %vm740, %v837, 0.0
        %884 = vadd.xlane.f32.xlu0 %v883
        %v885 = vpop.xlane.xlu0 %884
        %v886 = vmul.f32 %v840, %v789
        %v887 = vmul.f32 %v843, %v789
        %v888 = vmul.f32 %v846, %v789
        %v889 = vmul.f32 %v849, %v789
        %v890 = vmul.f32 %v852, %v789
        %v891 = vmul.f32 %v855, %v789
        %v892 = vmul.f32 %v858, %v789
        %v893 = vmul.f32 %v861, %v789
        %v894 = vmul.f32 %v864, %v789
        %v895 = vmul.f32 %v867, %v789
        %v896 = vmul.f32 %v870, %v789
        %v897 = vmul.f32 %v873, %v789
        %v898 = vmul.f32 %v876, %v789
        %v899 = vmul.f32 %v879, %v789
        %v900 = vmul.f32 %v882, %v789
        %v901 = vmul.f32 %v885, %v789
        %v902 = vadd.f32 %v886, 1e-05
        %v903 = vadd.f32 %v887, 1e-05
        %v904 = vadd.f32 %v888, 1e-05
        %v905 = vadd.f32 %v889, 1e-05
        %v906 = vadd.f32 %v890, 1e-05
        %v907 = vadd.f32 %v891, 1e-05
        %v908 = vadd.f32 %v892, 1e-05
        %v909 = vadd.f32 %v893, 1e-05
        %v910 = vadd.f32 %v894, 1e-05
        %v911 = vadd.f32 %v895, 1e-05
        %v912 = vadd.f32 %v896, 1e-05
        %v913 = vadd.f32 %v897, 1e-05
        %v914 = vadd.f32 %v898, 1e-05
        %v915 = vadd.f32 %v899, 1e-05
        %v916 = vadd.f32 %v900, 1e-05
        %v917 = vadd.f32 %v901, 1e-05
        %v918 = vrsqrt.pop %v902
        %v919 = vrsqrt.pop %v903
        %v920 = vrsqrt.pop %v904
        %v921 = vrsqrt.pop %v905
        %v922 = vrsqrt.pop %v906
        %v923 = vrsqrt.pop %v907
        %v924 = vrsqrt.pop %v908
        %v925 = vrsqrt.pop %v909
        %v926 = vrsqrt.pop %v910
        %v927 = vrsqrt.pop %v911
        %v928 = vrsqrt.pop %v912
        %v929 = vrsqrt.pop %v913
        %v930 = vrsqrt.pop %v914
        %v931 = vrsqrt.pop %v915
        %v932 = vrsqrt.pop %v916
        %v933 = vrsqrt.pop %v917
        %v934 = vmul.f32 %v806, %v918
        %v935 = vmul.f32 %v807, %v919
        %v936 = vmul.f32 %v808, %v920
        %v937 = vmul.f32 %v809, %v921
        %v938 = vmul.f32 %v810, %v922
        %v939 = vmul.f32 %v811, %v923
        %v940 = vmul.f32 %v812, %v924
        %v941 = vmul.f32 %v813, %v925
        %v942 = vmul.f32 %v814, %v926
        %v943 = vmul.f32 %v815, %v927
        %v944 = vmul.f32 %v816, %v928
        %v945 = vmul.f32 %v817, %v929
        %v946 = vmul.f32 %v818, %v930
        %v947 = vmul.f32 %v819, %v931
        %v948 = vmul.f32 %v820, %v932
        %v949 = vmul.f32 %v821, %v933
        %v950 = vlaneseq
        %v951 = vshrl.u32 %v950, 7
        %v952 = vsub.s32 0, %v951
        %v953 = vrot.slane %v738, %v952
        %v954 = vmul.f32 %v934, %v953
        %v955 = vmul.f32 %v935, %v953
        %v956 = vmul.f32 %v936, %v953
        %v957 = vmul.f32 %v937, %v953
        %v958 = vmul.f32 %v938, %v953
        %v959 = vmul.f32 %v939, %v953
        %v960 = vmul.f32 %v940, %v953
        %v961 = vmul.f32 %v941, %v953
        %v962 = vmul.f32 %v942, %v953
        %v963 = vmul.f32 %v943, %v953
        %v964 = vmul.f32 %v944, %v953
        %v965 = vmul.f32 %v945, %v953
        %v966 = vmul.f32 %v946, %v953
        %v967 = vmul.f32 %v947, %v953
        %v968 = vmul.f32 %v948, %v953
        %v969 = vmul.f32 %v949, %v953
        %v970 = vlaneseq
        %v971 = vshrl.u32 %v970, 7
        %v972 = vsub.s32 0, %v971
        %v973 = vrot.slane %v739, %v972
        %v974 = vadd.f32 %v954, %v973
        %v975 = vadd.f32 %v955, %v973
        %v976 = vadd.f32 %v956, %v973
        %v977 = vadd.f32 %v957, %v973
        %v978 = vadd.f32 %v958, %v973
        %v979 = vadd.f32 %v959, %v973
        %v980 = vadd.f32 %v960, %v973
        %v981 = vadd.f32 %v961, %v973
        %v982 = vadd.f32 %v962, %v973
        %v983 = vadd.f32 %v963, %v973
        %v984 = vadd.f32 %v964, %v973
        %v985 = vadd.f32 %v965, %v973
        %v986 = vadd.f32 %v966, %v973
        %v987 = vadd.f32 %v967, %v973
        %v988 = vadd.f32 %v968, %v973
        %v989 = vadd.f32 %v969, %v973
        %v990 = vld [vmem:[%s2 + $0x6] sm:$0x1]
        %v991 = vld [vmem:[%s2 + $0x7] sm:$0x1]
        %v992 = vld [vmem:[%s2 + $0x8] sm:$0x1]
        %v993 = vld [vmem:[%s2 + $0x9] sm:$0x1]
        %v994 = vld [vmem:[%s2 + $0xa] sm:$0x1]
        %v995 = vld [vmem:[%s2 + $0xb] sm:$0x1]
        %v996 = vld [vmem:[%s2 + $0xc] sm:$0x1]
        %v997 = vld [vmem:[%s2 + $0xd] sm:$0x1]
        %v998 = vld [vmem:[%s2 + $0xe] sm:$0x1]
        %v999 = vld [vmem:[%s2 + $0xf] sm:$0x1]
        %v1000 = vsel %vm740, %v974, 0.0
        %1001 = vadd.xlane.f32.xlu0 %v1000
        %v1002 = vpop.xlane.xlu0 %1001
        %v1003 = vsel %vm740, %v975, 0.0
        %1004 = vadd.xlane.f32.xlu0 %v1003
        %v1005 = vpop.xlane.xlu0 %1004
        %v1006 = vsel %vm740, %v976, 0.0
        %1007 = vadd.xlane.f32.xlu0 %v1006
        %v1008 = vpop.xlane.xlu0 %1007
        %v1009 = vsel %vm740, %v977, 0.0
        %1010 = vadd.xlane.f32.xlu0 %v1009
        %v1011 = vpop.xlane.xlu0 %1010
        %v1012 = vsel %vm740, %v978, 0.0
        %1013 = vadd.xlane.f32.xlu0 %v1012
        %v1014 = vpop.xlane.xlu0 %1013
        %v1015 = vsel %vm740, %v979, 0.0
        %1016 = vadd.xlane.f32.xlu0 %v1015
        %v1017 = vpop.xlane.xlu0 %1016
        %v1018 = vsel %vm740, %v980, 0.0
        %1019 = vadd.xlane.f32.xlu0 %v1018
        %v1020 = vpop.xlane.xlu0 %1019
        %v1021 = vsel %vm740, %v981, 0.0
        %1022 = vadd.xlane.f32.xlu0 %v1021
        %v1023 = vpop.xlane.xlu0 %1022
        %v1024 = vsel %vm740, %v982, 0.0
        %1025 = vadd.xlane.f32.xlu0 %v1024
        %v1026 = vpop.xlane.xlu0 %1025
        %v1027 = vsel %vm740, %v983, 0.0
        %1028 = vadd.xlane.f32.xlu0 %v1027
        %v1029 = vpop.xlane.xlu0 %1028
        %v1030 = vsel %vm740, %v984, 0.0
        %1031 = vadd.xlane.f32.xlu0 %v1030
        %v1032 = vpop.xlane.xlu0 %1031
        %v1033 = vsel %vm740, %v985, 0.0
        %1034 = vadd.xlane.f32.xlu0 %v1033
        %v1035 = vpop.xlane.xlu0 %1034
        %v1036 = vsel %vm740, %v986, 0.0
        %1037 = vadd.xlane.f32.xlu0 %v1036
        %v1038 = vpop.xlane.xlu0 %1037
        %v1039 = vsel %vm740, %v987, 0.0
        %1040 = vadd.xlane.f32.xlu0 %v1039
        %v1041 = vpop.xlane.xlu0 %1040
        %v1042 = vsel %vm740, %v988, 0.0
        %1043 = vadd.xlane.f32.xlu0 %v1042
        %v1044 = vpop.xlane.xlu0 %1043
        %v1045 = vsel %vm740, %v989, 0.0
        %1046 = vadd.xlane.f32.xlu0 %v1045
        %v1047 = vpop.xlane.xlu0 %1046
        %v1048 = vmul.f32 %v1002, %v789
        %v1049 = vmul.f32 %v1005, %v789
        %v1050 = vmul.f32 %v1008, %v789
        %v1051 = vmul.f32 %v1011, %v789
        %v1052 = vmul.f32 %v1014, %v789
        %v1053 = vmul.f32 %v1017, %v789
        %v1054 = vmul.f32 %v1020, %v789
        %v1055 = vmul.f32 %v1023, %v789
        %v1056 = vmul.f32 %v1026, %v789
        %v1057 = vmul.f32 %v1029, %v789
        %v1058 = vmul.f32 %v1032, %v789
        %v1059 = vmul.f32 %v1035, %v789
        %v1060 = vmul.f32 %v1038, %v789
        %v1061 = vmul.f32 %v1041, %v789
        %v1062 = vmul.f32 %v1044, %v789
        %v1063 = vmul.f32 %v1047, %v789
        %v1064 = vsub.f32 %v974, %v1048
        %v1065 = vsub.f32 %v975, %v1049
        %v1066 = vsub.f32 %v976, %v1050
        %v1067 = vsub.f32 %v977, %v1051
        %v1068 = vsub.f32 %v978, %v1052
        %v1069 = vsub.f32 %v979, %v1053
        %v1070 = vsub.f32 %v980, %v1054
        %v1071 = vsub.f32 %v981, %v1055
        %v1072 = vsub.f32 %v982, %v1056
        %v1073 = vsub.f32 %v983, %v1057
        %v1074 = vsub.f32 %v984, %v1058
        %v1075 = vsub.f32 %v985, %v1059
        %v1076 = vsub.f32 %v986, %v1060
        %v1077 = vsub.f32 %v987, %v1061
        %v1078 = vsub.f32 %v988, %v1062
        %v1079 = vsub.f32 %v989, %v1063
        %v1080 = vmul.f32 %v1064, %v1064
        %v1081 = vmul.f32 %v1065, %v1065
        %v1082 = vmul.f32 %v1066, %v1066
        %v1083 = vmul.f32 %v1067, %v1067
        %v1084 = vmul.f32 %v1068, %v1068
        %v1085 = vmul.f32 %v1069, %v1069
        %v1086 = vmul.f32 %v1070, %v1070
        %v1087 = vmul.f32 %v1071, %v1071
        %v1088 = vmul.f32 %v1072, %v1072
        %v1089 = vmul.f32 %v1073, %v1073
        %v1090 = vmul.f32 %v1074, %v1074
        %v1091 = vmul.f32 %v1075, %v1075
        %v1092 = vmul.f32 %v1076, %v1076
        %v1093 = vmul.f32 %v1077, %v1077
        %v1094 = vmul.f32 %v1078, %v1078
        %v1095 = vmul.f32 %v1079, %v1079
        %v1096 = vsel %vm740, %v1080, 0.0
        %1097 = vadd.xlane.f32.xlu0 %v1096
        %v1098 = vpop.xlane.xlu0 %1097
        %v1099 = vsel %vm740, %v1081, 0.0
        %1100 = vadd.xlane.f32.xlu0 %v1099
        %v1101 = vpop.xlane.xlu0 %1100
        %v1102 = vsel %vm740, %v1082, 0.0
        %1103 = vadd.xlane.f32.xlu0 %v1102
        %v1104 = vpop.xlane.xlu0 %1103
        %v1105 = vsel %vm740, %v1083, 0.0
        %1106 = vadd.xlane.f32.xlu0 %v1105
        %v1107 = vpop.xlane.xlu0 %1106
        %v1108 = vsel %vm740, %v1084, 0.0
        %1109 = vadd.xlane.f32.xlu0 %v1108
        %v1110 = vpop.xlane.xlu0 %1109
        %v1111 = vsel %vm740, %v1085, 0.0
        %1112 = vadd.xlane.f32.xlu0 %v1111
        %v1113 = vpop.xlane.xlu0 %1112
        %v1114 = vsel %vm740, %v1086, 0.0
        %1115 = vadd.xlane.f32.xlu0 %v1114
        %v1116 = vpop.xlane.xlu0 %1115
        %v1117 = vsel %vm740, %v1087, 0.0
        %1118 = vadd.xlane.f32.xlu0 %v1117
        %v1119 = vpop.xlane.xlu0 %1118
        %v1120 = vsel %vm740, %v1088, 0.0
        %1121 = vadd.xlane.f32.xlu0 %v1120
        %v1122 = vpop.xlane.xlu0 %1121
        %v1123 = vsel %vm740, %v1089, 0.0
        %1124 = vadd.xlane.f32.xlu0 %v1123
        %v1125 = vpop.xlane.xlu0 %1124
        %v1126 = vsel %vm740, %v1090, 0.0
        %1127 = vadd.xlane.f32.xlu0 %v1126
        %v1128 = vpop.xlane.xlu0 %1127
        %v1129 = vsel %vm740, %v1091, 0.0
        %1130 = vadd.xlane.f32.xlu0 %v1129
        %v1131 = vpop.xlane.xlu0 %1130
        %v1132 = vsel %vm740, %v1092, 0.0
        %1133 = vadd.xlane.f32.xlu0 %v1132
        %v1134 = vpop.xlane.xlu0 %1133
        %v1135 = vsel %vm740, %v1093, 0.0
        %1136 = vadd.xlane.f32.xlu0 %v1135
        %v1137 = vpop.xlane.xlu0 %1136
        %v1138 = vsel %vm740, %v1094, 0.0
        %1139 = vadd.xlane.f32.xlu0 %v1138
        %v1140 = vpop.xlane.xlu0 %1139
        %v1141 = vsel %vm740, %v1095, 0.0
        %1142 = vadd.xlane.f32.xlu0 %v1141
        %v1143 = vpop.xlane.xlu0 %1142
        %v1144 = vmul.f32 %v1098, %v789
        %v1145 = vmul.f32 %v1101, %v789
        %v1146 = vmul.f32 %v1104, %v789
        %v1147 = vmul.f32 %v1107, %v789
        %v1148 = vmul.f32 %v1110, %v789
        %v1149 = vmul.f32 %v1113, %v789
        %v1150 = vmul.f32 %v1116, %v789
        %v1151 = vmul.f32 %v1119, %v789
        %v1152 = vmul.f32 %v1122, %v789
        %v1153 = vmul.f32 %v1125, %v789
        %v1154 = vmul.f32 %v1128, %v789
        %v1155 = vmul.f32 %v1131, %v789
        %v1156 = vmul.f32 %v1134, %v789
        %v1157 = vmul.f32 %v1137, %v789
        %v1158 = vmul.f32 %v1140, %v789
        %v1159 = vmul.f32 %v1143, %v789
        %v1160 = vadd.f32 %v1144, 1e-05
        %v1161 = vadd.f32 %v1145, 1e-05
        %v1162 = vadd.f32 %v1146, 1e-05
        %v1163 = vadd.f32 %v1147, 1e-05
        %v1164 = vadd.f32 %v1148, 1e-05
        %v1165 = vadd.f32 %v1149, 1e-05
        %v1166 = vadd.f32 %v1150, 1e-05
        %v1167 = vadd.f32 %v1151, 1e-05
        %v1168 = vadd.f32 %v1152, 1e-05
        %v1169 = vadd.f32 %v1153, 1e-05
        %v1170 = vadd.f32 %v1154, 1e-05
        %v1171 = vadd.f32 %v1155, 1e-05
        %v1172 = vadd.f32 %v1156, 1e-05
        %v1173 = vadd.f32 %v1157, 1e-05
        %v1174 = vadd.f32 %v1158, 1e-05
        %v1175 = vadd.f32 %v1159, 1e-05
        %v1176 = vrsqrt.pop %v1160
        %v1177 = vrsqrt.pop %v1161
        %v1178 = vrsqrt.pop %v1162
        %v1179 = vrsqrt.pop %v1163
        %v1180 = vrsqrt.pop %v1164
        %v1181 = vrsqrt.pop %v1165
        %v1182 = vrsqrt.pop %v1166
        %v1183 = vrsqrt.pop %v1167
        %v1184 = vrsqrt.pop %v1168
        %v1185 = vrsqrt.pop %v1169
        %v1186 = vrsqrt.pop %v1170
        %v1187 = vrsqrt.pop %v1171
        %v1188 = vrsqrt.pop %v1172
        %v1189 = vrsqrt.pop %v1173
        %v1190 = vrsqrt.pop %v1174
        %v1191 = vrsqrt.pop %v1175
        %v1192 = vmul.f32 %v1064, %v1176
        %v1193 = vmul.f32 %v1065, %v1177
        %v1194 = vmul.f32 %v1066, %v1178
        %v1195 = vmul.f32 %v1067, %v1179
        %v1196 = vmul.f32 %v1068, %v1180
        %v1197 = vmul.f32 %v1069, %v1181
        %v1198 = vmul.f32 %v1070, %v1182
        %v1199 = vmul.f32 %v1071, %v1183
        %v1200 = vmul.f32 %v1072, %v1184
        %v1201 = vmul.f32 %v1073, %v1185
        %v1202 = vmul.f32 %v1074, %v1186
        %v1203 = vmul.f32 %v1075, %v1187
        %v1204 = vmul.f32 %v1076, %v1188
        %v1205 = vmul.f32 %v1077, %v1189
        %v1206 = vmul.f32 %v1078, %v1190
        %v1207 = vmul.f32 %v1079, %v1191
        %v1208 = vlaneseq
        %v1209 = vshrl.u32 %v1208, 7
        %v1210 = vsub.s32 0, %v1209
        %v1211 = vrot.slane %v990, %v1210
        %v1212 = vmul.f32 %v1192, %v1211
        %v1213 = vmul.f32 %v1193, %v1211
        %v1214 = vmul.f32 %v1194, %v1211
        %v1215 = vmul.f32 %v1195, %v1211
        %v1216 = vmul.f32 %v1196, %v1211
        %v1217 = vmul.f32 %v1197, %v1211
        %v1218 = vmul.f32 %v1198, %v1211
        %v1219 = vmul.f32 %v1199, %v1211
        %v1220 = vmul.f32 %v1200, %v1211
        %v1221 = vmul.f32 %v1201, %v1211
        %v1222 = vmul.f32 %v1202, %v1211
        %v1223 = vmul.f32 %v1203, %v1211
        %v1224 = vmul.f32 %v1204, %v1211
        %v1225 = vmul.f32 %v1205, %v1211
        %v1226 = vmul.f32 %v1206, %v1211
        %v1227 = vmul.f32 %v1207, %v1211
        %v1228 = vlaneseq
        %v1229 = vshrl.u32 %v1228, 7
        %v1230 = vsub.s32 0, %v1229
        %v1231 = vrot.slane %v991, %v1230
        %v1232 = vadd.f32 %v1212, %v1231
        %v1233 = vadd.f32 %v1213, %v1231
        %v1234 = vadd.f32 %v1214, %v1231
        %v1235 = vadd.f32 %v1215, %v1231
        %v1236 = vadd.f32 %v1216, %v1231
        %v1237 = vadd.f32 %v1217, %v1231
        %v1238 = vadd.f32 %v1218, %v1231
        %v1239 = vadd.f32 %v1219, %v1231
        %v1240 = vadd.f32 %v1220, %v1231
        %v1241 = vadd.f32 %v1221, %v1231
        %v1242 = vadd.f32 %v1222, %v1231
        %v1243 = vadd.f32 %v1223, %v1231
        %v1244 = vadd.f32 %v1224, %v1231
        %v1245 = vadd.f32 %v1225, %v1231
        %v1246 = vadd.f32 %v1226, %v1231
        %v1247 = vadd.f32 %v1227, %v1231
        %v1248 = vld [vmem:[%s5] sm:$0xff]
        %v1249 = vld [vmem:[%s5 + $0x8] sm:$0xff]
        %v1250 = vld [vmem:[%s5 + $0x10] sm:$0xff]
        %v1251 = vld [vmem:[%s5 + $0x18] sm:$0xff]
        %v1252 = vlaneseq
        %v1253 = vshrl.u32 %v1252, 7
        %v1254 = vsub.s32 0, %v1253
        %v1255 = vrot.slane %v992, %v1254
        %v1257 = vsel %vm740, %v1232, 0
        %v1260 = vsel %vm740, %v1233, 0
        %v1263 = vsel %vm740, %v1234, 0
        %v1266 = vsel %vm740, %v1235, 0
        %v1269 = vsel %vm740, %v1236, 0
        %v1272 = vsel %vm740, %v1237, 0
        %v1275 = vsel %vm740, %v1238, 0
        %v1278 = vsel %vm740, %v1239, 0
        %v1281 = vsel %vm740, %v1240, 0
        %v1284 = vsel %vm740, %v1241, 0
        %v1287 = vsel %vm740, %v1242, 0
        %v1290 = vsel %vm740, %v1243, 0
        %v1293 = vsel %vm740, %v1244, 0
        %v1296 = vsel %vm740, %v1245, 0
        %v1299 = vsel %vm740, %v1246, 0
        %v1302 = vsel %vm740, %v1247, 0
        %1304 = vmatprep.subr.mxu0 0.0
        %1305 = vmatpush1.msra.mxu0 0.0
        %1306 = vmatprep.subr.mxu0 0.0
        %1307 = vmatpush1.msra.mxu0 0.0
        %1308 = vmatprep.subr.mxu0 0.0
        %1309 = vmatpush1.msra.mxu0 0.0
        %1310 = vmatprep.subr.mxu0 0.0
        %1311 = vmatpush1.msra.mxu0 0.0
        %1312 = vmatprep.subr.mxu0 0.0
        %1313 = vmatpush1.msra.mxu0 0.0
        %1314 = vmatprep.subr.mxu0 0.0
        %1315 = vmatpush1.msra.mxu0 0.0
        %1316 = vmatprep.subr.mxu0 0.0
        %1317 = vmatpush1.msra.mxu0 0.0
        %1318 = vmatprep.subr.mxu0 0.0
        %1319 = vmatpush1.msra.mxu0 0.0
        %1320 = vmatprep.subr.mxu0 0.0
        %1321 = vmatpush1.msra.mxu0 0.0
        %1322 = vmatprep.subr.mxu0 0.0
        %1323 = vmatpush1.msra.mxu0 0.0
        %1324 = vmatprep.subr.mxu0 0.0
        %1325 = vmatpush1.msra.mxu0 0.0
        %1326 = vmatprep.subr.mxu0 0.0
        %1327 = vmatpush1.msra.mxu0 0.0
        %1328 = vmatprep.subr.mxu0 0.0
        %1329 = vmatpush1.msra.mxu0 %v1251
        %1330 = vmatprep.subr.mxu0 0.0
        %1331 = vmatpush1.msra.mxu0 %v1250
        %1332 = vmatprep.subr.mxu0 0.0
        %1333 = vmatpush1.msra.mxu0 %v1249
        %1334 = vmatprep.subr.mxu0 0.0
        %1335 = vmatpush1.msra.mxu0 %v1248
        %1336 = vmatprep.subr.mxu0 0.0
        %1337 = vmatpush2.msra.mxu0 0.0
        %1338 = vmatprep.subr.mxu0 0.0
        %1339 = vmatpush2.msra.mxu0 0.0
        %1340 = vmatprep.subr.mxu0 0.0
        %1341 = vmatpush2.msra.mxu0 0.0
        %1342 = vmatprep.subr.mxu0 0.0
        %1343 = vmatpush2.msra.mxu0 0.0
        %1344 = vmatprep.subr.mxu0 0.0
        %1345 = vmatpush2.msra.mxu0 0.0
        %1346 = vmatprep.subr.mxu0 0.0
        %1347 = vmatpush2.msra.mxu0 0.0
        %1348 = vmatprep.subr.mxu0 0.0
        %1349 = vmatpush2.msra.mxu0 0.0
        %1350 = vmatprep.subr.mxu0 0.0
        %1351 = vmatpush2.msra.mxu0 0.0
        %1352 = vmatprep.subr.mxu0 0.0
        %1353 = vmatpush2.msra.mxu0 0.0
        %1354 = vmatprep.subr.mxu0 0.0
        %1355 = vmatpush2.msra.mxu0 0.0
        %1356 = vmatprep.subr.mxu0 0.0
        %1357 = vmatpush2.msra.mxu0 0.0
        %1358 = vmatprep.subr.mxu0 0.0
        %1359 = vmatpush2.msra.mxu0 0.0
        %1360 = vmatprep.subr.mxu0 0.0
        %1361 = vmatpush2.msra.mxu0 0.0
        %1362 = vmatprep.subr.mxu0 0.0
        %1363 = vmatpush2.msra.mxu0 0.0
        %1364 = vmatprep.subr.mxu0 0.0
        %1365 = vmatpush2.msra.mxu0 0.0
        %1366 = vmatprep.subr.mxu0 0.0
        %1367 = vmatpush2.msra.mxu0 0.0
        %1368 = vmatprep.mubr.f32.mxu0 0.0
        %1369 = vmatmul.mubr.f32.gmra.mxu0 %v1257
        %v1370 = vpop.f32.mrf.mxu0
        %v1371 = vadd.f32 %v1255, %v1370
        %v1372 = vpop.f32.mrf.mxu0
        %1373 = vmatprep.mubr.f32.mxu0 0.0
        %1374 = vmatmul.mubr.f32.gmra.mxu0 %v1260
        %v1375 = vpop.f32.mrf.mxu0
        %v1376 = vadd.f32 %v1255, %v1375
        %v1377 = vpop.f32.mrf.mxu0
        %1378 = vmatprep.mubr.f32.mxu0 0.0
        %1379 = vmatmul.mubr.f32.gmra.mxu0 %v1263
        %v1380 = vpop.f32.mrf.mxu0
        %v1381 = vadd.f32 %v1255, %v1380
        %v1382 = vpop.f32.mrf.mxu0
        %1383 = vmatprep.mubr.f32.mxu0 0.0
        %1384 = vmatmul.mubr.f32.gmra.mxu0 %v1266
        %v1385 = vpop.f32.mrf.mxu0
        %v1386 = vadd.f32 %v1255, %v1385
        %v1387 = vpop.f32.mrf.mxu0
        %1388 = vmatprep.mubr.f32.mxu0 0.0
        %1389 = vmatmul.mubr.f32.gmra.mxu0 %v1269
        %v1390 = vpop.f32.mrf.mxu0
        %v1391 = vadd.f32 %v1255, %v1390
        %v1392 = vpop.f32.mrf.mxu0
        %1393 = vmatprep.mubr.f32.mxu0 0.0
        %1394 = vmatmul.mubr.f32.gmra.mxu0 %v1272
        %v1395 = vpop.f32.mrf.mxu0
        %v1396 = vadd.f32 %v1255, %v1395
        %v1397 = vpop.f32.mrf.mxu0
        %1398 = vmatprep.mubr.f32.mxu0 0.0
        %1399 = vmatmul.mubr.f32.gmra.mxu0 %v1275
        %v1400 = vpop.f32.mrf.mxu0
        %v1401 = vadd.f32 %v1255, %v1400
        %v1402 = vpop.f32.mrf.mxu0
        %1403 = vmatprep.mubr.f32.mxu0 0.0
        %1404 = vmatmul.mubr.f32.gmra.mxu0 %v1278
        %v1405 = vpop.f32.mrf.mxu0
        %v1406 = vadd.f32 %v1255, %v1405
        %v1407 = vpop.f32.mrf.mxu0
        %1408 = vmatprep.mubr.f32.mxu0 0.0
        %1409 = vmatmul.mubr.f32.gmra.mxu0 %v1281
        %v1410 = vpop.f32.mrf.mxu0
        %v1411 = vadd.f32 %v1255, %v1410
        %v1412 = vpop.f32.mrf.mxu0
        %1413 = vmatprep.mubr.f32.mxu0 0.0
        %1414 = vmatmul.mubr.f32.gmra.mxu0 %v1284
        %v1415 = vpop.f32.mrf.mxu0
        %v1416 = vadd.f32 %v1255, %v1415
        %v1417 = vpop.f32.mrf.mxu0
        %1418 = vmatprep.mubr.f32.mxu0 0.0
        %1419 = vmatmul.mubr.f32.gmra.mxu0 %v1287
        %v1420 = vpop.f32.mrf.mxu0
        %v1421 = vadd.f32 %v1255, %v1420
        %v1422 = vpop.f32.mrf.mxu0
        %1423 = vmatprep.mubr.f32.mxu0 0.0
        %1424 = vmatmul.mubr.f32.gmra.mxu0 %v1290
        %v1425 = vpop.f32.mrf.mxu0
        %v1426 = vadd.f32 %v1255, %v1425
        %v1427 = vpop.f32.mrf.mxu0
        %1428 = vmatprep.mubr.f32.mxu0 0.0
        %1429 = vmatmul.mubr.f32.gmra.mxu0 %v1293
        %v1430 = vpop.f32.mrf.mxu0
        %v1431 = vadd.f32 %v1255, %v1430
        %v1432 = vpop.f32.mrf.mxu0
        %1433 = vmatprep.mubr.f32.mxu0 0.0
        %1434 = vmatmul.mubr.f32.gmra.mxu0 %v1296
        %v1435 = vpop.f32.mrf.mxu0
        %v1436 = vadd.f32 %v1255, %v1435
        %v1437 = vpop.f32.mrf.mxu0
        %1438 = vmatprep.mubr.f32.mxu0 0.0
        %1439 = vmatmul.mubr.f32.gmra.mxu0 %v1299
        %v1440 = vpop.f32.mrf.mxu0
        %v1441 = vadd.f32 %v1255, %v1440
        %v1442 = vpop.f32.mrf.mxu0
        %1443 = vmatprep.mubr.f32.mxu0 0.0
        %1444 = vmatmul.mubr.f32.gmra.mxu0 %v1302
        %v1445 = vpop.f32.mrf.mxu0
        %v1446 = vadd.f32 %v1255, %v1445
        %v1447 = vpop.f32.mrf.mxu0
        %1448 = vdwg.mxu0
        %v1449 = vmul.f32 %v1371, 0.35355338
        %v1450 = vmul.f32 %v1376, 0.35355338
        %v1451 = vmul.f32 %v1381, 0.35355338
        %v1452 = vmul.f32 %v1386, 0.35355338
        %v1453 = vmul.f32 %v1391, 0.35355338
        %v1454 = vmul.f32 %v1396, 0.35355338
        %v1455 = vmul.f32 %v1401, 0.35355338
        %v1456 = vmul.f32 %v1406, 0.35355338
        %v1457 = vmul.f32 %v1411, 0.35355338
        %v1458 = vmul.f32 %v1416, 0.35355338
        %v1459 = vmul.f32 %v1421, 0.35355338
        %v1460 = vmul.f32 %v1426, 0.35355338
        %v1461 = vmul.f32 %v1431, 0.35355338
        %v1462 = vmul.f32 %v1436, 0.35355338
        %v1463 = vmul.f32 %v1441, 0.35355338
        %v1464 = vmul.f32 %v1446, 0.35355338
        %s1465 = scalar_lea.vmem %s5, 32
        %v1466 = vld [vmem:[%s1465] sm:$0xff]
        %v1467 = vld [vmem:[%s1465 + $0x8] sm:$0xff]
        %v1468 = vld [vmem:[%s1465 + $0x10] sm:$0xff]
        %v1469 = vld [vmem:[%s1465 + $0x18] sm:$0xff]
        %v1470 = vlaneseq
        %v1471 = vshrl.u32 %v1470, 7
        %v1472 = vsub.s32 0, %v1471
        %v1473 = vrot.slane %v993, %v1472
        %1474 = vmatprep.subr.mxu0 0.0
        %1475 = vmatpush1.msra.mxu0 0.0
        %1476 = vmatprep.subr.mxu0 0.0
        %1477 = vmatpush1.msra.mxu0 0.0
        %1478 = vmatprep.subr.mxu0 0.0
        %1479 = vmatpush1.msra.mxu0 0.0
        %1480 = vmatprep.subr.mxu0 0.0
        %1481 = vmatpush1.msra.mxu0 0.0
        %1482 = vmatprep.subr.mxu0 0.0
        %1483 = vmatpush1.msra.mxu0 0.0
        %1484 = vmatprep.subr.mxu0 0.0
        %1485 = vmatpush1.msra.mxu0 0.0
        %1486 = vmatprep.subr.mxu0 0.0
        %1487 = vmatpush1.msra.mxu0 0.0
        %1488 = vmatprep.subr.mxu0 0.0
        %1489 = vmatpush1.msra.mxu0 0.0
        %1490 = vmatprep.subr.mxu0 0.0
        %1491 = vmatpush1.msra.mxu0 0.0
        %1492 = vmatprep.subr.mxu0 0.0
        %1493 = vmatpush1.msra.mxu0 0.0
        %1494 = vmatprep.subr.mxu0 0.0
        %1495 = vmatpush1.msra.mxu0 0.0
        %1496 = vmatprep.subr.mxu0 0.0
        %1497 = vmatpush1.msra.mxu0 0.0
        %1498 = vmatprep.subr.mxu0 0.0
        %1499 = vmatpush1.msra.mxu0 %v1469
        %1500 = vmatprep.subr.mxu0 0.0
        %1501 = vmatpush1.msra.mxu0 %v1468
        %1502 = vmatprep.subr.mxu0 0.0
        %1503 = vmatpush1.msra.mxu0 %v1467
        %1504 = vmatprep.subr.mxu0 0.0
        %1505 = vmatpush1.msra.mxu0 %v1466
        %1506 = vmatprep.subr.mxu0 0.0
        %1507 = vmatpush2.msra.mxu0 0.0
        %1508 = vmatprep.subr.mxu0 0.0
        %1509 = vmatpush2.msra.mxu0 0.0
        %1510 = vmatprep.subr.mxu0 0.0
        %1511 = vmatpush2.msra.mxu0 0.0
        %1512 = vmatprep.subr.mxu0 0.0
        %1513 = vmatpush2.msra.mxu0 0.0
        %1514 = vmatprep.subr.mxu0 0.0
        %1515 = vmatpush2.msra.mxu0 0.0
        %1516 = vmatprep.subr.mxu0 0.0
        %1517 = vmatpush2.msra.mxu0 0.0
        %1518 = vmatprep.subr.mxu0 0.0
        %1519 = vmatpush2.msra.mxu0 0.0
        %1520 = vmatprep.subr.mxu0 0.0
        %1521 = vmatpush2.msra.mxu0 0.0
        %1522 = vmatprep.subr.mxu0 0.0
        %1523 = vmatpush2.msra.mxu0 0.0
        %1524 = vmatprep.subr.mxu0 0.0
        %1525 = vmatpush2.msra.mxu0 0.0
        %1526 = vmatprep.subr.mxu0 0.0
        %1527 = vmatpush2.msra.mxu0 0.0
        %1528 = vmatprep.subr.mxu0 0.0
        %1529 = vmatpush2.msra.mxu0 0.0
        %1530 = vmatprep.subr.mxu0 0.0
        %1531 = vmatpush2.msra.mxu0 0.0
        %1532 = vmatprep.subr.mxu0 0.0
        %1533 = vmatpush2.msra.mxu0 0.0
        %1534 = vmatprep.subr.mxu0 0.0
        %1535 = vmatpush2.msra.mxu0 0.0
        %1536 = vmatprep.subr.mxu0 0.0
        %1537 = vmatpush2.msra.mxu0 0.0
        %1538 = vmatprep.mubr.f32.mxu0 0.0
        %1539 = vmatmul.mubr.f32.gmra.mxu0 %v1257
        %v1540 = vpop.f32.mrf.mxu0
        %v1541 = vadd.f32 %v1473, %v1540
        %v1542 = vpop.f32.mrf.mxu0
        %1543 = vmatprep.mubr.f32.mxu0 0.0
        %1544 = vmatmul.mubr.f32.gmra.mxu0 %v1260
        %v1545 = vpop.f32.mrf.mxu0
        %v1546 = vadd.f32 %v1473, %v1545
        %v1547 = vpop.f32.mrf.mxu0
        %1548 = vmatprep.mubr.f32.mxu0 0.0
        %1549 = vmatmul.mubr.f32.gmra.mxu0 %v1263
        %v1550 = vpop.f32.mrf.mxu0
        %v1551 = vadd.f32 %v1473, %v1550
        %v1552 = vpop.f32.mrf.mxu0
        %1553 = vmatprep.mubr.f32.mxu0 0.0
        %1554 = vmatmul.mubr.f32.gmra.mxu0 %v1266
        %v1555 = vpop.f32.mrf.mxu0
        %v1556 = vadd.f32 %v1473, %v1555
        %v1557 = vpop.f32.mrf.mxu0
        %1558 = vmatprep.mubr.f32.mxu0 0.0
        %1559 = vmatmul.mubr.f32.gmra.mxu0 %v1269
        %v1560 = vpop.f32.mrf.mxu0
        %v1561 = vadd.f32 %v1473, %v1560
        %v1562 = vpop.f32.mrf.mxu0
        %1563 = vmatprep.mubr.f32.mxu0 0.0
        %1564 = vmatmul.mubr.f32.gmra.mxu0 %v1272
        %v1565 = vpop.f32.mrf.mxu0
        %v1566 = vadd.f32 %v1473, %v1565
        %v1567 = vpop.f32.mrf.mxu0
        %1568 = vmatprep.mubr.f32.mxu0 0.0
        %1569 = vmatmul.mubr.f32.gmra.mxu0 %v1275
        %v1570 = vpop.f32.mrf.mxu0
        %v1571 = vadd.f32 %v1473, %v1570
        %v1572 = vpop.f32.mrf.mxu0
        %1573 = vmatprep.mubr.f32.mxu0 0.0
        %1574 = vmatmul.mubr.f32.gmra.mxu0 %v1278
        %v1575 = vpop.f32.mrf.mxu0
        %v1576 = vadd.f32 %v1473, %v1575
        %v1577 = vpop.f32.mrf.mxu0
        %1578 = vmatprep.mubr.f32.mxu0 0.0
        %1579 = vmatmul.mubr.f32.gmra.mxu0 %v1281
        %v1580 = vpop.f32.mrf.mxu0
        %v1581 = vadd.f32 %v1473, %v1580
        %v1582 = vpop.f32.mrf.mxu0
        %1583 = vmatprep.mubr.f32.mxu0 0.0
        %1584 = vmatmul.mubr.f32.gmra.mxu0 %v1284
        %v1585 = vpop.f32.mrf.mxu0
        %v1586 = vadd.f32 %v1473, %v1585
        %v1587 = vpop.f32.mrf.mxu0
        %1588 = vmatprep.mubr.f32.mxu0 0.0
        %1589 = vmatmul.mubr.f32.gmra.mxu0 %v1287
        %v1590 = vpop.f32.mrf.mxu0
        %v1591 = vadd.f32 %v1473, %v1590
        %v1592 = vpop.f32.mrf.mxu0
        %1593 = vmatprep.mubr.f32.mxu0 0.0
        %1594 = vmatmul.mubr.f32.gmra.mxu0 %v1290
        %v1595 = vpop.f32.mrf.mxu0
        %v1596 = vadd.f32 %v1473, %v1595
        %v1597 = vpop.f32.mrf.mxu0
        %1598 = vmatprep.mubr.f32.mxu0 0.0
        %1599 = vmatmul.mubr.f32.gmra.mxu0 %v1293
        %v1600 = vpop.f32.mrf.mxu0
        %v1601 = vadd.f32 %v1473, %v1600
        %v1602 = vpop.f32.mrf.mxu0
        %1603 = vmatprep.mubr.f32.mxu0 0.0
        %1604 = vmatmul.mubr.f32.gmra.mxu0 %v1296
        %v1605 = vpop.f32.mrf.mxu0
        %v1606 = vadd.f32 %v1473, %v1605
        %v1607 = vpop.f32.mrf.mxu0
        %1608 = vmatprep.mubr.f32.mxu0 0.0
        %1609 = vmatmul.mubr.f32.gmra.mxu0 %v1299
        %v1610 = vpop.f32.mrf.mxu0
        %v1611 = vadd.f32 %v1473, %v1610
        %v1612 = vpop.f32.mrf.mxu0
        %1613 = vmatprep.mubr.f32.mxu0 0.0
        %1614 = vmatmul.mubr.f32.gmra.mxu0 %v1302
        %v1615 = vpop.f32.mrf.mxu0
        %v1616 = vadd.f32 %v1473, %v1615
        %v1617 = vpop.f32.mrf.mxu0
        %1618 = vdwg.mxu0
        %s1619 = scalar_lea.vmem %s5, 64
        %v1620 = vld [vmem:[%s1619] sm:$0xff]
        %v1621 = vld [vmem:[%s1619 + $0x8] sm:$0xff]
        %v1622 = vld [vmem:[%s1619 + $0x10] sm:$0xff]
        %v1623 = vld [vmem:[%s1619 + $0x18] sm:$0xff]
        %v1624 = vlaneseq
        %v1625 = vshrl.u32 %v1624, 7
        %v1626 = vsub.s32 0, %v1625
        %v1627 = vrot.slane %v994, %v1626
        %1628 = vmatprep.subr.mxu0 0.0
        %1629 = vmatpush1.msra.mxu0 0.0
        %1630 = vmatprep.subr.mxu0 0.0
        %1631 = vmatpush1.msra.mxu0 0.0
        %1632 = vmatprep.subr.mxu0 0.0
        %1633 = vmatpush1.msra.mxu0 0.0
        %1634 = vmatprep.subr.mxu0 0.0
        %1635 = vmatpush1.msra.mxu0 0.0
        %1636 = vmatprep.subr.mxu0 0.0
        %1637 = vmatpush1.msra.mxu0 0.0
        %1638 = vmatprep.subr.mxu0 0.0
        %1639 = vmatpush1.msra.mxu0 0.0
        %1640 = vmatprep.subr.mxu0 0.0
        %1641 = vmatpush1.msra.mxu0 0.0
        %1642 = vmatprep.subr.mxu0 0.0
        %1643 = vmatpush1.msra.mxu0 0.0
        %1644 = vmatprep.subr.mxu0 0.0
        %1645 = vmatpush1.msra.mxu0 0.0
        %1646 = vmatprep.subr.mxu0 0.0
        %1647 = vmatpush1.msra.mxu0 0.0
        %1648 = vmatprep.subr.mxu0 0.0
        %1649 = vmatpush1.msra.mxu0 0.0
        %1650 = vmatprep.subr.mxu0 0.0
        %1651 = vmatpush1.msra.mxu0 0.0
        %1652 = vmatprep.subr.mxu0 0.0
        %1653 = vmatpush1.msra.mxu0 %v1623
        %1654 = vmatprep.subr.mxu0 0.0
        %1655 = vmatpush1.msra.mxu0 %v1622
        %1656 = vmatprep.subr.mxu0 0.0
        %1657 = vmatpush1.msra.mxu0 %v1621
        %1658 = vmatprep.subr.mxu0 0.0
        %1659 = vmatpush1.msra.mxu0 %v1620
        %1660 = vmatprep.subr.mxu0 0.0
        %1661 = vmatpush2.msra.mxu0 0.0
        %1662 = vmatprep.subr.mxu0 0.0
        %1663 = vmatpush2.msra.mxu0 0.0
        %1664 = vmatprep.subr.mxu0 0.0
        %1665 = vmatpush2.msra.mxu0 0.0
        %1666 = vmatprep.subr.mxu0 0.0
        %1667 = vmatpush2.msra.mxu0 0.0
        %1668 = vmatprep.subr.mxu0 0.0
        %1669 = vmatpush2.msra.mxu0 0.0
        %1670 = vmatprep.subr.mxu0 0.0
        %1671 = vmatpush2.msra.mxu0 0.0
        %1672 = vmatprep.subr.mxu0 0.0
        %1673 = vmatpush2.msra.mxu0 0.0
        %1674 = vmatprep.subr.mxu0 0.0
        %1675 = vmatpush2.msra.mxu0 0.0
        %1676 = vmatprep.subr.mxu0 0.0
        %1677 = vmatpush2.msra.mxu0 0.0
        %1678 = vmatprep.subr.mxu0 0.0
        %1679 = vmatpush2.msra.mxu0 0.0
        %1680 = vmatprep.subr.mxu0 0.0
        %1681 = vmatpush2.msra.mxu0 0.0
        %1682 = vmatprep.subr.mxu0 0.0
        %1683 = vmatpush2.msra.mxu0 0.0
        %1684 = vmatprep.subr.mxu0 0.0
        %1685 = vmatpush2.msra.mxu0 0.0
        %1686 = vmatprep.subr.mxu0 0.0
        %1687 = vmatpush2.msra.mxu0 0.0
        %1688 = vmatprep.subr.mxu0 0.0
        %1689 = vmatpush2.msra.mxu0 0.0
        %1690 = vmatprep.subr.mxu0 0.0
        %1691 = vmatpush2.msra.mxu0 0.0
        %1692 = vmatprep.mubr.f32.mxu0 0.0
        %1693 = vmatmul.mubr.f32.gmra.mxu0 %v1257
        %v1694 = vpop.f32.mrf.mxu0
        %v1695 = vadd.f32 %v1627, %v1694
        %v1696 = vpop.f32.mrf.mxu0
        %1697 = vmatprep.mubr.f32.mxu0 0.0
        %1698 = vmatmul.mubr.f32.gmra.mxu0 %v1260
        %v1699 = vpop.f32.mrf.mxu0
        %v1700 = vadd.f32 %v1627, %v1699
        %v1701 = vpop.f32.mrf.mxu0
        %1702 = vmatprep.mubr.f32.mxu0 0.0
        %1703 = vmatmul.mubr.f32.gmra.mxu0 %v1263
        %v1704 = vpop.f32.mrf.mxu0
        %v1705 = vadd.f32 %v1627, %v1704
        %v1706 = vpop.f32.mrf.mxu0
        %1707 = vmatprep.mubr.f32.mxu0 0.0
        %1708 = vmatmul.mubr.f32.gmra.mxu0 %v1266
        %v1709 = vpop.f32.mrf.mxu0
        %v1710 = vadd.f32 %v1627, %v1709
        %v1711 = vpop.f32.mrf.mxu0
        %1712 = vmatprep.mubr.f32.mxu0 0.0
        %1713 = vmatmul.mubr.f32.gmra.mxu0 %v1269
        %v1714 = vpop.f32.mrf.mxu0
        %v1715 = vadd.f32 %v1627, %v1714
        %v1716 = vpop.f32.mrf.mxu0
        %1717 = vmatprep.mubr.f32.mxu0 0.0
        %1718 = vmatmul.mubr.f32.gmra.mxu0 %v1272
        %v1719 = vpop.f32.mrf.mxu0
        %v1720 = vadd.f32 %v1627, %v1719
        %v1721 = vpop.f32.mrf.mxu0
        %1722 = vmatprep.mubr.f32.mxu0 0.0
        %1723 = vmatmul.mubr.f32.gmra.mxu0 %v1275
        %v1724 = vpop.f32.mrf.mxu0
        %v1725 = vadd.f32 %v1627, %v1724
        %v1726 = vpop.f32.mrf.mxu0
        %1727 = vmatprep.mubr.f32.mxu0 0.0
        %1728 = vmatmul.mubr.f32.gmra.mxu0 %v1278
        %v1729 = vpop.f32.mrf.mxu0
        %v1730 = vadd.f32 %v1627, %v1729
        %v1731 = vpop.f32.mrf.mxu0
        %1732 = vmatprep.mubr.f32.mxu0 0.0
        %1733 = vmatmul.mubr.f32.gmra.mxu0 %v1281
        %v1734 = vpop.f32.mrf.mxu0
        %v1735 = vadd.f32 %v1627, %v1734
        %v1736 = vpop.f32.mrf.mxu0
        %1737 = vmatprep.mubr.f32.mxu0 0.0
        %1738 = vmatmul.mubr.f32.gmra.mxu0 %v1284
        %v1739 = vpop.f32.mrf.mxu0
        %v1740 = vadd.f32 %v1627, %v1739
        %v1741 = vpop.f32.mrf.mxu0
        %1742 = vmatprep.mubr.f32.mxu0 0.0
        %1743 = vmatmul.mubr.f32.gmra.mxu0 %v1287
        %v1744 = vpop.f32.mrf.mxu0
        %v1745 = vadd.f32 %v1627, %v1744
        %v1746 = vpop.f32.mrf.mxu0
        %1747 = vmatprep.mubr.f32.mxu0 0.0
        %1748 = vmatmul.mubr.f32.gmra.mxu0 %v1290
        %v1749 = vpop.f32.mrf.mxu0
        %v1750 = vadd.f32 %v1627, %v1749
        %v1751 = vpop.f32.mrf.mxu0
        %1752 = vmatprep.mubr.f32.mxu0 0.0
        %1753 = vmatmul.mubr.f32.gmra.mxu0 %v1293
        %v1754 = vpop.f32.mrf.mxu0
        %v1755 = vadd.f32 %v1627, %v1754
        %v1756 = vpop.f32.mrf.mxu0
        %1757 = vmatprep.mubr.f32.mxu0 0.0
        %1758 = vmatmul.mubr.f32.gmra.mxu0 %v1296
        %v1759 = vpop.f32.mrf.mxu0
        %v1760 = vadd.f32 %v1627, %v1759
        %v1761 = vpop.f32.mrf.mxu0
        %1762 = vmatprep.mubr.f32.mxu0 0.0
        %1763 = vmatmul.mubr.f32.gmra.mxu0 %v1299
        %v1764 = vpop.f32.mrf.mxu0
        %v1765 = vadd.f32 %v1627, %v1764
        %v1766 = vpop.f32.mrf.mxu0
        %1767 = vmatprep.mubr.f32.mxu0 0.0
        %1768 = vmatmul.mubr.f32.gmra.mxu0 %v1302
        %v1769 = vpop.f32.mrf.mxu0
        %v1770 = vadd.f32 %v1627, %v1769
        %v1771 = vpop.f32.mrf.mxu0
        %1772 = vdwg.mxu0
        %v1773 = vmul.f32 %v1449, %v501
        %v1774 = vmul.f32 %v1450, %v501
        %v1775 = vmul.f32 %v1451, %v501
        %v1776 = vmul.f32 %v1452, %v501
        %v1777 = vmul.f32 %v1453, %v501
        %v1778 = vmul.f32 %v1454, %v501
        %v1779 = vmul.f32 %v1455, %v501
        %v1780 = vmul.f32 %v1456, %v501
        %v1781 = vmul.f32 %v1457, %v501
        %v1782 = vmul.f32 %v1458, %v501
        %v1783 = vmul.f32 %v1459, %v501
        %v1784 = vmul.f32 %v1460, %v501
        %v1785 = vmul.f32 %v1461, %v501
        %v1786 = vmul.f32 %v1462, %v501
        %v1787 = vmul.f32 %v1463, %v501
        %v1788 = vmul.f32 %v1464, %v501
        %v1789 = vld [vmem:[%s9] sm:$0xff]
        %v1790 = vld [vmem:[%s9 + $0x8] sm:$0xff]
        %v1791 = vld [vmem:[%s9 + $0x10] sm:$0xff]
        %v1792 = vld [vmem:[%s9 + $0x18] sm:$0xff]
        %v1793 = vld [vmem:[%s9 + $0x20] sm:$0xff]
        %v1794 = vld [vmem:[%s9 + $0x28] sm:$0xff]
        %v1795 = vld [vmem:[%s9 + $0x30] sm:$0xff]
        %v1796 = vld [vmem:[%s9 + $0x38] sm:$0xff]
        %v1797 = vld [vmem:[%s9 + $0x40] sm:$0xff]
        %v1798 = vld [vmem:[%s9 + $0x48] sm:$0xff]
        %v1799 = vld [vmem:[%s9 + $0x50] sm:$0xff]
        %v1800 = vld [vmem:[%s9 + $0x58] sm:$0xff]
        %v1801 = vld [vmem:[%s9 + $0x60] sm:$0xff]
        %v1802 = vld [vmem:[%s9 + $0x68] sm:$0xff]
        %v1803 = vld [vmem:[%s9 + $0x70] sm:$0xff]
        %v1804 = vld [vmem:[%s9 + $0x78] sm:$0xff]
        %v1806 = vsel %vm740, %v1773, 0
        %v1809 = vsel %vm740, %v1774, 0
        %v1812 = vsel %vm740, %v1775, 0
        %v1815 = vsel %vm740, %v1776, 0
        %v1818 = vsel %vm740, %v1777, 0
        %v1821 = vsel %vm740, %v1778, 0
        %v1824 = vsel %vm740, %v1779, 0
        %v1827 = vsel %vm740, %v1780, 0
        %v1830 = vsel %vm740, %v1781, 0
        %v1833 = vsel %vm740, %v1782, 0
        %v1836 = vsel %vm740, %v1783, 0
        %v1839 = vsel %vm740, %v1784, 0
        %v1842 = vsel %vm740, %v1785, 0
        %v1845 = vsel %vm740, %v1786, 0
        %v1848 = vsel %vm740, %v1787, 0
        %v1851 = vsel %vm740, %v1788, 0
        %v1854 = vsel %vm740, %v1541, 0
        %v1857 = vsel %vm740, %v1546, 0
        %v1860 = vsel %vm740, %v1551, 0
        %v1863 = vsel %vm740, %v1556, 0
        %v1866 = vsel %vm740, %v1561, 0
        %v1869 = vsel %vm740, %v1566, 0
        %v1872 = vsel %vm740, %v1571, 0
        %v1875 = vsel %vm740, %v1576, 0
        %v1878 = vsel %vm740, %v1581, 0
        %v1881 = vsel %vm740, %v1586, 0
        %v1884 = vsel %vm740, %v1591, 0
        %v1887 = vsel %vm740, %v1596, 0
        %v1890 = vsel %vm740, %v1601, 0
        %v1893 = vsel %vm740, %v1606, 0
        %v1896 = vsel %vm740, %v1611, 0
        %v1899 = vsel %vm740, %v1616, 0
        %1901 = vmatprep.subr.mxu0 0.0
        %1902 = vmatpush1.xpose.msra.mxu0 %v1899
        %1903 = vmatprep.subr.mxu0 0.0
        %1904 = vmatpush1.xpose.msra.mxu0 %v1896
        %1905 = vmatprep.subr.mxu0 0.0
        %1906 = vmatpush1.xpose.msra.mxu0 %v1893
        %1907 = vmatprep.subr.mxu0 0.0
        %1908 = vmatpush1.xpose.msra.mxu0 %v1890
        %1909 = vmatprep.subr.mxu0 0.0
        %1910 = vmatpush1.xpose.msra.mxu0 %v1887
        %1911 = vmatprep.subr.mxu0 0.0
        %1912 = vmatpush1.xpose.msra.mxu0 %v1884
        %1913 = vmatprep.subr.mxu0 0.0
        %1914 = vmatpush1.xpose.msra.mxu0 %v1881
        %1915 = vmatprep.subr.mxu0 0.0
        %1916 = vmatpush1.xpose.msra.mxu0 %v1878
        %1917 = vmatprep.subr.mxu0 0.0
        %1918 = vmatpush1.xpose.msra.mxu0 %v1875
        %1919 = vmatprep.subr.mxu0 0.0
        %1920 = vmatpush1.xpose.msra.mxu0 %v1872
        %1921 = vmatprep.subr.mxu0 0.0
        %1922 = vmatpush1.xpose.msra.mxu0 %v1869
        %1923 = vmatprep.subr.mxu0 0.0
        %1924 = vmatpush1.xpose.msra.mxu0 %v1866
        %1925 = vmatprep.subr.mxu0 0.0
        %1926 = vmatpush1.xpose.msra.mxu0 %v1863
        %1927 = vmatprep.subr.mxu0 0.0
        %1928 = vmatpush1.xpose.msra.mxu0 %v1860
        %1929 = vmatprep.subr.mxu0 0.0
        %1930 = vmatpush1.xpose.msra.mxu0 %v1857
        %1931 = vmatprep.subr.mxu0 0.0
        %1932 = vmatpush1.xpose.msra.mxu0 %v1854
        %1933 = vmatprep.subr.mxu0 0.0
        %1934 = vmatpush2.xpose.msra.mxu0 0.0
        %1935 = vmatprep.subr.mxu0 0.0
        %1936 = vmatpush2.xpose.msra.mxu0 0.0
        %1937 = vmatprep.subr.mxu0 0.0
        %1938 = vmatpush2.xpose.msra.mxu0 0.0
        %1939 = vmatprep.subr.mxu0 0.0
        %1940 = vmatpush2.xpose.msra.mxu0 0.0
        %1941 = vmatprep.subr.mxu0 0.0
        %1942 = vmatpush2.xpose.msra.mxu0 0.0
        %1943 = vmatprep.subr.mxu0 0.0
        %1944 = vmatpush2.xpose.msra.mxu0 0.0
        %1945 = vmatprep.subr.mxu0 0.0
        %1946 = vmatpush2.xpose.msra.mxu0 0.0
        %1947 = vmatprep.subr.mxu0 0.0
        %1948 = vmatpush2.xpose.msra.mxu0 0.0
        %1949 = vmatprep.subr.mxu0 0.0
        %1950 = vmatpush2.xpose.msra.mxu0 0.0
        %1951 = vmatprep.subr.mxu0 0.0
        %1952 = vmatpush2.xpose.msra.mxu0 0.0
        %1953 = vmatprep.subr.mxu0 0.0
        %1954 = vmatpush2.xpose.msra.mxu0 0.0
        %1955 = vmatprep.subr.mxu0 0.0
        %1956 = vmatpush2.xpose.msra.mxu0 0.0
        %1957 = vmatprep.subr.mxu0 0.0
        %1958 = vmatpush2.xpose.msra.mxu0 0.0
        %1959 = vmatprep.subr.mxu0 0.0
        %1960 = vmatpush2.xpose.msra.mxu0 0.0
        %1961 = vmatprep.subr.mxu0 0.0
        %1962 = vmatpush2.xpose.msra.mxu0 0.0
        %1963 = vmatprep.subr.mxu0 0.0
        %1964 = vmatpush2.xpose.msra.mxu0 0.0
        %1965 = vmatprep.mubr.f32.mxu0 0.0
        %1966 = vmatmul.mubr.f32.gmra.mxu0 %v1806
        %v1967 = vpop.f32.mrf.mxu0
        %v1968 = vadd.f32 %v1789, %v1967
        %v1969 = vpop.f32.mrf.mxu0
        %1970 = vmatprep.mubr.f32.mxu0 0.0
        %1971 = vmatmul.mubr.f32.gmra.mxu0 %v1809
        %v1972 = vpop.f32.mrf.mxu0
        %v1973 = vadd.f32 %v1790, %v1972
        %v1974 = vpop.f32.mrf.mxu0
        %1975 = vmatprep.mubr.f32.mxu0 0.0
        %1976 = vmatmul.mubr.f32.gmra.mxu0 %v1812
        %v1977 = vpop.f32.mrf.mxu0
        %v1978 = vadd.f32 %v1791, %v1977
        %v1979 = vpop.f32.mrf.mxu0
        %1980 = vmatprep.mubr.f32.mxu0 0.0
        %1981 = vmatmul.mubr.f32.gmra.mxu0 %v1815
        %v1982 = vpop.f32.mrf.mxu0
        %v1983 = vadd.f32 %v1792, %v1982
        %v1984 = vpop.f32.mrf.mxu0
        %1985 = vmatprep.mubr.f32.mxu0 0.0
        %1986 = vmatmul.mubr.f32.gmra.mxu0 %v1818
        %v1987 = vpop.f32.mrf.mxu0
        %v1988 = vadd.f32 %v1793, %v1987
        %v1989 = vpop.f32.mrf.mxu0
        %1990 = vmatprep.mubr.f32.mxu0 0.0
        %1991 = vmatmul.mubr.f32.gmra.mxu0 %v1821
        %v1992 = vpop.f32.mrf.mxu0
        %v1993 = vadd.f32 %v1794, %v1992
        %v1994 = vpop.f32.mrf.mxu0
        %1995 = vmatprep.mubr.f32.mxu0 0.0
        %1996 = vmatmul.mubr.f32.gmra.mxu0 %v1824
        %v1997 = vpop.f32.mrf.mxu0
        %v1998 = vadd.f32 %v1795, %v1997
        %v1999 = vpop.f32.mrf.mxu0
        %2000 = vmatprep.mubr.f32.mxu0 0.0
        %2001 = vmatmul.mubr.f32.gmra.mxu0 %v1827
        %v2002 = vpop.f32.mrf.mxu0
        %v2003 = vadd.f32 %v1796, %v2002
        %v2004 = vpop.f32.mrf.mxu0
        %2005 = vmatprep.mubr.f32.mxu0 0.0
        %2006 = vmatmul.mubr.f32.gmra.mxu0 %v1830
        %v2007 = vpop.f32.mrf.mxu0
        %v2008 = vadd.f32 %v1797, %v2007
        %v2009 = vpop.f32.mrf.mxu0
        %2010 = vmatprep.mubr.f32.mxu0 0.0
        %2011 = vmatmul.mubr.f32.gmra.mxu0 %v1833
        %v2012 = vpop.f32.mrf.mxu0
        %v2013 = vadd.f32 %v1798, %v2012
        %v2014 = vpop.f32.mrf.mxu0
        %2015 = vmatprep.mubr.f32.mxu0 0.0
        %2016 = vmatmul.mubr.f32.gmra.mxu0 %v1836
        %v2017 = vpop.f32.mrf.mxu0
        %v2018 = vadd.f32 %v1799, %v2017
        %v2019 = vpop.f32.mrf.mxu0
        %2020 = vmatprep.mubr.f32.mxu0 0.0
        %2021 = vmatmul.mubr.f32.gmra.mxu0 %v1839
        %v2022 = vpop.f32.mrf.mxu0
        %v2023 = vadd.f32 %v1800, %v2022
        %v2024 = vpop.f32.mrf.mxu0
        %2025 = vmatprep.mubr.f32.mxu0 0.0
        %2026 = vmatmul.mubr.f32.gmra.mxu0 %v1842
        %v2027 = vpop.f32.mrf.mxu0
        %v2028 = vadd.f32 %v1801, %v2027
        %v2029 = vpop.f32.mrf.mxu0
        %2030 = vmatprep.mubr.f32.mxu0 0.0
        %2031 = vmatmul.mubr.f32.gmra.mxu0 %v1845
        %v2032 = vpop.f32.mrf.mxu0
        %v2033 = vadd.f32 %v1802, %v2032
        %v2034 = vpop.f32.mrf.mxu0
        %2035 = vmatprep.mubr.f32.mxu0 0.0
        %2036 = vmatmul.mubr.f32.gmra.mxu0 %v1848
        %v2037 = vpop.f32.mrf.mxu0
        %v2038 = vadd.f32 %v1803, %v2037
        %v2039 = vpop.f32.mrf.mxu0
        %2040 = vmatprep.mubr.f32.mxu0 0.0
        %2041 = vmatmul.mubr.f32.gmra.mxu0 %v1851
        %v2042 = vpop.f32.mrf.mxu0
        %v2043 = vadd.f32 %v1804, %v2042
        %v2044 = vpop.f32.mrf.mxu0
        %2045 = vdwg.mxu0
        %2046 = vmax.xlane.f32.xlu0 %v1968
        %v2047 = vpop.xlane.xlu0 %2046
        %2048 = vmax.xlane.f32.xlu0 %v1973
        %v2049 = vpop.xlane.xlu0 %2048
        %2050 = vmax.xlane.f32.xlu0 %v1978
        %v2051 = vpop.xlane.xlu0 %2050
        %2052 = vmax.xlane.f32.xlu0 %v1983
        %v2053 = vpop.xlane.xlu0 %2052
        %2054 = vmax.xlane.f32.xlu0 %v1988
        %v2055 = vpop.xlane.xlu0 %2054
        %2056 = vmax.xlane.f32.xlu0 %v1993
        %v2057 = vpop.xlane.xlu0 %2056
        %2058 = vmax.xlane.f32.xlu0 %v1998
        %v2059 = vpop.xlane.xlu0 %2058
        %2060 = vmax.xlane.f32.xlu0 %v2003
        %v2061 = vpop.xlane.xlu0 %2060
        %2062 = vmax.xlane.f32.xlu0 %v2008
        %v2063 = vpop.xlane.xlu0 %2062
        %2064 = vmax.xlane.f32.xlu0 %v2013
        %v2065 = vpop.xlane.xlu0 %2064
        %2066 = vmax.xlane.f32.xlu0 %v2018
        %v2067 = vpop.xlane.xlu0 %2066
        %2068 = vmax.xlane.f32.xlu0 %v2023
        %v2069 = vpop.xlane.xlu0 %2068
        %2070 = vmax.xlane.f32.xlu0 %v2028
        %v2071 = vpop.xlane.xlu0 %2070
        %2072 = vmax.xlane.f32.xlu0 %v2033
        %v2073 = vpop.xlane.xlu0 %2072
        %2074 = vmax.xlane.f32.xlu0 %v2038
        %v2075 = vpop.xlane.xlu0 %2074
        %2076 = vmax.xlane.f32.xlu0 %v2043
        %v2077 = vpop.xlane.xlu0 %2076
        %v2078 = vsub.f32 %v1968, %v2047
        %v2079 = vsub.f32 %v1973, %v2049
        %v2080 = vsub.f32 %v1978, %v2051
        %v2081 = vsub.f32 %v1983, %v2053
        %v2082 = vsub.f32 %v1988, %v2055
        %v2083 = vsub.f32 %v1993, %v2057
        %v2084 = vsub.f32 %v1998, %v2059
        %v2085 = vsub.f32 %v2003, %v2061
        %v2086 = vsub.f32 %v2008, %v2063
        %v2087 = vsub.f32 %v2013, %v2065
        %v2088 = vsub.f32 %v2018, %v2067
        %v2089 = vsub.f32 %v2023, %v2069
        %v2090 = vsub.f32 %v2028, %v2071
        %v2091 = vsub.f32 %v2033, %v2073
        %v2092 = vsub.f32 %v2038, %v2075
        %v2093 = vsub.f32 %v2043, %v2077
        %v2094 = vmul.f32 %v2078, 1.442695
        %v2095 = vpow.pop %v2094
        %v2096 = vmul.f32 %v2079, 1.442695
        %v2097 = vpow.pop %v2096
        %v2098 = vmul.f32 %v2080, 1.442695
        %v2099 = vpow.pop %v2098
        %v2100 = vmul.f32 %v2081, 1.442695
        %v2101 = vpow.pop %v2100
        %v2102 = vmul.f32 %v2082, 1.442695
        %v2103 = vpow.pop %v2102
        %v2104 = vmul.f32 %v2083, 1.442695
        %v2105 = vpow.pop %v2104
        %v2106 = vmul.f32 %v2084, 1.442695
        %v2107 = vpow.pop %v2106
        %v2108 = vmul.f32 %v2085, 1.442695
        %v2109 = vpow.pop %v2108
        %v2110 = vmul.f32 %v2086, 1.442695
        %v2111 = vpow.pop %v2110
        %v2112 = vmul.f32 %v2087, 1.442695
        %v2113 = vpow.pop %v2112
        %v2114 = vmul.f32 %v2088, 1.442695
        %v2115 = vpow.pop %v2114
        %v2116 = vmul.f32 %v2089, 1.442695
        %v2117 = vpow.pop %v2116
        %v2118 = vmul.f32 %v2090, 1.442695
        %v2119 = vpow.pop %v2118
        %v2120 = vmul.f32 %v2091, 1.442695
        %v2121 = vpow.pop %v2120
        %v2122 = vmul.f32 %v2092, 1.442695
        %v2123 = vpow.pop %v2122
        %v2124 = vmul.f32 %v2093, 1.442695
        %v2125 = vpow.pop %v2124
        %2126 = vadd.xlane.f32.xlu0 %v2095
        %v2127 = vpop.xlane.xlu0 %2126
        %2128 = vadd.xlane.f32.xlu0 %v2097
        %v2129 = vpop.xlane.xlu0 %2128
        %2130 = vadd.xlane.f32.xlu0 %v2099
        %v2131 = vpop.xlane.xlu0 %2130
        %2132 = vadd.xlane.f32.xlu0 %v2101
        %v2133 = vpop.xlane.xlu0 %2132
        %2134 = vadd.xlane.f32.xlu0 %v2103
        %v2135 = vpop.xlane.xlu0 %2134
        %2136 = vadd.xlane.f32.xlu0 %v2105
        %v2137 = vpop.xlane.xlu0 %2136
        %2138 = vadd.xlane.f32.xlu0 %v2107
        %v2139 = vpop.xlane.xlu0 %2138
        %2140 = vadd.xlane.f32.xlu0 %v2109
        %v2141 = vpop.xlane.xlu0 %2140
        %2142 = vadd.xlane.f32.xlu0 %v2111
        %v2143 = vpop.xlane.xlu0 %2142
        %2144 = vadd.xlane.f32.xlu0 %v2113
        %v2145 = vpop.xlane.xlu0 %2144
        %2146 = vadd.xlane.f32.xlu0 %v2115
        %v2147 = vpop.xlane.xlu0 %2146
        %2148 = vadd.xlane.f32.xlu0 %v2117
        %v2149 = vpop.xlane.xlu0 %2148
        %2150 = vadd.xlane.f32.xlu0 %v2119
        %v2151 = vpop.xlane.xlu0 %2150
        %2152 = vadd.xlane.f32.xlu0 %v2121
        %v2153 = vpop.xlane.xlu0 %2152
        %2154 = vadd.xlane.f32.xlu0 %v2123
        %v2155 = vpop.xlane.xlu0 %2154
        %2156 = vadd.xlane.f32.xlu0 %v2125
        %v2157 = vpop.xlane.xlu0 %2156
        %v2158 = vrcp.pop %v2127
        %v2159 = vrcp.pop %v2129
        %v2160 = vrcp.pop %v2131
        %v2161 = vrcp.pop %v2133
        %v2162 = vrcp.pop %v2135
        %v2163 = vrcp.pop %v2137
        %v2164 = vrcp.pop %v2139
        %v2165 = vrcp.pop %v2141
        %v2166 = vrcp.pop %v2143
        %v2167 = vrcp.pop %v2145
        %v2168 = vrcp.pop %v2147
        %v2169 = vrcp.pop %v2149
        %v2170 = vrcp.pop %v2151
        %v2171 = vrcp.pop %v2153
        %v2172 = vrcp.pop %v2155
        %v2173 = vrcp.pop %v2157
        %v2174 = vmul.f32 %v2095, %v2158
        %v2175 = vmul.f32 %v2097, %v2159
        %v2176 = vmul.f32 %v2099, %v2160
        %v2177 = vmul.f32 %v2101, %v2161
        %v2178 = vmul.f32 %v2103, %v2162
        %v2179 = vmul.f32 %v2105, %v2163
        %v2180 = vmul.f32 %v2107, %v2164
        %v2181 = vmul.f32 %v2109, %v2165
        %v2182 = vmul.f32 %v2111, %v2166
        %v2183 = vmul.f32 %v2113, %v2167
        %v2184 = vmul.f32 %v2115, %v2168
        %v2185 = vmul.f32 %v2117, %v2169
        %v2186 = vmul.f32 %v2119, %v2170
        %v2187 = vmul.f32 %v2121, %v2171
        %v2188 = vmul.f32 %v2123, %v2172
        %v2189 = vmul.f32 %v2125, %v2173
        %v2190 = vmul.f32 %v1695, %v501
        %v2191 = vmul.f32 %v1700, %v501
        %v2192 = vmul.f32 %v1705, %v501
        %v2193 = vmul.f32 %v1710, %v501
        %v2194 = vmul.f32 %v1715, %v501
        %v2195 = vmul.f32 %v1720, %v501
        %v2196 = vmul.f32 %v1725, %v501
        %v2197 = vmul.f32 %v1730, %v501
        %v2198 = vmul.f32 %v1735, %v501
        %v2199 = vmul.f32 %v1740, %v501
        %v2200 = vmul.f32 %v1745, %v501
        %v2201 = vmul.f32 %v1750, %v501
        %v2202 = vmul.f32 %v1755, %v501
        %v2203 = vmul.f32 %v1760, %v501
        %v2204 = vmul.f32 %v1765, %v501
        %v2205 = vmul.f32 %v1770, %v501
        %v2206 = vmul.f32 %v1449, %v506
        %v2207 = vmul.f32 %v1450, %v506
        %v2208 = vmul.f32 %v1451, %v506
        %v2209 = vmul.f32 %v1452, %v506
        %v2210 = vmul.f32 %v1453, %v506
        %v2211 = vmul.f32 %v1454, %v506
        %v2212 = vmul.f32 %v1455, %v506
        %v2213 = vmul.f32 %v1456, %v506
        %v2214 = vmul.f32 %v1457, %v506
        %v2215 = vmul.f32 %v1458, %v506
        %v2216 = vmul.f32 %v1459, %v506
        %v2217 = vmul.f32 %v1460, %v506
        %v2218 = vmul.f32 %v1461, %v506
        %v2219 = vmul.f32 %v1462, %v506
        %v2220 = vmul.f32 %v1463, %v506
        %v2221 = vmul.f32 %v1464, %v506
        %s2222 = scalar_lea.vmem %s9, 128
        %v2223 = vld [vmem:[%s2222] sm:$0xff]
        %v2224 = vld [vmem:[%s2222 + $0x8] sm:$0xff]
        %v2225 = vld [vmem:[%s2222 + $0x10] sm:$0xff]
        %v2226 = vld [vmem:[%s2222 + $0x18] sm:$0xff]
        %v2227 = vld [vmem:[%s2222 + $0x20] sm:$0xff]
        %v2228 = vld [vmem:[%s2222 + $0x28] sm:$0xff]
        %v2229 = vld [vmem:[%s2222 + $0x30] sm:$0xff]
        %v2230 = vld [vmem:[%s2222 + $0x38] sm:$0xff]
        %v2231 = vld [vmem:[%s2222 + $0x40] sm:$0xff]
        %v2232 = vld [vmem:[%s2222 + $0x48] sm:$0xff]
        %v2233 = vld [vmem:[%s2222 + $0x50] sm:$0xff]
        %v2234 = vld [vmem:[%s2222 + $0x58] sm:$0xff]
        %v2235 = vld [vmem:[%s2222 + $0x60] sm:$0xff]
        %v2236 = vld [vmem:[%s2222 + $0x68] sm:$0xff]
        %v2237 = vld [vmem:[%s2222 + $0x70] sm:$0xff]
        %v2238 = vld [vmem:[%s2222 + $0x78] sm:$0xff]
        %v2240 = vsel %vm740, %v2206, 0
        %v2243 = vsel %vm740, %v2207, 0
        %v2246 = vsel %vm740, %v2208, 0
        %v2249 = vsel %vm740, %v2209, 0
        %v2252 = vsel %vm740, %v2210, 0
        %v2255 = vsel %vm740, %v2211, 0
        %v2258 = vsel %vm740, %v2212, 0
        %v2261 = vsel %vm740, %v2213, 0
        %v2264 = vsel %vm740, %v2214, 0
        %v2267 = vsel %vm740, %v2215, 0
        %v2270 = vsel %vm740, %v2216, 0
        %v2273 = vsel %vm740, %v2217, 0
        %v2276 = vsel %vm740, %v2218, 0
        %v2279 = vsel %vm740, %v2219, 0
        %v2282 = vsel %vm740, %v2220, 0
        %v2285 = vsel %vm740, %v2221, 0
        %2287 = vmatprep.subr.mxu0 0.0
        %2288 = vmatpush1.xpose.msra.mxu0 %v1899
        %2289 = vmatprep.subr.mxu0 0.0
        %2290 = vmatpush1.xpose.msra.mxu0 %v1896
        %2291 = vmatprep.subr.mxu0 0.0
        %2292 = vmatpush1.xpose.msra.mxu0 %v1893
        %2293 = vmatprep.subr.mxu0 0.0
        %2294 = vmatpush1.xpose.msra.mxu0 %v1890
        %2295 = vmatprep.subr.mxu0 0.0
        %2296 = vmatpush1.xpose.msra.mxu0 %v1887
        %2297 = vmatprep.subr.mxu0 0.0
        %2298 = vmatpush1.xpose.msra.mxu0 %v1884
        %2299 = vmatprep.subr.mxu0 0.0
        %2300 = vmatpush1.xpose.msra.mxu0 %v1881
        %2301 = vmatprep.subr.mxu0 0.0
        %2302 = vmatpush1.xpose.msra.mxu0 %v1878
        %2303 = vmatprep.subr.mxu0 0.0
        %2304 = vmatpush1.xpose.msra.mxu0 %v1875
        %2305 = vmatprep.subr.mxu0 0.0
        %2306 = vmatpush1.xpose.msra.mxu0 %v1872
        %2307 = vmatprep.subr.mxu0 0.0
        %2308 = vmatpush1.xpose.msra.mxu0 %v1869
        %2309 = vmatprep.subr.mxu0 0.0
        %2310 = vmatpush1.xpose.msra.mxu0 %v1866
        %2311 = vmatprep.subr.mxu0 0.0
        %2312 = vmatpush1.xpose.msra.mxu0 %v1863
        %2313 = vmatprep.subr.mxu0 0.0
        %2314 = vmatpush1.xpose.msra.mxu0 %v1860
        %2315 = vmatprep.subr.mxu0 0.0
        %2316 = vmatpush1.xpose.msra.mxu0 %v1857
        %2317 = vmatprep.subr.mxu0 0.0
        %2318 = vmatpush1.xpose.msra.mxu0 %v1854
        %2319 = vmatprep.subr.mxu0 0.0
        %2320 = vmatpush2.xpose.msra.mxu0 0.0
        %2321 = vmatprep.subr.mxu0 0.0
        %2322 = vmatpush2.xpose.msra.mxu0 0.0
        %2323 = vmatprep.subr.mxu0 0.0
        %2324 = vmatpush2.xpose.msra.mxu0 0.0
        %2325 = vmatprep.subr.mxu0 0.0
        %2326 = vmatpush2.xpose.msra.mxu0 0.0
        %2327 = vmatprep.subr.mxu0 0.0
        %2328 = vmatpush2.xpose.msra.mxu0 0.0
        %2329 = vmatprep.subr.mxu0 0.0
        %2330 = vmatpush2.xpose.msra.mxu0 0.0
        %2331 = vmatprep.subr.mxu0 0.0
        %2332 = vmatpush2.xpose.msra.mxu0 0.0
        %2333 = vmatprep.subr.mxu0 0.0
        %2334 = vmatpush2.xpose.msra.mxu0 0.0
        %2335 = vmatprep.subr.mxu0 0.0
        %2336 = vmatpush2.xpose.msra.mxu0 0.0
        %2337 = vmatprep.subr.mxu0 0.0
        %2338 = vmatpush2.xpose.msra.mxu0 0.0
        %2339 = vmatprep.subr.mxu0 0.0
        %2340 = vmatpush2.xpose.msra.mxu0 0.0
        %2341 = vmatprep.subr.mxu0 0.0
        %2342 = vmatpush2.xpose.msra.mxu0 0.0
        %2343 = vmatprep.subr.mxu0 0.0
        %2344 = vmatpush2.xpose.msra.mxu0 0.0
        %2345 = vmatprep.subr.mxu0 0.0
        %2346 = vmatpush2.xpose.msra.mxu0 0.0
        %2347 = vmatprep.subr.mxu0 0.0
        %2348 = vmatpush2.xpose.msra.mxu0 0.0
        %2349 = vmatprep.subr.mxu0 0.0
        %2350 = vmatpush2.xpose.msra.mxu0 0.0
        %2351 = vmatprep.mubr.f32.mxu0 0.0
        %2352 = vmatmul.mubr.f32.gmra.mxu0 %v2240
        %v2353 = vpop.f32.mrf.mxu0
        %v2354 = vadd.f32 %v2223, %v2353
        %v2355 = vpop.f32.mrf.mxu0
        %2356 = vmatprep.mubr.f32.mxu0 0.0
        %2357 = vmatmul.mubr.f32.gmra.mxu0 %v2243
        %v2358 = vpop.f32.mrf.mxu0
        %v2359 = vadd.f32 %v2224, %v2358
        %v2360 = vpop.f32.mrf.mxu0
        %2361 = vmatprep.mubr.f32.mxu0 0.0
        %2362 = vmatmul.mubr.f32.gmra.mxu0 %v2246
        %v2363 = vpop.f32.mrf.mxu0
        %v2364 = vadd.f32 %v2225, %v2363
        %v2365 = vpop.f32.mrf.mxu0
        %2366 = vmatprep.mubr.f32.mxu0 0.0
        %2367 = vmatmul.mubr.f32.gmra.mxu0 %v2249
        %v2368 = vpop.f32.mrf.mxu0
        %v2369 = vadd.f32 %v2226, %v2368
        %v2370 = vpop.f32.mrf.mxu0
        %2371 = vmatprep.mubr.f32.mxu0 0.0
        %2372 = vmatmul.mubr.f32.gmra.mxu0 %v2252
        %v2373 = vpop.f32.mrf.mxu0
        %v2374 = vadd.f32 %v2227, %v2373
        %v2375 = vpop.f32.mrf.mxu0
        %2376 = vmatprep.mubr.f32.mxu0 0.0
        %2377 = vmatmul.mubr.f32.gmra.mxu0 %v2255
        %v2378 = vpop.f32.mrf.mxu0
        %v2379 = vadd.f32 %v2228, %v2378
        %v2380 = vpop.f32.mrf.mxu0
        %2381 = vmatprep.mubr.f32.mxu0 0.0
        %2382 = vmatmul.mubr.f32.gmra.mxu0 %v2258
        %v2383 = vpop.f32.mrf.mxu0
        %v2384 = vadd.f32 %v2229, %v2383
        %v2385 = vpop.f32.mrf.mxu0
        %2386 = vmatprep.mubr.f32.mxu0 0.0
        %2387 = vmatmul.mubr.f32.gmra.mxu0 %v2261
        %v2388 = vpop.f32.mrf.mxu0
        %v2389 = vadd.f32 %v2230, %v2388
        %v2390 = vpop.f32.mrf.mxu0
        %2391 = vmatprep.mubr.f32.mxu0 0.0
        %2392 = vmatmul.mubr.f32.gmra.mxu0 %v2264
        %v2393 = vpop.f32.mrf.mxu0
        %v2394 = vadd.f32 %v2231, %v2393
        %v2395 = vpop.f32.mrf.mxu0
        %2396 = vmatprep.mubr.f32.mxu0 0.0
        %2397 = vmatmul.mubr.f32.gmra.mxu0 %v2267
        %v2398 = vpop.f32.mrf.mxu0
        %v2399 = vadd.f32 %v2232, %v2398
        %v2400 = vpop.f32.mrf.mxu0
        %2401 = vmatprep.mubr.f32.mxu0 0.0
        %2402 = vmatmul.mubr.f32.gmra.mxu0 %v2270
        %v2403 = vpop.f32.mrf.mxu0
        %v2404 = vadd.f32 %v2233, %v2403
        %v2405 = vpop.f32.mrf.mxu0
        %2406 = vmatprep.mubr.f32.mxu0 0.0
        %2407 = vmatmul.mubr.f32.gmra.mxu0 %v2273
        %v2408 = vpop.f32.mrf.mxu0
        %v2409 = vadd.f32 %v2234, %v2408
        %v2410 = vpop.f32.mrf.mxu0
        %2411 = vmatprep.mubr.f32.mxu0 0.0
        %2412 = vmatmul.mubr.f32.gmra.mxu0 %v2276
        %v2413 = vpop.f32.mrf.mxu0
        %v2414 = vadd.f32 %v2235, %v2413
        %v2415 = vpop.f32.mrf.mxu0
        %2416 = vmatprep.mubr.f32.mxu0 0.0
        %2417 = vmatmul.mubr.f32.gmra.mxu0 %v2279
        %v2418 = vpop.f32.mrf.mxu0
        %v2419 = vadd.f32 %v2236, %v2418
        %v2420 = vpop.f32.mrf.mxu0
        %2421 = vmatprep.mubr.f32.mxu0 0.0
        %2422 = vmatmul.mubr.f32.gmra.mxu0 %v2282
        %v2423 = vpop.f32.mrf.mxu0
        %v2424 = vadd.f32 %v2237, %v2423
        %v2425 = vpop.f32.mrf.mxu0
        %2426 = vmatprep.mubr.f32.mxu0 0.0
        %2427 = vmatmul.mubr.f32.gmra.mxu0 %v2285
        %v2428 = vpop.f32.mrf.mxu0
        %v2429 = vadd.f32 %v2238, %v2428
        %v2430 = vpop.f32.mrf.mxu0
        %2431 = vdwg.mxu0
        %2432 = vmax.xlane.f32.xlu0 %v2354
        %v2433 = vpop.xlane.xlu0 %2432
        %2434 = vmax.xlane.f32.xlu0 %v2359
        %v2435 = vpop.xlane.xlu0 %2434
        %2436 = vmax.xlane.f32.xlu0 %v2364
        %v2437 = vpop.xlane.xlu0 %2436
        %2438 = vmax.xlane.f32.xlu0 %v2369
        %v2439 = vpop.xlane.xlu0 %2438
        %2440 = vmax.xlane.f32.xlu0 %v2374
        %v2441 = vpop.xlane.xlu0 %2440
        %2442 = vmax.xlane.f32.xlu0 %v2379
        %v2443 = vpop.xlane.xlu0 %2442
        %2444 = vmax.xlane.f32.xlu0 %v2384
        %v2445 = vpop.xlane.xlu0 %2444
        %2446 = vmax.xlane.f32.xlu0 %v2389
        %v2447 = vpop.xlane.xlu0 %2446
        %2448 = vmax.xlane.f32.xlu0 %v2394
        %v2449 = vpop.xlane.xlu0 %2448
        %2450 = vmax.xlane.f32.xlu0 %v2399
        %v2451 = vpop.xlane.xlu0 %2450
        %2452 = vmax.xlane.f32.xlu0 %v2404
        %v2453 = vpop.xlane.xlu0 %2452
        %2454 = vmax.xlane.f32.xlu0 %v2409
        %v2455 = vpop.xlane.xlu0 %2454
        %2456 = vmax.xlane.f32.xlu0 %v2414
        %v2457 = vpop.xlane.xlu0 %2456
        %2458 = vmax.xlane.f32.xlu0 %v2419
        %v2459 = vpop.xlane.xlu0 %2458
        %2460 = vmax.xlane.f32.xlu0 %v2424
        %v2461 = vpop.xlane.xlu0 %2460
        %2462 = vmax.xlane.f32.xlu0 %v2429
        %v2463 = vpop.xlane.xlu0 %2462
        %v2464 = vsub.f32 %v2354, %v2433
        %v2465 = vsub.f32 %v2359, %v2435
        %v2466 = vsub.f32 %v2364, %v2437
        %v2467 = vsub.f32 %v2369, %v2439
        %v2468 = vsub.f32 %v2374, %v2441
        %v2469 = vsub.f32 %v2379, %v2443
        %v2470 = vsub.f32 %v2384, %v2445
        %v2471 = vsub.f32 %v2389, %v2447
        %v2472 = vsub.f32 %v2394, %v2449
        %v2473 = vsub.f32 %v2399, %v2451
        %v2474 = vsub.f32 %v2404, %v2453
        %v2475 = vsub.f32 %v2409, %v2455
        %v2476 = vsub.f32 %v2414, %v2457
        %v2477 = vsub.f32 %v2419, %v2459
        %v2478 = vsub.f32 %v2424, %v2461
        %v2479 = vsub.f32 %v2429, %v2463
        %v2480 = vmul.f32 %v2464, 1.442695
        %v2481 = vpow.pop %v2480
        %v2482 = vmul.f32 %v2465, 1.442695
        %v2483 = vpow.pop %v2482
        %v2484 = vmul.f32 %v2466, 1.442695
        %v2485 = vpow.pop %v2484
        %v2486 = vmul.f32 %v2467, 1.442695
        %v2487 = vpow.pop %v2486
        %v2488 = vmul.f32 %v2468, 1.442695
        %v2489 = vpow.pop %v2488
        %v2490 = vmul.f32 %v2469, 1.442695
        %v2491 = vpow.pop %v2490
        %v2492 = vmul.f32 %v2470, 1.442695
        %v2493 = vpow.pop %v2492
        %v2494 = vmul.f32 %v2471, 1.442695
        %v2495 = vpow.pop %v2494
        %v2496 = vmul.f32 %v2472, 1.442695
        %v2497 = vpow.pop %v2496
        %v2498 = vmul.f32 %v2473, 1.442695
        %v2499 = vpow.pop %v2498
        %v2500 = vmul.f32 %v2474, 1.442695
        %v2501 = vpow.pop %v2500
        %v2502 = vmul.f32 %v2475, 1.442695
        %v2503 = vpow.pop %v2502
        %v2504 = vmul.f32 %v2476, 1.442695
        %v2505 = vpow.pop %v2504
        %v2506 = vmul.f32 %v2477, 1.442695
        %v2507 = vpow.pop %v2506
        %v2508 = vmul.f32 %v2478, 1.442695
        %v2509 = vpow.pop %v2508
        %v2510 = vmul.f32 %v2479, 1.442695
        %v2511 = vpow.pop %v2510
        %2512 = vadd.xlane.f32.xlu0 %v2481
        %v2513 = vpop.xlane.xlu0 %2512
        %2514 = vadd.xlane.f32.xlu0 %v2483
        %v2515 = vpop.xlane.xlu0 %2514
        %2516 = vadd.xlane.f32.xlu0 %v2485
        %v2517 = vpop.xlane.xlu0 %2516
        %2518 = vadd.xlane.f32.xlu0 %v2487
        %v2519 = vpop.xlane.xlu0 %2518
        %2520 = vadd.xlane.f32.xlu0 %v2489
        %v2521 = vpop.xlane.xlu0 %2520
        %2522 = vadd.xlane.f32.xlu0 %v2491
        %v2523 = vpop.xlane.xlu0 %2522
        %2524 = vadd.xlane.f32.xlu0 %v2493
        %v2525 = vpop.xlane.xlu0 %2524
        %2526 = vadd.xlane.f32.xlu0 %v2495
        %v2527 = vpop.xlane.xlu0 %2526
        %2528 = vadd.xlane.f32.xlu0 %v2497
        %v2529 = vpop.xlane.xlu0 %2528
        %2530 = vadd.xlane.f32.xlu0 %v2499
        %v2531 = vpop.xlane.xlu0 %2530
        %2532 = vadd.xlane.f32.xlu0 %v2501
        %v2533 = vpop.xlane.xlu0 %2532
        %2534 = vadd.xlane.f32.xlu0 %v2503
        %v2535 = vpop.xlane.xlu0 %2534
        %2536 = vadd.xlane.f32.xlu0 %v2505
        %v2537 = vpop.xlane.xlu0 %2536
        %2538 = vadd.xlane.f32.xlu0 %v2507
        %v2539 = vpop.xlane.xlu0 %2538
        %2540 = vadd.xlane.f32.xlu0 %v2509
        %v2541 = vpop.xlane.xlu0 %2540
        %2542 = vadd.xlane.f32.xlu0 %v2511
        %v2543 = vpop.xlane.xlu0 %2542
        %v2544 = vrcp.pop %v2513
        %v2545 = vrcp.pop %v2515
        %v2546 = vrcp.pop %v2517
        %v2547 = vrcp.pop %v2519
        %v2548 = vrcp.pop %v2521
        %v2549 = vrcp.pop %v2523
        %v2550 = vrcp.pop %v2525
        %v2551 = vrcp.pop %v2527
        %v2552 = vrcp.pop %v2529
        %v2553 = vrcp.pop %v2531
        %v2554 = vrcp.pop %v2533
        %v2555 = vrcp.pop %v2535
        %v2556 = vrcp.pop %v2537
        %v2557 = vrcp.pop %v2539
        %v2558 = vrcp.pop %v2541
        %v2559 = vrcp.pop %v2543
        %v2560 = vmul.f32 %v2481, %v2544
        %v2561 = vmul.f32 %v2483, %v2545
        %v2562 = vmul.f32 %v2485, %v2546
        %v2563 = vmul.f32 %v2487, %v2547
        %v2564 = vmul.f32 %v2489, %v2548
        %v2565 = vmul.f32 %v2491, %v2549
        %v2566 = vmul.f32 %v2493, %v2550
        %v2567 = vmul.f32 %v2495, %v2551
        %v2568 = vmul.f32 %v2497, %v2552
        %v2569 = vmul.f32 %v2499, %v2553
        %v2570 = vmul.f32 %v2501, %v2554
        %v2571 = vmul.f32 %v2503, %v2555
        %v2572 = vmul.f32 %v2505, %v2556
        %v2573 = vmul.f32 %v2507, %v2557
        %v2574 = vmul.f32 %v2509, %v2558
        %v2575 = vmul.f32 %v2511, %v2559
        %v2576 = vmul.f32 %v1695, %v506
        %v2577 = vmul.f32 %v1700, %v506
        %v2578 = vmul.f32 %v1705, %v506
        %v2579 = vmul.f32 %v1710, %v506
        %v2580 = vmul.f32 %v1715, %v506
        %v2581 = vmul.f32 %v1720, %v506
        %v2582 = vmul.f32 %v1725, %v506
        %v2583 = vmul.f32 %v1730, %v506
        %v2584 = vmul.f32 %v1735, %v506
        %v2585 = vmul.f32 %v1740, %v506
        %v2586 = vmul.f32 %v1745, %v506
        %v2587 = vmul.f32 %v1750, %v506
        %v2588 = vmul.f32 %v1755, %v506
        %v2589 = vmul.f32 %v1760, %v506
        %v2590 = vmul.f32 %v1765, %v506
        %v2591 = vmul.f32 %v1770, %v506
        %2592 = vmatprep.subr.mxu0 0.0
        %2593 = vmatpush1.msra.mxu0 %v2591
        %2594 = vmatprep.subr.mxu0 0.0
        %2595 = vmatpush1.msra.mxu0 %v2590
        %2596 = vmatprep.subr.mxu0 0.0
        %2597 = vmatpush1.msra.mxu0 %v2589
        %2598 = vmatprep.subr.mxu0 0.0
        %2599 = vmatpush1.msra.mxu0 %v2588
        %2600 = vmatprep.subr.mxu0 0.0
        %2601 = vmatpush1.msra.mxu0 %v2587
        %2602 = vmatprep.subr.mxu0 0.0
        %2603 = vmatpush1.msra.mxu0 %v2586
        %2604 = vmatprep.subr.mxu0 0.0
        %2605 = vmatpush1.msra.mxu0 %v2585
        %2606 = vmatprep.subr.mxu0 0.0
        %2607 = vmatpush1.msra.mxu0 %v2584
        %2608 = vmatprep.subr.mxu0 0.0
        %2609 = vmatpush1.msra.mxu0 %v2583
        %2610 = vmatprep.subr.mxu0 0.0
        %2611 = vmatpush1.msra.mxu0 %v2582
        %2612 = vmatprep.subr.mxu0 0.0
        %2613 = vmatpush1.msra.mxu0 %v2581
        %2614 = vmatprep.subr.mxu0 0.0
        %2615 = vmatpush1.msra.mxu0 %v2580
        %2616 = vmatprep.subr.mxu0 0.0
        %2617 = vmatpush1.msra.mxu0 %v2579
        %2618 = vmatprep.subr.mxu0 0.0
        %2619 = vmatpush1.msra.mxu0 %v2578
        %2620 = vmatprep.subr.mxu0 0.0
        %2621 = vmatpush1.msra.mxu0 %v2577
        %2622 = vmatprep.subr.mxu0 0.0
        %2623 = vmatpush1.msra.mxu0 %v2576
        %2624 = vmatprep.subr.mxu0 0.0
        %2625 = vmatpush2.msra.mxu0 0.0
        %2626 = vmatprep.subr.mxu0 0.0
        %2627 = vmatpush2.msra.mxu0 0.0
        %2628 = vmatprep.subr.mxu0 0.0
        %2629 = vmatpush2.msra.mxu0 0.0
        %2630 = vmatprep.subr.mxu0 0.0
        %2631 = vmatpush2.msra.mxu0 0.0
        %2632 = vmatprep.subr.mxu0 0.0
        %2633 = vmatpush2.msra.mxu0 0.0
        %2634 = vmatprep.subr.mxu0 0.0
        %2635 = vmatpush2.msra.mxu0 0.0
        %2636 = vmatprep.subr.mxu0 0.0
        %2637 = vmatpush2.msra.mxu0 0.0
        %2638 = vmatprep.subr.mxu0 0.0
        %2639 = vmatpush2.msra.mxu0 0.0
        %2640 = vmatprep.subr.mxu0 0.0
        %2641 = vmatpush2.msra.mxu0 0.0
        %2642 = vmatprep.subr.mxu0 0.0
        %2643 = vmatpush2.msra.mxu0 0.0
        %2644 = vmatprep.subr.mxu0 0.0
        %2645 = vmatpush2.msra.mxu0 0.0
        %2646 = vmatprep.subr.mxu0 0.0
        %2647 = vmatpush2.msra.mxu0 0.0
        %2648 = vmatprep.subr.mxu0 0.0
        %2649 = vmatpush2.msra.mxu0 0.0
        %2650 = vmatprep.subr.mxu0 0.0
        %2651 = vmatpush2.msra.mxu0 0.0
        %2652 = vmatprep.subr.mxu0 0.0
        %2653 = vmatpush2.msra.mxu0 0.0
        %2654 = vmatprep.subr.mxu0 0.0
        %2655 = vmatpush2.msra.mxu0 0.0
        %2656 = vmatprep.mubr.f32.mxu0 0.0
        %2657 = vmatmul.mubr.f32.gmra.mxu0 %v2560
        %v2658 = vpop.f32.mrf.mxu0
        %v2659 = vadd.f32 0.0, %v2658
        %v2660 = vpop.f32.mrf.mxu0
        %2661 = vmatprep.mubr.f32.mxu0 0.0
        %2662 = vmatmul.mubr.f32.gmra.mxu0 %v2561
        %v2663 = vpop.f32.mrf.mxu0
        %v2664 = vadd.f32 0.0, %v2663
        %v2665 = vpop.f32.mrf.mxu0
        %2666 = vmatprep.mubr.f32.mxu0 0.0
        %2667 = vmatmul.mubr.f32.gmra.mxu0 %v2562
        %v2668 = vpop.f32.mrf.mxu0
        %v2669 = vadd.f32 0.0, %v2668
        %v2670 = vpop.f32.mrf.mxu0
        %2671 = vmatprep.mubr.f32.mxu0 0.0
        %2672 = vmatmul.mubr.f32.gmra.mxu0 %v2563
        %v2673 = vpop.f32.mrf.mxu0
        %v2674 = vadd.f32 0.0, %v2673
        %v2675 = vpop.f32.mrf.mxu0
        %2676 = vmatprep.mubr.f32.mxu0 0.0
        %2677 = vmatmul.mubr.f32.gmra.mxu0 %v2564
        %v2678 = vpop.f32.mrf.mxu0
        %v2679 = vadd.f32 0.0, %v2678
        %v2680 = vpop.f32.mrf.mxu0
        %2681 = vmatprep.mubr.f32.mxu0 0.0
        %2682 = vmatmul.mubr.f32.gmra.mxu0 %v2565
        %v2683 = vpop.f32.mrf.mxu0
        %v2684 = vadd.f32 0.0, %v2683
        %v2685 = vpop.f32.mrf.mxu0
        %2686 = vmatprep.mubr.f32.mxu0 0.0
        %2687 = vmatmul.mubr.f32.gmra.mxu0 %v2566
        %v2688 = vpop.f32.mrf.mxu0
        %v2689 = vadd.f32 0.0, %v2688
        %v2690 = vpop.f32.mrf.mxu0
        %2691 = vmatprep.mubr.f32.mxu0 0.0
        %2692 = vmatmul.mubr.f32.gmra.mxu0 %v2567
        %v2693 = vpop.f32.mrf.mxu0
        %v2694 = vadd.f32 0.0, %v2693
        %v2695 = vpop.f32.mrf.mxu0
        %2696 = vmatprep.mubr.f32.mxu0 0.0
        %2697 = vmatmul.mubr.f32.gmra.mxu0 %v2568
        %v2698 = vpop.f32.mrf.mxu0
        %v2699 = vadd.f32 0.0, %v2698
        %v2700 = vpop.f32.mrf.mxu0
        %2701 = vmatprep.mubr.f32.mxu0 0.0
        %2702 = vmatmul.mubr.f32.gmra.mxu0 %v2569
        %v2703 = vpop.f32.mrf.mxu0
        %v2704 = vadd.f32 0.0, %v2703
        %v2705 = vpop.f32.mrf.mxu0
        %2706 = vmatprep.mubr.f32.mxu0 0.0
        %2707 = vmatmul.mubr.f32.gmra.mxu0 %v2570
        %v2708 = vpop.f32.mrf.mxu0
        %v2709 = vadd.f32 0.0, %v2708
        %v2710 = vpop.f32.mrf.mxu0
        %2711 = vmatprep.mubr.f32.mxu0 0.0
        %2712 = vmatmul.mubr.f32.gmra.mxu0 %v2571
        %v2713 = vpop.f32.mrf.mxu0
        %v2714 = vadd.f32 0.0, %v2713
        %v2715 = vpop.f32.mrf.mxu0
        %2716 = vmatprep.mubr.f32.mxu0 0.0
        %2717 = vmatmul.mubr.f32.gmra.mxu0 %v2572
        %v2718 = vpop.f32.mrf.mxu0
        %v2719 = vadd.f32 0.0, %v2718
        %v2720 = vpop.f32.mrf.mxu0
        %2721 = vmatprep.mubr.f32.mxu0 0.0
        %2722 = vmatmul.mubr.f32.gmra.mxu0 %v2573
        %v2723 = vpop.f32.mrf.mxu0
        %v2724 = vadd.f32 0.0, %v2723
        %v2725 = vpop.f32.mrf.mxu0
        %2726 = vmatprep.mubr.f32.mxu0 0.0
        %2727 = vmatmul.mubr.f32.gmra.mxu0 %v2574
        %v2728 = vpop.f32.mrf.mxu0
        %v2729 = vadd.f32 0.0, %v2728
        %v2730 = vpop.f32.mrf.mxu0
        %2731 = vmatprep.mubr.f32.mxu0 0.0
        %2732 = vmatmul.mubr.f32.gmra.mxu0 %v2575
        %v2733 = vpop.f32.mrf.mxu0
        %v2734 = vadd.f32 0.0, %v2733
        %v2735 = vpop.f32.mrf.mxu0
        %2736 = vdwg.mxu0
        %2737 = vmatprep.subr.mxu0 0.0
        %2738 = vmatpush1.msra.mxu0 %v2205
        %2739 = vmatprep.subr.mxu0 0.0
        %2740 = vmatpush1.msra.mxu0 %v2204
        %2741 = vmatprep.subr.mxu0 0.0
        %2742 = vmatpush1.msra.mxu0 %v2203
        %2743 = vmatprep.subr.mxu0 0.0
        %2744 = vmatpush1.msra.mxu0 %v2202
        %2745 = vmatprep.subr.mxu0 0.0
        %2746 = vmatpush1.msra.mxu0 %v2201
        %2747 = vmatprep.subr.mxu0 0.0
        %2748 = vmatpush1.msra.mxu0 %v2200
        %2749 = vmatprep.subr.mxu0 0.0
        %2750 = vmatpush1.msra.mxu0 %v2199
        %2751 = vmatprep.subr.mxu0 0.0
        %2752 = vmatpush1.msra.mxu0 %v2198
        %2753 = vmatprep.subr.mxu0 0.0
        %2754 = vmatpush1.msra.mxu0 %v2197
        %2755 = vmatprep.subr.mxu0 0.0
        %2756 = vmatpush1.msra.mxu0 %v2196
        %2757 = vmatprep.subr.mxu0 0.0
        %2758 = vmatpush1.msra.mxu0 %v2195
        %2759 = vmatprep.subr.mxu0 0.0
        %2760 = vmatpush1.msra.mxu0 %v2194
        %2761 = vmatprep.subr.mxu0 0.0
        %2762 = vmatpush1.msra.mxu0 %v2193
        %2763 = vmatprep.subr.mxu0 0.0
        %2764 = vmatpush1.msra.mxu0 %v2192
        %2765 = vmatprep.subr.mxu0 0.0
        %2766 = vmatpush1.msra.mxu0 %v2191
        %2767 = vmatprep.subr.mxu0 0.0
        %2768 = vmatpush1.msra.mxu0 %v2190
        %2769 = vmatprep.subr.mxu0 0.0
        %2770 = vmatpush2.msra.mxu0 0.0
        %2771 = vmatprep.subr.mxu0 0.0
        %2772 = vmatpush2.msra.mxu0 0.0
        %2773 = vmatprep.subr.mxu0 0.0
        %2774 = vmatpush2.msra.mxu0 0.0
        %2775 = vmatprep.subr.mxu0 0.0
        %2776 = vmatpush2.msra.mxu0 0.0
        %2777 = vmatprep.subr.mxu0 0.0
        %2778 = vmatpush2.msra.mxu0 0.0
        %2779 = vmatprep.subr.mxu0 0.0
        %2780 = vmatpush2.msra.mxu0 0.0
        %2781 = vmatprep.subr.mxu0 0.0
        %2782 = vmatpush2.msra.mxu0 0.0
        %2783 = vmatprep.subr.mxu0 0.0
        %2784 = vmatpush2.msra.mxu0 0.0
        %2785 = vmatprep.subr.mxu0 0.0
        %2786 = vmatpush2.msra.mxu0 0.0
        %2787 = vmatprep.subr.mxu0 0.0
        %2788 = vmatpush2.msra.mxu0 0.0
        %2789 = vmatprep.subr.mxu0 0.0
        %2790 = vmatpush2.msra.mxu0 0.0
        %2791 = vmatprep.subr.mxu0 0.0
        %2792 = vmatpush2.msra.mxu0 0.0
        %2793 = vmatprep.subr.mxu0 0.0
        %2794 = vmatpush2.msra.mxu0 0.0
        %2795 = vmatprep.subr.mxu0 0.0
        %2796 = vmatpush2.msra.mxu0 0.0
        %2797 = vmatprep.subr.mxu0 0.0
        %2798 = vmatpush2.msra.mxu0 0.0
        %2799 = vmatprep.subr.mxu0 0.0
        %2800 = vmatpush2.msra.mxu0 0.0
        %2801 = vmatprep.mubr.f32.mxu0 0.0
        %2802 = vmatmul.mubr.f32.gmra.mxu0 %v2174
        %v2803 = vpop.f32.mrf.mxu0
        %v2804 = vadd.f32 %v2659, %v2803
        %v2805 = vpop.f32.mrf.mxu0
        %2806 = vmatprep.mubr.f32.mxu0 0.0
        %2807 = vmatmul.mubr.f32.gmra.mxu0 %v2175
        %v2808 = vpop.f32.mrf.mxu0
        %v2809 = vadd.f32 %v2664, %v2808
        %v2810 = vpop.f32.mrf.mxu0
        %2811 = vmatprep.mubr.f32.mxu0 0.0
        %2812 = vmatmul.mubr.f32.gmra.mxu0 %v2176
        %v2813 = vpop.f32.mrf.mxu0
        %v2814 = vadd.f32 %v2669, %v2813
        %v2815 = vpop.f32.mrf.mxu0
        %2816 = vmatprep.mubr.f32.mxu0 0.0
        %2817 = vmatmul.mubr.f32.gmra.mxu0 %v2177
        %v2818 = vpop.f32.mrf.mxu0
        %v2819 = vadd.f32 %v2674, %v2818
        %v2820 = vpop.f32.mrf.mxu0
        %2821 = vmatprep.mubr.f32.mxu0 0.0
        %2822 = vmatmul.mubr.f32.gmra.mxu0 %v2178
        %v2823 = vpop.f32.mrf.mxu0
        %v2824 = vadd.f32 %v2679, %v2823
        %v2825 = vpop.f32.mrf.mxu0
        %2826 = vmatprep.mubr.f32.mxu0 0.0
        %2827 = vmatmul.mubr.f32.gmra.mxu0 %v2179
        %v2828 = vpop.f32.mrf.mxu0
        %v2829 = vadd.f32 %v2684, %v2828
        %v2830 = vpop.f32.mrf.mxu0
        %2831 = vmatprep.mubr.f32.mxu0 0.0
        %2832 = vmatmul.mubr.f32.gmra.mxu0 %v2180
        %v2833 = vpop.f32.mrf.mxu0
        %v2834 = vadd.f32 %v2689, %v2833
        %v2835 = vpop.f32.mrf.mxu0
        %2836 = vmatprep.mubr.f32.mxu0 0.0
        %2837 = vmatmul.mubr.f32.gmra.mxu0 %v2181
        %v2838 = vpop.f32.mrf.mxu0
        %v2839 = vadd.f32 %v2694, %v2838
        %v2840 = vpop.f32.mrf.mxu0
        %2841 = vmatprep.mubr.f32.mxu0 0.0
        %2842 = vmatmul.mubr.f32.gmra.mxu0 %v2182
        %v2843 = vpop.f32.mrf.mxu0
        %v2844 = vadd.f32 %v2699, %v2843
        %v2845 = vpop.f32.mrf.mxu0
        %2846 = vmatprep.mubr.f32.mxu0 0.0
        %2847 = vmatmul.mubr.f32.gmra.mxu0 %v2183
        %v2848 = vpop.f32.mrf.mxu0
        %v2849 = vadd.f32 %v2704, %v2848
        %v2850 = vpop.f32.mrf.mxu0
        %2851 = vmatprep.mubr.f32.mxu0 0.0
        %2852 = vmatmul.mubr.f32.gmra.mxu0 %v2184
        %v2853 = vpop.f32.mrf.mxu0
        %v2854 = vadd.f32 %v2709, %v2853
        %v2855 = vpop.f32.mrf.mxu0
        %2856 = vmatprep.mubr.f32.mxu0 0.0
        %2857 = vmatmul.mubr.f32.gmra.mxu0 %v2185
        %v2858 = vpop.f32.mrf.mxu0
        %v2859 = vadd.f32 %v2714, %v2858
        %v2860 = vpop.f32.mrf.mxu0
        %2861 = vmatprep.mubr.f32.mxu0 0.0
        %2862 = vmatmul.mubr.f32.gmra.mxu0 %v2186
        %v2863 = vpop.f32.mrf.mxu0
        %v2864 = vadd.f32 %v2719, %v2863
        %v2865 = vpop.f32.mrf.mxu0
        %2866 = vmatprep.mubr.f32.mxu0 0.0
        %2867 = vmatmul.mubr.f32.gmra.mxu0 %v2187
        %v2868 = vpop.f32.mrf.mxu0
        %v2869 = vadd.f32 %v2724, %v2868
        %v2870 = vpop.f32.mrf.mxu0
        %2871 = vmatprep.mubr.f32.mxu0 0.0
        %2872 = vmatmul.mubr.f32.gmra.mxu0 %v2188
        %v2873 = vpop.f32.mrf.mxu0
        %v2874 = vadd.f32 %v2729, %v2873
        %v2875 = vpop.f32.mrf.mxu0
        %2876 = vmatprep.mubr.f32.mxu0 0.0
        %2877 = vmatmul.mubr.f32.gmra.mxu0 %v2189
        %v2878 = vpop.f32.mrf.mxu0
        %v2879 = vadd.f32 %v2734, %v2878
        %v2880 = vpop.f32.mrf.mxu0
        %2881 = vdwg.mxu0
        %v2882 = vmul.f32 %v1449, %v511
        %v2883 = vmul.f32 %v1450, %v511
        %v2884 = vmul.f32 %v1451, %v511
        %v2885 = vmul.f32 %v1452, %v511
        %v2886 = vmul.f32 %v1453, %v511
        %v2887 = vmul.f32 %v1454, %v511
        %v2888 = vmul.f32 %v1455, %v511
        %v2889 = vmul.f32 %v1456, %v511
        %v2890 = vmul.f32 %v1457, %v511
        %v2891 = vmul.f32 %v1458, %v511
        %v2892 = vmul.f32 %v1459, %v511
        %v2893 = vmul.f32 %v1460, %v511
        %v2894 = vmul.f32 %v1461, %v511
        %v2895 = vmul.f32 %v1462, %v511
        %v2896 = vmul.f32 %v1463, %v511
        %v2897 = vmul.f32 %v1464, %v511
        %s2898 = scalar_lea.vmem %s9, 256
        %v2899 = vld [vmem:[%s2898] sm:$0xff]
        %v2900 = vld [vmem:[%s2898 + $0x8] sm:$0xff]
        %v2901 = vld [vmem:[%s2898 + $0x10] sm:$0xff]
        %v2902 = vld [vmem:[%s2898 + $0x18] sm:$0xff]
        %v2903 = vld [vmem:[%s2898 + $0x20] sm:$0xff]
        %v2904 = vld [vmem:[%s2898 + $0x28] sm:$0xff]
        %v2905 = vld [vmem:[%s2898 + $0x30] sm:$0xff]
        %v2906 = vld [vmem:[%s2898 + $0x38] sm:$0xff]
        %v2907 = vld [vmem:[%s2898 + $0x40] sm:$0xff]
        %v2908 = vld [vmem:[%s2898 + $0x48] sm:$0xff]
        %v2909 = vld [vmem:[%s2898 + $0x50] sm:$0xff]
        %v2910 = vld [vmem:[%s2898 + $0x58] sm:$0xff]
        %v2911 = vld [vmem:[%s2898 + $0x60] sm:$0xff]
        %v2912 = vld [vmem:[%s2898 + $0x68] sm:$0xff]
        %v2913 = vld [vmem:[%s2898 + $0x70] sm:$0xff]
        %v2914 = vld [vmem:[%s2898 + $0x78] sm:$0xff]
        %v2916 = vsel %vm740, %v2882, 0
        %v2919 = vsel %vm740, %v2883, 0
        %v2922 = vsel %vm740, %v2884, 0
        %v2925 = vsel %vm740, %v2885, 0
        %v2928 = vsel %vm740, %v2886, 0
        %v2931 = vsel %vm740, %v2887, 0
        %v2934 = vsel %vm740, %v2888, 0
        %v2937 = vsel %vm740, %v2889, 0
        %v2940 = vsel %vm740, %v2890, 0
        %v2943 = vsel %vm740, %v2891, 0
        %v2946 = vsel %vm740, %v2892, 0
        %v2949 = vsel %vm740, %v2893, 0
        %v2952 = vsel %vm740, %v2894, 0
        %v2955 = vsel %vm740, %v2895, 0
        %v2958 = vsel %vm740, %v2896, 0
        %v2961 = vsel %vm740, %v2897, 0
        %2963 = vmatprep.subr.mxu0 0.0
        %2964 = vmatpush1.xpose.msra.mxu0 %v1899
        %2965 = vmatprep.subr.mxu0 0.0
        %2966 = vmatpush1.xpose.msra.mxu0 %v1896
        %2967 = vmatprep.subr.mxu0 0.0
        %2968 = vmatpush1.xpose.msra.mxu0 %v1893
        %2969 = vmatprep.subr.mxu0 0.0
        %2970 = vmatpush1.xpose.msra.mxu0 %v1890
        %2971 = vmatprep.subr.mxu0 0.0
        %2972 = vmatpush1.xpose.msra.mxu0 %v1887
        %2973 = vmatprep.subr.mxu0 0.0
        %2974 = vmatpush1.xpose.msra.mxu0 %v1884
        %2975 = vmatprep.subr.mxu0 0.0
        %2976 = vmatpush1.xpose.msra.mxu0 %v1881
        %2977 = vmatprep.subr.mxu0 0.0
        %2978 = vmatpush1.xpose.msra.mxu0 %v1878
        %2979 = vmatprep.subr.mxu0 0.0
        %2980 = vmatpush1.xpose.msra.mxu0 %v1875
        %2981 = vmatprep.subr.mxu0 0.0
        %2982 = vmatpush1.xpose.msra.mxu0 %v1872
        %2983 = vmatprep.subr.mxu0 0.0
        %2984 = vmatpush1.xpose.msra.mxu0 %v1869
        %2985 = vmatprep.subr.mxu0 0.0
        %2986 = vmatpush1.xpose.msra.mxu0 %v1866
        %2987 = vmatprep.subr.mxu0 0.0
        %2988 = vmatpush1.xpose.msra.mxu0 %v1863
        %2989 = vmatprep.subr.mxu0 0.0
        %2990 = vmatpush1.xpose.msra.mxu0 %v1860
        %2991 = vmatprep.subr.mxu0 0.0
        %2992 = vmatpush1.xpose.msra.mxu0 %v1857
        %2993 = vmatprep.subr.mxu0 0.0
        %2994 = vmatpush1.xpose.msra.mxu0 %v1854
        %2995 = vmatprep.subr.mxu0 0.0
        %2996 = vmatpush2.xpose.msra.mxu0 0.0
        %2997 = vmatprep.subr.mxu0 0.0
        %2998 = vmatpush2.xpose.msra.mxu0 0.0
        %2999 = vmatprep.subr.mxu0 0.0
        %3000 = vmatpush2.xpose.msra.mxu0 0.0
        %3001 = vmatprep.subr.mxu0 0.0
        %3002 = vmatpush2.xpose.msra.mxu0 0.0
        %3003 = vmatprep.subr.mxu0 0.0
        %3004 = vmatpush2.xpose.msra.mxu0 0.0
        %3005 = vmatprep.subr.mxu0 0.0
        %3006 = vmatpush2.xpose.msra.mxu0 0.0
        %3007 = vmatprep.subr.mxu0 0.0
        %3008 = vmatpush2.xpose.msra.mxu0 0.0
        %3009 = vmatprep.subr.mxu0 0.0
        %3010 = vmatpush2.xpose.msra.mxu0 0.0
        %3011 = vmatprep.subr.mxu0 0.0
        %3012 = vmatpush2.xpose.msra.mxu0 0.0
        %3013 = vmatprep.subr.mxu0 0.0
        %3014 = vmatpush2.xpose.msra.mxu0 0.0
        %3015 = vmatprep.subr.mxu0 0.0
        %3016 = vmatpush2.xpose.msra.mxu0 0.0
        %3017 = vmatprep.subr.mxu0 0.0
        %3018 = vmatpush2.xpose.msra.mxu0 0.0
        %3019 = vmatprep.subr.mxu0 0.0
        %3020 = vmatpush2.xpose.msra.mxu0 0.0
        %3021 = vmatprep.subr.mxu0 0.0
        %3022 = vmatpush2.xpose.msra.mxu0 0.0
        %3023 = vmatprep.subr.mxu0 0.0
        %3024 = vmatpush2.xpose.msra.mxu0 0.0
        %3025 = vmatprep.subr.mxu0 0.0
        %3026 = vmatpush2.xpose.msra.mxu0 0.0
        %3027 = vmatprep.mubr.f32.mxu0 0.0
        %3028 = vmatmul.mubr.f32.gmra.mxu0 %v2916
        %v3029 = vpop.f32.mrf.mxu0
        %v3030 = vadd.f32 %v2899, %v3029
        %v3031 = vpop.f32.mrf.mxu0
        %3032 = vmatprep.mubr.f32.mxu0 0.0
        %3033 = vmatmul.mubr.f32.gmra.mxu0 %v2919
        %v3034 = vpop.f32.mrf.mxu0
        %v3035 = vadd.f32 %v2900, %v3034
        %v3036 = vpop.f32.mrf.mxu0
        %3037 = vmatprep.mubr.f32.mxu0 0.0
        %3038 = vmatmul.mubr.f32.gmra.mxu0 %v2922
        %v3039 = vpop.f32.mrf.mxu0
        %v3040 = vadd.f32 %v2901, %v3039
        %v3041 = vpop.f32.mrf.mxu0
        %3042 = vmatprep.mubr.f32.mxu0 0.0
        %3043 = vmatmul.mubr.f32.gmra.mxu0 %v2925
        %v3044 = vpop.f32.mrf.mxu0
        %v3045 = vadd.f32 %v2902, %v3044
        %v3046 = vpop.f32.mrf.mxu0
        %3047 = vmatprep.mubr.f32.mxu0 0.0
        %3048 = vmatmul.mubr.f32.gmra.mxu0 %v2928
        %v3049 = vpop.f32.mrf.mxu0
        %v3050 = vadd.f32 %v2903, %v3049
        %v3051 = vpop.f32.mrf.mxu0
        %3052 = vmatprep.mubr.f32.mxu0 0.0
        %3053 = vmatmul.mubr.f32.gmra.mxu0 %v2931
        %v3054 = vpop.f32.mrf.mxu0
        %v3055 = vadd.f32 %v2904, %v3054
        %v3056 = vpop.f32.mrf.mxu0
        %3057 = vmatprep.mubr.f32.mxu0 0.0
        %3058 = vmatmul.mubr.f32.gmra.mxu0 %v2934
        %v3059 = vpop.f32.mrf.mxu0
        %v3060 = vadd.f32 %v2905, %v3059
        %v3061 = vpop.f32.mrf.mxu0
        %3062 = vmatprep.mubr.f32.mxu0 0.0
        %3063 = vmatmul.mubr.f32.gmra.mxu0 %v2937
        %v3064 = vpop.f32.mrf.mxu0
        %v3065 = vadd.f32 %v2906, %v3064
        %v3066 = vpop.f32.mrf.mxu0
        %3067 = vmatprep.mubr.f32.mxu0 0.0
        %3068 = vmatmul.mubr.f32.gmra.mxu0 %v2940
        %v3069 = vpop.f32.mrf.mxu0
        %v3070 = vadd.f32 %v2907, %v3069
        %v3071 = vpop.f32.mrf.mxu0
        %3072 = vmatprep.mubr.f32.mxu0 0.0
        %3073 = vmatmul.mubr.f32.gmra.mxu0 %v2943
        %v3074 = vpop.f32.mrf.mxu0
        %v3075 = vadd.f32 %v2908, %v3074
        %v3076 = vpop.f32.mrf.mxu0
        %3077 = vmatprep.mubr.f32.mxu0 0.0
        %3078 = vmatmul.mubr.f32.gmra.mxu0 %v2946
        %v3079 = vpop.f32.mrf.mxu0
        %v3080 = vadd.f32 %v2909, %v3079
        %v3081 = vpop.f32.mrf.mxu0
        %3082 = vmatprep.mubr.f32.mxu0 0.0
        %3083 = vmatmul.mubr.f32.gmra.mxu0 %v2949
        %v3084 = vpop.f32.mrf.mxu0
        %v3085 = vadd.f32 %v2910, %v3084
        %v3086 = vpop.f32.mrf.mxu0
        %3087 = vmatprep.mubr.f32.mxu0 0.0
        %3088 = vmatmul.mubr.f32.gmra.mxu0 %v2952
        %v3089 = vpop.f32.mrf.mxu0
        %v3090 = vadd.f32 %v2911, %v3089
        %v3091 = vpop.f32.mrf.mxu0
        %3092 = vmatprep.mubr.f32.mxu0 0.0
        %3093 = vmatmul.mubr.f32.gmra.mxu0 %v2955
        %v3094 = vpop.f32.mrf.mxu0
        %v3095 = vadd.f32 %v2912, %v3094
        %v3096 = vpop.f32.mrf.mxu0
        %3097 = vmatprep.mubr.f32.mxu0 0.0
        %3098 = vmatmul.mubr.f32.gmra.mxu0 %v2958
        %v3099 = vpop.f32.mrf.mxu0
        %v3100 = vadd.f32 %v2913, %v3099
        %v3101 = vpop.f32.mrf.mxu0
        %3102 = vmatprep.mubr.f32.mxu0 0.0
        %3103 = vmatmul.mubr.f32.gmra.mxu0 %v2961
        %v3104 = vpop.f32.mrf.mxu0
        %v3105 = vadd.f32 %v2914, %v3104
        %v3106 = vpop.f32.mrf.mxu0
        %3107 = vdwg.mxu0
        %3108 = vmax.xlane.f32.xlu0 %v3030
        %v3109 = vpop.xlane.xlu0 %3108
        %3110 = vmax.xlane.f32.xlu0 %v3035
        %v3111 = vpop.xlane.xlu0 %3110
        %3112 = vmax.xlane.f32.xlu0 %v3040
        %v3113 = vpop.xlane.xlu0 %3112
        %3114 = vmax.xlane.f32.xlu0 %v3045
        %v3115 = vpop.xlane.xlu0 %3114
        %3116 = vmax.xlane.f32.xlu0 %v3050
        %v3117 = vpop.xlane.xlu0 %3116
        %3118 = vmax.xlane.f32.xlu0 %v3055
        %v3119 = vpop.xlane.xlu0 %3118
        %3120 = vmax.xlane.f32.xlu0 %v3060
        %v3121 = vpop.xlane.xlu0 %3120
        %3122 = vmax.xlane.f32.xlu0 %v3065
        %v3123 = vpop.xlane.xlu0 %3122
        %3124 = vmax.xlane.f32.xlu0 %v3070
        %v3125 = vpop.xlane.xlu0 %3124
        %3126 = vmax.xlane.f32.xlu0 %v3075
        %v3127 = vpop.xlane.xlu0 %3126
        %3128 = vmax.xlane.f32.xlu0 %v3080
        %v3129 = vpop.xlane.xlu0 %3128
        %3130 = vmax.xlane.f32.xlu0 %v3085
        %v3131 = vpop.xlane.xlu0 %3130
        %3132 = vmax.xlane.f32.xlu0 %v3090
        %v3133 = vpop.xlane.xlu0 %3132
        %3134 = vmax.xlane.f32.xlu0 %v3095
        %v3135 = vpop.xlane.xlu0 %3134
        %3136 = vmax.xlane.f32.xlu0 %v3100
        %v3137 = vpop.xlane.xlu0 %3136
        %3138 = vmax.xlane.f32.xlu0 %v3105
        %v3139 = vpop.xlane.xlu0 %3138
        %v3140 = vsub.f32 %v3030, %v3109
        %v3141 = vsub.f32 %v3035, %v3111
        %v3142 = vsub.f32 %v3040, %v3113
        %v3143 = vsub.f32 %v3045, %v3115
        %v3144 = vsub.f32 %v3050, %v3117
        %v3145 = vsub.f32 %v3055, %v3119
        %v3146 = vsub.f32 %v3060, %v3121
        %v3147 = vsub.f32 %v3065, %v3123
        %v3148 = vsub.f32 %v3070, %v3125
        %v3149 = vsub.f32 %v3075, %v3127
        %v3150 = vsub.f32 %v3080, %v3129
        %v3151 = vsub.f32 %v3085, %v3131
        %v3152 = vsub.f32 %v3090, %v3133
        %v3153 = vsub.f32 %v3095, %v3135
        %v3154 = vsub.f32 %v3100, %v3137
        %v3155 = vsub.f32 %v3105, %v3139
        %v3156 = vmul.f32 %v3140, 1.442695
        %v3157 = vpow.pop %v3156
        %v3158 = vmul.f32 %v3141, 1.442695
        %v3159 = vpow.pop %v3158
        %v3160 = vmul.f32 %v3142, 1.442695
        %v3161 = vpow.pop %v3160
        %v3162 = vmul.f32 %v3143, 1.442695
        %v3163 = vpow.pop %v3162
        %v3164 = vmul.f32 %v3144, 1.442695
        %v3165 = vpow.pop %v3164
        %v3166 = vmul.f32 %v3145, 1.442695
        %v3167 = vpow.pop %v3166
        %v3168 = vmul.f32 %v3146, 1.442695
        %v3169 = vpow.pop %v3168
        %v3170 = vmul.f32 %v3147, 1.442695
        %v3171 = vpow.pop %v3170
        %v3172 = vmul.f32 %v3148, 1.442695
        %v3173 = vpow.pop %v3172
        %v3174 = vmul.f32 %v3149, 1.442695
        %v3175 = vpow.pop %v3174
        %v3176 = vmul.f32 %v3150, 1.442695
        %v3177 = vpow.pop %v3176
        %v3178 = vmul.f32 %v3151, 1.442695
        %v3179 = vpow.pop %v3178
        %v3180 = vmul.f32 %v3152, 1.442695
        %v3181 = vpow.pop %v3180
        %v3182 = vmul.f32 %v3153, 1.442695
        %v3183 = vpow.pop %v3182
        %v3184 = vmul.f32 %v3154, 1.442695
        %v3185 = vpow.pop %v3184
        %v3186 = vmul.f32 %v3155, 1.442695
        %v3187 = vpow.pop %v3186
        %3188 = vadd.xlane.f32.xlu0 %v3157
        %v3189 = vpop.xlane.xlu0 %3188
        %3190 = vadd.xlane.f32.xlu0 %v3159
        %v3191 = vpop.xlane.xlu0 %3190
        %3192 = vadd.xlane.f32.xlu0 %v3161
        %v3193 = vpop.xlane.xlu0 %3192
        %3194 = vadd.xlane.f32.xlu0 %v3163
        %v3195 = vpop.xlane.xlu0 %3194
        %3196 = vadd.xlane.f32.xlu0 %v3165
        %v3197 = vpop.xlane.xlu0 %3196
        %3198 = vadd.xlane.f32.xlu0 %v3167
        %v3199 = vpop.xlane.xlu0 %3198
        %3200 = vadd.xlane.f32.xlu0 %v3169
        %v3201 = vpop.xlane.xlu0 %3200
        %3202 = vadd.xlane.f32.xlu0 %v3171
        %v3203 = vpop.xlane.xlu0 %3202
        %3204 = vadd.xlane.f32.xlu0 %v3173
        %v3205 = vpop.xlane.xlu0 %3204
        %3206 = vadd.xlane.f32.xlu0 %v3175
        %v3207 = vpop.xlane.xlu0 %3206
        %3208 = vadd.xlane.f32.xlu0 %v3177
        %v3209 = vpop.xlane.xlu0 %3208
        %3210 = vadd.xlane.f32.xlu0 %v3179
        %v3211 = vpop.xlane.xlu0 %3210
        %3212 = vadd.xlane.f32.xlu0 %v3181
        %v3213 = vpop.xlane.xlu0 %3212
        %3214 = vadd.xlane.f32.xlu0 %v3183
        %v3215 = vpop.xlane.xlu0 %3214
        %3216 = vadd.xlane.f32.xlu0 %v3185
        %v3217 = vpop.xlane.xlu0 %3216
        %3218 = vadd.xlane.f32.xlu0 %v3187
        %v3219 = vpop.xlane.xlu0 %3218
        %v3220 = vrcp.pop %v3189
        %v3221 = vrcp.pop %v3191
        %v3222 = vrcp.pop %v3193
        %v3223 = vrcp.pop %v3195
        %v3224 = vrcp.pop %v3197
        %v3225 = vrcp.pop %v3199
        %v3226 = vrcp.pop %v3201
        %v3227 = vrcp.pop %v3203
        %v3228 = vrcp.pop %v3205
        %v3229 = vrcp.pop %v3207
        %v3230 = vrcp.pop %v3209
        %v3231 = vrcp.pop %v3211
        %v3232 = vrcp.pop %v3213
        %v3233 = vrcp.pop %v3215
        %v3234 = vrcp.pop %v3217
        %v3235 = vrcp.pop %v3219
        %v3236 = vmul.f32 %v3157, %v3220
        %v3237 = vmul.f32 %v3159, %v3221
        %v3238 = vmul.f32 %v3161, %v3222
        %v3239 = vmul.f32 %v3163, %v3223
        %v3240 = vmul.f32 %v3165, %v3224
        %v3241 = vmul.f32 %v3167, %v3225
        %v3242 = vmul.f32 %v3169, %v3226
        %v3243 = vmul.f32 %v3171, %v3227
        %v3244 = vmul.f32 %v3173, %v3228
        %v3245 = vmul.f32 %v3175, %v3229
        %v3246 = vmul.f32 %v3177, %v3230
        %v3247 = vmul.f32 %v3179, %v3231
        %v3248 = vmul.f32 %v3181, %v3232
        %v3249 = vmul.f32 %v3183, %v3233
        %v3250 = vmul.f32 %v3185, %v3234
        %v3251 = vmul.f32 %v3187, %v3235
        %v3252 = vmul.f32 %v1695, %v511
        %v3253 = vmul.f32 %v1700, %v511
        %v3254 = vmul.f32 %v1705, %v511
        %v3255 = vmul.f32 %v1710, %v511
        %v3256 = vmul.f32 %v1715, %v511
        %v3257 = vmul.f32 %v1720, %v511
        %v3258 = vmul.f32 %v1725, %v511
        %v3259 = vmul.f32 %v1730, %v511
        %v3260 = vmul.f32 %v1735, %v511
        %v3261 = vmul.f32 %v1740, %v511
        %v3262 = vmul.f32 %v1745, %v511
        %v3263 = vmul.f32 %v1750, %v511
        %v3264 = vmul.f32 %v1755, %v511
        %v3265 = vmul.f32 %v1760, %v511
        %v3266 = vmul.f32 %v1765, %v511
        %v3267 = vmul.f32 %v1770, %v511
        %3268 = vmatprep.subr.mxu0 0.0
        %3269 = vmatpush1.msra.mxu0 %v3267
        %3270 = vmatprep.subr.mxu0 0.0
        %3271 = vmatpush1.msra.mxu0 %v3266
        %3272 = vmatprep.subr.mxu0 0.0
        %3273 = vmatpush1.msra.mxu0 %v3265
        %3274 = vmatprep.subr.mxu0 0.0
        %3275 = vmatpush1.msra.mxu0 %v3264
        %3276 = vmatprep.subr.mxu0 0.0
        %3277 = vmatpush1.msra.mxu0 %v3263
        %3278 = vmatprep.subr.mxu0 0.0
        %3279 = vmatpush1.msra.mxu0 %v3262
        %3280 = vmatprep.subr.mxu0 0.0
        %3281 = vmatpush1.msra.mxu0 %v3261
        %3282 = vmatprep.subr.mxu0 0.0
        %3283 = vmatpush1.msra.mxu0 %v3260
        %3284 = vmatprep.subr.mxu0 0.0
        %3285 = vmatpush1.msra.mxu0 %v3259
        %3286 = vmatprep.subr.mxu0 0.0
        %3287 = vmatpush1.msra.mxu0 %v3258
        %3288 = vmatprep.subr.mxu0 0.0
        %3289 = vmatpush1.msra.mxu0 %v3257
        %3290 = vmatprep.subr.mxu0 0.0
        %3291 = vmatpush1.msra.mxu0 %v3256
        %3292 = vmatprep.subr.mxu0 0.0
        %3293 = vmatpush1.msra.mxu0 %v3255
        %3294 = vmatprep.subr.mxu0 0.0
        %3295 = vmatpush1.msra.mxu0 %v3254
        %3296 = vmatprep.subr.mxu0 0.0
        %3297 = vmatpush1.msra.mxu0 %v3253
        %3298 = vmatprep.subr.mxu0 0.0
        %3299 = vmatpush1.msra.mxu0 %v3252
        %3300 = vmatprep.subr.mxu0 0.0
        %3301 = vmatpush2.msra.mxu0 0.0
        %3302 = vmatprep.subr.mxu0 0.0
        %3303 = vmatpush2.msra.mxu0 0.0
        %3304 = vmatprep.subr.mxu0 0.0
        %3305 = vmatpush2.msra.mxu0 0.0
        %3306 = vmatprep.subr.mxu0 0.0
        %3307 = vmatpush2.msra.mxu0 0.0
        %3308 = vmatprep.subr.mxu0 0.0
        %3309 = vmatpush2.msra.mxu0 0.0
        %3310 = vmatprep.subr.mxu0 0.0
        %3311 = vmatpush2.msra.mxu0 0.0
        %3312 = vmatprep.subr.mxu0 0.0
        %3313 = vmatpush2.msra.mxu0 0.0
        %3314 = vmatprep.subr.mxu0 0.0
        %3315 = vmatpush2.msra.mxu0 0.0
        %3316 = vmatprep.subr.mxu0 0.0
        %3317 = vmatpush2.msra.mxu0 0.0
        %3318 = vmatprep.subr.mxu0 0.0
        %3319 = vmatpush2.msra.mxu0 0.0
        %3320 = vmatprep.subr.mxu0 0.0
        %3321 = vmatpush2.msra.mxu0 0.0
        %3322 = vmatprep.subr.mxu0 0.0
        %3323 = vmatpush2.msra.mxu0 0.0
        %3324 = vmatprep.subr.mxu0 0.0
        %3325 = vmatpush2.msra.mxu0 0.0
        %3326 = vmatprep.subr.mxu0 0.0
        %3327 = vmatpush2.msra.mxu0 0.0
        %3328 = vmatprep.subr.mxu0 0.0
        %3329 = vmatpush2.msra.mxu0 0.0
        %3330 = vmatprep.subr.mxu0 0.0
        %3331 = vmatpush2.msra.mxu0 0.0
        %3332 = vmatprep.mubr.f32.mxu0 0.0
        %3333 = vmatmul.mubr.f32.gmra.mxu0 %v3236
        %v3334 = vpop.f32.mrf.mxu0
        %v3335 = vadd.f32 0.0, %v3334
        %v3336 = vpop.f32.mrf.mxu0
        %3337 = vmatprep.mubr.f32.mxu0 0.0
        %3338 = vmatmul.mubr.f32.gmra.mxu0 %v3237
        %v3339 = vpop.f32.mrf.mxu0
        %v3340 = vadd.f32 0.0, %v3339
        %v3341 = vpop.f32.mrf.mxu0
        %3342 = vmatprep.mubr.f32.mxu0 0.0
        %3343 = vmatmul.mubr.f32.gmra.mxu0 %v3238
        %v3344 = vpop.f32.mrf.mxu0
        %v3345 = vadd.f32 0.0, %v3344
        %v3346 = vpop.f32.mrf.mxu0
        %3347 = vmatprep.mubr.f32.mxu0 0.0
        %3348 = vmatmul.mubr.f32.gmra.mxu0 %v3239
        %v3349 = vpop.f32.mrf.mxu0
        %v3350 = vadd.f32 0.0, %v3349
        %v3351 = vpop.f32.mrf.mxu0
        %3352 = vmatprep.mubr.f32.mxu0 0.0
        %3353 = vmatmul.mubr.f32.gmra.mxu0 %v3240
        %v3354 = vpop.f32.mrf.mxu0
        %v3355 = vadd.f32 0.0, %v3354
        %v3356 = vpop.f32.mrf.mxu0
        %3357 = vmatprep.mubr.f32.mxu0 0.0
        %3358 = vmatmul.mubr.f32.gmra.mxu0 %v3241
        %v3359 = vpop.f32.mrf.mxu0
        %v3360 = vadd.f32 0.0, %v3359
        %v3361 = vpop.f32.mrf.mxu0
        %3362 = vmatprep.mubr.f32.mxu0 0.0
        %3363 = vmatmul.mubr.f32.gmra.mxu0 %v3242
        %v3364 = vpop.f32.mrf.mxu0
        %v3365 = vadd.f32 0.0, %v3364
        %v3366 = vpop.f32.mrf.mxu0
        %3367 = vmatprep.mubr.f32.mxu0 0.0
        %3368 = vmatmul.mubr.f32.gmra.mxu0 %v3243
        %v3369 = vpop.f32.mrf.mxu0
        %v3370 = vadd.f32 0.0, %v3369
        %v3371 = vpop.f32.mrf.mxu0
        %3372 = vmatprep.mubr.f32.mxu0 0.0
        %3373 = vmatmul.mubr.f32.gmra.mxu0 %v3244
        %v3374 = vpop.f32.mrf.mxu0
        %v3375 = vadd.f32 0.0, %v3374
        %v3376 = vpop.f32.mrf.mxu0
        %3377 = vmatprep.mubr.f32.mxu0 0.0
        %3378 = vmatmul.mubr.f32.gmra.mxu0 %v3245
        %v3379 = vpop.f32.mrf.mxu0
        %v3380 = vadd.f32 0.0, %v3379
        %v3381 = vpop.f32.mrf.mxu0
        %3382 = vmatprep.mubr.f32.mxu0 0.0
        %3383 = vmatmul.mubr.f32.gmra.mxu0 %v3246
        %v3384 = vpop.f32.mrf.mxu0
        %v3385 = vadd.f32 0.0, %v3384
        %v3386 = vpop.f32.mrf.mxu0
        %3387 = vmatprep.mubr.f32.mxu0 0.0
        %3388 = vmatmul.mubr.f32.gmra.mxu0 %v3247
        %v3389 = vpop.f32.mrf.mxu0
        %v3390 = vadd.f32 0.0, %v3389
        %v3391 = vpop.f32.mrf.mxu0
        %3392 = vmatprep.mubr.f32.mxu0 0.0
        %3393 = vmatmul.mubr.f32.gmra.mxu0 %v3248
        %v3394 = vpop.f32.mrf.mxu0
        %v3395 = vadd.f32 0.0, %v3394
        %v3396 = vpop.f32.mrf.mxu0
        %3397 = vmatprep.mubr.f32.mxu0 0.0
        %3398 = vmatmul.mubr.f32.gmra.mxu0 %v3249
        %v3399 = vpop.f32.mrf.mxu0
        %v3400 = vadd.f32 0.0, %v3399
        %v3401 = vpop.f32.mrf.mxu0
        %3402 = vmatprep.mubr.f32.mxu0 0.0
        %3403 = vmatmul.mubr.f32.gmra.mxu0 %v3250
        %v3404 = vpop.f32.mrf.mxu0
        %v3405 = vadd.f32 0.0, %v3404
        %v3406 = vpop.f32.mrf.mxu0
        %3407 = vmatprep.mubr.f32.mxu0 0.0
        %3408 = vmatmul.mubr.f32.gmra.mxu0 %v3251
        %v3409 = vpop.f32.mrf.mxu0
        %v3410 = vadd.f32 0.0, %v3409
        %v3411 = vpop.f32.mrf.mxu0
        %3412 = vdwg.mxu0
        %v3413 = vadd.f32 %v2804, %v3335
        %v3414 = vadd.f32 %v2809, %v3340
        %v3415 = vadd.f32 %v2814, %v3345
        %v3416 = vadd.f32 %v2819, %v3350
        %v3417 = vadd.f32 %v2824, %v3355
        %v3418 = vadd.f32 %v2829, %v3360
        %v3419 = vadd.f32 %v2834, %v3365
        %v3420 = vadd.f32 %v2839, %v3370
        %v3421 = vadd.f32 %v2844, %v3375
        %v3422 = vadd.f32 %v2849, %v3380
        %v3423 = vadd.f32 %v2854, %v3385
        %v3424 = vadd.f32 %v2859, %v3390
        %v3425 = vadd.f32 %v2864, %v3395
        %v3426 = vadd.f32 %v2869, %v3400
        %v3427 = vadd.f32 %v2874, %v3405
        %v3428 = vadd.f32 %v2879, %v3410
        %v3429 = vmul.f32 %v1449, %v516
        %v3430 = vmul.f32 %v1450, %v516
        %v3431 = vmul.f32 %v1451, %v516
        %v3432 = vmul.f32 %v1452, %v516
        %v3433 = vmul.f32 %v1453, %v516
        %v3434 = vmul.f32 %v1454, %v516
        %v3435 = vmul.f32 %v1455, %v516
        %v3436 = vmul.f32 %v1456, %v516
        %v3437 = vmul.f32 %v1457, %v516
        %v3438 = vmul.f32 %v1458, %v516
        %v3439 = vmul.f32 %v1459, %v516
        %v3440 = vmul.f32 %v1460, %v516
        %v3441 = vmul.f32 %v1461, %v516
        %v3442 = vmul.f32 %v1462, %v516
        %v3443 = vmul.f32 %v1463, %v516
        %v3444 = vmul.f32 %v1464, %v516
        %s3445 = scalar_lea.vmem %s9, 384
        %v3446 = vld [vmem:[%s3445] sm:$0xff]
        %v3447 = vld [vmem:[%s3445 + $0x8] sm:$0xff]
        %v3448 = vld [vmem:[%s3445 + $0x10] sm:$0xff]
        %v3449 = vld [vmem:[%s3445 + $0x18] sm:$0xff]
        %v3450 = vld [vmem:[%s3445 + $0x20] sm:$0xff]
        %v3451 = vld [vmem:[%s3445 + $0x28] sm:$0xff]
        %v3452 = vld [vmem:[%s3445 + $0x30] sm:$0xff]
        %v3453 = vld [vmem:[%s3445 + $0x38] sm:$0xff]
        %v3454 = vld [vmem:[%s3445 + $0x40] sm:$0xff]
        %v3455 = vld [vmem:[%s3445 + $0x48] sm:$0xff]
        %v3456 = vld [vmem:[%s3445 + $0x50] sm:$0xff]
        %v3457 = vld [vmem:[%s3445 + $0x58] sm:$0xff]
        %v3458 = vld [vmem:[%s3445 + $0x60] sm:$0xff]
        %v3459 = vld [vmem:[%s3445 + $0x68] sm:$0xff]
        %v3460 = vld [vmem:[%s3445 + $0x70] sm:$0xff]
        %v3461 = vld [vmem:[%s3445 + $0x78] sm:$0xff]
        %v3463 = vsel %vm740, %v3429, 0
        %v3466 = vsel %vm740, %v3430, 0
        %v3469 = vsel %vm740, %v3431, 0
        %v3472 = vsel %vm740, %v3432, 0
        %v3475 = vsel %vm740, %v3433, 0
        %v3478 = vsel %vm740, %v3434, 0
        %v3481 = vsel %vm740, %v3435, 0
        %v3484 = vsel %vm740, %v3436, 0
        %v3487 = vsel %vm740, %v3437, 0
        %v3490 = vsel %vm740, %v3438, 0
        %v3493 = vsel %vm740, %v3439, 0
        %v3496 = vsel %vm740, %v3440, 0
        %v3499 = vsel %vm740, %v3441, 0
        %v3502 = vsel %vm740, %v3442, 0
        %v3505 = vsel %vm740, %v3443, 0
        %v3508 = vsel %vm740, %v3444, 0
        %3510 = vmatprep.subr.mxu0 0.0
        %3511 = vmatpush1.xpose.msra.mxu0 %v1899
        %3512 = vmatprep.subr.mxu0 0.0
        %3513 = vmatpush1.xpose.msra.mxu0 %v1896
        %3514 = vmatprep.subr.mxu0 0.0
        %3515 = vmatpush1.xpose.msra.mxu0 %v1893
        %3516 = vmatprep.subr.mxu0 0.0
        %3517 = vmatpush1.xpose.msra.mxu0 %v1890
        %3518 = vmatprep.subr.mxu0 0.0
        %3519 = vmatpush1.xpose.msra.mxu0 %v1887
        %3520 = vmatprep.subr.mxu0 0.0
        %3521 = vmatpush1.xpose.msra.mxu0 %v1884
        %3522 = vmatprep.subr.mxu0 0.0
        %3523 = vmatpush1.xpose.msra.mxu0 %v1881
        %3524 = vmatprep.subr.mxu0 0.0
        %3525 = vmatpush1.xpose.msra.mxu0 %v1878
        %3526 = vmatprep.subr.mxu0 0.0
        %3527 = vmatpush1.xpose.msra.mxu0 %v1875
        %3528 = vmatprep.subr.mxu0 0.0
        %3529 = vmatpush1.xpose.msra.mxu0 %v1872
        %3530 = vmatprep.subr.mxu0 0.0
        %3531 = vmatpush1.xpose.msra.mxu0 %v1869
        %3532 = vmatprep.subr.mxu0 0.0
        %3533 = vmatpush1.xpose.msra.mxu0 %v1866
        %3534 = vmatprep.subr.mxu0 0.0
        %3535 = vmatpush1.xpose.msra.mxu0 %v1863
        %3536 = vmatprep.subr.mxu0 0.0
        %3537 = vmatpush1.xpose.msra.mxu0 %v1860
        %3538 = vmatprep.subr.mxu0 0.0
        %3539 = vmatpush1.xpose.msra.mxu0 %v1857
        %3540 = vmatprep.subr.mxu0 0.0
        %3541 = vmatpush1.xpose.msra.mxu0 %v1854
        %3542 = vmatprep.subr.mxu0 0.0
        %3543 = vmatpush2.xpose.msra.mxu0 0.0
        %3544 = vmatprep.subr.mxu0 0.0
        %3545 = vmatpush2.xpose.msra.mxu0 0.0
        %3546 = vmatprep.subr.mxu0 0.0
        %3547 = vmatpush2.xpose.msra.mxu0 0.0
        %3548 = vmatprep.subr.mxu0 0.0
        %3549 = vmatpush2.xpose.msra.mxu0 0.0
        %3550 = vmatprep.subr.mxu0 0.0
        %3551 = vmatpush2.xpose.msra.mxu0 0.0
        %3552 = vmatprep.subr.mxu0 0.0
        %3553 = vmatpush2.xpose.msra.mxu0 0.0
        %3554 = vmatprep.subr.mxu0 0.0
        %3555 = vmatpush2.xpose.msra.mxu0 0.0
        %3556 = vmatprep.subr.mxu0 0.0
        %3557 = vmatpush2.xpose.msra.mxu0 0.0
        %3558 = vmatprep.subr.mxu0 0.0
        %3559 = vmatpush2.xpose.msra.mxu0 0.0
        %3560 = vmatprep.subr.mxu0 0.0
        %3561 = vmatpush2.xpose.msra.mxu0 0.0
        %3562 = vmatprep.subr.mxu0 0.0
        %3563 = vmatpush2.xpose.msra.mxu0 0.0
        %3564 = vmatprep.subr.mxu0 0.0
        %3565 = vmatpush2.xpose.msra.mxu0 0.0
        %3566 = vmatprep.subr.mxu0 0.0
        %3567 = vmatpush2.xpose.msra.mxu0 0.0
        %3568 = vmatprep.subr.mxu0 0.0
        %3569 = vmatpush2.xpose.msra.mxu0 0.0
        %3570 = vmatprep.subr.mxu0 0.0
        %3571 = vmatpush2.xpose.msra.mxu0 0.0
        %3572 = vmatprep.subr.mxu0 0.0
        %3573 = vmatpush2.xpose.msra.mxu0 0.0
        %3574 = vmatprep.mubr.f32.mxu0 0.0
        %3575 = vmatmul.mubr.f32.gmra.mxu0 %v3463
        %v3576 = vpop.f32.mrf.mxu0
        %v3577 = vadd.f32 %v3446, %v3576
        %v3578 = vpop.f32.mrf.mxu0
        %3579 = vmatprep.mubr.f32.mxu0 0.0
        %3580 = vmatmul.mubr.f32.gmra.mxu0 %v3466
        %v3581 = vpop.f32.mrf.mxu0
        %v3582 = vadd.f32 %v3447, %v3581
        %v3583 = vpop.f32.mrf.mxu0
        %3584 = vmatprep.mubr.f32.mxu0 0.0
        %3585 = vmatmul.mubr.f32.gmra.mxu0 %v3469
        %v3586 = vpop.f32.mrf.mxu0
        %v3587 = vadd.f32 %v3448, %v3586
        %v3588 = vpop.f32.mrf.mxu0
        %3589 = vmatprep.mubr.f32.mxu0 0.0
        %3590 = vmatmul.mubr.f32.gmra.mxu0 %v3472
        %v3591 = vpop.f32.mrf.mxu0
        %v3592 = vadd.f32 %v3449, %v3591
        %v3593 = vpop.f32.mrf.mxu0
        %3594 = vmatprep.mubr.f32.mxu0 0.0
        %3595 = vmatmul.mubr.f32.gmra.mxu0 %v3475
        %v3596 = vpop.f32.mrf.mxu0
        %v3597 = vadd.f32 %v3450, %v3596
        %v3598 = vpop.f32.mrf.mxu0
        %3599 = vmatprep.mubr.f32.mxu0 0.0
        %3600 = vmatmul.mubr.f32.gmra.mxu0 %v3478
        %v3601 = vpop.f32.mrf.mxu0
        %v3602 = vadd.f32 %v3451, %v3601
        %v3603 = vpop.f32.mrf.mxu0
        %3604 = vmatprep.mubr.f32.mxu0 0.0
        %3605 = vmatmul.mubr.f32.gmra.mxu0 %v3481
        %v3606 = vpop.f32.mrf.mxu0
        %v3607 = vadd.f32 %v3452, %v3606
        %v3608 = vpop.f32.mrf.mxu0
        %3609 = vmatprep.mubr.f32.mxu0 0.0
        %3610 = vmatmul.mubr.f32.gmra.mxu0 %v3484
        %v3611 = vpop.f32.mrf.mxu0
        %v3612 = vadd.f32 %v3453, %v3611
        %v3613 = vpop.f32.mrf.mxu0
        %3614 = vmatprep.mubr.f32.mxu0 0.0
        %3615 = vmatmul.mubr.f32.gmra.mxu0 %v3487
        %v3616 = vpop.f32.mrf.mxu0
        %v3617 = vadd.f32 %v3454, %v3616
        %v3618 = vpop.f32.mrf.mxu0
        %3619 = vmatprep.mubr.f32.mxu0 0.0
        %3620 = vmatmul.mubr.f32.gmra.mxu0 %v3490
        %v3621 = vpop.f32.mrf.mxu0
        %v3622 = vadd.f32 %v3455, %v3621
        %v3623 = vpop.f32.mrf.mxu0
        %3624 = vmatprep.mubr.f32.mxu0 0.0
        %3625 = vmatmul.mubr.f32.gmra.mxu0 %v3493
        %v3626 = vpop.f32.mrf.mxu0
        %v3627 = vadd.f32 %v3456, %v3626
        %v3628 = vpop.f32.mrf.mxu0
        %3629 = vmatprep.mubr.f32.mxu0 0.0
        %3630 = vmatmul.mubr.f32.gmra.mxu0 %v3496
        %v3631 = vpop.f32.mrf.mxu0
        %v3632 = vadd.f32 %v3457, %v3631
        %v3633 = vpop.f32.mrf.mxu0
        %3634 = vmatprep.mubr.f32.mxu0 0.0
        %3635 = vmatmul.mubr.f32.gmra.mxu0 %v3499
        %v3636 = vpop.f32.mrf.mxu0
        %v3637 = vadd.f32 %v3458, %v3636
        %v3638 = vpop.f32.mrf.mxu0
        %3639 = vmatprep.mubr.f32.mxu0 0.0
        %3640 = vmatmul.mubr.f32.gmra.mxu0 %v3502
        %v3641 = vpop.f32.mrf.mxu0
        %v3642 = vadd.f32 %v3459, %v3641
        %v3643 = vpop.f32.mrf.mxu0
        %3644 = vmatprep.mubr.f32.mxu0 0.0
        %3645 = vmatmul.mubr.f32.gmra.mxu0 %v3505
        %v3646 = vpop.f32.mrf.mxu0
        %v3647 = vadd.f32 %v3460, %v3646
        %v3648 = vpop.f32.mrf.mxu0
        %3649 = vmatprep.mubr.f32.mxu0 0.0
        %3650 = vmatmul.mubr.f32.gmra.mxu0 %v3508
        %v3651 = vpop.f32.mrf.mxu0
        %v3652 = vadd.f32 %v3461, %v3651
        %v3653 = vpop.f32.mrf.mxu0
        %3654 = vdwg.mxu0
        %3655 = vmax.xlane.f32.xlu0 %v3577
        %v3656 = vpop.xlane.xlu0 %3655
        %3657 = vmax.xlane.f32.xlu0 %v3582
        %v3658 = vpop.xlane.xlu0 %3657
        %3659 = vmax.xlane.f32.xlu0 %v3587
        %v3660 = vpop.xlane.xlu0 %3659
        %3661 = vmax.xlane.f32.xlu0 %v3592
        %v3662 = vpop.xlane.xlu0 %3661
        %3663 = vmax.xlane.f32.xlu0 %v3597
        %v3664 = vpop.xlane.xlu0 %3663
        %3665 = vmax.xlane.f32.xlu0 %v3602
        %v3666 = vpop.xlane.xlu0 %3665
        %3667 = vmax.xlane.f32.xlu0 %v3607
        %v3668 = vpop.xlane.xlu0 %3667
        %3669 = vmax.xlane.f32.xlu0 %v3612
        %v3670 = vpop.xlane.xlu0 %3669
        %3671 = vmax.xlane.f32.xlu0 %v3617
        %v3672 = vpop.xlane.xlu0 %3671
        %3673 = vmax.xlane.f32.xlu0 %v3622
        %v3674 = vpop.xlane.xlu0 %3673
        %3675 = vmax.xlane.f32.xlu0 %v3627
        %v3676 = vpop.xlane.xlu0 %3675
        %3677 = vmax.xlane.f32.xlu0 %v3632
        %v3678 = vpop.xlane.xlu0 %3677
        %3679 = vmax.xlane.f32.xlu0 %v3637
        %v3680 = vpop.xlane.xlu0 %3679
        %3681 = vmax.xlane.f32.xlu0 %v3642
        %v3682 = vpop.xlane.xlu0 %3681
        %3683 = vmax.xlane.f32.xlu0 %v3647
        %v3684 = vpop.xlane.xlu0 %3683
        %3685 = vmax.xlane.f32.xlu0 %v3652
        %v3686 = vpop.xlane.xlu0 %3685
        %v3687 = vsub.f32 %v3577, %v3656
        %v3688 = vsub.f32 %v3582, %v3658
        %v3689 = vsub.f32 %v3587, %v3660
        %v3690 = vsub.f32 %v3592, %v3662
        %v3691 = vsub.f32 %v3597, %v3664
        %v3692 = vsub.f32 %v3602, %v3666
        %v3693 = vsub.f32 %v3607, %v3668
        %v3694 = vsub.f32 %v3612, %v3670
        %v3695 = vsub.f32 %v3617, %v3672
        %v3696 = vsub.f32 %v3622, %v3674
        %v3697 = vsub.f32 %v3627, %v3676
        %v3698 = vsub.f32 %v3632, %v3678
        %v3699 = vsub.f32 %v3637, %v3680
        %v3700 = vsub.f32 %v3642, %v3682
        %v3701 = vsub.f32 %v3647, %v3684
        %v3702 = vsub.f32 %v3652, %v3686
        %v3703 = vmul.f32 %v3687, 1.442695
        %v3704 = vpow.pop %v3703
        %v3705 = vmul.f32 %v3688, 1.442695
        %v3706 = vpow.pop %v3705
        %v3707 = vmul.f32 %v3689, 1.442695
        %v3708 = vpow.pop %v3707
        %v3709 = vmul.f32 %v3690, 1.442695
        %v3710 = vpow.pop %v3709
        %v3711 = vmul.f32 %v3691, 1.442695
        %v3712 = vpow.pop %v3711
        %v3713 = vmul.f32 %v3692, 1.442695
        %v3714 = vpow.pop %v3713
        %v3715 = vmul.f32 %v3693, 1.442695
        %v3716 = vpow.pop %v3715
        %v3717 = vmul.f32 %v3694, 1.442695
        %v3718 = vpow.pop %v3717
        %v3719 = vmul.f32 %v3695, 1.442695
        %v3720 = vpow.pop %v3719
        %v3721 = vmul.f32 %v3696, 1.442695
        %v3722 = vpow.pop %v3721
        %v3723 = vmul.f32 %v3697, 1.442695
        %v3724 = vpow.pop %v3723
        %v3725 = vmul.f32 %v3698, 1.442695
        %v3726 = vpow.pop %v3725
        %v3727 = vmul.f32 %v3699, 1.442695
        %v3728 = vpow.pop %v3727
        %v3729 = vmul.f32 %v3700, 1.442695
        %v3730 = vpow.pop %v3729
        %v3731 = vmul.f32 %v3701, 1.442695
        %v3732 = vpow.pop %v3731
        %v3733 = vmul.f32 %v3702, 1.442695
        %v3734 = vpow.pop %v3733
        %3735 = vadd.xlane.f32.xlu0 %v3704
        %v3736 = vpop.xlane.xlu0 %3735
        %3737 = vadd.xlane.f32.xlu0 %v3706
        %v3738 = vpop.xlane.xlu0 %3737
        %3739 = vadd.xlane.f32.xlu0 %v3708
        %v3740 = vpop.xlane.xlu0 %3739
        %3741 = vadd.xlane.f32.xlu0 %v3710
        %v3742 = vpop.xlane.xlu0 %3741
        %3743 = vadd.xlane.f32.xlu0 %v3712
        %v3744 = vpop.xlane.xlu0 %3743
        %3745 = vadd.xlane.f32.xlu0 %v3714
        %v3746 = vpop.xlane.xlu0 %3745
        %3747 = vadd.xlane.f32.xlu0 %v3716
        %v3748 = vpop.xlane.xlu0 %3747
        %3749 = vadd.xlane.f32.xlu0 %v3718
        %v3750 = vpop.xlane.xlu0 %3749
        %3751 = vadd.xlane.f32.xlu0 %v3720
        %v3752 = vpop.xlane.xlu0 %3751
        %3753 = vadd.xlane.f32.xlu0 %v3722
        %v3754 = vpop.xlane.xlu0 %3753
        %3755 = vadd.xlane.f32.xlu0 %v3724
        %v3756 = vpop.xlane.xlu0 %3755
        %3757 = vadd.xlane.f32.xlu0 %v3726
        %v3758 = vpop.xlane.xlu0 %3757
        %3759 = vadd.xlane.f32.xlu0 %v3728
        %v3760 = vpop.xlane.xlu0 %3759
        %3761 = vadd.xlane.f32.xlu0 %v3730
        %v3762 = vpop.xlane.xlu0 %3761
        %3763 = vadd.xlane.f32.xlu0 %v3732
        %v3764 = vpop.xlane.xlu0 %3763
        %3765 = vadd.xlane.f32.xlu0 %v3734
        %v3766 = vpop.xlane.xlu0 %3765
        %v3767 = vrcp.pop %v3736
        %v3768 = vrcp.pop %v3738
        %v3769 = vrcp.pop %v3740
        %v3770 = vrcp.pop %v3742
        %v3771 = vrcp.pop %v3744
        %v3772 = vrcp.pop %v3746
        %v3773 = vrcp.pop %v3748
        %v3774 = vrcp.pop %v3750
        %v3775 = vrcp.pop %v3752
        %v3776 = vrcp.pop %v3754
        %v3777 = vrcp.pop %v3756
        %v3778 = vrcp.pop %v3758
        %v3779 = vrcp.pop %v3760
        %v3780 = vrcp.pop %v3762
        %v3781 = vrcp.pop %v3764
        %v3782 = vrcp.pop %v3766
        %v3783 = vmul.f32 %v3704, %v3767
        %v3784 = vmul.f32 %v3706, %v3768
        %v3785 = vmul.f32 %v3708, %v3769
        %v3786 = vmul.f32 %v3710, %v3770
        %v3787 = vmul.f32 %v3712, %v3771
        %v3788 = vmul.f32 %v3714, %v3772
        %v3789 = vmul.f32 %v3716, %v3773
        %v3790 = vmul.f32 %v3718, %v3774
        %v3791 = vmul.f32 %v3720, %v3775
        %v3792 = vmul.f32 %v3722, %v3776
        %v3793 = vmul.f32 %v3724, %v3777
        %v3794 = vmul.f32 %v3726, %v3778
        %v3795 = vmul.f32 %v3728, %v3779
        %v3796 = vmul.f32 %v3730, %v3780
        %v3797 = vmul.f32 %v3732, %v3781
        %v3798 = vmul.f32 %v3734, %v3782
        %v3799 = vmul.f32 %v1695, %v516
        %v3800 = vmul.f32 %v1700, %v516
        %v3801 = vmul.f32 %v1705, %v516
        %v3802 = vmul.f32 %v1710, %v516
        %v3803 = vmul.f32 %v1715, %v516
        %v3804 = vmul.f32 %v1720, %v516
        %v3805 = vmul.f32 %v1725, %v516
        %v3806 = vmul.f32 %v1730, %v516
        %v3807 = vmul.f32 %v1735, %v516
        %v3808 = vmul.f32 %v1740, %v516
        %v3809 = vmul.f32 %v1745, %v516
        %v3810 = vmul.f32 %v1750, %v516
        %v3811 = vmul.f32 %v1755, %v516
        %v3812 = vmul.f32 %v1760, %v516
        %v3813 = vmul.f32 %v1765, %v516
        %v3814 = vmul.f32 %v1770, %v516
        %3815 = vmatprep.subr.mxu0 0.0
        %3816 = vmatpush1.msra.mxu0 %v3814
        %3817 = vmatprep.subr.mxu0 0.0
        %3818 = vmatpush1.msra.mxu0 %v3813
        %3819 = vmatprep.subr.mxu0 0.0
        %3820 = vmatpush1.msra.mxu0 %v3812
        %3821 = vmatprep.subr.mxu0 0.0
        %3822 = vmatpush1.msra.mxu0 %v3811
        %3823 = vmatprep.subr.mxu0 0.0
        %3824 = vmatpush1.msra.mxu0 %v3810
        %3825 = vmatprep.subr.mxu0 0.0
        %3826 = vmatpush1.msra.mxu0 %v3809
        %3827 = vmatprep.subr.mxu0 0.0
        %3828 = vmatpush1.msra.mxu0 %v3808
        %3829 = vmatprep.subr.mxu0 0.0
        %3830 = vmatpush1.msra.mxu0 %v3807
        %3831 = vmatprep.subr.mxu0 0.0
        %3832 = vmatpush1.msra.mxu0 %v3806
        %3833 = vmatprep.subr.mxu0 0.0
        %3834 = vmatpush1.msra.mxu0 %v3805
        %3835 = vmatprep.subr.mxu0 0.0
        %3836 = vmatpush1.msra.mxu0 %v3804
        %3837 = vmatprep.subr.mxu0 0.0
        %3838 = vmatpush1.msra.mxu0 %v3803
        %3839 = vmatprep.subr.mxu0 0.0
        %3840 = vmatpush1.msra.mxu0 %v3802
        %3841 = vmatprep.subr.mxu0 0.0
        %3842 = vmatpush1.msra.mxu0 %v3801
        %3843 = vmatprep.subr.mxu0 0.0
        %3844 = vmatpush1.msra.mxu0 %v3800
        %3845 = vmatprep.subr.mxu0 0.0
        %3846 = vmatpush1.msra.mxu0 %v3799
        %3847 = vmatprep.subr.mxu0 0.0
        %3848 = vmatpush2.msra.mxu0 0.0
        %3849 = vmatprep.subr.mxu0 0.0
        %3850 = vmatpush2.msra.mxu0 0.0
        %3851 = vmatprep.subr.mxu0 0.0
        %3852 = vmatpush2.msra.mxu0 0.0
        %3853 = vmatprep.subr.mxu0 0.0
        %3854 = vmatpush2.msra.mxu0 0.0
        %3855 = vmatprep.subr.mxu0 0.0
        %3856 = vmatpush2.msra.mxu0 0.0
        %3857 = vmatprep.subr.mxu0 0.0
        %3858 = vmatpush2.msra.mxu0 0.0
        %3859 = vmatprep.subr.mxu0 0.0
        %3860 = vmatpush2.msra.mxu0 0.0
        %3861 = vmatprep.subr.mxu0 0.0
        %3862 = vmatpush2.msra.mxu0 0.0
        %3863 = vmatprep.subr.mxu0 0.0
        %3864 = vmatpush2.msra.mxu0 0.0
        %3865 = vmatprep.subr.mxu0 0.0
        %3866 = vmatpush2.msra.mxu0 0.0
        %3867 = vmatprep.subr.mxu0 0.0
        %3868 = vmatpush2.msra.mxu0 0.0
        %3869 = vmatprep.subr.mxu0 0.0
        %3870 = vmatpush2.msra.mxu0 0.0
        %3871 = vmatprep.subr.mxu0 0.0
        %3872 = vmatpush2.msra.mxu0 0.0
        %3873 = vmatprep.subr.mxu0 0.0
        %3874 = vmatpush2.msra.mxu0 0.0
        %3875 = vmatprep.subr.mxu0 0.0
        %3876 = vmatpush2.msra.mxu0 0.0
        %3877 = vmatprep.subr.mxu0 0.0
        %3878 = vmatpush2.msra.mxu0 0.0
        %3879 = vmatprep.mubr.f32.mxu0 0.0
        %3880 = vmatmul.mubr.f32.gmra.mxu0 %v3783
        %v3881 = vpop.f32.mrf.mxu0
        %v3882 = vadd.f32 0.0, %v3881
        %v3883 = vpop.f32.mrf.mxu0
        %3884 = vmatprep.mubr.f32.mxu0 0.0
        %3885 = vmatmul.mubr.f32.gmra.mxu0 %v3784
        %v3886 = vpop.f32.mrf.mxu0
        %v3887 = vadd.f32 0.0, %v3886
        %v3888 = vpop.f32.mrf.mxu0
        %3889 = vmatprep.mubr.f32.mxu0 0.0
        %3890 = vmatmul.mubr.f32.gmra.mxu0 %v3785
        %v3891 = vpop.f32.mrf.mxu0
        %v3892 = vadd.f32 0.0, %v3891
        %v3893 = vpop.f32.mrf.mxu0
        %3894 = vmatprep.mubr.f32.mxu0 0.0
        %3895 = vmatmul.mubr.f32.gmra.mxu0 %v3786
        %v3896 = vpop.f32.mrf.mxu0
        %v3897 = vadd.f32 0.0, %v3896
        %v3898 = vpop.f32.mrf.mxu0
        %3899 = vmatprep.mubr.f32.mxu0 0.0
        %3900 = vmatmul.mubr.f32.gmra.mxu0 %v3787
        %v3901 = vpop.f32.mrf.mxu0
        %v3902 = vadd.f32 0.0, %v3901
        %v3903 = vpop.f32.mrf.mxu0
        %3904 = vmatprep.mubr.f32.mxu0 0.0
        %3905 = vmatmul.mubr.f32.gmra.mxu0 %v3788
        %v3906 = vpop.f32.mrf.mxu0
        %v3907 = vadd.f32 0.0, %v3906
        %v3908 = vpop.f32.mrf.mxu0
        %3909 = vmatprep.mubr.f32.mxu0 0.0
        %3910 = vmatmul.mubr.f32.gmra.mxu0 %v3789
        %v3911 = vpop.f32.mrf.mxu0
        %v3912 = vadd.f32 0.0, %v3911
        %v3913 = vpop.f32.mrf.mxu0
        %3914 = vmatprep.mubr.f32.mxu0 0.0
        %3915 = vmatmul.mubr.f32.gmra.mxu0 %v3790
        %v3916 = vpop.f32.mrf.mxu0
        %v3917 = vadd.f32 0.0, %v3916
        %v3918 = vpop.f32.mrf.mxu0
        %3919 = vmatprep.mubr.f32.mxu0 0.0
        %3920 = vmatmul.mubr.f32.gmra.mxu0 %v3791
        %v3921 = vpop.f32.mrf.mxu0
        %v3922 = vadd.f32 0.0, %v3921
        %v3923 = vpop.f32.mrf.mxu0
        %3924 = vmatprep.mubr.f32.mxu0 0.0
        %3925 = vmatmul.mubr.f32.gmra.mxu0 %v3792
        %v3926 = vpop.f32.mrf.mxu0
        %v3927 = vadd.f32 0.0, %v3926
        %v3928 = vpop.f32.mrf.mxu0
        %3929 = vmatprep.mubr.f32.mxu0 0.0
        %3930 = vmatmul.mubr.f32.gmra.mxu0 %v3793
        %v3931 = vpop.f32.mrf.mxu0
        %v3932 = vadd.f32 0.0, %v3931
        %v3933 = vpop.f32.mrf.mxu0
        %3934 = vmatprep.mubr.f32.mxu0 0.0
        %3935 = vmatmul.mubr.f32.gmra.mxu0 %v3794
        %v3936 = vpop.f32.mrf.mxu0
        %v3937 = vadd.f32 0.0, %v3936
        %v3938 = vpop.f32.mrf.mxu0
        %3939 = vmatprep.mubr.f32.mxu0 0.0
        %3940 = vmatmul.mubr.f32.gmra.mxu0 %v3795
        %v3941 = vpop.f32.mrf.mxu0
        %v3942 = vadd.f32 0.0, %v3941
        %v3943 = vpop.f32.mrf.mxu0
        %3944 = vmatprep.mubr.f32.mxu0 0.0
        %3945 = vmatmul.mubr.f32.gmra.mxu0 %v3796
        %v3946 = vpop.f32.mrf.mxu0
        %v3947 = vadd.f32 0.0, %v3946
        %v3948 = vpop.f32.mrf.mxu0
        %3949 = vmatprep.mubr.f32.mxu0 0.0
        %3950 = vmatmul.mubr.f32.gmra.mxu0 %v3797
        %v3951 = vpop.f32.mrf.mxu0
        %v3952 = vadd.f32 0.0, %v3951
        %v3953 = vpop.f32.mrf.mxu0
        %3954 = vmatprep.mubr.f32.mxu0 0.0
        %3955 = vmatmul.mubr.f32.gmra.mxu0 %v3798
        %v3956 = vpop.f32.mrf.mxu0
        %v3957 = vadd.f32 0.0, %v3956
        %v3958 = vpop.f32.mrf.mxu0
        %3959 = vdwg.mxu0
        %v3960 = vadd.f32 %v3413, %v3882
        %v3961 = vadd.f32 %v3414, %v3887
        %v3962 = vadd.f32 %v3415, %v3892
        %v3963 = vadd.f32 %v3416, %v3897
        %v3964 = vadd.f32 %v3417, %v3902
        %v3965 = vadd.f32 %v3418, %v3907
        %v3966 = vadd.f32 %v3419, %v3912
        %v3967 = vadd.f32 %v3420, %v3917
        %v3968 = vadd.f32 %v3421, %v3922
        %v3969 = vadd.f32 %v3422, %v3927
        %v3970 = vadd.f32 %v3423, %v3932
        %v3971 = vadd.f32 %v3424, %v3937
        %v3972 = vadd.f32 %v3425, %v3942
        %v3973 = vadd.f32 %v3426, %v3947
        %v3974 = vadd.f32 %v3427, %v3952
        %v3975 = vadd.f32 %v3428, %v3957
        %v3976 = vld [vmem:[%s6] sm:$0xff]
        %v3977 = vld [vmem:[%s6 + $0x8] sm:$0xff]
        %v3978 = vld [vmem:[%s6 + $0x10] sm:$0xff]
        %v3979 = vld [vmem:[%s6 + $0x18] sm:$0xff]
        %v3980 = vlaneseq
        %v3981 = vshrl.u32 %v3980, 7
        %v3982 = vsub.s32 0, %v3981
        %v3983 = vrot.slane %v995, %v3982
        %v3985 = vsel %vm740, %v3960, 0
        %v3988 = vsel %vm740, %v3961, 0
        %v3991 = vsel %vm740, %v3962, 0
        %v3994 = vsel %vm740, %v3963, 0
        %v3997 = vsel %vm740, %v3964, 0
        %v4000 = vsel %vm740, %v3965, 0
        %v4003 = vsel %vm740, %v3966, 0
        %v4006 = vsel %vm740, %v3967, 0
        %v4009 = vsel %vm740, %v3968, 0
        %v4012 = vsel %vm740, %v3969, 0
        %v4015 = vsel %vm740, %v3970, 0
        %v4018 = vsel %vm740, %v3971, 0
        %v4021 = vsel %vm740, %v3972, 0
        %v4024 = vsel %vm740, %v3973, 0
        %v4027 = vsel %vm740, %v3974, 0
        %v4030 = vsel %vm740, %v3975, 0
        %4032 = vmatprep.subr.mxu0 0.0
        %4033 = vmatpush1.msra.mxu0 0.0
        %4034 = vmatprep.subr.mxu0 0.0
        %4035 = vmatpush1.msra.mxu0 0.0
        %4036 = vmatprep.subr.mxu0 0.0
        %4037 = vmatpush1.msra.mxu0 0.0
        %4038 = vmatprep.subr.mxu0 0.0
        %4039 = vmatpush1.msra.mxu0 0.0
        %4040 = vmatprep.subr.mxu0 0.0
        %4041 = vmatpush1.msra.mxu0 0.0
        %4042 = vmatprep.subr.mxu0 0.0
        %4043 = vmatpush1.msra.mxu0 0.0
        %4044 = vmatprep.subr.mxu0 0.0
        %4045 = vmatpush1.msra.mxu0 0.0
        %4046 = vmatprep.subr.mxu0 0.0
        %4047 = vmatpush1.msra.mxu0 0.0
        %4048 = vmatprep.subr.mxu0 0.0
        %4049 = vmatpush1.msra.mxu0 0.0
        %4050 = vmatprep.subr.mxu0 0.0
        %4051 = vmatpush1.msra.mxu0 0.0
        %4052 = vmatprep.subr.mxu0 0.0
        %4053 = vmatpush1.msra.mxu0 0.0
        %4054 = vmatprep.subr.mxu0 0.0
        %4055 = vmatpush1.msra.mxu0 0.0
        %4056 = vmatprep.subr.mxu0 0.0
        %4057 = vmatpush1.msra.mxu0 %v3979
        %4058 = vmatprep.subr.mxu0 0.0
        %4059 = vmatpush1.msra.mxu0 %v3978
        %4060 = vmatprep.subr.mxu0 0.0
        %4061 = vmatpush1.msra.mxu0 %v3977
        %4062 = vmatprep.subr.mxu0 0.0
        %4063 = vmatpush1.msra.mxu0 %v3976
        %4064 = vmatprep.subr.mxu0 0.0
        %4065 = vmatpush2.msra.mxu0 0.0
        %4066 = vmatprep.subr.mxu0 0.0
        %4067 = vmatpush2.msra.mxu0 0.0
        %4068 = vmatprep.subr.mxu0 0.0
        %4069 = vmatpush2.msra.mxu0 0.0
        %4070 = vmatprep.subr.mxu0 0.0
        %4071 = vmatpush2.msra.mxu0 0.0
        %4072 = vmatprep.subr.mxu0 0.0
        %4073 = vmatpush2.msra.mxu0 0.0
        %4074 = vmatprep.subr.mxu0 0.0
        %4075 = vmatpush2.msra.mxu0 0.0
        %4076 = vmatprep.subr.mxu0 0.0
        %4077 = vmatpush2.msra.mxu0 0.0
        %4078 = vmatprep.subr.mxu0 0.0
        %4079 = vmatpush2.msra.mxu0 0.0
        %4080 = vmatprep.subr.mxu0 0.0
        %4081 = vmatpush2.msra.mxu0 0.0
        %4082 = vmatprep.subr.mxu0 0.0
        %4083 = vmatpush2.msra.mxu0 0.0
        %4084 = vmatprep.subr.mxu0 0.0
        %4085 = vmatpush2.msra.mxu0 0.0
        %4086 = vmatprep.subr.mxu0 0.0
        %4087 = vmatpush2.msra.mxu0 0.0
        %4088 = vmatprep.subr.mxu0 0.0
        %4089 = vmatpush2.msra.mxu0 0.0
        %4090 = vmatprep.subr.mxu0 0.0
        %4091 = vmatpush2.msra.mxu0 0.0
        %4092 = vmatprep.subr.mxu0 0.0
        %4093 = vmatpush2.msra.mxu0 0.0
        %4094 = vmatprep.subr.mxu0 0.0
        %4095 = vmatpush2.msra.mxu0 0.0
        %4096 = vmatprep.mubr.f32.mxu0 0.0
        %4097 = vmatmul.mubr.f32.gmra.mxu0 %v3985
        %v4098 = vpop.f32.mrf.mxu0
        %v4099 = vadd.f32 %v3983, %v4098
        %v4100 = vpop.f32.mrf.mxu0
        %4101 = vmatprep.mubr.f32.mxu0 0.0
        %4102 = vmatmul.mubr.f32.gmra.mxu0 %v3988
        %v4103 = vpop.f32.mrf.mxu0
        %v4104 = vadd.f32 %v3983, %v4103
        %v4105 = vpop.f32.mrf.mxu0
        %4106 = vmatprep.mubr.f32.mxu0 0.0
        %4107 = vmatmul.mubr.f32.gmra.mxu0 %v3991
        %v4108 = vpop.f32.mrf.mxu0
        %v4109 = vadd.f32 %v3983, %v4108
        %v4110 = vpop.f32.mrf.mxu0
        %4111 = vmatprep.mubr.f32.mxu0 0.0
        %4112 = vmatmul.mubr.f32.gmra.mxu0 %v3994
        %v4113 = vpop.f32.mrf.mxu0
        %v4114 = vadd.f32 %v3983, %v4113
        %v4115 = vpop.f32.mrf.mxu0
        %4116 = vmatprep.mubr.f32.mxu0 0.0
        %4117 = vmatmul.mubr.f32.gmra.mxu0 %v3997
        %v4118 = vpop.f32.mrf.mxu0
        %v4119 = vadd.f32 %v3983, %v4118
        %v4120 = vpop.f32.mrf.mxu0
        %4121 = vmatprep.mubr.f32.mxu0 0.0
        %4122 = vmatmul.mubr.f32.gmra.mxu0 %v4000
        %v4123 = vpop.f32.mrf.mxu0
        %v4124 = vadd.f32 %v3983, %v4123
        %v4125 = vpop.f32.mrf.mxu0
        %4126 = vmatprep.mubr.f32.mxu0 0.0
        %4127 = vmatmul.mubr.f32.gmra.mxu0 %v4003
        %v4128 = vpop.f32.mrf.mxu0
        %v4129 = vadd.f32 %v3983, %v4128
        %v4130 = vpop.f32.mrf.mxu0
        %4131 = vmatprep.mubr.f32.mxu0 0.0
        %4132 = vmatmul.mubr.f32.gmra.mxu0 %v4006
        %v4133 = vpop.f32.mrf.mxu0
        %v4134 = vadd.f32 %v3983, %v4133
        %v4135 = vpop.f32.mrf.mxu0
        %4136 = vmatprep.mubr.f32.mxu0 0.0
        %4137 = vmatmul.mubr.f32.gmra.mxu0 %v4009
        %v4138 = vpop.f32.mrf.mxu0
        %v4139 = vadd.f32 %v3983, %v4138
        %v4140 = vpop.f32.mrf.mxu0
        %4141 = vmatprep.mubr.f32.mxu0 0.0
        %4142 = vmatmul.mubr.f32.gmra.mxu0 %v4012
        %v4143 = vpop.f32.mrf.mxu0
        %v4144 = vadd.f32 %v3983, %v4143
        %v4145 = vpop.f32.mrf.mxu0
        %4146 = vmatprep.mubr.f32.mxu0 0.0
        %4147 = vmatmul.mubr.f32.gmra.mxu0 %v4015
        %v4148 = vpop.f32.mrf.mxu0
        %v4149 = vadd.f32 %v3983, %v4148
        %v4150 = vpop.f32.mrf.mxu0
        %4151 = vmatprep.mubr.f32.mxu0 0.0
        %4152 = vmatmul.mubr.f32.gmra.mxu0 %v4018
        %v4153 = vpop.f32.mrf.mxu0
        %v4154 = vadd.f32 %v3983, %v4153
        %v4155 = vpop.f32.mrf.mxu0
        %4156 = vmatprep.mubr.f32.mxu0 0.0
        %4157 = vmatmul.mubr.f32.gmra.mxu0 %v4021
        %v4158 = vpop.f32.mrf.mxu0
        %v4159 = vadd.f32 %v3983, %v4158
        %v4160 = vpop.f32.mrf.mxu0
        %4161 = vmatprep.mubr.f32.mxu0 0.0
        %4162 = vmatmul.mubr.f32.gmra.mxu0 %v4024
        %v4163 = vpop.f32.mrf.mxu0
        %v4164 = vadd.f32 %v3983, %v4163
        %v4165 = vpop.f32.mrf.mxu0
        %4166 = vmatprep.mubr.f32.mxu0 0.0
        %4167 = vmatmul.mubr.f32.gmra.mxu0 %v4027
        %v4168 = vpop.f32.mrf.mxu0
        %v4169 = vadd.f32 %v3983, %v4168
        %v4170 = vpop.f32.mrf.mxu0
        %4171 = vmatprep.mubr.f32.mxu0 0.0
        %4172 = vmatmul.mubr.f32.gmra.mxu0 %v4030
        %v4173 = vpop.f32.mrf.mxu0
        %v4174 = vadd.f32 %v3983, %v4173
        %v4175 = vpop.f32.mrf.mxu0
        %4176 = vdwg.mxu0
        %v4177 = vadd.f32 %v974, %v4099
        %v4178 = vadd.f32 %v975, %v4104
        %v4179 = vadd.f32 %v976, %v4109
        %v4180 = vadd.f32 %v977, %v4114
        %v4181 = vadd.f32 %v978, %v4119
        %v4182 = vadd.f32 %v979, %v4124
        %v4183 = vadd.f32 %v980, %v4129
        %v4184 = vadd.f32 %v981, %v4134
        %v4185 = vadd.f32 %v982, %v4139
        %v4186 = vadd.f32 %v983, %v4144
        %v4187 = vadd.f32 %v984, %v4149
        %v4188 = vadd.f32 %v985, %v4154
        %v4189 = vadd.f32 %v986, %v4159
        %v4190 = vadd.f32 %v987, %v4164
        %v4191 = vadd.f32 %v988, %v4169
        %v4192 = vadd.f32 %v989, %v4174
        %v4193 = vsel %vm740, %v4177, 0.0
        %4194 = vadd.xlane.f32.xlu0 %v4193
        %v4195 = vpop.xlane.xlu0 %4194
        %v4196 = vsel %vm740, %v4178, 0.0
        %4197 = vadd.xlane.f32.xlu0 %v4196
        %v4198 = vpop.xlane.xlu0 %4197
        %v4199 = vsel %vm740, %v4179, 0.0
        %4200 = vadd.xlane.f32.xlu0 %v4199
        %v4201 = vpop.xlane.xlu0 %4200
        %v4202 = vsel %vm740, %v4180, 0.0
        %4203 = vadd.xlane.f32.xlu0 %v4202
        %v4204 = vpop.xlane.xlu0 %4203
        %v4205 = vsel %vm740, %v4181, 0.0
        %4206 = vadd.xlane.f32.xlu0 %v4205
        %v4207 = vpop.xlane.xlu0 %4206
        %v4208 = vsel %vm740, %v4182, 0.0
        %4209 = vadd.xlane.f32.xlu0 %v4208
        %v4210 = vpop.xlane.xlu0 %4209
        %v4211 = vsel %vm740, %v4183, 0.0
        %4212 = vadd.xlane.f32.xlu0 %v4211
        %v4213 = vpop.xlane.xlu0 %4212
        %v4214 = vsel %vm740, %v4184, 0.0
        %4215 = vadd.xlane.f32.xlu0 %v4214
        %v4216 = vpop.xlane.xlu0 %4215
        %v4217 = vsel %vm740, %v4185, 0.0
        %4218 = vadd.xlane.f32.xlu0 %v4217
        %v4219 = vpop.xlane.xlu0 %4218
        %v4220 = vsel %vm740, %v4186, 0.0
        %4221 = vadd.xlane.f32.xlu0 %v4220
        %v4222 = vpop.xlane.xlu0 %4221
        %v4223 = vsel %vm740, %v4187, 0.0
        %4224 = vadd.xlane.f32.xlu0 %v4223
        %v4225 = vpop.xlane.xlu0 %4224
        %v4226 = vsel %vm740, %v4188, 0.0
        %4227 = vadd.xlane.f32.xlu0 %v4226
        %v4228 = vpop.xlane.xlu0 %4227
        %v4229 = vsel %vm740, %v4189, 0.0
        %4230 = vadd.xlane.f32.xlu0 %v4229
        %v4231 = vpop.xlane.xlu0 %4230
        %v4232 = vsel %vm740, %v4190, 0.0
        %4233 = vadd.xlane.f32.xlu0 %v4232
        %v4234 = vpop.xlane.xlu0 %4233
        %v4235 = vsel %vm740, %v4191, 0.0
        %4236 = vadd.xlane.f32.xlu0 %v4235
        %v4237 = vpop.xlane.xlu0 %4236
        %v4238 = vsel %vm740, %v4192, 0.0
        %4239 = vadd.xlane.f32.xlu0 %v4238
        %v4240 = vpop.xlane.xlu0 %4239
        %v4241 = vmul.f32 %v4195, %v789
        %v4242 = vmul.f32 %v4198, %v789
        %v4243 = vmul.f32 %v4201, %v789
        %v4244 = vmul.f32 %v4204, %v789
        %v4245 = vmul.f32 %v4207, %v789
        %v4246 = vmul.f32 %v4210, %v789
        %v4247 = vmul.f32 %v4213, %v789
        %v4248 = vmul.f32 %v4216, %v789
        %v4249 = vmul.f32 %v4219, %v789
        %v4250 = vmul.f32 %v4222, %v789
        %v4251 = vmul.f32 %v4225, %v789
        %v4252 = vmul.f32 %v4228, %v789
        %v4253 = vmul.f32 %v4231, %v789
        %v4254 = vmul.f32 %v4234, %v789
        %v4255 = vmul.f32 %v4237, %v789
        %v4256 = vmul.f32 %v4240, %v789
        %v4257 = vsub.f32 %v4177, %v4241
        %v4258 = vsub.f32 %v4178, %v4242
        %v4259 = vsub.f32 %v4179, %v4243
        %v4260 = vsub.f32 %v4180, %v4244
        %v4261 = vsub.f32 %v4181, %v4245
        %v4262 = vsub.f32 %v4182, %v4246
        %v4263 = vsub.f32 %v4183, %v4247
        %v4264 = vsub.f32 %v4184, %v4248
        %v4265 = vsub.f32 %v4185, %v4249
        %v4266 = vsub.f32 %v4186, %v4250
        %v4267 = vsub.f32 %v4187, %v4251
        %v4268 = vsub.f32 %v4188, %v4252
        %v4269 = vsub.f32 %v4189, %v4253
        %v4270 = vsub.f32 %v4190, %v4254
        %v4271 = vsub.f32 %v4191, %v4255
        %v4272 = vsub.f32 %v4192, %v4256
        %v4273 = vmul.f32 %v4257, %v4257
        %v4274 = vmul.f32 %v4258, %v4258
        %v4275 = vmul.f32 %v4259, %v4259
        %v4276 = vmul.f32 %v4260, %v4260
        %v4277 = vmul.f32 %v4261, %v4261
        %v4278 = vmul.f32 %v4262, %v4262
        %v4279 = vmul.f32 %v4263, %v4263
        %v4280 = vmul.f32 %v4264, %v4264
        %v4281 = vmul.f32 %v4265, %v4265
        %v4282 = vmul.f32 %v4266, %v4266
        %v4283 = vmul.f32 %v4267, %v4267
        %v4284 = vmul.f32 %v4268, %v4268
        %v4285 = vmul.f32 %v4269, %v4269
        %v4286 = vmul.f32 %v4270, %v4270
        %v4287 = vmul.f32 %v4271, %v4271
        %v4288 = vmul.f32 %v4272, %v4272
        %v4289 = vsel %vm740, %v4273, 0.0
        %4290 = vadd.xlane.f32.xlu0 %v4289
        %v4291 = vpop.xlane.xlu0 %4290
        %v4292 = vsel %vm740, %v4274, 0.0
        %4293 = vadd.xlane.f32.xlu0 %v4292
        %v4294 = vpop.xlane.xlu0 %4293
        %v4295 = vsel %vm740, %v4275, 0.0
        %4296 = vadd.xlane.f32.xlu0 %v4295
        %v4297 = vpop.xlane.xlu0 %4296
        %v4298 = vsel %vm740, %v4276, 0.0
        %4299 = vadd.xlane.f32.xlu0 %v4298
        %v4300 = vpop.xlane.xlu0 %4299
        %v4301 = vsel %vm740, %v4277, 0.0
        %4302 = vadd.xlane.f32.xlu0 %v4301
        %v4303 = vpop.xlane.xlu0 %4302
        %v4304 = vsel %vm740, %v4278, 0.0
        %4305 = vadd.xlane.f32.xlu0 %v4304
        %v4306 = vpop.xlane.xlu0 %4305
        %v4307 = vsel %vm740, %v4279, 0.0
        %4308 = vadd.xlane.f32.xlu0 %v4307
        %v4309 = vpop.xlane.xlu0 %4308
        %v4310 = vsel %vm740, %v4280, 0.0
        %4311 = vadd.xlane.f32.xlu0 %v4310
        %v4312 = vpop.xlane.xlu0 %4311
        %v4313 = vsel %vm740, %v4281, 0.0
        %4314 = vadd.xlane.f32.xlu0 %v4313
        %v4315 = vpop.xlane.xlu0 %4314
        %v4316 = vsel %vm740, %v4282, 0.0
        %4317 = vadd.xlane.f32.xlu0 %v4316
        %v4318 = vpop.xlane.xlu0 %4317
        %v4319 = vsel %vm740, %v4283, 0.0
        %4320 = vadd.xlane.f32.xlu0 %v4319
        %v4321 = vpop.xlane.xlu0 %4320
        %v4322 = vsel %vm740, %v4284, 0.0
        %4323 = vadd.xlane.f32.xlu0 %v4322
        %v4324 = vpop.xlane.xlu0 %4323
        %v4325 = vsel %vm740, %v4285, 0.0
        %4326 = vadd.xlane.f32.xlu0 %v4325
        %v4327 = vpop.xlane.xlu0 %4326
        %v4328 = vsel %vm740, %v4286, 0.0
        %4329 = vadd.xlane.f32.xlu0 %v4328
        %v4330 = vpop.xlane.xlu0 %4329
        %v4331 = vsel %vm740, %v4287, 0.0
        %4332 = vadd.xlane.f32.xlu0 %v4331
        %v4333 = vpop.xlane.xlu0 %4332
        %v4334 = vsel %vm740, %v4288, 0.0
        %4335 = vadd.xlane.f32.xlu0 %v4334
        %v4336 = vpop.xlane.xlu0 %4335
        %v4337 = vmul.f32 %v4291, %v789
        %v4338 = vmul.f32 %v4294, %v789
        %v4339 = vmul.f32 %v4297, %v789
        %v4340 = vmul.f32 %v4300, %v789
        %v4341 = vmul.f32 %v4303, %v789
        %v4342 = vmul.f32 %v4306, %v789
        %v4343 = vmul.f32 %v4309, %v789
        %v4344 = vmul.f32 %v4312, %v789
        %v4345 = vmul.f32 %v4315, %v789
        %v4346 = vmul.f32 %v4318, %v789
        %v4347 = vmul.f32 %v4321, %v789
        %v4348 = vmul.f32 %v4324, %v789
        %v4349 = vmul.f32 %v4327, %v789
        %v4350 = vmul.f32 %v4330, %v789
        %v4351 = vmul.f32 %v4333, %v789
        %v4352 = vmul.f32 %v4336, %v789
        %v4353 = vadd.f32 %v4337, 1e-05
        %v4354 = vadd.f32 %v4338, 1e-05
        %v4355 = vadd.f32 %v4339, 1e-05
        %v4356 = vadd.f32 %v4340, 1e-05
        %v4357 = vadd.f32 %v4341, 1e-05
        %v4358 = vadd.f32 %v4342, 1e-05
        %v4359 = vadd.f32 %v4343, 1e-05
        %v4360 = vadd.f32 %v4344, 1e-05
        %v4361 = vadd.f32 %v4345, 1e-05
        %v4362 = vadd.f32 %v4346, 1e-05
        %v4363 = vadd.f32 %v4347, 1e-05
        %v4364 = vadd.f32 %v4348, 1e-05
        %v4365 = vadd.f32 %v4349, 1e-05
        %v4366 = vadd.f32 %v4350, 1e-05
        %v4367 = vadd.f32 %v4351, 1e-05
        %v4368 = vadd.f32 %v4352, 1e-05
        %v4369 = vrsqrt.pop %v4353
        %v4370 = vrsqrt.pop %v4354
        %v4371 = vrsqrt.pop %v4355
        %v4372 = vrsqrt.pop %v4356
        %v4373 = vrsqrt.pop %v4357
        %v4374 = vrsqrt.pop %v4358
        %v4375 = vrsqrt.pop %v4359
        %v4376 = vrsqrt.pop %v4360
        %v4377 = vrsqrt.pop %v4361
        %v4378 = vrsqrt.pop %v4362
        %v4379 = vrsqrt.pop %v4363
        %v4380 = vrsqrt.pop %v4364
        %v4381 = vrsqrt.pop %v4365
        %v4382 = vrsqrt.pop %v4366
        %v4383 = vrsqrt.pop %v4367
        %v4384 = vrsqrt.pop %v4368
        %v4385 = vmul.f32 %v4257, %v4369
        %v4386 = vmul.f32 %v4258, %v4370
        %v4387 = vmul.f32 %v4259, %v4371
        %v4388 = vmul.f32 %v4260, %v4372
        %v4389 = vmul.f32 %v4261, %v4373
        %v4390 = vmul.f32 %v4262, %v4374
        %v4391 = vmul.f32 %v4263, %v4375
        %v4392 = vmul.f32 %v4264, %v4376
        %v4393 = vmul.f32 %v4265, %v4377
        %v4394 = vmul.f32 %v4266, %v4378
        %v4395 = vmul.f32 %v4267, %v4379
        %v4396 = vmul.f32 %v4268, %v4380
        %v4397 = vmul.f32 %v4269, %v4381
        %v4398 = vmul.f32 %v4270, %v4382
        %v4399 = vmul.f32 %v4271, %v4383
        %v4400 = vmul.f32 %v4272, %v4384
        %v4401 = vlaneseq
        %v4402 = vshrl.u32 %v4401, 7
        %v4403 = vsub.s32 0, %v4402
        %v4404 = vrot.slane %v996, %v4403
        %v4405 = vmul.f32 %v4385, %v4404
        %v4406 = vmul.f32 %v4386, %v4404
        %v4407 = vmul.f32 %v4387, %v4404
        %v4408 = vmul.f32 %v4388, %v4404
        %v4409 = vmul.f32 %v4389, %v4404
        %v4410 = vmul.f32 %v4390, %v4404
        %v4411 = vmul.f32 %v4391, %v4404
        %v4412 = vmul.f32 %v4392, %v4404
        %v4413 = vmul.f32 %v4393, %v4404
        %v4414 = vmul.f32 %v4394, %v4404
        %v4415 = vmul.f32 %v4395, %v4404
        %v4416 = vmul.f32 %v4396, %v4404
        %v4417 = vmul.f32 %v4397, %v4404
        %v4418 = vmul.f32 %v4398, %v4404
        %v4419 = vmul.f32 %v4399, %v4404
        %v4420 = vmul.f32 %v4400, %v4404
        %v4421 = vlaneseq
        %v4422 = vshrl.u32 %v4421, 7
        %v4423 = vsub.s32 0, %v4422
        %v4424 = vrot.slane %v997, %v4423
        %v4425 = vadd.f32 %v4405, %v4424
        %v4426 = vadd.f32 %v4406, %v4424
        %v4427 = vadd.f32 %v4407, %v4424
        %v4428 = vadd.f32 %v4408, %v4424
        %v4429 = vadd.f32 %v4409, %v4424
        %v4430 = vadd.f32 %v4410, %v4424
        %v4431 = vadd.f32 %v4411, %v4424
        %v4432 = vadd.f32 %v4412, %v4424
        %v4433 = vadd.f32 %v4413, %v4424
        %v4434 = vadd.f32 %v4414, %v4424
        %v4435 = vadd.f32 %v4415, %v4424
        %v4436 = vadd.f32 %v4416, %v4424
        %v4437 = vadd.f32 %v4417, %v4424
        %v4438 = vadd.f32 %v4418, %v4424
        %v4439 = vadd.f32 %v4419, %v4424
        %v4440 = vadd.f32 %v4420, %v4424
        %v4441 = vld [vmem:[%s7] sm:$0xff]
        %v4442 = vld [vmem:[%s7 + $0x8] sm:$0xff]
        %v4443 = vld [vmem:[%s7 + $0x10] sm:$0xff]
        %v4444 = vld [vmem:[%s7 + $0x18] sm:$0xff]
        %v4445 = vlaneseq
        %v4446 = vshrl.u32 %v4445, 7
        %v4447 = vsub.s32 0, %v4446
        %v4448 = vrot.slane %v998, %v4447
        %v4450 = vsel %vm740, %v4425, 0
        %v4453 = vsel %vm740, %v4426, 0
        %v4456 = vsel %vm740, %v4427, 0
        %v4459 = vsel %vm740, %v4428, 0
        %v4462 = vsel %vm740, %v4429, 0
        %v4465 = vsel %vm740, %v4430, 0
        %v4468 = vsel %vm740, %v4431, 0
        %v4471 = vsel %vm740, %v4432, 0
        %v4474 = vsel %vm740, %v4433, 0
        %v4477 = vsel %vm740, %v4434, 0
        %v4480 = vsel %vm740, %v4435, 0
        %v4483 = vsel %vm740, %v4436, 0
        %v4486 = vsel %vm740, %v4437, 0
        %v4489 = vsel %vm740, %v4438, 0
        %v4492 = vsel %vm740, %v4439, 0
        %v4495 = vsel %vm740, %v4440, 0
        %4497 = vmatprep.subr.mxu0 0.0
        %4498 = vmatpush1.msra.mxu0 0.0
        %4499 = vmatprep.subr.mxu0 0.0
        %4500 = vmatpush1.msra.mxu0 0.0
        %4501 = vmatprep.subr.mxu0 0.0
        %4502 = vmatpush1.msra.mxu0 0.0
        %4503 = vmatprep.subr.mxu0 0.0
        %4504 = vmatpush1.msra.mxu0 0.0
        %4505 = vmatprep.subr.mxu0 0.0
        %4506 = vmatpush1.msra.mxu0 0.0
        %4507 = vmatprep.subr.mxu0 0.0
        %4508 = vmatpush1.msra.mxu0 0.0
        %4509 = vmatprep.subr.mxu0 0.0
        %4510 = vmatpush1.msra.mxu0 0.0
        %4511 = vmatprep.subr.mxu0 0.0
        %4512 = vmatpush1.msra.mxu0 0.0
        %4513 = vmatprep.subr.mxu0 0.0
        %4514 = vmatpush1.msra.mxu0 0.0
        %4515 = vmatprep.subr.mxu0 0.0
        %4516 = vmatpush1.msra.mxu0 0.0
        %4517 = vmatprep.subr.mxu0 0.0
        %4518 = vmatpush1.msra.mxu0 0.0
        %4519 = vmatprep.subr.mxu0 0.0
        %4520 = vmatpush1.msra.mxu0 0.0
        %4521 = vmatprep.subr.mxu0 0.0
        %4522 = vmatpush1.msra.mxu0 %v4444
        %4523 = vmatprep.subr.mxu0 0.0
        %4524 = vmatpush1.msra.mxu0 %v4443
        %4525 = vmatprep.subr.mxu0 0.0
        %4526 = vmatpush1.msra.mxu0 %v4442
        %4527 = vmatprep.subr.mxu0 0.0
        %4528 = vmatpush1.msra.mxu0 %v4441
        %4529 = vmatprep.subr.mxu0 0.0
        %4530 = vmatpush2.msra.mxu0 0.0
        %4531 = vmatprep.subr.mxu0 0.0
        %4532 = vmatpush2.msra.mxu0 0.0
        %4533 = vmatprep.subr.mxu0 0.0
        %4534 = vmatpush2.msra.mxu0 0.0
        %4535 = vmatprep.subr.mxu0 0.0
        %4536 = vmatpush2.msra.mxu0 0.0
        %4537 = vmatprep.subr.mxu0 0.0
        %4538 = vmatpush2.msra.mxu0 0.0
        %4539 = vmatprep.subr.mxu0 0.0
        %4540 = vmatpush2.msra.mxu0 0.0
        %4541 = vmatprep.subr.mxu0 0.0
        %4542 = vmatpush2.msra.mxu0 0.0
        %4543 = vmatprep.subr.mxu0 0.0
        %4544 = vmatpush2.msra.mxu0 0.0
        %4545 = vmatprep.subr.mxu0 0.0
        %4546 = vmatpush2.msra.mxu0 0.0
        %4547 = vmatprep.subr.mxu0 0.0
        %4548 = vmatpush2.msra.mxu0 0.0
        %4549 = vmatprep.subr.mxu0 0.0
        %4550 = vmatpush2.msra.mxu0 0.0
        %4551 = vmatprep.subr.mxu0 0.0
        %4552 = vmatpush2.msra.mxu0 0.0
        %4553 = vmatprep.subr.mxu0 0.0
        %4554 = vmatpush2.msra.mxu0 0.0
        %4555 = vmatprep.subr.mxu0 0.0
        %4556 = vmatpush2.msra.mxu0 0.0
        %4557 = vmatprep.subr.mxu0 0.0
        %4558 = vmatpush2.msra.mxu0 0.0
        %4559 = vmatprep.subr.mxu0 0.0
        %4560 = vmatpush2.msra.mxu0 0.0
        %4561 = vmatprep.mubr.f32.mxu0 0.0
        %4562 = vmatmul.mubr.f32.gmra.mxu0 %v4450
        %v4563 = vpop.f32.mrf.mxu0
        %v4564 = vadd.f32 %v4448, %v4563
        %v4565 = vpop.f32.mrf.mxu0
        %4566 = vmatprep.mubr.f32.mxu0 0.0
        %4567 = vmatmul.mubr.f32.gmra.mxu0 %v4453
        %v4568 = vpop.f32.mrf.mxu0
        %v4569 = vadd.f32 %v4448, %v4568
        %v4570 = vpop.f32.mrf.mxu0
        %4571 = vmatprep.mubr.f32.mxu0 0.0
        %4572 = vmatmul.mubr.f32.gmra.mxu0 %v4456
        %v4573 = vpop.f32.mrf.mxu0
        %v4574 = vadd.f32 %v4448, %v4573
        %v4575 = vpop.f32.mrf.mxu0
        %4576 = vmatprep.mubr.f32.mxu0 0.0
        %4577 = vmatmul.mubr.f32.gmra.mxu0 %v4459
        %v4578 = vpop.f32.mrf.mxu0
        %v4579 = vadd.f32 %v4448, %v4578
        %v4580 = vpop.f32.mrf.mxu0
        %4581 = vmatprep.mubr.f32.mxu0 0.0
        %4582 = vmatmul.mubr.f32.gmra.mxu0 %v4462
        %v4583 = vpop.f32.mrf.mxu0
        %v4584 = vadd.f32 %v4448, %v4583
        %v4585 = vpop.f32.mrf.mxu0
        %4586 = vmatprep.mubr.f32.mxu0 0.0
        %4587 = vmatmul.mubr.f32.gmra.mxu0 %v4465
        %v4588 = vpop.f32.mrf.mxu0
        %v4589 = vadd.f32 %v4448, %v4588
        %v4590 = vpop.f32.mrf.mxu0
        %4591 = vmatprep.mubr.f32.mxu0 0.0
        %4592 = vmatmul.mubr.f32.gmra.mxu0 %v4468
        %v4593 = vpop.f32.mrf.mxu0
        %v4594 = vadd.f32 %v4448, %v4593
        %v4595 = vpop.f32.mrf.mxu0
        %4596 = vmatprep.mubr.f32.mxu0 0.0
        %4597 = vmatmul.mubr.f32.gmra.mxu0 %v4471
        %v4598 = vpop.f32.mrf.mxu0
        %v4599 = vadd.f32 %v4448, %v4598
        %v4600 = vpop.f32.mrf.mxu0
        %4601 = vmatprep.mubr.f32.mxu0 0.0
        %4602 = vmatmul.mubr.f32.gmra.mxu0 %v4474
        %v4603 = vpop.f32.mrf.mxu0
        %v4604 = vadd.f32 %v4448, %v4603
        %v4605 = vpop.f32.mrf.mxu0
        %4606 = vmatprep.mubr.f32.mxu0 0.0
        %4607 = vmatmul.mubr.f32.gmra.mxu0 %v4477
        %v4608 = vpop.f32.mrf.mxu0
        %v4609 = vadd.f32 %v4448, %v4608
        %v4610 = vpop.f32.mrf.mxu0
        %4611 = vmatprep.mubr.f32.mxu0 0.0
        %4612 = vmatmul.mubr.f32.gmra.mxu0 %v4480
        %v4613 = vpop.f32.mrf.mxu0
        %v4614 = vadd.f32 %v4448, %v4613
        %v4615 = vpop.f32.mrf.mxu0
        %4616 = vmatprep.mubr.f32.mxu0 0.0
        %4617 = vmatmul.mubr.f32.gmra.mxu0 %v4483
        %v4618 = vpop.f32.mrf.mxu0
        %v4619 = vadd.f32 %v4448, %v4618
        %v4620 = vpop.f32.mrf.mxu0
        %4621 = vmatprep.mubr.f32.mxu0 0.0
        %4622 = vmatmul.mubr.f32.gmra.mxu0 %v4486
        %v4623 = vpop.f32.mrf.mxu0
        %v4624 = vadd.f32 %v4448, %v4623
        %v4625 = vpop.f32.mrf.mxu0
        %4626 = vmatprep.mubr.f32.mxu0 0.0
        %4627 = vmatmul.mubr.f32.gmra.mxu0 %v4489
        %v4628 = vpop.f32.mrf.mxu0
        %v4629 = vadd.f32 %v4448, %v4628
        %v4630 = vpop.f32.mrf.mxu0
        %4631 = vmatprep.mubr.f32.mxu0 0.0
        %4632 = vmatmul.mubr.f32.gmra.mxu0 %v4492
        %v4633 = vpop.f32.mrf.mxu0
        %v4634 = vadd.f32 %v4448, %v4633
        %v4635 = vpop.f32.mrf.mxu0
        %4636 = vmatprep.mubr.f32.mxu0 0.0
        %4637 = vmatmul.mubr.f32.gmra.mxu0 %v4495
        %v4638 = vpop.f32.mrf.mxu0
        %v4639 = vadd.f32 %v4448, %v4638
        %v4640 = vpop.f32.mrf.mxu0
        %4641 = vdwg.mxu0
        %v4642 = vmul.f32 %v4564, 0.5
        %v4643 = vmul.f32 %v4569, 0.5
        %v4644 = vmul.f32 %v4574, 0.5
        %v4645 = vmul.f32 %v4579, 0.5
        %v4646 = vmul.f32 %v4584, 0.5
        %v4647 = vmul.f32 %v4589, 0.5
        %v4648 = vmul.f32 %v4594, 0.5
        %v4649 = vmul.f32 %v4599, 0.5
        %v4650 = vmul.f32 %v4604, 0.5
        %v4651 = vmul.f32 %v4609, 0.5
        %v4652 = vmul.f32 %v4614, 0.5
        %v4653 = vmul.f32 %v4619, 0.5
        %v4654 = vmul.f32 %v4624, 0.5
        %v4655 = vmul.f32 %v4629, 0.5
        %v4656 = vmul.f32 %v4634, 0.5
        %v4657 = vmul.f32 %v4639, 0.5
        %v4658 = vmul.f32 %v4564, 0.044715
        %v4659 = vmul.f32 %v4569, 0.044715
        %v4660 = vmul.f32 %v4574, 0.044715
        %v4661 = vmul.f32 %v4579, 0.044715
        %v4662 = vmul.f32 %v4584, 0.044715
        %v4663 = vmul.f32 %v4589, 0.044715
        %v4664 = vmul.f32 %v4594, 0.044715
        %v4665 = vmul.f32 %v4599, 0.044715
        %v4666 = vmul.f32 %v4604, 0.044715
        %v4667 = vmul.f32 %v4609, 0.044715
        %v4668 = vmul.f32 %v4614, 0.044715
        %v4669 = vmul.f32 %v4619, 0.044715
        %v4670 = vmul.f32 %v4624, 0.044715
        %v4671 = vmul.f32 %v4629, 0.044715
        %v4672 = vmul.f32 %v4634, 0.044715
        %v4673 = vmul.f32 %v4639, 0.044715
        %v4674 = vmul.f32 %v4658, %v4564
        %v4675 = vmul.f32 %v4659, %v4569
        %v4676 = vmul.f32 %v4660, %v4574
        %v4677 = vmul.f32 %v4661, %v4579
        %v4678 = vmul.f32 %v4662, %v4584
        %v4679 = vmul.f32 %v4663, %v4589
        %v4680 = vmul.f32 %v4664, %v4594
        %v4681 = vmul.f32 %v4665, %v4599
        %v4682 = vmul.f32 %v4666, %v4604
        %v4683 = vmul.f32 %v4667, %v4609
        %v4684 = vmul.f32 %v4668, %v4614
        %v4685 = vmul.f32 %v4669, %v4619
        %v4686 = vmul.f32 %v4670, %v4624
        %v4687 = vmul.f32 %v4671, %v4629
        %v4688 = vmul.f32 %v4672, %v4634
        %v4689 = vmul.f32 %v4673, %v4639
        %v4690 = vmul.f32 %v4674, %v4564
        %v4691 = vmul.f32 %v4675, %v4569
        %v4692 = vmul.f32 %v4676, %v4574
        %v4693 = vmul.f32 %v4677, %v4579
        %v4694 = vmul.f32 %v4678, %v4584
        %v4695 = vmul.f32 %v4679, %v4589
        %v4696 = vmul.f32 %v4680, %v4594
        %v4697 = vmul.f32 %v4681, %v4599
        %v4698 = vmul.f32 %v4682, %v4604
        %v4699 = vmul.f32 %v4683, %v4609
        %v4700 = vmul.f32 %v4684, %v4614
        %v4701 = vmul.f32 %v4685, %v4619
        %v4702 = vmul.f32 %v4686, %v4624
        %v4703 = vmul.f32 %v4687, %v4629
        %v4704 = vmul.f32 %v4688, %v4634
        %v4705 = vmul.f32 %v4689, %v4639
        %v4706 = vadd.f32 %v4564, %v4690
        %v4707 = vadd.f32 %v4569, %v4691
        %v4708 = vadd.f32 %v4574, %v4692
        %v4709 = vadd.f32 %v4579, %v4693
        %v4710 = vadd.f32 %v4584, %v4694
        %v4711 = vadd.f32 %v4589, %v4695
        %v4712 = vadd.f32 %v4594, %v4696
        %v4713 = vadd.f32 %v4599, %v4697
        %v4714 = vadd.f32 %v4604, %v4698
        %v4715 = vadd.f32 %v4609, %v4699
        %v4716 = vadd.f32 %v4614, %v4700
        %v4717 = vadd.f32 %v4619, %v4701
        %v4718 = vadd.f32 %v4624, %v4702
        %v4719 = vadd.f32 %v4629, %v4703
        %v4720 = vadd.f32 %v4634, %v4704
        %v4721 = vadd.f32 %v4639, %v4705
        %v4722 = vmul.f32 %v4706, 0.7978846
        %v4723 = vmul.f32 %v4707, 0.7978846
        %v4724 = vmul.f32 %v4708, 0.7978846
        %v4725 = vmul.f32 %v4709, 0.7978846
        %v4726 = vmul.f32 %v4710, 0.7978846
        %v4727 = vmul.f32 %v4711, 0.7978846
        %v4728 = vmul.f32 %v4712, 0.7978846
        %v4729 = vmul.f32 %v4713, 0.7978846
        %v4730 = vmul.f32 %v4714, 0.7978846
        %v4731 = vmul.f32 %v4715, 0.7978846
        %v4732 = vmul.f32 %v4716, 0.7978846
        %v4733 = vmul.f32 %v4717, 0.7978846
        %v4734 = vmul.f32 %v4718, 0.7978846
        %v4735 = vmul.f32 %v4719, 0.7978846
        %v4736 = vmul.f32 %v4720, 0.7978846
        %v4737 = vmul.f32 %v4721, 0.7978846
        %v4738 = vtanh.pop %v4722
        %v4739 = vtanh.pop %v4723
        %v4740 = vtanh.pop %v4724
        %v4741 = vtanh.pop %v4725
        %v4742 = vtanh.pop %v4726
        %v4743 = vtanh.pop %v4727
        %v4744 = vtanh.pop %v4728
        %v4745 = vtanh.pop %v4729
        %v4746 = vtanh.pop %v4730
        %v4747 = vtanh.pop %v4731
        %v4748 = vtanh.pop %v4732
        %v4749 = vtanh.pop %v4733
        %v4750 = vtanh.pop %v4734
        %v4751 = vtanh.pop %v4735
        %v4752 = vtanh.pop %v4736
        %v4753 = vtanh.pop %v4737
        %v4754 = vadd.f32 %v4738, 1.0
        %v4755 = vadd.f32 %v4739, 1.0
        %v4756 = vadd.f32 %v4740, 1.0
        %v4757 = vadd.f32 %v4741, 1.0
        %v4758 = vadd.f32 %v4742, 1.0
        %v4759 = vadd.f32 %v4743, 1.0
        %v4760 = vadd.f32 %v4744, 1.0
        %v4761 = vadd.f32 %v4745, 1.0
        %v4762 = vadd.f32 %v4746, 1.0
        %v4763 = vadd.f32 %v4747, 1.0
        %v4764 = vadd.f32 %v4748, 1.0
        %v4765 = vadd.f32 %v4749, 1.0
        %v4766 = vadd.f32 %v4750, 1.0
        %v4767 = vadd.f32 %v4751, 1.0
        %v4768 = vadd.f32 %v4752, 1.0
        %v4769 = vadd.f32 %v4753, 1.0
        %v4770 = vmul.f32 %v4642, %v4754
        %v4771 = vmul.f32 %v4643, %v4755
        %v4772 = vmul.f32 %v4644, %v4756
        %v4773 = vmul.f32 %v4645, %v4757
        %v4774 = vmul.f32 %v4646, %v4758
        %v4775 = vmul.f32 %v4647, %v4759
        %v4776 = vmul.f32 %v4648, %v4760
        %v4777 = vmul.f32 %v4649, %v4761
        %v4778 = vmul.f32 %v4650, %v4762
        %v4779 = vmul.f32 %v4651, %v4763
        %v4780 = vmul.f32 %v4652, %v4764
        %v4781 = vmul.f32 %v4653, %v4765
        %v4782 = vmul.f32 %v4654, %v4766
        %v4783 = vmul.f32 %v4655, %v4767
        %v4784 = vmul.f32 %v4656, %v4768
        %v4785 = vmul.f32 %v4657, %v4769
        %v4786 = vld [vmem:[%s8] sm:$0xff]
        %v4787 = vld [vmem:[%s8 + $0x8] sm:$0xff]
        %v4788 = vld [vmem:[%s8 + $0x10] sm:$0xff]
        %v4789 = vld [vmem:[%s8 + $0x18] sm:$0xff]
        %v4790 = vld [vmem:[%s8 + $0x20] sm:$0xff]
        %v4791 = vld [vmem:[%s8 + $0x28] sm:$0xff]
        %v4792 = vld [vmem:[%s8 + $0x30] sm:$0xff]
        %v4793 = vld [vmem:[%s8 + $0x38] sm:$0xff]
        %v4794 = vld [vmem:[%s8 + $0x40] sm:$0xff]
        %v4795 = vld [vmem:[%s8 + $0x48] sm:$0xff]
        %v4796 = vld [vmem:[%s8 + $0x50] sm:$0xff]
        %v4797 = vld [vmem:[%s8 + $0x58] sm:$0xff]
        %v4798 = vld [vmem:[%s8 + $0x60] sm:$0xff]
        %v4799 = vld [vmem:[%s8 + $0x68] sm:$0xff]
        %v4800 = vld [vmem:[%s8 + $0x70] sm:$0xff]
        %v4801 = vld [vmem:[%s8 + $0x78] sm:$0xff]
        %v4802 = vlaneseq
        %v4803 = vshrl.u32 %v4802, 7
        %v4804 = vsub.s32 0, %v4803
        %v4805 = vrot.slane %v999, %v4804
        %4806 = vmatprep.subr.mxu0 0.0
        %4807 = vmatpush1.msra.mxu0 %v4801
        %4808 = vmatprep.subr.mxu0 0.0
        %4809 = vmatpush1.msra.mxu0 %v4800
        %4810 = vmatprep.subr.mxu0 0.0
        %4811 = vmatpush1.msra.mxu0 %v4799
        %4812 = vmatprep.subr.mxu0 0.0
        %4813 = vmatpush1.msra.mxu0 %v4798
        %4814 = vmatprep.subr.mxu0 0.0
        %4815 = vmatpush1.msra.mxu0 %v4797
        %4816 = vmatprep.subr.mxu0 0.0
        %4817 = vmatpush1.msra.mxu0 %v4796
        %4818 = vmatprep.subr.mxu0 0.0
        %4819 = vmatpush1.msra.mxu0 %v4795
        %4820 = vmatprep.subr.mxu0 0.0
        %4821 = vmatpush1.msra.mxu0 %v4794
        %4822 = vmatprep.subr.mxu0 0.0
        %4823 = vmatpush1.msra.mxu0 %v4793
        %4824 = vmatprep.subr.mxu0 0.0
        %4825 = vmatpush1.msra.mxu0 %v4792
        %4826 = vmatprep.subr.mxu0 0.0
        %4827 = vmatpush1.msra.mxu0 %v4791
        %4828 = vmatprep.subr.mxu0 0.0
        %4829 = vmatpush1.msra.mxu0 %v4790
        %4830 = vmatprep.subr.mxu0 0.0
        %4831 = vmatpush1.msra.mxu0 %v4789
        %4832 = vmatprep.subr.mxu0 0.0
        %4833 = vmatpush1.msra.mxu0 %v4788
        %4834 = vmatprep.subr.mxu0 0.0
        %4835 = vmatpush1.msra.mxu0 %v4787
        %4836 = vmatprep.subr.mxu0 0.0
        %4837 = vmatpush1.msra.mxu0 %v4786
        %4838 = vmatprep.subr.mxu0 0.0
        %4839 = vmatpush2.msra.mxu0 0.0
        %4840 = vmatprep.subr.mxu0 0.0
        %4841 = vmatpush2.msra.mxu0 0.0
        %4842 = vmatprep.subr.mxu0 0.0
        %4843 = vmatpush2.msra.mxu0 0.0
        %4844 = vmatprep.subr.mxu0 0.0
        %4845 = vmatpush2.msra.mxu0 0.0
        %4846 = vmatprep.subr.mxu0 0.0
        %4847 = vmatpush2.msra.mxu0 0.0
        %4848 = vmatprep.subr.mxu0 0.0
        %4849 = vmatpush2.msra.mxu0 0.0
        %4850 = vmatprep.subr.mxu0 0.0
        %4851 = vmatpush2.msra.mxu0 0.0
        %4852 = vmatprep.subr.mxu0 0.0
        %4853 = vmatpush2.msra.mxu0 0.0
        %4854 = vmatprep.subr.mxu0 0.0
        %4855 = vmatpush2.msra.mxu0 0.0
        %4856 = vmatprep.subr.mxu0 0.0
        %4857 = vmatpush2.msra.mxu0 0.0
        %4858 = vmatprep.subr.mxu0 0.0
        %4859 = vmatpush2.msra.mxu0 0.0
        %4860 = vmatprep.subr.mxu0 0.0
        %4861 = vmatpush2.msra.mxu0 0.0
        %4862 = vmatprep.subr.mxu0 0.0
        %4863 = vmatpush2.msra.mxu0 0.0
        %4864 = vmatprep.subr.mxu0 0.0
        %4865 = vmatpush2.msra.mxu0 0.0
        %4866 = vmatprep.subr.mxu0 0.0
        %4867 = vmatpush2.msra.mxu0 0.0
        %4868 = vmatprep.subr.mxu0 0.0
        %4869 = vmatpush2.msra.mxu0 0.0
        %4870 = vmatprep.mubr.f32.mxu0 0.0
        %4871 = vmatmul.mubr.f32.gmra.mxu0 %v4770
        %v4872 = vpop.f32.mrf.mxu0
        %v4873 = vadd.f32 %v4805, %v4872
        %v4874 = vpop.f32.mrf.mxu0
        %4875 = vmatprep.mubr.f32.mxu0 0.0
        %4876 = vmatmul.mubr.f32.gmra.mxu0 %v4771
        %v4877 = vpop.f32.mrf.mxu0
        %v4878 = vadd.f32 %v4805, %v4877
        %v4879 = vpop.f32.mrf.mxu0
        %4880 = vmatprep.mubr.f32.mxu0 0.0
        %4881 = vmatmul.mubr.f32.gmra.mxu0 %v4772
        %v4882 = vpop.f32.mrf.mxu0
        %v4883 = vadd.f32 %v4805, %v4882
        %v4884 = vpop.f32.mrf.mxu0
        %4885 = vmatprep.mubr.f32.mxu0 0.0
        %4886 = vmatmul.mubr.f32.gmra.mxu0 %v4773
        %v4887 = vpop.f32.mrf.mxu0
        %v4888 = vadd.f32 %v4805, %v4887
        %v4889 = vpop.f32.mrf.mxu0
        %4890 = vmatprep.mubr.f32.mxu0 0.0
        %4891 = vmatmul.mubr.f32.gmra.mxu0 %v4774
        %v4892 = vpop.f32.mrf.mxu0
        %v4893 = vadd.f32 %v4805, %v4892
        %v4894 = vpop.f32.mrf.mxu0
        %4895 = vmatprep.mubr.f32.mxu0 0.0
        %4896 = vmatmul.mubr.f32.gmra.mxu0 %v4775
        %v4897 = vpop.f32.mrf.mxu0
        %v4898 = vadd.f32 %v4805, %v4897
        %v4899 = vpop.f32.mrf.mxu0
        %4900 = vmatprep.mubr.f32.mxu0 0.0
        %4901 = vmatmul.mubr.f32.gmra.mxu0 %v4776
        %v4902 = vpop.f32.mrf.mxu0
        %v4903 = vadd.f32 %v4805, %v4902
        %v4904 = vpop.f32.mrf.mxu0
        %4905 = vmatprep.mubr.f32.mxu0 0.0
        %4906 = vmatmul.mubr.f32.gmra.mxu0 %v4777
        %v4907 = vpop.f32.mrf.mxu0
        %v4908 = vadd.f32 %v4805, %v4907
        %v4909 = vpop.f32.mrf.mxu0
        %4910 = vmatprep.mubr.f32.mxu0 0.0
        %4911 = vmatmul.mubr.f32.gmra.mxu0 %v4778
        %v4912 = vpop.f32.mrf.mxu0
        %v4913 = vadd.f32 %v4805, %v4912
        %v4914 = vpop.f32.mrf.mxu0
        %4915 = vmatprep.mubr.f32.mxu0 0.0
        %4916 = vmatmul.mubr.f32.gmra.mxu0 %v4779
        %v4917 = vpop.f32.mrf.mxu0
        %v4918 = vadd.f32 %v4805, %v4917
        %v4919 = vpop.f32.mrf.mxu0
        %4920 = vmatprep.mubr.f32.mxu0 0.0
        %4921 = vmatmul.mubr.f32.gmra.mxu0 %v4780
        %v4922 = vpop.f32.mrf.mxu0
        %v4923 = vadd.f32 %v4805, %v4922
        %v4924 = vpop.f32.mrf.mxu0
        %4925 = vmatprep.mubr.f32.mxu0 0.0
        %4926 = vmatmul.mubr.f32.gmra.mxu0 %v4781
        %v4927 = vpop.f32.mrf.mxu0
        %v4928 = vadd.f32 %v4805, %v4927
        %v4929 = vpop.f32.mrf.mxu0
        %4930 = vmatprep.mubr.f32.mxu0 0.0
        %4931 = vmatmul.mubr.f32.gmra.mxu0 %v4782
        %v4932 = vpop.f32.mrf.mxu0
        %v4933 = vadd.f32 %v4805, %v4932
        %v4934 = vpop.f32.mrf.mxu0
        %4935 = vmatprep.mubr.f32.mxu0 0.0
        %4936 = vmatmul.mubr.f32.gmra.mxu0 %v4783
        %v4937 = vpop.f32.mrf.mxu0
        %v4938 = vadd.f32 %v4805, %v4937
        %v4939 = vpop.f32.mrf.mxu0
        %4940 = vmatprep.mubr.f32.mxu0 0.0
        %4941 = vmatmul.mubr.f32.gmra.mxu0 %v4784
        %v4942 = vpop.f32.mrf.mxu0
        %v4943 = vadd.f32 %v4805, %v4942
        %v4944 = vpop.f32.mrf.mxu0
        %4945 = vmatprep.mubr.f32.mxu0 0.0
        %4946 = vmatmul.mubr.f32.gmra.mxu0 %v4785
        %v4947 = vpop.f32.mrf.mxu0
        %v4948 = vadd.f32 %v4805, %v4947
        %v4949 = vpop.f32.mrf.mxu0
        %4950 = vdwg.mxu0
        %v4951 = vadd.f32 %v4177, %v4873
        %v4952 = vadd.f32 %v4178, %v4878
        %v4953 = vadd.f32 %v4179, %v4883
        %v4954 = vadd.f32 %v4180, %v4888
        %v4955 = vadd.f32 %v4181, %v4893
        %v4956 = vadd.f32 %v4182, %v4898
        %v4957 = vadd.f32 %v4183, %v4903
        %v4958 = vadd.f32 %v4184, %v4908
        %v4959 = vadd.f32 %v4185, %v4913
        %v4960 = vadd.f32 %v4186, %v4918
        %v4961 = vadd.f32 %v4187, %v4923
        %v4962 = vadd.f32 %v4188, %v4928
        %v4963 = vadd.f32 %v4189, %v4933
        %v4964 = vadd.f32 %v4190, %v4938
        %v4965 = vadd.f32 %v4191, %v4943
        %v4966 = vadd.f32 %v4192, %v4948
        %v4967 = vld [vmem:[%s2 + $0x10] sm:$0x1]
        %v4968 = vld [vmem:[%s2 + $0x11] sm:$0x1]
        %v4969 = vld [vmem:[%s2 + $0x12] sm:$0x1]
        %v4970 = vld [vmem:[%s2 + $0x13] sm:$0x1]
        %v4971 = vld [vmem:[%s2 + $0x14] sm:$0x1]
        %v4972 = vld [vmem:[%s2 + $0x15] sm:$0x1]
        %v4973 = vld [vmem:[%s2 + $0x16] sm:$0x1]
        %v4974 = vld [vmem:[%s2 + $0x17] sm:$0x1]
        %v4975 = vld [vmem:[%s2 + $0x18] sm:$0x1]
        %v4976 = vld [vmem:[%s2 + $0x19] sm:$0x1]
        %v4977 = vsel %vm740, %v4951, 0.0
        %4978 = vadd.xlane.f32.xlu0 %v4977
        %v4979 = vpop.xlane.xlu0 %4978
        %v4980 = vsel %vm740, %v4952, 0.0
        %4981 = vadd.xlane.f32.xlu0 %v4980
        %v4982 = vpop.xlane.xlu0 %4981
        %v4983 = vsel %vm740, %v4953, 0.0
        %4984 = vadd.xlane.f32.xlu0 %v4983
        %v4985 = vpop.xlane.xlu0 %4984
        %v4986 = vsel %vm740, %v4954, 0.0
        %4987 = vadd.xlane.f32.xlu0 %v4986
        %v4988 = vpop.xlane.xlu0 %4987
        %v4989 = vsel %vm740, %v4955, 0.0
        %4990 = vadd.xlane.f32.xlu0 %v4989
        %v4991 = vpop.xlane.xlu0 %4990
        %v4992 = vsel %vm740, %v4956, 0.0
        %4993 = vadd.xlane.f32.xlu0 %v4992
        %v4994 = vpop.xlane.xlu0 %4993
        %v4995 = vsel %vm740, %v4957, 0.0
        %4996 = vadd.xlane.f32.xlu0 %v4995
        %v4997 = vpop.xlane.xlu0 %4996
        %v4998 = vsel %vm740, %v4958, 0.0
        %4999 = vadd.xlane.f32.xlu0 %v4998
        %v5000 = vpop.xlane.xlu0 %4999
        %v5001 = vsel %vm740, %v4959, 0.0
        %5002 = vadd.xlane.f32.xlu0 %v5001
        %v5003 = vpop.xlane.xlu0 %5002
        %v5004 = vsel %vm740, %v4960, 0.0
        %5005 = vadd.xlane.f32.xlu0 %v5004
        %v5006 = vpop.xlane.xlu0 %5005
        %v5007 = vsel %vm740, %v4961, 0.0
        %5008 = vadd.xlane.f32.xlu0 %v5007
        %v5009 = vpop.xlane.xlu0 %5008
        %v5010 = vsel %vm740, %v4962, 0.0
        %5011 = vadd.xlane.f32.xlu0 %v5010
        %v5012 = vpop.xlane.xlu0 %5011
        %v5013 = vsel %vm740, %v4963, 0.0
        %5014 = vadd.xlane.f32.xlu0 %v5013
        %v5015 = vpop.xlane.xlu0 %5014
        %v5016 = vsel %vm740, %v4964, 0.0
        %5017 = vadd.xlane.f32.xlu0 %v5016
        %v5018 = vpop.xlane.xlu0 %5017
        %v5019 = vsel %vm740, %v4965, 0.0
        %5020 = vadd.xlane.f32.xlu0 %v5019
        %v5021 = vpop.xlane.xlu0 %5020
        %v5022 = vsel %vm740, %v4966, 0.0
        %5023 = vadd.xlane.f32.xlu0 %v5022
        %v5024 = vpop.xlane.xlu0 %5023
        %v5025 = vmul.f32 %v4979, %v789
        %v5026 = vmul.f32 %v4982, %v789
        %v5027 = vmul.f32 %v4985, %v789
        %v5028 = vmul.f32 %v4988, %v789
        %v5029 = vmul.f32 %v4991, %v789
        %v5030 = vmul.f32 %v4994, %v789
        %v5031 = vmul.f32 %v4997, %v789
        %v5032 = vmul.f32 %v5000, %v789
        %v5033 = vmul.f32 %v5003, %v789
        %v5034 = vmul.f32 %v5006, %v789
        %v5035 = vmul.f32 %v5009, %v789
        %v5036 = vmul.f32 %v5012, %v789
        %v5037 = vmul.f32 %v5015, %v789
        %v5038 = vmul.f32 %v5018, %v789
        %v5039 = vmul.f32 %v5021, %v789
        %v5040 = vmul.f32 %v5024, %v789
        %v5041 = vsub.f32 %v4951, %v5025
        %v5042 = vsub.f32 %v4952, %v5026
        %v5043 = vsub.f32 %v4953, %v5027
        %v5044 = vsub.f32 %v4954, %v5028
        %v5045 = vsub.f32 %v4955, %v5029
        %v5046 = vsub.f32 %v4956, %v5030
        %v5047 = vsub.f32 %v4957, %v5031
        %v5048 = vsub.f32 %v4958, %v5032
        %v5049 = vsub.f32 %v4959, %v5033
        %v5050 = vsub.f32 %v4960, %v5034
        %v5051 = vsub.f32 %v4961, %v5035
        %v5052 = vsub.f32 %v4962, %v5036
        %v5053 = vsub.f32 %v4963, %v5037
        %v5054 = vsub.f32 %v4964, %v5038
        %v5055 = vsub.f32 %v4965, %v5039
        %v5056 = vsub.f32 %v4966, %v5040
        %v5057 = vmul.f32 %v5041, %v5041
        %v5058 = vmul.f32 %v5042, %v5042
        %v5059 = vmul.f32 %v5043, %v5043
        %v5060 = vmul.f32 %v5044, %v5044
        %v5061 = vmul.f32 %v5045, %v5045
        %v5062 = vmul.f32 %v5046, %v5046
        %v5063 = vmul.f32 %v5047, %v5047
        %v5064 = vmul.f32 %v5048, %v5048
        %v5065 = vmul.f32 %v5049, %v5049
        %v5066 = vmul.f32 %v5050, %v5050
        %v5067 = vmul.f32 %v5051, %v5051
        %v5068 = vmul.f32 %v5052, %v5052
        %v5069 = vmul.f32 %v5053, %v5053
        %v5070 = vmul.f32 %v5054, %v5054
        %v5071 = vmul.f32 %v5055, %v5055
        %v5072 = vmul.f32 %v5056, %v5056
        %v5073 = vsel %vm740, %v5057, 0.0
        %5074 = vadd.xlane.f32.xlu0 %v5073
        %v5075 = vpop.xlane.xlu0 %5074
        %v5076 = vsel %vm740, %v5058, 0.0
        %5077 = vadd.xlane.f32.xlu0 %v5076
        %v5078 = vpop.xlane.xlu0 %5077
        %v5079 = vsel %vm740, %v5059, 0.0
        %5080 = vadd.xlane.f32.xlu0 %v5079
        %v5081 = vpop.xlane.xlu0 %5080
        %v5082 = vsel %vm740, %v5060, 0.0
        %5083 = vadd.xlane.f32.xlu0 %v5082
        %v5084 = vpop.xlane.xlu0 %5083
        %v5085 = vsel %vm740, %v5061, 0.0
        %5086 = vadd.xlane.f32.xlu0 %v5085
        %v5087 = vpop.xlane.xlu0 %5086
        %v5088 = vsel %vm740, %v5062, 0.0
        %5089 = vadd.xlane.f32.xlu0 %v5088
        %v5090 = vpop.xlane.xlu0 %5089
        %v5091 = vsel %vm740, %v5063, 0.0
        %5092 = vadd.xlane.f32.xlu0 %v5091
        %v5093 = vpop.xlane.xlu0 %5092
        %v5094 = vsel %vm740, %v5064, 0.0
        %5095 = vadd.xlane.f32.xlu0 %v5094
        %v5096 = vpop.xlane.xlu0 %5095
        %v5097 = vsel %vm740, %v5065, 0.0
        %5098 = vadd.xlane.f32.xlu0 %v5097
        %v5099 = vpop.xlane.xlu0 %5098
        %v5100 = vsel %vm740, %v5066, 0.0
        %5101 = vadd.xlane.f32.xlu0 %v5100
        %v5102 = vpop.xlane.xlu0 %5101
        %v5103 = vsel %vm740, %v5067, 0.0
        %5104 = vadd.xlane.f32.xlu0 %v5103
        %v5105 = vpop.xlane.xlu0 %5104
        %v5106 = vsel %vm740, %v5068, 0.0
        %5107 = vadd.xlane.f32.xlu0 %v5106
        %v5108 = vpop.xlane.xlu0 %5107
        %v5109 = vsel %vm740, %v5069, 0.0
        %5110 = vadd.xlane.f32.xlu0 %v5109
        %v5111 = vpop.xlane.xlu0 %5110
        %v5112 = vsel %vm740, %v5070, 0.0
        %5113 = vadd.xlane.f32.xlu0 %v5112
        %v5114 = vpop.xlane.xlu0 %5113
        %v5115 = vsel %vm740, %v5071, 0.0
        %5116 = vadd.xlane.f32.xlu0 %v5115
        %v5117 = vpop.xlane.xlu0 %5116
        %v5118 = vsel %vm740, %v5072, 0.0
        %5119 = vadd.xlane.f32.xlu0 %v5118
        %v5120 = vpop.xlane.xlu0 %5119
        %v5121 = vmul.f32 %v5075, %v789
        %v5122 = vmul.f32 %v5078, %v789
        %v5123 = vmul.f32 %v5081, %v789
        %v5124 = vmul.f32 %v5084, %v789
        %v5125 = vmul.f32 %v5087, %v789
        %v5126 = vmul.f32 %v5090, %v789
        %v5127 = vmul.f32 %v5093, %v789
        %v5128 = vmul.f32 %v5096, %v789
        %v5129 = vmul.f32 %v5099, %v789
        %v5130 = vmul.f32 %v5102, %v789
        %v5131 = vmul.f32 %v5105, %v789
        %v5132 = vmul.f32 %v5108, %v789
        %v5133 = vmul.f32 %v5111, %v789
        %v5134 = vmul.f32 %v5114, %v789
        %v5135 = vmul.f32 %v5117, %v789
        %v5136 = vmul.f32 %v5120, %v789
        %v5137 = vadd.f32 %v5121, 1e-05
        %v5138 = vadd.f32 %v5122, 1e-05
        %v5139 = vadd.f32 %v5123, 1e-05
        %v5140 = vadd.f32 %v5124, 1e-05
        %v5141 = vadd.f32 %v5125, 1e-05
        %v5142 = vadd.f32 %v5126, 1e-05
        %v5143 = vadd.f32 %v5127, 1e-05
        %v5144 = vadd.f32 %v5128, 1e-05
        %v5145 = vadd.f32 %v5129, 1e-05
        %v5146 = vadd.f32 %v5130, 1e-05
        %v5147 = vadd.f32 %v5131, 1e-05
        %v5148 = vadd.f32 %v5132, 1e-05
        %v5149 = vadd.f32 %v5133, 1e-05
        %v5150 = vadd.f32 %v5134, 1e-05
        %v5151 = vadd.f32 %v5135, 1e-05
        %v5152 = vadd.f32 %v5136, 1e-05
        %v5153 = vrsqrt.pop %v5137
        %v5154 = vrsqrt.pop %v5138
        %v5155 = vrsqrt.pop %v5139
        %v5156 = vrsqrt.pop %v5140
        %v5157 = vrsqrt.pop %v5141
        %v5158 = vrsqrt.pop %v5142
        %v5159 = vrsqrt.pop %v5143
        %v5160 = vrsqrt.pop %v5144
        %v5161 = vrsqrt.pop %v5145
        %v5162 = vrsqrt.pop %v5146
        %v5163 = vrsqrt.pop %v5147
        %v5164 = vrsqrt.pop %v5148
        %v5165 = vrsqrt.pop %v5149
        %v5166 = vrsqrt.pop %v5150
        %v5167 = vrsqrt.pop %v5151
        %v5168 = vrsqrt.pop %v5152
        %v5169 = vmul.f32 %v5041, %v5153
        %v5170 = vmul.f32 %v5042, %v5154
        %v5171 = vmul.f32 %v5043, %v5155
        %v5172 = vmul.f32 %v5044, %v5156
        %v5173 = vmul.f32 %v5045, %v5157
        %v5174 = vmul.f32 %v5046, %v5158
        %v5175 = vmul.f32 %v5047, %v5159
        %v5176 = vmul.f32 %v5048, %v5160
        %v5177 = vmul.f32 %v5049, %v5161
        %v5178 = vmul.f32 %v5050, %v5162
        %v5179 = vmul.f32 %v5051, %v5163
        %v5180 = vmul.f32 %v5052, %v5164
        %v5181 = vmul.f32 %v5053, %v5165
        %v5182 = vmul.f32 %v5054, %v5166
        %v5183 = vmul.f32 %v5055, %v5167
        %v5184 = vmul.f32 %v5056, %v5168
        %v5185 = vlaneseq
        %v5186 = vshrl.u32 %v5185, 7
        %v5187 = vsub.s32 0, %v5186
        %v5188 = vrot.slane %v4967, %v5187
        %v5189 = vmul.f32 %v5169, %v5188
        %v5190 = vmul.f32 %v5170, %v5188
        %v5191 = vmul.f32 %v5171, %v5188
        %v5192 = vmul.f32 %v5172, %v5188
        %v5193 = vmul.f32 %v5173, %v5188
        %v5194 = vmul.f32 %v5174, %v5188
        %v5195 = vmul.f32 %v5175, %v5188
        %v5196 = vmul.f32 %v5176, %v5188
        %v5197 = vmul.f32 %v5177, %v5188
        %v5198 = vmul.f32 %v5178, %v5188
        %v5199 = vmul.f32 %v5179, %v5188
        %v5200 = vmul.f32 %v5180, %v5188
        %v5201 = vmul.f32 %v5181, %v5188
        %v5202 = vmul.f32 %v5182, %v5188
        %v5203 = vmul.f32 %v5183, %v5188
        %v5204 = vmul.f32 %v5184, %v5188
        %v5205 = vlaneseq
        %v5206 = vshrl.u32 %v5205, 7
        %v5207 = vsub.s32 0, %v5206
        %v5208 = vrot.slane %v4968, %v5207
        %v5209 = vadd.f32 %v5189, %v5208
        %v5210 = vadd.f32 %v5190, %v5208
        %v5211 = vadd.f32 %v5191, %v5208
        %v5212 = vadd.f32 %v5192, %v5208
        %v5213 = vadd.f32 %v5193, %v5208
        %v5214 = vadd.f32 %v5194, %v5208
        %v5215 = vadd.f32 %v5195, %v5208
        %v5216 = vadd.f32 %v5196, %v5208
        %v5217 = vadd.f32 %v5197, %v5208
        %v5218 = vadd.f32 %v5198, %v5208
        %v5219 = vadd.f32 %v5199, %v5208
        %v5220 = vadd.f32 %v5200, %v5208
        %v5221 = vadd.f32 %v5201, %v5208
        %v5222 = vadd.f32 %v5202, %v5208
        %v5223 = vadd.f32 %v5203, %v5208
        %v5224 = vadd.f32 %v5204, %v5208
        %v5225 = vld [vmem:[%s10] sm:$0xff]
        %v5226 = vld [vmem:[%s10 + $0x8] sm:$0xff]
        %v5227 = vld [vmem:[%s10 + $0x10] sm:$0xff]
        %v5228 = vld [vmem:[%s10 + $0x18] sm:$0xff]
        %v5229 = vlaneseq
        %v5230 = vshrl.u32 %v5229, 7
        %v5231 = vsub.s32 0, %v5230
        %v5232 = vrot.slane %v4969, %v5231
        %v5234 = vsel %vm740, %v5209, 0
        %v5237 = vsel %vm740, %v5210, 0
        %v5240 = vsel %vm740, %v5211, 0
        %v5243 = vsel %vm740, %v5212, 0
        %v5246 = vsel %vm740, %v5213, 0
        %v5249 = vsel %vm740, %v5214, 0
        %v5252 = vsel %vm740, %v5215, 0
        %v5255 = vsel %vm740, %v5216, 0
        %v5258 = vsel %vm740, %v5217, 0
        %v5261 = vsel %vm740, %v5218, 0
        %v5264 = vsel %vm740, %v5219, 0
        %v5267 = vsel %vm740, %v5220, 0
        %v5270 = vsel %vm740, %v5221, 0
        %v5273 = vsel %vm740, %v5222, 0
        %v5276 = vsel %vm740, %v5223, 0
        %v5279 = vsel %vm740, %v5224, 0
        %5281 = vmatprep.subr.mxu0 0.0
        %5282 = vmatpush1.msra.mxu0 0.0
        %5283 = vmatprep.subr.mxu0 0.0
        %5284 = vmatpush1.msra.mxu0 0.0
        %5285 = vmatprep.subr.mxu0 0.0
        %5286 = vmatpush1.msra.mxu0 0.0
        %5287 = vmatprep.subr.mxu0 0.0
        %5288 = vmatpush1.msra.mxu0 0.0
        %5289 = vmatprep.subr.mxu0 0.0
        %5290 = vmatpush1.msra.mxu0 0.0
        %5291 = vmatprep.subr.mxu0 0.0
        %5292 = vmatpush1.msra.mxu0 0.0
        %5293 = vmatprep.subr.mxu0 0.0
        %5294 = vmatpush1.msra.mxu0 0.0
        %5295 = vmatprep.subr.mxu0 0.0
        %5296 = vmatpush1.msra.mxu0 0.0
        %5297 = vmatprep.subr.mxu0 0.0
        %5298 = vmatpush1.msra.mxu0 0.0
        %5299 = vmatprep.subr.mxu0 0.0
        %5300 = vmatpush1.msra.mxu0 0.0
        %5301 = vmatprep.subr.mxu0 0.0
        %5302 = vmatpush1.msra.mxu0 0.0
        %5303 = vmatprep.subr.mxu0 0.0
        %5304 = vmatpush1.msra.mxu0 0.0
        %5305 = vmatprep.subr.mxu0 0.0
        %5306 = vmatpush1.msra.mxu0 %v5228
        %5307 = vmatprep.subr.mxu0 0.0
        %5308 = vmatpush1.msra.mxu0 %v5227
        %5309 = vmatprep.subr.mxu0 0.0
        %5310 = vmatpush1.msra.mxu0 %v5226
        %5311 = vmatprep.subr.mxu0 0.0
        %5312 = vmatpush1.msra.mxu0 %v5225
        %5313 = vmatprep.subr.mxu0 0.0
        %5314 = vmatpush2.msra.mxu0 0.0
        %5315 = vmatprep.subr.mxu0 0.0
        %5316 = vmatpush2.msra.mxu0 0.0
        %5317 = vmatprep.subr.mxu0 0.0
        %5318 = vmatpush2.msra.mxu0 0.0
        %5319 = vmatprep.subr.mxu0 0.0
        %5320 = vmatpush2.msra.mxu0 0.0
        %5321 = vmatprep.subr.mxu0 0.0
        %5322 = vmatpush2.msra.mxu0 0.0
        %5323 = vmatprep.subr.mxu0 0.0
        %5324 = vmatpush2.msra.mxu0 0.0
        %5325 = vmatprep.subr.mxu0 0.0
        %5326 = vmatpush2.msra.mxu0 0.0
        %5327 = vmatprep.subr.mxu0 0.0
        %5328 = vmatpush2.msra.mxu0 0.0
        %5329 = vmatprep.subr.mxu0 0.0
        %5330 = vmatpush2.msra.mxu0 0.0
        %5331 = vmatprep.subr.mxu0 0.0
        %5332 = vmatpush2.msra.mxu0 0.0
        %5333 = vmatprep.subr.mxu0 0.0
        %5334 = vmatpush2.msra.mxu0 0.0
        %5335 = vmatprep.subr.mxu0 0.0
        %5336 = vmatpush2.msra.mxu0 0.0
        %5337 = vmatprep.subr.mxu0 0.0
        %5338 = vmatpush2.msra.mxu0 0.0
        %5339 = vmatprep.subr.mxu0 0.0
        %5340 = vmatpush2.msra.mxu0 0.0
        %5341 = vmatprep.subr.mxu0 0.0
        %5342 = vmatpush2.msra.mxu0 0.0
        %5343 = vmatprep.subr.mxu0 0.0
        %5344 = vmatpush2.msra.mxu0 0.0
        %5345 = vmatprep.mubr.f32.mxu0 0.0
        %5346 = vmatmul.mubr.f32.gmra.mxu0 %v5234
        %v5347 = vpop.f32.mrf.mxu0
        %v5348 = vadd.f32 %v5232, %v5347
        %v5349 = vpop.f32.mrf.mxu0
        %5350 = vmatprep.mubr.f32.mxu0 0.0
        %5351 = vmatmul.mubr.f32.gmra.mxu0 %v5237
        %v5352 = vpop.f32.mrf.mxu0
        %v5353 = vadd.f32 %v5232, %v5352
        %v5354 = vpop.f32.mrf.mxu0
        %5355 = vmatprep.mubr.f32.mxu0 0.0
        %5356 = vmatmul.mubr.f32.gmra.mxu0 %v5240
        %v5357 = vpop.f32.mrf.mxu0
        %v5358 = vadd.f32 %v5232, %v5357
        %v5359 = vpop.f32.mrf.mxu0
        %5360 = vmatprep.mubr.f32.mxu0 0.0
        %5361 = vmatmul.mubr.f32.gmra.mxu0 %v5243
        %v5362 = vpop.f32.mrf.mxu0
        %v5363 = vadd.f32 %v5232, %v5362
        %v5364 = vpop.f32.mrf.mxu0
        %5365 = vmatprep.mubr.f32.mxu0 0.0
        %5366 = vmatmul.mubr.f32.gmra.mxu0 %v5246
        %v5367 = vpop.f32.mrf.mxu0
        %v5368 = vadd.f32 %v5232, %v5367
        %v5369 = vpop.f32.mrf.mxu0
        %5370 = vmatprep.mubr.f32.mxu0 0.0
        %5371 = vmatmul.mubr.f32.gmra.mxu0 %v5249
        %v5372 = vpop.f32.mrf.mxu0
        %v5373 = vadd.f32 %v5232, %v5372
        %v5374 = vpop.f32.mrf.mxu0
        %5375 = vmatprep.mubr.f32.mxu0 0.0
        %5376 = vmatmul.mubr.f32.gmra.mxu0 %v5252
        %v5377 = vpop.f32.mrf.mxu0
        %v5378 = vadd.f32 %v5232, %v5377
        %v5379 = vpop.f32.mrf.mxu0
        %5380 = vmatprep.mubr.f32.mxu0 0.0
        %5381 = vmatmul.mubr.f32.gmra.mxu0 %v5255
        %v5382 = vpop.f32.mrf.mxu0
        %v5383 = vadd.f32 %v5232, %v5382
        %v5384 = vpop.f32.mrf.mxu0
        %5385 = vmatprep.mubr.f32.mxu0 0.0
        %5386 = vmatmul.mubr.f32.gmra.mxu0 %v5258
        %v5387 = vpop.f32.mrf.mxu0
        %v5388 = vadd.f32 %v5232, %v5387
        %v5389 = vpop.f32.mrf.mxu0
        %5390 = vmatprep.mubr.f32.mxu0 0.0
        %5391 = vmatmul.mubr.f32.gmra.mxu0 %v5261
        %v5392 = vpop.f32.mrf.mxu0
        %v5393 = vadd.f32 %v5232, %v5392
        %v5394 = vpop.f32.mrf.mxu0
        %5395 = vmatprep.mubr.f32.mxu0 0.0
        %5396 = vmatmul.mubr.f32.gmra.mxu0 %v5264
        %v5397 = vpop.f32.mrf.mxu0
        %v5398 = vadd.f32 %v5232, %v5397
        %v5399 = vpop.f32.mrf.mxu0
        %5400 = vmatprep.mubr.f32.mxu0 0.0
        %5401 = vmatmul.mubr.f32.gmra.mxu0 %v5267
        %v5402 = vpop.f32.mrf.mxu0
        %v5403 = vadd.f32 %v5232, %v5402
        %v5404 = vpop.f32.mrf.mxu0
        %5405 = vmatprep.mubr.f32.mxu0 0.0
        %5406 = vmatmul.mubr.f32.gmra.mxu0 %v5270
        %v5407 = vpop.f32.mrf.mxu0
        %v5408 = vadd.f32 %v5232, %v5407
        %v5409 = vpop.f32.mrf.mxu0
        %5410 = vmatprep.mubr.f32.mxu0 0.0
        %5411 = vmatmul.mubr.f32.gmra.mxu0 %v5273
        %v5412 = vpop.f32.mrf.mxu0
        %v5413 = vadd.f32 %v5232, %v5412
        %v5414 = vpop.f32.mrf.mxu0
        %5415 = vmatprep.mubr.f32.mxu0 0.0
        %5416 = vmatmul.mubr.f32.gmra.mxu0 %v5276
        %v5417 = vpop.f32.mrf.mxu0
        %v5418 = vadd.f32 %v5232, %v5417
        %v5419 = vpop.f32.mrf.mxu0
        %5420 = vmatprep.mubr.f32.mxu0 0.0
        %5421 = vmatmul.mubr.f32.gmra.mxu0 %v5279
        %v5422 = vpop.f32.mrf.mxu0
        %v5423 = vadd.f32 %v5232, %v5422
        %v5424 = vpop.f32.mrf.mxu0
        %5425 = vdwg.mxu0
        %v5426 = vmul.f32 %v5348, 0.35355338
        %v5427 = vmul.f32 %v5353, 0.35355338
        %v5428 = vmul.f32 %v5358, 0.35355338
        %v5429 = vmul.f32 %v5363, 0.35355338
        %v5430 = vmul.f32 %v5368, 0.35355338
        %v5431 = vmul.f32 %v5373, 0.35355338
        %v5432 = vmul.f32 %v5378, 0.35355338
        %v5433 = vmul.f32 %v5383, 0.35355338
        %v5434 = vmul.f32 %v5388, 0.35355338
        %v5435 = vmul.f32 %v5393, 0.35355338
        %v5436 = vmul.f32 %v5398, 0.35355338
        %v5437 = vmul.f32 %v5403, 0.35355338
        %v5438 = vmul.f32 %v5408, 0.35355338
        %v5439 = vmul.f32 %v5413, 0.35355338
        %v5440 = vmul.f32 %v5418, 0.35355338
        %v5441 = vmul.f32 %v5423, 0.35355338
        %s5442 = scalar_lea.vmem %s10, 32
        %v5443 = vld [vmem:[%s5442] sm:$0xff]
        %v5444 = vld [vmem:[%s5442 + $0x8] sm:$0xff]
        %v5445 = vld [vmem:[%s5442 + $0x10] sm:$0xff]
        %v5446 = vld [vmem:[%s5442 + $0x18] sm:$0xff]
        %v5447 = vlaneseq
        %v5448 = vshrl.u32 %v5447, 7
        %v5449 = vsub.s32 0, %v5448
        %v5450 = vrot.slane %v4970, %v5449
        %5451 = vmatprep.subr.mxu0 0.0
        %5452 = vmatpush1.msra.mxu0 0.0
        %5453 = vmatprep.subr.mxu0 0.0
        %5454 = vmatpush1.msra.mxu0 0.0
        %5455 = vmatprep.subr.mxu0 0.0
        %5456 = vmatpush1.msra.mxu0 0.0
        %5457 = vmatprep.subr.mxu0 0.0
        %5458 = vmatpush1.msra.mxu0 0.0
        %5459 = vmatprep.subr.mxu0 0.0
        %5460 = vmatpush1.msra.mxu0 0.0
        %5461 = vmatprep.subr.mxu0 0.0
        %5462 = vmatpush1.msra.mxu0 0.0
        %5463 = vmatprep.subr.mxu0 0.0
        %5464 = vmatpush1.msra.mxu0 0.0
        %5465 = vmatprep.subr.mxu0 0.0
        %5466 = vmatpush1.msra.mxu0 0.0
        %5467 = vmatprep.subr.mxu0 0.0
        %5468 = vmatpush1.msra.mxu0 0.0
        %5469 = vmatprep.subr.mxu0 0.0
        %5470 = vmatpush1.msra.mxu0 0.0
        %5471 = vmatprep.subr.mxu0 0.0
        %5472 = vmatpush1.msra.mxu0 0.0
        %5473 = vmatprep.subr.mxu0 0.0
        %5474 = vmatpush1.msra.mxu0 0.0
        %5475 = vmatprep.subr.mxu0 0.0
        %5476 = vmatpush1.msra.mxu0 %v5446
        %5477 = vmatprep.subr.mxu0 0.0
        %5478 = vmatpush1.msra.mxu0 %v5445
        %5479 = vmatprep.subr.mxu0 0.0
        %5480 = vmatpush1.msra.mxu0 %v5444
        %5481 = vmatprep.subr.mxu0 0.0
        %5482 = vmatpush1.msra.mxu0 %v5443
        %5483 = vmatprep.subr.mxu0 0.0
        %5484 = vmatpush2.msra.mxu0 0.0
        %5485 = vmatprep.subr.mxu0 0.0
        %5486 = vmatpush2.msra.mxu0 0.0
        %5487 = vmatprep.subr.mxu0 0.0
        %5488 = vmatpush2.msra.mxu0 0.0
        %5489 = vmatprep.subr.mxu0 0.0
        %5490 = vmatpush2.msra.mxu0 0.0
        %5491 = vmatprep.subr.mxu0 0.0
        %5492 = vmatpush2.msra.mxu0 0.0
        %5493 = vmatprep.subr.mxu0 0.0
        %5494 = vmatpush2.msra.mxu0 0.0
        %5495 = vmatprep.subr.mxu0 0.0
        %5496 = vmatpush2.msra.mxu0 0.0
        %5497 = vmatprep.subr.mxu0 0.0
        %5498 = vmatpush2.msra.mxu0 0.0
        %5499 = vmatprep.subr.mxu0 0.0
        %5500 = vmatpush2.msra.mxu0 0.0
        %5501 = vmatprep.subr.mxu0 0.0
        %5502 = vmatpush2.msra.mxu0 0.0
        %5503 = vmatprep.subr.mxu0 0.0
        %5504 = vmatpush2.msra.mxu0 0.0
        %5505 = vmatprep.subr.mxu0 0.0
        %5506 = vmatpush2.msra.mxu0 0.0
        %5507 = vmatprep.subr.mxu0 0.0
        %5508 = vmatpush2.msra.mxu0 0.0
        %5509 = vmatprep.subr.mxu0 0.0
        %5510 = vmatpush2.msra.mxu0 0.0
        %5511 = vmatprep.subr.mxu0 0.0
        %5512 = vmatpush2.msra.mxu0 0.0
        %5513 = vmatprep.subr.mxu0 0.0
        %5514 = vmatpush2.msra.mxu0 0.0
        %5515 = vmatprep.mubr.f32.mxu0 0.0
        %5516 = vmatmul.mubr.f32.gmra.mxu0 %v5234
        %v5517 = vpop.f32.mrf.mxu0
        %v5518 = vadd.f32 %v5450, %v5517
        %v5519 = vpop.f32.mrf.mxu0
        %5520 = vmatprep.mubr.f32.mxu0 0.0
        %5521 = vmatmul.mubr.f32.gmra.mxu0 %v5237
        %v5522 = vpop.f32.mrf.mxu0
        %v5523 = vadd.f32 %v5450, %v5522
        %v5524 = vpop.f32.mrf.mxu0
        %5525 = vmatprep.mubr.f32.mxu0 0.0
        %5526 = vmatmul.mubr.f32.gmra.mxu0 %v5240
        %v5527 = vpop.f32.mrf.mxu0
        %v5528 = vadd.f32 %v5450, %v5527
        %v5529 = vpop.f32.mrf.mxu0
        %5530 = vmatprep.mubr.f32.mxu0 0.0
        %5531 = vmatmul.mubr.f32.gmra.mxu0 %v5243
        %v5532 = vpop.f32.mrf.mxu0
        %v5533 = vadd.f32 %v5450, %v5532
        %v5534 = vpop.f32.mrf.mxu0
        %5535 = vmatprep.mubr.f32.mxu0 0.0
        %5536 = vmatmul.mubr.f32.gmra.mxu0 %v5246
        %v5537 = vpop.f32.mrf.mxu0
        %v5538 = vadd.f32 %v5450, %v5537
        %v5539 = vpop.f32.mrf.mxu0
        %5540 = vmatprep.mubr.f32.mxu0 0.0
        %5541 = vmatmul.mubr.f32.gmra.mxu0 %v5249
        %v5542 = vpop.f32.mrf.mxu0
        %v5543 = vadd.f32 %v5450, %v5542
        %v5544 = vpop.f32.mrf.mxu0
        %5545 = vmatprep.mubr.f32.mxu0 0.0
        %5546 = vmatmul.mubr.f32.gmra.mxu0 %v5252
        %v5547 = vpop.f32.mrf.mxu0
        %v5548 = vadd.f32 %v5450, %v5547
        %v5549 = vpop.f32.mrf.mxu0
        %5550 = vmatprep.mubr.f32.mxu0 0.0
        %5551 = vmatmul.mubr.f32.gmra.mxu0 %v5255
        %v5552 = vpop.f32.mrf.mxu0
        %v5553 = vadd.f32 %v5450, %v5552
        %v5554 = vpop.f32.mrf.mxu0
        %5555 = vmatprep.mubr.f32.mxu0 0.0
        %5556 = vmatmul.mubr.f32.gmra.mxu0 %v5258
        %v5557 = vpop.f32.mrf.mxu0
        %v5558 = vadd.f32 %v5450, %v5557
        %v5559 = vpop.f32.mrf.mxu0
        %5560 = vmatprep.mubr.f32.mxu0 0.0
        %5561 = vmatmul.mubr.f32.gmra.mxu0 %v5261
        %v5562 = vpop.f32.mrf.mxu0
        %v5563 = vadd.f32 %v5450, %v5562
        %v5564 = vpop.f32.mrf.mxu0
        %5565 = vmatprep.mubr.f32.mxu0 0.0
        %5566 = vmatmul.mubr.f32.gmra.mxu0 %v5264
        %v5567 = vpop.f32.mrf.mxu0
        %v5568 = vadd.f32 %v5450, %v5567
        %v5569 = vpop.f32.mrf.mxu0
        %5570 = vmatprep.mubr.f32.mxu0 0.0
        %5571 = vmatmul.mubr.f32.gmra.mxu0 %v5267
        %v5572 = vpop.f32.mrf.mxu0
        %v5573 = vadd.f32 %v5450, %v5572
        %v5574 = vpop.f32.mrf.mxu0
        %5575 = vmatprep.mubr.f32.mxu0 0.0
        %5576 = vmatmul.mubr.f32.gmra.mxu0 %v5270
        %v5577 = vpop.f32.mrf.mxu0
        %v5578 = vadd.f32 %v5450, %v5577
        %v5579 = vpop.f32.mrf.mxu0
        %5580 = vmatprep.mubr.f32.mxu0 0.0
        %5581 = vmatmul.mubr.f32.gmra.mxu0 %v5273
        %v5582 = vpop.f32.mrf.mxu0
        %v5583 = vadd.f32 %v5450, %v5582
        %v5584 = vpop.f32.mrf.mxu0
        %5585 = vmatprep.mubr.f32.mxu0 0.0
        %5586 = vmatmul.mubr.f32.gmra.mxu0 %v5276
        %v5587 = vpop.f32.mrf.mxu0
        %v5588 = vadd.f32 %v5450, %v5587
        %v5589 = vpop.f32.mrf.mxu0
        %5590 = vmatprep.mubr.f32.mxu0 0.0
        %5591 = vmatmul.mubr.f32.gmra.mxu0 %v5279
        %v5592 = vpop.f32.mrf.mxu0
        %v5593 = vadd.f32 %v5450, %v5592
        %v5594 = vpop.f32.mrf.mxu0
        %5595 = vdwg.mxu0
        %s5596 = scalar_lea.vmem %s10, 64
        %v5597 = vld [vmem:[%s5596] sm:$0xff]
        %v5598 = vld [vmem:[%s5596 + $0x8] sm:$0xff]
        %v5599 = vld [vmem:[%s5596 + $0x10] sm:$0xff]
        %v5600 = vld [vmem:[%s5596 + $0x18] sm:$0xff]
        %v5601 = vlaneseq
        %v5602 = vshrl.u32 %v5601, 7
        %v5603 = vsub.s32 0, %v5602
        %v5604 = vrot.slane %v4971, %v5603
        %5605 = vmatprep.subr.mxu0 0.0
        %5606 = vmatpush1.msra.mxu0 0.0
        %5607 = vmatprep.subr.mxu0 0.0
        %5608 = vmatpush1.msra.mxu0 0.0
        %5609 = vmatprep.subr.mxu0 0.0
        %5610 = vmatpush1.msra.mxu0 0.0
        %5611 = vmatprep.subr.mxu0 0.0
        %5612 = vmatpush1.msra.mxu0 0.0
        %5613 = vmatprep.subr.mxu0 0.0
        %5614 = vmatpush1.msra.mxu0 0.0
        %5615 = vmatprep.subr.mxu0 0.0
        %5616 = vmatpush1.msra.mxu0 0.0
        %5617 = vmatprep.subr.mxu0 0.0
        %5618 = vmatpush1.msra.mxu0 0.0
        %5619 = vmatprep.subr.mxu0 0.0
        %5620 = vmatpush1.msra.mxu0 0.0
        %5621 = vmatprep.subr.mxu0 0.0
        %5622 = vmatpush1.msra.mxu0 0.0
        %5623 = vmatprep.subr.mxu0 0.0
        %5624 = vmatpush1.msra.mxu0 0.0
        %5625 = vmatprep.subr.mxu0 0.0
        %5626 = vmatpush1.msra.mxu0 0.0
        %5627 = vmatprep.subr.mxu0 0.0
        %5628 = vmatpush1.msra.mxu0 0.0
        %5629 = vmatprep.subr.mxu0 0.0
        %5630 = vmatpush1.msra.mxu0 %v5600
        %5631 = vmatprep.subr.mxu0 0.0
        %5632 = vmatpush1.msra.mxu0 %v5599
        %5633 = vmatprep.subr.mxu0 0.0
        %5634 = vmatpush1.msra.mxu0 %v5598
        %5635 = vmatprep.subr.mxu0 0.0
        %5636 = vmatpush1.msra.mxu0 %v5597
        %5637 = vmatprep.subr.mxu0 0.0
        %5638 = vmatpush2.msra.mxu0 0.0
        %5639 = vmatprep.subr.mxu0 0.0
        %5640 = vmatpush2.msra.mxu0 0.0
        %5641 = vmatprep.subr.mxu0 0.0
        %5642 = vmatpush2.msra.mxu0 0.0
        %5643 = vmatprep.subr.mxu0 0.0
        %5644 = vmatpush2.msra.mxu0 0.0
        %5645 = vmatprep.subr.mxu0 0.0
        %5646 = vmatpush2.msra.mxu0 0.0
        %5647 = vmatprep.subr.mxu0 0.0
        %5648 = vmatpush2.msra.mxu0 0.0
        %5649 = vmatprep.subr.mxu0 0.0
        %5650 = vmatpush2.msra.mxu0 0.0
        %5651 = vmatprep.subr.mxu0 0.0
        %5652 = vmatpush2.msra.mxu0 0.0
        %5653 = vmatprep.subr.mxu0 0.0
        %5654 = vmatpush2.msra.mxu0 0.0
        %5655 = vmatprep.subr.mxu0 0.0
        %5656 = vmatpush2.msra.mxu0 0.0
        %5657 = vmatprep.subr.mxu0 0.0
        %5658 = vmatpush2.msra.mxu0 0.0
        %5659 = vmatprep.subr.mxu0 0.0
        %5660 = vmatpush2.msra.mxu0 0.0
        %5661 = vmatprep.subr.mxu0 0.0
        %5662 = vmatpush2.msra.mxu0 0.0
        %5663 = vmatprep.subr.mxu0 0.0
        %5664 = vmatpush2.msra.mxu0 0.0
        %5665 = vmatprep.subr.mxu0 0.0
        %5666 = vmatpush2.msra.mxu0 0.0
        %5667 = vmatprep.subr.mxu0 0.0
        %5668 = vmatpush2.msra.mxu0 0.0
        %5669 = vmatprep.mubr.f32.mxu0 0.0
        %5670 = vmatmul.mubr.f32.gmra.mxu0 %v5234
        %v5671 = vpop.f32.mrf.mxu0
        %v5672 = vadd.f32 %v5604, %v5671
        %v5673 = vpop.f32.mrf.mxu0
        %5674 = vmatprep.mubr.f32.mxu0 0.0
        %5675 = vmatmul.mubr.f32.gmra.mxu0 %v5237
        %v5676 = vpop.f32.mrf.mxu0
        %v5677 = vadd.f32 %v5604, %v5676
        %v5678 = vpop.f32.mrf.mxu0
        %5679 = vmatprep.mubr.f32.mxu0 0.0
        %5680 = vmatmul.mubr.f32.gmra.mxu0 %v5240
        %v5681 = vpop.f32.mrf.mxu0
        %v5682 = vadd.f32 %v5604, %v5681
        %v5683 = vpop.f32.mrf.mxu0
        %5684 = vmatprep.mubr.f32.mxu0 0.0
        %5685 = vmatmul.mubr.f32.gmra.mxu0 %v5243
        %v5686 = vpop.f32.mrf.mxu0
        %v5687 = vadd.f32 %v5604, %v5686
        %v5688 = vpop.f32.mrf.mxu0
        %5689 = vmatprep.mubr.f32.mxu0 0.0
        %5690 = vmatmul.mubr.f32.gmra.mxu0 %v5246
        %v5691 = vpop.f32.mrf.mxu0
        %v5692 = vadd.f32 %v5604, %v5691
        %v5693 = vpop.f32.mrf.mxu0
        %5694 = vmatprep.mubr.f32.mxu0 0.0
        %5695 = vmatmul.mubr.f32.gmra.mxu0 %v5249
        %v5696 = vpop.f32.mrf.mxu0
        %v5697 = vadd.f32 %v5604, %v5696
        %v5698 = vpop.f32.mrf.mxu0
        %5699 = vmatprep.mubr.f32.mxu0 0.0
        %5700 = vmatmul.mubr.f32.gmra.mxu0 %v5252
        %v5701 = vpop.f32.mrf.mxu0
        %v5702 = vadd.f32 %v5604, %v5701
        %v5703 = vpop.f32.mrf.mxu0
        %5704 = vmatprep.mubr.f32.mxu0 0.0
        %5705 = vmatmul.mubr.f32.gmra.mxu0 %v5255
        %v5706 = vpop.f32.mrf.mxu0
        %v5707 = vadd.f32 %v5604, %v5706
        %v5708 = vpop.f32.mrf.mxu0
        %5709 = vmatprep.mubr.f32.mxu0 0.0
        %5710 = vmatmul.mubr.f32.gmra.mxu0 %v5258
        %v5711 = vpop.f32.mrf.mxu0
        %v5712 = vadd.f32 %v5604, %v5711
        %v5713 = vpop.f32.mrf.mxu0
        %5714 = vmatprep.mubr.f32.mxu0 0.0
        %5715 = vmatmul.mubr.f32.gmra.mxu0 %v5261
        %v5716 = vpop.f32.mrf.mxu0
        %v5717 = vadd.f32 %v5604, %v5716
        %v5718 = vpop.f32.mrf.mxu0
        %5719 = vmatprep.mubr.f32.mxu0 0.0
        %5720 = vmatmul.mubr.f32.gmra.mxu0 %v5264
        %v5721 = vpop.f32.mrf.mxu0
        %v5722 = vadd.f32 %v5604, %v5721
        %v5723 = vpop.f32.mrf.mxu0
        %5724 = vmatprep.mubr.f32.mxu0 0.0
        %5725 = vmatmul.mubr.f32.gmra.mxu0 %v5267
        %v5726 = vpop.f32.mrf.mxu0
        %v5727 = vadd.f32 %v5604, %v5726
        %v5728 = vpop.f32.mrf.mxu0
        %5729 = vmatprep.mubr.f32.mxu0 0.0
        %5730 = vmatmul.mubr.f32.gmra.mxu0 %v5270
        %v5731 = vpop.f32.mrf.mxu0
        %v5732 = vadd.f32 %v5604, %v5731
        %v5733 = vpop.f32.mrf.mxu0
        %5734 = vmatprep.mubr.f32.mxu0 0.0
        %5735 = vmatmul.mubr.f32.gmra.mxu0 %v5273
        %v5736 = vpop.f32.mrf.mxu0
        %v5737 = vadd.f32 %v5604, %v5736
        %v5738 = vpop.f32.mrf.mxu0
        %5739 = vmatprep.mubr.f32.mxu0 0.0
        %5740 = vmatmul.mubr.f32.gmra.mxu0 %v5276
        %v5741 = vpop.f32.mrf.mxu0
        %v5742 = vadd.f32 %v5604, %v5741
        %v5743 = vpop.f32.mrf.mxu0
        %5744 = vmatprep.mubr.f32.mxu0 0.0
        %5745 = vmatmul.mubr.f32.gmra.mxu0 %v5279
        %v5746 = vpop.f32.mrf.mxu0
        %v5747 = vadd.f32 %v5604, %v5746
        %v5748 = vpop.f32.mrf.mxu0
        %5749 = vdwg.mxu0
        %v5750 = vmul.f32 %v5426, %v501
        %v5751 = vmul.f32 %v5427, %v501
        %v5752 = vmul.f32 %v5428, %v501
        %v5753 = vmul.f32 %v5429, %v501
        %v5754 = vmul.f32 %v5430, %v501
        %v5755 = vmul.f32 %v5431, %v501
        %v5756 = vmul.f32 %v5432, %v501
        %v5757 = vmul.f32 %v5433, %v501
        %v5758 = vmul.f32 %v5434, %v501
        %v5759 = vmul.f32 %v5435, %v501
        %v5760 = vmul.f32 %v5436, %v501
        %v5761 = vmul.f32 %v5437, %v501
        %v5762 = vmul.f32 %v5438, %v501
        %v5763 = vmul.f32 %v5439, %v501
        %v5764 = vmul.f32 %v5440, %v501
        %v5765 = vmul.f32 %v5441, %v501
        %v5766 = vld [vmem:[%s14] sm:$0xff]
        %v5767 = vld [vmem:[%s14 + $0x8] sm:$0xff]
        %v5768 = vld [vmem:[%s14 + $0x10] sm:$0xff]
        %v5769 = vld [vmem:[%s14 + $0x18] sm:$0xff]
        %v5770 = vld [vmem:[%s14 + $0x20] sm:$0xff]
        %v5771 = vld [vmem:[%s14 + $0x28] sm:$0xff]
        %v5772 = vld [vmem:[%s14 + $0x30] sm:$0xff]
        %v5773 = vld [vmem:[%s14 + $0x38] sm:$0xff]
        %v5774 = vld [vmem:[%s14 + $0x40] sm:$0xff]
        %v5775 = vld [vmem:[%s14 + $0x48] sm:$0xff]
        %v5776 = vld [vmem:[%s14 + $0x50] sm:$0xff]
        %v5777 = vld [vmem:[%s14 + $0x58] sm:$0xff]
        %v5778 = vld [vmem:[%s14 + $0x60] sm:$0xff]
        %v5779 = vld [vmem:[%s14 + $0x68] sm:$0xff]
        %v5780 = vld [vmem:[%s14 + $0x70] sm:$0xff]
        %v5781 = vld [vmem:[%s14 + $0x78] sm:$0xff]
        %v5783 = vsel %vm740, %v5750, 0
        %v5786 = vsel %vm740, %v5751, 0
        %v5789 = vsel %vm740, %v5752, 0
        %v5792 = vsel %vm740, %v5753, 0
        %v5795 = vsel %vm740, %v5754, 0
        %v5798 = vsel %vm740, %v5755, 0
        %v5801 = vsel %vm740, %v5756, 0
        %v5804 = vsel %vm740, %v5757, 0
        %v5807 = vsel %vm740, %v5758, 0
        %v5810 = vsel %vm740, %v5759, 0
        %v5813 = vsel %vm740, %v5760, 0
        %v5816 = vsel %vm740, %v5761, 0
        %v5819 = vsel %vm740, %v5762, 0
        %v5822 = vsel %vm740, %v5763, 0
        %v5825 = vsel %vm740, %v5764, 0
        %v5828 = vsel %vm740, %v5765, 0
        %v5831 = vsel %vm740, %v5518, 0
        %v5834 = vsel %vm740, %v5523, 0
        %v5837 = vsel %vm740, %v5528, 0
        %v5840 = vsel %vm740, %v5533, 0
        %v5843 = vsel %vm740, %v5538, 0
        %v5846 = vsel %vm740, %v5543, 0
        %v5849 = vsel %vm740, %v5548, 0
        %v5852 = vsel %vm740, %v5553, 0
        %v5855 = vsel %vm740, %v5558, 0
        %v5858 = vsel %vm740, %v5563, 0
        %v5861 = vsel %vm740, %v5568, 0
        %v5864 = vsel %vm740, %v5573, 0
        %v5867 = vsel %vm740, %v5578, 0
        %v5870 = vsel %vm740, %v5583, 0
        %v5873 = vsel %vm740, %v5588, 0
        %v5876 = vsel %vm740, %v5593, 0
        %5878 = vmatprep.subr.mxu0 0.0
        %5879 = vmatpush1.xpose.msra.mxu0 %v5876
        %5880 = vmatprep.subr.mxu0 0.0
        %5881 = vmatpush1.xpose.msra.mxu0 %v5873
        %5882 = vmatprep.subr.mxu0 0.0
        %5883 = vmatpush1.xpose.msra.mxu0 %v5870
        %5884 = vmatprep.subr.mxu0 0.0
        %5885 = vmatpush1.xpose.msra.mxu0 %v5867
        %5886 = vmatprep.subr.mxu0 0.0
        %5887 = vmatpush1.xpose.msra.mxu0 %v5864
        %5888 = vmatprep.subr.mxu0 0.0
        %5889 = vmatpush1.xpose.msra.mxu0 %v5861
        %5890 = vmatprep.subr.mxu0 0.0
        %5891 = vmatpush1.xpose.msra.mxu0 %v5858
        %5892 = vmatprep.subr.mxu0 0.0
        %5893 = vmatpush1.xpose.msra.mxu0 %v5855
        %5894 = vmatprep.subr.mxu0 0.0
        %5895 = vmatpush1.xpose.msra.mxu0 %v5852
        %5896 = vmatprep.subr.mxu0 0.0
        %5897 = vmatpush1.xpose.msra.mxu0 %v5849
        %5898 = vmatprep.subr.mxu0 0.0
        %5899 = vmatpush1.xpose.msra.mxu0 %v5846
        %5900 = vmatprep.subr.mxu0 0.0
        %5901 = vmatpush1.xpose.msra.mxu0 %v5843
        %5902 = vmatprep.subr.mxu0 0.0
        %5903 = vmatpush1.xpose.msra.mxu0 %v5840
        %5904 = vmatprep.subr.mxu0 0.0
        %5905 = vmatpush1.xpose.msra.mxu0 %v5837
        %5906 = vmatprep.subr.mxu0 0.0
        %5907 = vmatpush1.xpose.msra.mxu0 %v5834
        %5908 = vmatprep.subr.mxu0 0.0
        %5909 = vmatpush1.xpose.msra.mxu0 %v5831
        %5910 = vmatprep.subr.mxu0 0.0
        %5911 = vmatpush2.xpose.msra.mxu0 0.0
        %5912 = vmatprep.subr.mxu0 0.0
        %5913 = vmatpush2.xpose.msra.mxu0 0.0
        %5914 = vmatprep.subr.mxu0 0.0
        %5915 = vmatpush2.xpose.msra.mxu0 0.0
        %5916 = vmatprep.subr.mxu0 0.0
        %5917 = vmatpush2.xpose.msra.mxu0 0.0
        %5918 = vmatprep.subr.mxu0 0.0
        %5919 = vmatpush2.xpose.msra.mxu0 0.0
        %5920 = vmatprep.subr.mxu0 0.0
        %5921 = vmatpush2.xpose.msra.mxu0 0.0
        %5922 = vmatprep.subr.mxu0 0.0
        %5923 = vmatpush2.xpose.msra.mxu0 0.0
        %5924 = vmatprep.subr.mxu0 0.0
        %5925 = vmatpush2.xpose.msra.mxu0 0.0
        %5926 = vmatprep.subr.mxu0 0.0
        %5927 = vmatpush2.xpose.msra.mxu0 0.0
        %5928 = vmatprep.subr.mxu0 0.0
        %5929 = vmatpush2.xpose.msra.mxu0 0.0
        %5930 = vmatprep.subr.mxu0 0.0
        %5931 = vmatpush2.xpose.msra.mxu0 0.0
        %5932 = vmatprep.subr.mxu0 0.0
        %5933 = vmatpush2.xpose.msra.mxu0 0.0
        %5934 = vmatprep.subr.mxu0 0.0
        %5935 = vmatpush2.xpose.msra.mxu0 0.0
        %5936 = vmatprep.subr.mxu0 0.0
        %5937 = vmatpush2.xpose.msra.mxu0 0.0
        %5938 = vmatprep.subr.mxu0 0.0
        %5939 = vmatpush2.xpose.msra.mxu0 0.0
        %5940 = vmatprep.subr.mxu0 0.0
        %5941 = vmatpush2.xpose.msra.mxu0 0.0
        %5942 = vmatprep.mubr.f32.mxu0 0.0
        %5943 = vmatmul.mubr.f32.gmra.mxu0 %v5783
        %v5944 = vpop.f32.mrf.mxu0
        %v5945 = vadd.f32 %v5766, %v5944
        %v5946 = vpop.f32.mrf.mxu0
        %5947 = vmatprep.mubr.f32.mxu0 0.0
        %5948 = vmatmul.mubr.f32.gmra.mxu0 %v5786
        %v5949 = vpop.f32.mrf.mxu0
        %v5950 = vadd.f32 %v5767, %v5949
        %v5951 = vpop.f32.mrf.mxu0
        %5952 = vmatprep.mubr.f32.mxu0 0.0
        %5953 = vmatmul.mubr.f32.gmra.mxu0 %v5789
        %v5954 = vpop.f32.mrf.mxu0
        %v5955 = vadd.f32 %v5768, %v5954
        %v5956 = vpop.f32.mrf.mxu0
        %5957 = vmatprep.mubr.f32.mxu0 0.0
        %5958 = vmatmul.mubr.f32.gmra.mxu0 %v5792
        %v5959 = vpop.f32.mrf.mxu0
        %v5960 = vadd.f32 %v5769, %v5959
        %v5961 = vpop.f32.mrf.mxu0
        %5962 = vmatprep.mubr.f32.mxu0 0.0
        %5963 = vmatmul.mubr.f32.gmra.mxu0 %v5795
        %v5964 = vpop.f32.mrf.mxu0
        %v5965 = vadd.f32 %v5770, %v5964
        %v5966 = vpop.f32.mrf.mxu0
        %5967 = vmatprep.mubr.f32.mxu0 0.0
        %5968 = vmatmul.mubr.f32.gmra.mxu0 %v5798
        %v5969 = vpop.f32.mrf.mxu0
        %v5970 = vadd.f32 %v5771, %v5969
        %v5971 = vpop.f32.mrf.mxu0
        %5972 = vmatprep.mubr.f32.mxu0 0.0
        %5973 = vmatmul.mubr.f32.gmra.mxu0 %v5801
        %v5974 = vpop.f32.mrf.mxu0
        %v5975 = vadd.f32 %v5772, %v5974
        %v5976 = vpop.f32.mrf.mxu0
        %5977 = vmatprep.mubr.f32.mxu0 0.0
        %5978 = vmatmul.mubr.f32.gmra.mxu0 %v5804
        %v5979 = vpop.f32.mrf.mxu0
        %v5980 = vadd.f32 %v5773, %v5979
        %v5981 = vpop.f32.mrf.mxu0
        %5982 = vmatprep.mubr.f32.mxu0 0.0
        %5983 = vmatmul.mubr.f32.gmra.mxu0 %v5807
        %v5984 = vpop.f32.mrf.mxu0
        %v5985 = vadd.f32 %v5774, %v5984
        %v5986 = vpop.f32.mrf.mxu0
        %5987 = vmatprep.mubr.f32.mxu0 0.0
        %5988 = vmatmul.mubr.f32.gmra.mxu0 %v5810
        %v5989 = vpop.f32.mrf.mxu0
        %v5990 = vadd.f32 %v5775, %v5989
        %v5991 = vpop.f32.mrf.mxu0
        %5992 = vmatprep.mubr.f32.mxu0 0.0
        %5993 = vmatmul.mubr.f32.gmra.mxu0 %v5813
        %v5994 = vpop.f32.mrf.mxu0
        %v5995 = vadd.f32 %v5776, %v5994
        %v5996 = vpop.f32.mrf.mxu0
        %5997 = vmatprep.mubr.f32.mxu0 0.0
        %5998 = vmatmul.mubr.f32.gmra.mxu0 %v5816
        %v5999 = vpop.f32.mrf.mxu0
        %v6000 = vadd.f32 %v5777, %v5999
        %v6001 = vpop.f32.mrf.mxu0
        %6002 = vmatprep.mubr.f32.mxu0 0.0
        %6003 = vmatmul.mubr.f32.gmra.mxu0 %v5819
        %v6004 = vpop.f32.mrf.mxu0
        %v6005 = vadd.f32 %v5778, %v6004
        %v6006 = vpop.f32.mrf.mxu0
        %6007 = vmatprep.mubr.f32.mxu0 0.0
        %6008 = vmatmul.mubr.f32.gmra.mxu0 %v5822
        %v6009 = vpop.f32.mrf.mxu0
        %v6010 = vadd.f32 %v5779, %v6009
        %v6011 = vpop.f32.mrf.mxu0
        %6012 = vmatprep.mubr.f32.mxu0 0.0
        %6013 = vmatmul.mubr.f32.gmra.mxu0 %v5825
        %v6014 = vpop.f32.mrf.mxu0
        %v6015 = vadd.f32 %v5780, %v6014
        %v6016 = vpop.f32.mrf.mxu0
        %6017 = vmatprep.mubr.f32.mxu0 0.0
        %6018 = vmatmul.mubr.f32.gmra.mxu0 %v5828
        %v6019 = vpop.f32.mrf.mxu0
        %v6020 = vadd.f32 %v5781, %v6019
        %v6021 = vpop.f32.mrf.mxu0
        %6022 = vdwg.mxu0
        %6023 = vmax.xlane.f32.xlu0 %v5945
        %v6024 = vpop.xlane.xlu0 %6023
        %6025 = vmax.xlane.f32.xlu0 %v5950
        %v6026 = vpop.xlane.xlu0 %6025
        %6027 = vmax.xlane.f32.xlu0 %v5955
        %v6028 = vpop.xlane.xlu0 %6027
        %6029 = vmax.xlane.f32.xlu0 %v5960
        %v6030 = vpop.xlane.xlu0 %6029
        %6031 = vmax.xlane.f32.xlu0 %v5965
        %v6032 = vpop.xlane.xlu0 %6031
        %6033 = vmax.xlane.f32.xlu0 %v5970
        %v6034 = vpop.xlane.xlu0 %6033
        %6035 = vmax.xlane.f32.xlu0 %v5975
        %v6036 = vpop.xlane.xlu0 %6035
        %6037 = vmax.xlane.f32.xlu0 %v5980
        %v6038 = vpop.xlane.xlu0 %6037
        %6039 = vmax.xlane.f32.xlu0 %v5985
        %v6040 = vpop.xlane.xlu0 %6039
        %6041 = vmax.xlane.f32.xlu0 %v5990
        %v6042 = vpop.xlane.xlu0 %6041
        %6043 = vmax.xlane.f32.xlu0 %v5995
        %v6044 = vpop.xlane.xlu0 %6043
        %6045 = vmax.xlane.f32.xlu0 %v6000
        %v6046 = vpop.xlane.xlu0 %6045
        %6047 = vmax.xlane.f32.xlu0 %v6005
        %v6048 = vpop.xlane.xlu0 %6047
        %6049 = vmax.xlane.f32.xlu0 %v6010
        %v6050 = vpop.xlane.xlu0 %6049
        %6051 = vmax.xlane.f32.xlu0 %v6015
        %v6052 = vpop.xlane.xlu0 %6051
        %6053 = vmax.xlane.f32.xlu0 %v6020
        %v6054 = vpop.xlane.xlu0 %6053
        %v6055 = vsub.f32 %v5945, %v6024
        %v6056 = vsub.f32 %v5950, %v6026
        %v6057 = vsub.f32 %v5955, %v6028
        %v6058 = vsub.f32 %v5960, %v6030
        %v6059 = vsub.f32 %v5965, %v6032
        %v6060 = vsub.f32 %v5970, %v6034
        %v6061 = vsub.f32 %v5975, %v6036
        %v6062 = vsub.f32 %v5980, %v6038
        %v6063 = vsub.f32 %v5985, %v6040
        %v6064 = vsub.f32 %v5990, %v6042
        %v6065 = vsub.f32 %v5995, %v6044
        %v6066 = vsub.f32 %v6000, %v6046
        %v6067 = vsub.f32 %v6005, %v6048
        %v6068 = vsub.f32 %v6010, %v6050
        %v6069 = vsub.f32 %v6015, %v6052
        %v6070 = vsub.f32 %v6020, %v6054
        %v6071 = vmul.f32 %v6055, 1.442695
        %v6072 = vpow.pop %v6071
        %v6073 = vmul.f32 %v6056, 1.442695
        %v6074 = vpow.pop %v6073
        %v6075 = vmul.f32 %v6057, 1.442695
        %v6076 = vpow.pop %v6075
        %v6077 = vmul.f32 %v6058, 1.442695
        %v6078 = vpow.pop %v6077
        %v6079 = vmul.f32 %v6059, 1.442695
        %v6080 = vpow.pop %v6079
        %v6081 = vmul.f32 %v6060, 1.442695
        %v6082 = vpow.pop %v6081
        %v6083 = vmul.f32 %v6061, 1.442695
        %v6084 = vpow.pop %v6083
        %v6085 = vmul.f32 %v6062, 1.442695
        %v6086 = vpow.pop %v6085
        %v6087 = vmul.f32 %v6063, 1.442695
        %v6088 = vpow.pop %v6087
        %v6089 = vmul.f32 %v6064, 1.442695
        %v6090 = vpow.pop %v6089
        %v6091 = vmul.f32 %v6065, 1.442695
        %v6092 = vpow.pop %v6091
        %v6093 = vmul.f32 %v6066, 1.442695
        %v6094 = vpow.pop %v6093
        %v6095 = vmul.f32 %v6067, 1.442695
        %v6096 = vpow.pop %v6095
        %v6097 = vmul.f32 %v6068, 1.442695
        %v6098 = vpow.pop %v6097
        %v6099 = vmul.f32 %v6069, 1.442695
        %v6100 = vpow.pop %v6099
        %v6101 = vmul.f32 %v6070, 1.442695
        %v6102 = vpow.pop %v6101
        %6103 = vadd.xlane.f32.xlu0 %v6072
        %v6104 = vpop.xlane.xlu0 %6103
        %6105 = vadd.xlane.f32.xlu0 %v6074
        %v6106 = vpop.xlane.xlu0 %6105
        %6107 = vadd.xlane.f32.xlu0 %v6076
        %v6108 = vpop.xlane.xlu0 %6107
        %6109 = vadd.xlane.f32.xlu0 %v6078
        %v6110 = vpop.xlane.xlu0 %6109
        %6111 = vadd.xlane.f32.xlu0 %v6080
        %v6112 = vpop.xlane.xlu0 %6111
        %6113 = vadd.xlane.f32.xlu0 %v6082
        %v6114 = vpop.xlane.xlu0 %6113
        %6115 = vadd.xlane.f32.xlu0 %v6084
        %v6116 = vpop.xlane.xlu0 %6115
        %6117 = vadd.xlane.f32.xlu0 %v6086
        %v6118 = vpop.xlane.xlu0 %6117
        %6119 = vadd.xlane.f32.xlu0 %v6088
        %v6120 = vpop.xlane.xlu0 %6119
        %6121 = vadd.xlane.f32.xlu0 %v6090
        %v6122 = vpop.xlane.xlu0 %6121
        %6123 = vadd.xlane.f32.xlu0 %v6092
        %v6124 = vpop.xlane.xlu0 %6123
        %6125 = vadd.xlane.f32.xlu0 %v6094
        %v6126 = vpop.xlane.xlu0 %6125
        %6127 = vadd.xlane.f32.xlu0 %v6096
        %v6128 = vpop.xlane.xlu0 %6127
        %6129 = vadd.xlane.f32.xlu0 %v6098
        %v6130 = vpop.xlane.xlu0 %6129
        %6131 = vadd.xlane.f32.xlu0 %v6100
        %v6132 = vpop.xlane.xlu0 %6131
        %6133 = vadd.xlane.f32.xlu0 %v6102
        %v6134 = vpop.xlane.xlu0 %6133
        %v6135 = vrcp.pop %v6104
        %v6136 = vrcp.pop %v6106
        %v6137 = vrcp.pop %v6108
        %v6138 = vrcp.pop %v6110
        %v6139 = vrcp.pop %v6112
        %v6140 = vrcp.pop %v6114
        %v6141 = vrcp.pop %v6116
        %v6142 = vrcp.pop %v6118
        %v6143 = vrcp.pop %v6120
        %v6144 = vrcp.pop %v6122
        %v6145 = vrcp.pop %v6124
        %v6146 = vrcp.pop %v6126
        %v6147 = vrcp.pop %v6128
        %v6148 = vrcp.pop %v6130
        %v6149 = vrcp.pop %v6132
        %v6150 = vrcp.pop %v6134
        %v6151 = vmul.f32 %v6072, %v6135
        %v6152 = vmul.f32 %v6074, %v6136
        %v6153 = vmul.f32 %v6076, %v6137
        %v6154 = vmul.f32 %v6078, %v6138
        %v6155 = vmul.f32 %v6080, %v6139
        %v6156 = vmul.f32 %v6082, %v6140
        %v6157 = vmul.f32 %v6084, %v6141
        %v6158 = vmul.f32 %v6086, %v6142
        %v6159 = vmul.f32 %v6088, %v6143
        %v6160 = vmul.f32 %v6090, %v6144
        %v6161 = vmul.f32 %v6092, %v6145
        %v6162 = vmul.f32 %v6094, %v6146
        %v6163 = vmul.f32 %v6096, %v6147
        %v6164 = vmul.f32 %v6098, %v6148
        %v6165 = vmul.f32 %v6100, %v6149
        %v6166 = vmul.f32 %v6102, %v6150
        %v6167 = vmul.f32 %v5672, %v501
        %v6168 = vmul.f32 %v5677, %v501
        %v6169 = vmul.f32 %v5682, %v501
        %v6170 = vmul.f32 %v5687, %v501
        %v6171 = vmul.f32 %v5692, %v501
        %v6172 = vmul.f32 %v5697, %v501
        %v6173 = vmul.f32 %v5702, %v501
        %v6174 = vmul.f32 %v5707, %v501
        %v6175 = vmul.f32 %v5712, %v501
        %v6176 = vmul.f32 %v5717, %v501
        %v6177 = vmul.f32 %v5722, %v501
        %v6178 = vmul.f32 %v5727, %v501
        %v6179 = vmul.f32 %v5732, %v501
        %v6180 = vmul.f32 %v5737, %v501
        %v6181 = vmul.f32 %v5742, %v501
        %v6182 = vmul.f32 %v5747, %v501
        %v6183 = vmul.f32 %v5426, %v506
        %v6184 = vmul.f32 %v5427, %v506
        %v6185 = vmul.f32 %v5428, %v506
        %v6186 = vmul.f32 %v5429, %v506
        %v6187 = vmul.f32 %v5430, %v506
        %v6188 = vmul.f32 %v5431, %v506
        %v6189 = vmul.f32 %v5432, %v506
        %v6190 = vmul.f32 %v5433, %v506
        %v6191 = vmul.f32 %v5434, %v506
        %v6192 = vmul.f32 %v5435, %v506
        %v6193 = vmul.f32 %v5436, %v506
        %v6194 = vmul.f32 %v5437, %v506
        %v6195 = vmul.f32 %v5438, %v506
        %v6196 = vmul.f32 %v5439, %v506
        %v6197 = vmul.f32 %v5440, %v506
        %v6198 = vmul.f32 %v5441, %v506
        %s6199 = scalar_lea.vmem %s14, 128
        %v6200 = vld [vmem:[%s6199] sm:$0xff]
        %v6201 = vld [vmem:[%s6199 + $0x8] sm:$0xff]
        %v6202 = vld [vmem:[%s6199 + $0x10] sm:$0xff]
        %v6203 = vld [vmem:[%s6199 + $0x18] sm:$0xff]
        %v6204 = vld [vmem:[%s6199 + $0x20] sm:$0xff]
        %v6205 = vld [vmem:[%s6199 + $0x28] sm:$0xff]
        %v6206 = vld [vmem:[%s6199 + $0x30] sm:$0xff]
        %v6207 = vld [vmem:[%s6199 + $0x38] sm:$0xff]
        %v6208 = vld [vmem:[%s6199 + $0x40] sm:$0xff]
        %v6209 = vld [vmem:[%s6199 + $0x48] sm:$0xff]
        %v6210 = vld [vmem:[%s6199 + $0x50] sm:$0xff]
        %v6211 = vld [vmem:[%s6199 + $0x58] sm:$0xff]
        %v6212 = vld [vmem:[%s6199 + $0x60] sm:$0xff]
        %v6213 = vld [vmem:[%s6199 + $0x68] sm:$0xff]
        %v6214 = vld [vmem:[%s6199 + $0x70] sm:$0xff]
        %v6215 = vld [vmem:[%s6199 + $0x78] sm:$0xff]
        %v6217 = vsel %vm740, %v6183, 0
        %v6220 = vsel %vm740, %v6184, 0
        %v6223 = vsel %vm740, %v6185, 0
        %v6226 = vsel %vm740, %v6186, 0
        %v6229 = vsel %vm740, %v6187, 0
        %v6232 = vsel %vm740, %v6188, 0
        %v6235 = vsel %vm740, %v6189, 0
        %v6238 = vsel %vm740, %v6190, 0
        %v6241 = vsel %vm740, %v6191, 0
        %v6244 = vsel %vm740, %v6192, 0
        %v6247 = vsel %vm740, %v6193, 0
        %v6250 = vsel %vm740, %v6194, 0
        %v6253 = vsel %vm740, %v6195, 0
        %v6256 = vsel %vm740, %v6196, 0
        %v6259 = vsel %vm740, %v6197, 0
        %v6262 = vsel %vm740, %v6198, 0
        %6264 = vmatprep.subr.mxu0 0.0
        %6265 = vmatpush1.xpose.msra.mxu0 %v5876
        %6266 = vmatprep.subr.mxu0 0.0
        %6267 = vmatpush1.xpose.msra.mxu0 %v5873
        %6268 = vmatprep.subr.mxu0 0.0
        %6269 = vmatpush1.xpose.msra.mxu0 %v5870
        %6270 = vmatprep.subr.mxu0 0.0
        %6271 = vmatpush1.xpose.msra.mxu0 %v5867
        %6272 = vmatprep.subr.mxu0 0.0
        %6273 = vmatpush1.xpose.msra.mxu0 %v5864
        %6274 = vmatprep.subr.mxu0 0.0
        %6275 = vmatpush1.xpose.msra.mxu0 %v5861
        %6276 = vmatprep.subr.mxu0 0.0
        %6277 = vmatpush1.xpose.msra.mxu0 %v5858
        %6278 = vmatprep.subr.mxu0 0.0
        %6279 = vmatpush1.xpose.msra.mxu0 %v5855
        %6280 = vmatprep.subr.mxu0 0.0
        %6281 = vmatpush1.xpose.msra.mxu0 %v5852
        %6282 = vmatprep.subr.mxu0 0.0
        %6283 = vmatpush1.xpose.msra.mxu0 %v5849
        %6284 = vmatprep.subr.mxu0 0.0
        %6285 = vmatpush1.xpose.msra.mxu0 %v5846
        %6286 = vmatprep.subr.mxu0 0.0
        %6287 = vmatpush1.xpose.msra.mxu0 %v5843
        %6288 = vmatprep.subr.mxu0 0.0
        %6289 = vmatpush1.xpose.msra.mxu0 %v5840
        %6290 = vmatprep.subr.mxu0 0.0
        %6291 = vmatpush1.xpose.msra.mxu0 %v5837
        %6292 = vmatprep.subr.mxu0 0.0
        %6293 = vmatpush1.xpose.msra.mxu0 %v5834
        %6294 = vmatprep.subr.mxu0 0.0
        %6295 = vmatpush1.xpose.msra.mxu0 %v5831
        %6296 = vmatprep.subr.mxu0 0.0
        %6297 = vmatpush2.xpose.msra.mxu0 0.0
        %6298 = vmatprep.subr.mxu0 0.0
        %6299 = vmatpush2.xpose.msra.mxu0 0.0
        %6300 = vmatprep.subr.mxu0 0.0
        %6301 = vmatpush2.xpose.msra.mxu0 0.0
        %6302 = vmatprep.subr.mxu0 0.0
        %6303 = vmatpush2.xpose.msra.mxu0 0.0
        %6304 = vmatprep.subr.mxu0 0.0
        %6305 = vmatpush2.xpose.msra.mxu0 0.0
        %6306 = vmatprep.subr.mxu0 0.0
        %6307 = vmatpush2.xpose.msra.mxu0 0.0
        %6308 = vmatprep.subr.mxu0 0.0
        %6309 = vmatpush2.xpose.msra.mxu0 0.0
        %6310 = vmatprep.subr.mxu0 0.0
        %6311 = vmatpush2.xpose.msra.mxu0 0.0
        %6312 = vmatprep.subr.mxu0 0.0
        %6313 = vmatpush2.xpose.msra.mxu0 0.0
        %6314 = vmatprep.subr.mxu0 0.0
        %6315 = vmatpush2.xpose.msra.mxu0 0.0
        %6316 = vmatprep.subr.mxu0 0.0
        %6317 = vmatpush2.xpose.msra.mxu0 0.0
        %6318 = vmatprep.subr.mxu0 0.0
        %6319 = vmatpush2.xpose.msra.mxu0 0.0
        %6320 = vmatprep.subr.mxu0 0.0
        %6321 = vmatpush2.xpose.msra.mxu0 0.0
        %6322 = vmatprep.subr.mxu0 0.0
        %6323 = vmatpush2.xpose.msra.mxu0 0.0
        %6324 = vmatprep.subr.mxu0 0.0
        %6325 = vmatpush2.xpose.msra.mxu0 0.0
        %6326 = vmatprep.subr.mxu0 0.0
        %6327 = vmatpush2.xpose.msra.mxu0 0.0
        %6328 = vmatprep.mubr.f32.mxu0 0.0
        %6329 = vmatmul.mubr.f32.gmra.mxu0 %v6217
        %v6330 = vpop.f32.mrf.mxu0
        %v6331 = vadd.f32 %v6200, %v6330
        %v6332 = vpop.f32.mrf.mxu0
        %6333 = vmatprep.mubr.f32.mxu0 0.0
        %6334 = vmatmul.mubr.f32.gmra.mxu0 %v6220
        %v6335 = vpop.f32.mrf.mxu0
        %v6336 = vadd.f32 %v6201, %v6335
        %v6337 = vpop.f32.mrf.mxu0
        %6338 = vmatprep.mubr.f32.mxu0 0.0
        %6339 = vmatmul.mubr.f32.gmra.mxu0 %v6223
        %v6340 = vpop.f32.mrf.mxu0
        %v6341 = vadd.f32 %v6202, %v6340
        %v6342 = vpop.f32.mrf.mxu0
        %6343 = vmatprep.mubr.f32.mxu0 0.0
        %6344 = vmatmul.mubr.f32.gmra.mxu0 %v6226
        %v6345 = vpop.f32.mrf.mxu0
        %v6346 = vadd.f32 %v6203, %v6345
        %v6347 = vpop.f32.mrf.mxu0
        %6348 = vmatprep.mubr.f32.mxu0 0.0
        %6349 = vmatmul.mubr.f32.gmra.mxu0 %v6229
        %v6350 = vpop.f32.mrf.mxu0
        %v6351 = vadd.f32 %v6204, %v6350
        %v6352 = vpop.f32.mrf.mxu0
        %6353 = vmatprep.mubr.f32.mxu0 0.0
        %6354 = vmatmul.mubr.f32.gmra.mxu0 %v6232
        %v6355 = vpop.f32.mrf.mxu0
        %v6356 = vadd.f32 %v6205, %v6355
        %v6357 = vpop.f32.mrf.mxu0
        %6358 = vmatprep.mubr.f32.mxu0 0.0
        %6359 = vmatmul.mubr.f32.gmra.mxu0 %v6235
        %v6360 = vpop.f32.mrf.mxu0
        %v6361 = vadd.f32 %v6206, %v6360
        %v6362 = vpop.f32.mrf.mxu0
        %6363 = vmatprep.mubr.f32.mxu0 0.0
        %6364 = vmatmul.mubr.f32.gmra.mxu0 %v6238
        %v6365 = vpop.f32.mrf.mxu0
        %v6366 = vadd.f32 %v6207, %v6365
        %v6367 = vpop.f32.mrf.mxu0
        %6368 = vmatprep.mubr.f32.mxu0 0.0
        %6369 = vmatmul.mubr.f32.gmra.mxu0 %v6241
        %v6370 = vpop.f32.mrf.mxu0
        %v6371 = vadd.f32 %v6208, %v6370
        %v6372 = vpop.f32.mrf.mxu0
        %6373 = vmatprep.mubr.f32.mxu0 0.0
        %6374 = vmatmul.mubr.f32.gmra.mxu0 %v6244
        %v6375 = vpop.f32.mrf.mxu0
        %v6376 = vadd.f32 %v6209, %v6375
        %v6377 = vpop.f32.mrf.mxu0
        %6378 = vmatprep.mubr.f32.mxu0 0.0
        %6379 = vmatmul.mubr.f32.gmra.mxu0 %v6247
        %v6380 = vpop.f32.mrf.mxu0
        %v6381 = vadd.f32 %v6210, %v6380
        %v6382 = vpop.f32.mrf.mxu0
        %6383 = vmatprep.mubr.f32.mxu0 0.0
        %6384 = vmatmul.mubr.f32.gmra.mxu0 %v6250
        %v6385 = vpop.f32.mrf.mxu0
        %v6386 = vadd.f32 %v6211, %v6385
        %v6387 = vpop.f32.mrf.mxu0
        %6388 = vmatprep.mubr.f32.mxu0 0.0
        %6389 = vmatmul.mubr.f32.gmra.mxu0 %v6253
        %v6390 = vpop.f32.mrf.mxu0
        %v6391 = vadd.f32 %v6212, %v6390
        %v6392 = vpop.f32.mrf.mxu0
        %6393 = vmatprep.mubr.f32.mxu0 0.0
        %6394 = vmatmul.mubr.f32.gmra.mxu0 %v6256
        %v6395 = vpop.f32.mrf.mxu0
        %v6396 = vadd.f32 %v6213, %v6395
        %v6397 = vpop.f32.mrf.mxu0
        %6398 = vmatprep.mubr.f32.mxu0 0.0
        %6399 = vmatmul.mubr.f32.gmra.mxu0 %v6259
        %v6400 = vpop.f32.mrf.mxu0
        %v6401 = vadd.f32 %v6214, %v6400
        %v6402 = vpop.f32.mrf.mxu0
        %6403 = vmatprep.mubr.f32.mxu0 0.0
        %6404 = vmatmul.mubr.f32.gmra.mxu0 %v6262
        %v6405 = vpop.f32.mrf.mxu0
        %v6406 = vadd.f32 %v6215, %v6405
        %v6407 = vpop.f32.mrf.mxu0
        %6408 = vdwg.mxu0
        %6409 = vmax.xlane.f32.xlu0 %v6331
        %v6410 = vpop.xlane.xlu0 %6409
        %6411 = vmax.xlane.f32.xlu0 %v6336
        %v6412 = vpop.xlane.xlu0 %6411
        %6413 = vmax.xlane.f32.xlu0 %v6341
        %v6414 = vpop.xlane.xlu0 %6413
        %6415 = vmax.xlane.f32.xlu0 %v6346
        %v6416 = vpop.xlane.xlu0 %6415
        %6417 = vmax.xlane.f32.xlu0 %v6351
        %v6418 = vpop.xlane.xlu0 %6417
        %6419 = vmax.xlane.f32.xlu0 %v6356
        %v6420 = vpop.xlane.xlu0 %6419
        %6421 = vmax.xlane.f32.xlu0 %v6361
        %v6422 = vpop.xlane.xlu0 %6421
        %6423 = vmax.xlane.f32.xlu0 %v6366
        %v6424 = vpop.xlane.xlu0 %6423
        %6425 = vmax.xlane.f32.xlu0 %v6371
        %v6426 = vpop.xlane.xlu0 %6425
        %6427 = vmax.xlane.f32.xlu0 %v6376
        %v6428 = vpop.xlane.xlu0 %6427
        %6429 = vmax.xlane.f32.xlu0 %v6381
        %v6430 = vpop.xlane.xlu0 %6429
        %6431 = vmax.xlane.f32.xlu0 %v6386
        %v6432 = vpop.xlane.xlu0 %6431
        %6433 = vmax.xlane.f32.xlu0 %v6391
        %v6434 = vpop.xlane.xlu0 %6433
        %6435 = vmax.xlane.f32.xlu0 %v6396
        %v6436 = vpop.xlane.xlu0 %6435
        %6437 = vmax.xlane.f32.xlu0 %v6401
        %v6438 = vpop.xlane.xlu0 %6437
        %6439 = vmax.xlane.f32.xlu0 %v6406
        %v6440 = vpop.xlane.xlu0 %6439
        %v6441 = vsub.f32 %v6331, %v6410
        %v6442 = vsub.f32 %v6336, %v6412
        %v6443 = vsub.f32 %v6341, %v6414
        %v6444 = vsub.f32 %v6346, %v6416
        %v6445 = vsub.f32 %v6351, %v6418
        %v6446 = vsub.f32 %v6356, %v6420
        %v6447 = vsub.f32 %v6361, %v6422
        %v6448 = vsub.f32 %v6366, %v6424
        %v6449 = vsub.f32 %v6371, %v6426
        %v6450 = vsub.f32 %v6376, %v6428
        %v6451 = vsub.f32 %v6381, %v6430
        %v6452 = vsub.f32 %v6386, %v6432
        %v6453 = vsub.f32 %v6391, %v6434
        %v6454 = vsub.f32 %v6396, %v6436
        %v6455 = vsub.f32 %v6401, %v6438
        %v6456 = vsub.f32 %v6406, %v6440
        %v6457 = vmul.f32 %v6441, 1.442695
        %v6458 = vpow.pop %v6457
        %v6459 = vmul.f32 %v6442, 1.442695
        %v6460 = vpow.pop %v6459
        %v6461 = vmul.f32 %v6443, 1.442695
        %v6462 = vpow.pop %v6461
        %v6463 = vmul.f32 %v6444, 1.442695
        %v6464 = vpow.pop %v6463
        %v6465 = vmul.f32 %v6445, 1.442695
        %v6466 = vpow.pop %v6465
        %v6467 = vmul.f32 %v6446, 1.442695
        %v6468 = vpow.pop %v6467
        %v6469 = vmul.f32 %v6447, 1.442695
        %v6470 = vpow.pop %v6469
        %v6471 = vmul.f32 %v6448, 1.442695
        %v6472 = vpow.pop %v6471
        %v6473 = vmul.f32 %v6449, 1.442695
        %v6474 = vpow.pop %v6473
        %v6475 = vmul.f32 %v6450, 1.442695
        %v6476 = vpow.pop %v6475
        %v6477 = vmul.f32 %v6451, 1.442695
        %v6478 = vpow.pop %v6477
        %v6479 = vmul.f32 %v6452, 1.442695
        %v6480 = vpow.pop %v6479
        %v6481 = vmul.f32 %v6453, 1.442695
        %v6482 = vpow.pop %v6481
        %v6483 = vmul.f32 %v6454, 1.442695
        %v6484 = vpow.pop %v6483
        %v6485 = vmul.f32 %v6455, 1.442695
        %v6486 = vpow.pop %v6485
        %v6487 = vmul.f32 %v6456, 1.442695
        %v6488 = vpow.pop %v6487
        %6489 = vadd.xlane.f32.xlu0 %v6458
        %v6490 = vpop.xlane.xlu0 %6489
        %6491 = vadd.xlane.f32.xlu0 %v6460
        %v6492 = vpop.xlane.xlu0 %6491
        %6493 = vadd.xlane.f32.xlu0 %v6462
        %v6494 = vpop.xlane.xlu0 %6493
        %6495 = vadd.xlane.f32.xlu0 %v6464
        %v6496 = vpop.xlane.xlu0 %6495
        %6497 = vadd.xlane.f32.xlu0 %v6466
        %v6498 = vpop.xlane.xlu0 %6497
        %6499 = vadd.xlane.f32.xlu0 %v6468
        %v6500 = vpop.xlane.xlu0 %6499
        %6501 = vadd.xlane.f32.xlu0 %v6470
        %v6502 = vpop.xlane.xlu0 %6501
        %6503 = vadd.xlane.f32.xlu0 %v6472
        %v6504 = vpop.xlane.xlu0 %6503
        %6505 = vadd.xlane.f32.xlu0 %v6474
        %v6506 = vpop.xlane.xlu0 %6505
        %6507 = vadd.xlane.f32.xlu0 %v6476
        %v6508 = vpop.xlane.xlu0 %6507
        %6509 = vadd.xlane.f32.xlu0 %v6478
        %v6510 = vpop.xlane.xlu0 %6509
        %6511 = vadd.xlane.f32.xlu0 %v6480
        %v6512 = vpop.xlane.xlu0 %6511
        %6513 = vadd.xlane.f32.xlu0 %v6482
        %v6514 = vpop.xlane.xlu0 %6513
        %6515 = vadd.xlane.f32.xlu0 %v6484
        %v6516 = vpop.xlane.xlu0 %6515
        %6517 = vadd.xlane.f32.xlu0 %v6486
        %v6518 = vpop.xlane.xlu0 %6517
        %6519 = vadd.xlane.f32.xlu0 %v6488
        %v6520 = vpop.xlane.xlu0 %6519
        %v6521 = vrcp.pop %v6490
        %v6522 = vrcp.pop %v6492
        %v6523 = vrcp.pop %v6494
        %v6524 = vrcp.pop %v6496
        %v6525 = vrcp.pop %v6498
        %v6526 = vrcp.pop %v6500
        %v6527 = vrcp.pop %v6502
        %v6528 = vrcp.pop %v6504
        %v6529 = vrcp.pop %v6506
        %v6530 = vrcp.pop %v6508
        %v6531 = vrcp.pop %v6510
        %v6532 = vrcp.pop %v6512
        %v6533 = vrcp.pop %v6514
        %v6534 = vrcp.pop %v6516
        %v6535 = vrcp.pop %v6518
        %v6536 = vrcp.pop %v6520
        %v6537 = vmul.f32 %v6458, %v6521
        %v6538 = vmul.f32 %v6460, %v6522
        %v6539 = vmul.f32 %v6462, %v6523
        %v6540 = vmul.f32 %v6464, %v6524
        %v6541 = vmul.f32 %v6466, %v6525
        %v6542 = vmul.f32 %v6468, %v6526
        %v6543 = vmul.f32 %v6470, %v6527
        %v6544 = vmul.f32 %v6472, %v6528
        %v6545 = vmul.f32 %v6474, %v6529
        %v6546 = vmul.f32 %v6476, %v6530
        %v6547 = vmul.f32 %v6478, %v6531
        %v6548 = vmul.f32 %v6480, %v6532
        %v6549 = vmul.f32 %v6482, %v6533
        %v6550 = vmul.f32 %v6484, %v6534
        %v6551 = vmul.f32 %v6486, %v6535
        %v6552 = vmul.f32 %v6488, %v6536
        %v6553 = vmul.f32 %v5672, %v506
        %v6554 = vmul.f32 %v5677, %v506
        %v6555 = vmul.f32 %v5682, %v506
        %v6556 = vmul.f32 %v5687, %v506
        %v6557 = vmul.f32 %v5692, %v506
        %v6558 = vmul.f32 %v5697, %v506
        %v6559 = vmul.f32 %v5702, %v506
        %v6560 = vmul.f32 %v5707, %v506
        %v6561 = vmul.f32 %v5712, %v506
        %v6562 = vmul.f32 %v5717, %v506
        %v6563 = vmul.f32 %v5722, %v506
        %v6564 = vmul.f32 %v5727, %v506
        %v6565 = vmul.f32 %v5732, %v506
        %v6566 = vmul.f32 %v5737, %v506
        %v6567 = vmul.f32 %v5742, %v506
        %v6568 = vmul.f32 %v5747, %v506
        %6569 = vmatprep.subr.mxu0 0.0
        %6570 = vmatpush1.msra.mxu0 %v6568
        %6571 = vmatprep.subr.mxu0 0.0
        %6572 = vmatpush1.msra.mxu0 %v6567
        %6573 = vmatprep.subr.mxu0 0.0
        %6574 = vmatpush1.msra.mxu0 %v6566
        %6575 = vmatprep.subr.mxu0 0.0
        %6576 = vmatpush1.msra.mxu0 %v6565
        %6577 = vmatprep.subr.mxu0 0.0
        %6578 = vmatpush1.msra.mxu0 %v6564
        %6579 = vmatprep.subr.mxu0 0.0
        %6580 = vmatpush1.msra.mxu0 %v6563
        %6581 = vmatprep.subr.mxu0 0.0
        %6582 = vmatpush1.msra.mxu0 %v6562
        %6583 = vmatprep.subr.mxu0 0.0
        %6584 = vmatpush1.msra.mxu0 %v6561
        %6585 = vmatprep.subr.mxu0 0.0
        %6586 = vmatpush1.msra.mxu0 %v6560
        %6587 = vmatprep.subr.mxu0 0.0
        %6588 = vmatpush1.msra.mxu0 %v6559
        %6589 = vmatprep.subr.mxu0 0.0
        %6590 = vmatpush1.msra.mxu0 %v6558
        %6591 = vmatprep.subr.mxu0 0.0
        %6592 = vmatpush1.msra.mxu0 %v6557
        %6593 = vmatprep.subr.mxu0 0.0
        %6594 = vmatpush1.msra.mxu0 %v6556
        %6595 = vmatprep.subr.mxu0 0.0
        %6596 = vmatpush1.msra.mxu0 %v6555
        %6597 = vmatprep.subr.mxu0 0.0
        %6598 = vmatpush1.msra.mxu0 %v6554
        %6599 = vmatprep.subr.mxu0 0.0
        %6600 = vmatpush1.msra.mxu0 %v6553
        %6601 = vmatprep.subr.mxu0 0.0
        %6602 = vmatpush2.msra.mxu0 0.0
        %6603 = vmatprep.subr.mxu0 0.0
        %6604 = vmatpush2.msra.mxu0 0.0
        %6605 = vmatprep.subr.mxu0 0.0
        %6606 = vmatpush2.msra.mxu0 0.0
        %6607 = vmatprep.subr.mxu0 0.0
        %6608 = vmatpush2.msra.mxu0 0.0
        %6609 = vmatprep.subr.mxu0 0.0
        %6610 = vmatpush2.msra.mxu0 0.0
        %6611 = vmatprep.subr.mxu0 0.0
        %6612 = vmatpush2.msra.mxu0 0.0
        %6613 = vmatprep.subr.mxu0 0.0
        %6614 = vmatpush2.msra.mxu0 0.0
        %6615 = vmatprep.subr.mxu0 0.0
        %6616 = vmatpush2.msra.mxu0 0.0
        %6617 = vmatprep.subr.mxu0 0.0
        %6618 = vmatpush2.msra.mxu0 0.0
        %6619 = vmatprep.subr.mxu0 0.0
        %6620 = vmatpush2.msra.mxu0 0.0
        %6621 = vmatprep.subr.mxu0 0.0
        %6622 = vmatpush2.msra.mxu0 0.0
        %6623 = vmatprep.subr.mxu0 0.0
        %6624 = vmatpush2.msra.mxu0 0.0
        %6625 = vmatprep.subr.mxu0 0.0
        %6626 = vmatpush2.msra.mxu0 0.0
        %6627 = vmatprep.subr.mxu0 0.0
        %6628 = vmatpush2.msra.mxu0 0.0
        %6629 = vmatprep.subr.mxu0 0.0
        %6630 = vmatpush2.msra.mxu0 0.0
        %6631 = vmatprep.subr.mxu0 0.0
        %6632 = vmatpush2.msra.mxu0 0.0
        %6633 = vmatprep.mubr.f32.mxu0 0.0
        %6634 = vmatmul.mubr.f32.gmra.mxu0 %v6537
        %v6635 = vpop.f32.mrf.mxu0
        %v6636 = vadd.f32 0.0, %v6635
        %v6637 = vpop.f32.mrf.mxu0
        %6638 = vmatprep.mubr.f32.mxu0 0.0
        %6639 = vmatmul.mubr.f32.gmra.mxu0 %v6538
        %v6640 = vpop.f32.mrf.mxu0
        %v6641 = vadd.f32 0.0, %v6640
        %v6642 = vpop.f32.mrf.mxu0
        %6643 = vmatprep.mubr.f32.mxu0 0.0
        %6644 = vmatmul.mubr.f32.gmra.mxu0 %v6539
        %v6645 = vpop.f32.mrf.mxu0
        %v6646 = vadd.f32 0.0, %v6645
        %v6647 = vpop.f32.mrf.mxu0
        %6648 = vmatprep.mubr.f32.mxu0 0.0
        %6649 = vmatmul.mubr.f32.gmra.mxu0 %v6540
        %v6650 = vpop.f32.mrf.mxu0
        %v6651 = vadd.f32 0.0, %v6650
        %v6652 = vpop.f32.mrf.mxu0
        %6653 = vmatprep.mubr.f32.mxu0 0.0
        %6654 = vmatmul.mubr.f32.gmra.mxu0 %v6541
        %v6655 = vpop.f32.mrf.mxu0
        %v6656 = vadd.f32 0.0, %v6655
        %v6657 = vpop.f32.mrf.mxu0
        %6658 = vmatprep.mubr.f32.mxu0 0.0
        %6659 = vmatmul.mubr.f32.gmra.mxu0 %v6542
        %v6660 = vpop.f32.mrf.mxu0
        %v6661 = vadd.f32 0.0, %v6660
        %v6662 = vpop.f32.mrf.mxu0
        %6663 = vmatprep.mubr.f32.mxu0 0.0
        %6664 = vmatmul.mubr.f32.gmra.mxu0 %v6543
        %v6665 = vpop.f32.mrf.mxu0
        %v6666 = vadd.f32 0.0, %v6665
        %v6667 = vpop.f32.mrf.mxu0
        %6668 = vmatprep.mubr.f32.mxu0 0.0
        %6669 = vmatmul.mubr.f32.gmra.mxu0 %v6544
        %v6670 = vpop.f32.mrf.mxu0
        %v6671 = vadd.f32 0.0, %v6670
        %v6672 = vpop.f32.mrf.mxu0
        %6673 = vmatprep.mubr.f32.mxu0 0.0
        %6674 = vmatmul.mubr.f32.gmra.mxu0 %v6545
        %v6675 = vpop.f32.mrf.mxu0
        %v6676 = vadd.f32 0.0, %v6675
        %v6677 = vpop.f32.mrf.mxu0
        %6678 = vmatprep.mubr.f32.mxu0 0.0
        %6679 = vmatmul.mubr.f32.gmra.mxu0 %v6546
        %v6680 = vpop.f32.mrf.mxu0
        %v6681 = vadd.f32 0.0, %v6680
        %v6682 = vpop.f32.mrf.mxu0
        %6683 = vmatprep.mubr.f32.mxu0 0.0
        %6684 = vmatmul.mubr.f32.gmra.mxu0 %v6547
        %v6685 = vpop.f32.mrf.mxu0
        %v6686 = vadd.f32 0.0, %v6685
        %v6687 = vpop.f32.mrf.mxu0
        %6688 = vmatprep.mubr.f32.mxu0 0.0
        %6689 = vmatmul.mubr.f32.gmra.mxu0 %v6548
        %v6690 = vpop.f32.mrf.mxu0
        %v6691 = vadd.f32 0.0, %v6690
        %v6692 = vpop.f32.mrf.mxu0
        %6693 = vmatprep.mubr.f32.mxu0 0.0
        %6694 = vmatmul.mubr.f32.gmra.mxu0 %v6549
        %v6695 = vpop.f32.mrf.mxu0
        %v6696 = vadd.f32 0.0, %v6695
        %v6697 = vpop.f32.mrf.mxu0
        %6698 = vmatprep.mubr.f32.mxu0 0.0
        %6699 = vmatmul.mubr.f32.gmra.mxu0 %v6550
        %v6700 = vpop.f32.mrf.mxu0
        %v6701 = vadd.f32 0.0, %v6700
        %v6702 = vpop.f32.mrf.mxu0
        %6703 = vmatprep.mubr.f32.mxu0 0.0
        %6704 = vmatmul.mubr.f32.gmra.mxu0 %v6551
        %v6705 = vpop.f32.mrf.mxu0
        %v6706 = vadd.f32 0.0, %v6705
        %v6707 = vpop.f32.mrf.mxu0
        %6708 = vmatprep.mubr.f32.mxu0 0.0
        %6709 = vmatmul.mubr.f32.gmra.mxu0 %v6552
        %v6710 = vpop.f32.mrf.mxu0
        %v6711 = vadd.f32 0.0, %v6710
        %v6712 = vpop.f32.mrf.mxu0
        %6713 = vdwg.mxu0
        %6714 = vmatprep.subr.mxu0 0.0
        %6715 = vmatpush1.msra.mxu0 %v6182
        %6716 = vmatprep.subr.mxu0 0.0
        %6717 = vmatpush1.msra.mxu0 %v6181
        %6718 = vmatprep.subr.mxu0 0.0
        %6719 = vmatpush1.msra.mxu0 %v6180
        %6720 = vmatprep.subr.mxu0 0.0
        %6721 = vmatpush1.msra.mxu0 %v6179
        %6722 = vmatprep.subr.mxu0 0.0
        %6723 = vmatpush1.msra.mxu0 %v6178
        %6724 = vmatprep.subr.mxu0 0.0
        %6725 = vmatpush1.msra.mxu0 %v6177
        %6726 = vmatprep.subr.mxu0 0.0
        %6727 = vmatpush1.msra.mxu0 %v6176
        %6728 = vmatprep.subr.mxu0 0.0
        %6729 = vmatpush1.msra.mxu0 %v6175
        %6730 = vmatprep.subr.mxu0 0.0
        %6731 = vmatpush1.msra.mxu0 %v6174
        %6732 = vmatprep.subr.mxu0 0.0
        %6733 = vmatpush1.msra.mxu0 %v6173
        %6734 = vmatprep.subr.mxu0 0.0
        %6735 = vmatpush1.msra.mxu0 %v6172
        %6736 = vmatprep.subr.mxu0 0.0
        %6737 = vmatpush1.msra.mxu0 %v6171
        %6738 = vmatprep.subr.mxu0 0.0
        %6739 = vmatpush1.msra.mxu0 %v6170
        %6740 = vmatprep.subr.mxu0 0.0
        %6741 = vmatpush1.msra.mxu0 %v6169
        %6742 = vmatprep.subr.mxu0 0.0
        %6743 = vmatpush1.msra.mxu0 %v6168
        %6744 = vmatprep.subr.mxu0 0.0
        %6745 = vmatpush1.msra.mxu0 %v6167
        %6746 = vmatprep.subr.mxu0 0.0
        %6747 = vmatpush2.msra.mxu0 0.0
        %6748 = vmatprep.subr.mxu0 0.0
        %6749 = vmatpush2.msra.mxu0 0.0
        %6750 = vmatprep.subr.mxu0 0.0
        %6751 = vmatpush2.msra.mxu0 0.0
        %6752 = vmatprep.subr.mxu0 0.0
        %6753 = vmatpush2.msra.mxu0 0.0
        %6754 = vmatprep.subr.mxu0 0.0
        %6755 = vmatpush2.msra.mxu0 0.0
        %6756 = vmatprep.subr.mxu0 0.0
        %6757 = vmatpush2.msra.mxu0 0.0
        %6758 = vmatprep.subr.mxu0 0.0
        %6759 = vmatpush2.msra.mxu0 0.0
        %6760 = vmatprep.subr.mxu0 0.0
        %6761 = vmatpush2.msra.mxu0 0.0
        %6762 = vmatprep.subr.mxu0 0.0
        %6763 = vmatpush2.msra.mxu0 0.0
        %6764 = vmatprep.subr.mxu0 0.0
        %6765 = vmatpush2.msra.mxu0 0.0
        %6766 = vmatprep.subr.mxu0 0.0
        %6767 = vmatpush2.msra.mxu0 0.0
        %6768 = vmatprep.subr.mxu0 0.0
        %6769 = vmatpush2.msra.mxu0 0.0
        %6770 = vmatprep.subr.mxu0 0.0
        %6771 = vmatpush2.msra.mxu0 0.0
        %6772 = vmatprep.subr.mxu0 0.0
        %6773 = vmatpush2.msra.mxu0 0.0
        %6774 = vmatprep.subr.mxu0 0.0
        %6775 = vmatpush2.msra.mxu0 0.0
        %6776 = vmatprep.subr.mxu0 0.0
        %6777 = vmatpush2.msra.mxu0 0.0
        %6778 = vmatprep.mubr.f32.mxu0 0.0
        %6779 = vmatmul.mubr.f32.gmra.mxu0 %v6151
        %v6780 = vpop.f32.mrf.mxu0
        %v6781 = vadd.f32 %v6636, %v6780
        %v6782 = vpop.f32.mrf.mxu0
        %6783 = vmatprep.mubr.f32.mxu0 0.0
        %6784 = vmatmul.mubr.f32.gmra.mxu0 %v6152
        %v6785 = vpop.f32.mrf.mxu0
        %v6786 = vadd.f32 %v6641, %v6785
        %v6787 = vpop.f32.mrf.mxu0
        %6788 = vmatprep.mubr.f32.mxu0 0.0
        %6789 = vmatmul.mubr.f32.gmra.mxu0 %v6153
        %v6790 = vpop.f32.mrf.mxu0
        %v6791 = vadd.f32 %v6646, %v6790
        %v6792 = vpop.f32.mrf.mxu0
        %6793 = vmatprep.mubr.f32.mxu0 0.0
        %6794 = vmatmul.mubr.f32.gmra.mxu0 %v6154
        %v6795 = vpop.f32.mrf.mxu0
        %v6796 = vadd.f32 %v6651, %v6795
        %v6797 = vpop.f32.mrf.mxu0
        %6798 = vmatprep.mubr.f32.mxu0 0.0
        %6799 = vmatmul.mubr.f32.gmra.mxu0 %v6155
        %v6800 = vpop.f32.mrf.mxu0
        %v6801 = vadd.f32 %v6656, %v6800
        %v6802 = vpop.f32.mrf.mxu0
        %6803 = vmatprep.mubr.f32.mxu0 0.0
        %6804 = vmatmul.mubr.f32.gmra.mxu0 %v6156
        %v6805 = vpop.f32.mrf.mxu0
        %v6806 = vadd.f32 %v6661, %v6805
        %v6807 = vpop.f32.mrf.mxu0
        %6808 = vmatprep.mubr.f32.mxu0 0.0
        %6809 = vmatmul.mubr.f32.gmra.mxu0 %v6157
        %v6810 = vpop.f32.mrf.mxu0
        %v6811 = vadd.f32 %v6666, %v6810
        %v6812 = vpop.f32.mrf.mxu0
        %6813 = vmatprep.mubr.f32.mxu0 0.0
        %6814 = vmatmul.mubr.f32.gmra.mxu0 %v6158
        %v6815 = vpop.f32.mrf.mxu0
        %v6816 = vadd.f32 %v6671, %v6815
        %v6817 = vpop.f32.mrf.mxu0
        %6818 = vmatprep.mubr.f32.mxu0 0.0
        %6819 = vmatmul.mubr.f32.gmra.mxu0 %v6159
        %v6820 = vpop.f32.mrf.mxu0
        %v6821 = vadd.f32 %v6676, %v6820
        %v6822 = vpop.f32.mrf.mxu0
        %6823 = vmatprep.mubr.f32.mxu0 0.0
        %6824 = vmatmul.mubr.f32.gmra.mxu0 %v6160
        %v6825 = vpop.f32.mrf.mxu0
        %v6826 = vadd.f32 %v6681, %v6825
        %v6827 = vpop.f32.mrf.mxu0
        %6828 = vmatprep.mubr.f32.mxu0 0.0
        %6829 = vmatmul.mubr.f32.gmra.mxu0 %v6161
        %v6830 = vpop.f32.mrf.mxu0
        %v6831 = vadd.f32 %v6686, %v6830
        %v6832 = vpop.f32.mrf.mxu0
        %6833 = vmatprep.mubr.f32.mxu0 0.0
        %6834 = vmatmul.mubr.f32.gmra.mxu0 %v6162
        %v6835 = vpop.f32.mrf.mxu0
        %v6836 = vadd.f32 %v6691, %v6835
        %v6837 = vpop.f32.mrf.mxu0
        %6838 = vmatprep.mubr.f32.mxu0 0.0
        %6839 = vmatmul.mubr.f32.gmra.mxu0 %v6163
        %v6840 = vpop.f32.mrf.mxu0
        %v6841 = vadd.f32 %v6696, %v6840
        %v6842 = vpop.f32.mrf.mxu0
        %6843 = vmatprep.mubr.f32.mxu0 0.0
        %6844 = vmatmul.mubr.f32.gmra.mxu0 %v6164
        %v6845 = vpop.f32.mrf.mxu0
        %v6846 = vadd.f32 %v6701, %v6845
        %v6847 = vpop.f32.mrf.mxu0
        %6848 = vmatprep.mubr.f32.mxu0 0.0
        %6849 = vmatmul.mubr.f32.gmra.mxu0 %v6165
        %v6850 = vpop.f32.mrf.mxu0
        %v6851 = vadd.f32 %v6706, %v6850
        %v6852 = vpop.f32.mrf.mxu0
        %6853 = vmatprep.mubr.f32.mxu0 0.0
        %6854 = vmatmul.mubr.f32.gmra.mxu0 %v6166
        %v6855 = vpop.f32.mrf.mxu0
        %v6856 = vadd.f32 %v6711, %v6855
        %v6857 = vpop.f32.mrf.mxu0
        %6858 = vdwg.mxu0
        %v6859 = vmul.f32 %v5426, %v511
        %v6860 = vmul.f32 %v5427, %v511
        %v6861 = vmul.f32 %v5428, %v511
        %v6862 = vmul.f32 %v5429, %v511
        %v6863 = vmul.f32 %v5430, %v511
        %v6864 = vmul.f32 %v5431, %v511
        %v6865 = vmul.f32 %v5432, %v511
        %v6866 = vmul.f32 %v5433, %v511
        %v6867 = vmul.f32 %v5434, %v511
        %v6868 = vmul.f32 %v5435, %v511
        %v6869 = vmul.f32 %v5436, %v511
        %v6870 = vmul.f32 %v5437, %v511
        %v6871 = vmul.f32 %v5438, %v511
        %v6872 = vmul.f32 %v5439, %v511
        %v6873 = vmul.f32 %v5440, %v511
        %v6874 = vmul.f32 %v5441, %v511
        %s6875 = scalar_lea.vmem %s14, 256
        %v6876 = vld [vmem:[%s6875] sm:$0xff]
        %v6877 = vld [vmem:[%s6875 + $0x8] sm:$0xff]
        %v6878 = vld [vmem:[%s6875 + $0x10] sm:$0xff]
        %v6879 = vld [vmem:[%s6875 + $0x18] sm:$0xff]
        %v6880 = vld [vmem:[%s6875 + $0x20] sm:$0xff]
        %v6881 = vld [vmem:[%s6875 + $0x28] sm:$0xff]
        %v6882 = vld [vmem:[%s6875 + $0x30] sm:$0xff]
        %v6883 = vld [vmem:[%s6875 + $0x38] sm:$0xff]
        %v6884 = vld [vmem:[%s6875 + $0x40] sm:$0xff]
        %v6885 = vld [vmem:[%s6875 + $0x48] sm:$0xff]
        %v6886 = vld [vmem:[%s6875 + $0x50] sm:$0xff]
        %v6887 = vld [vmem:[%s6875 + $0x58] sm:$0xff]
        %v6888 = vld [vmem:[%s6875 + $0x60] sm:$0xff]
        %v6889 = vld [vmem:[%s6875 + $0x68] sm:$0xff]
        %v6890 = vld [vmem:[%s6875 + $0x70] sm:$0xff]
        %v6891 = vld [vmem:[%s6875 + $0x78] sm:$0xff]
        %v6893 = vsel %vm740, %v6859, 0
        %v6896 = vsel %vm740, %v6860, 0
        %v6899 = vsel %vm740, %v6861, 0
        %v6902 = vsel %vm740, %v6862, 0
        %v6905 = vsel %vm740, %v6863, 0
        %v6908 = vsel %vm740, %v6864, 0
        %v6911 = vsel %vm740, %v6865, 0
        %v6914 = vsel %vm740, %v6866, 0
        %v6917 = vsel %vm740, %v6867, 0
        %v6920 = vsel %vm740, %v6868, 0
        %v6923 = vsel %vm740, %v6869, 0
        %v6926 = vsel %vm740, %v6870, 0
        %v6929 = vsel %vm740, %v6871, 0
        %v6932 = vsel %vm740, %v6872, 0
        %v6935 = vsel %vm740, %v6873, 0
        %v6938 = vsel %vm740, %v6874, 0
        %6940 = vmatprep.subr.mxu0 0.0
        %6941 = vmatpush1.xpose.msra.mxu0 %v5876
        %6942 = vmatprep.subr.mxu0 0.0
        %6943 = vmatpush1.xpose.msra.mxu0 %v5873
        %6944 = vmatprep.subr.mxu0 0.0
        %6945 = vmatpush1.xpose.msra.mxu0 %v5870
        %6946 = vmatprep.subr.mxu0 0.0
        %6947 = vmatpush1.xpose.msra.mxu0 %v5867
        %6948 = vmatprep.subr.mxu0 0.0
        %6949 = vmatpush1.xpose.msra.mxu0 %v5864
        %6950 = vmatprep.subr.mxu0 0.0
        %6951 = vmatpush1.xpose.msra.mxu0 %v5861
        %6952 = vmatprep.subr.mxu0 0.0
        %6953 = vmatpush1.xpose.msra.mxu0 %v5858
        %6954 = vmatprep.subr.mxu0 0.0
        %6955 = vmatpush1.xpose.msra.mxu0 %v5855
        %6956 = vmatprep.subr.mxu0 0.0
        %6957 = vmatpush1.xpose.msra.mxu0 %v5852
        %6958 = vmatprep.subr.mxu0 0.0
        %6959 = vmatpush1.xpose.msra.mxu0 %v5849
        %6960 = vmatprep.subr.mxu0 0.0
        %6961 = vmatpush1.xpose.msra.mxu0 %v5846
        %6962 = vmatprep.subr.mxu0 0.0
        %6963 = vmatpush1.xpose.msra.mxu0 %v5843
        %6964 = vmatprep.subr.mxu0 0.0
        %6965 = vmatpush1.xpose.msra.mxu0 %v5840
        %6966 = vmatprep.subr.mxu0 0.0
        %6967 = vmatpush1.xpose.msra.mxu0 %v5837
        %6968 = vmatprep.subr.mxu0 0.0
        %6969 = vmatpush1.xpose.msra.mxu0 %v5834
        %6970 = vmatprep.subr.mxu0 0.0
        %6971 = vmatpush1.xpose.msra.mxu0 %v5831
        %6972 = vmatprep.subr.mxu0 0.0
        %6973 = vmatpush2.xpose.msra.mxu0 0.0
        %6974 = vmatprep.subr.mxu0 0.0
        %6975 = vmatpush2.xpose.msra.mxu0 0.0
        %6976 = vmatprep.subr.mxu0 0.0
        %6977 = vmatpush2.xpose.msra.mxu0 0.0
        %6978 = vmatprep.subr.mxu0 0.0
        %6979 = vmatpush2.xpose.msra.mxu0 0.0
        %6980 = vmatprep.subr.mxu0 0.0
        %6981 = vmatpush2.xpose.msra.mxu0 0.0
        %6982 = vmatprep.subr.mxu0 0.0
        %6983 = vmatpush2.xpose.msra.mxu0 0.0
        %6984 = vmatprep.subr.mxu0 0.0
        %6985 = vmatpush2.xpose.msra.mxu0 0.0
        %6986 = vmatprep.subr.mxu0 0.0
        %6987 = vmatpush2.xpose.msra.mxu0 0.0
        %6988 = vmatprep.subr.mxu0 0.0
        %6989 = vmatpush2.xpose.msra.mxu0 0.0
        %6990 = vmatprep.subr.mxu0 0.0
        %6991 = vmatpush2.xpose.msra.mxu0 0.0
        %6992 = vmatprep.subr.mxu0 0.0
        %6993 = vmatpush2.xpose.msra.mxu0 0.0
        %6994 = vmatprep.subr.mxu0 0.0
        %6995 = vmatpush2.xpose.msra.mxu0 0.0
        %6996 = vmatprep.subr.mxu0 0.0
        %6997 = vmatpush2.xpose.msra.mxu0 0.0
        %6998 = vmatprep.subr.mxu0 0.0
        %6999 = vmatpush2.xpose.msra.mxu0 0.0
        %7000 = vmatprep.subr.mxu0 0.0
        %7001 = vmatpush2.xpose.msra.mxu0 0.0
        %7002 = vmatprep.subr.mxu0 0.0
        %7003 = vmatpush2.xpose.msra.mxu0 0.0
        %7004 = vmatprep.mubr.f32.mxu0 0.0
        %7005 = vmatmul.mubr.f32.gmra.mxu0 %v6893
        %v7006 = vpop.f32.mrf.mxu0
        %v7007 = vadd.f32 %v6876, %v7006
        %v7008 = vpop.f32.mrf.mxu0
        %7009 = vmatprep.mubr.f32.mxu0 0.0
        %7010 = vmatmul.mubr.f32.gmra.mxu0 %v6896
        %v7011 = vpop.f32.mrf.mxu0
        %v7012 = vadd.f32 %v6877, %v7011
        %v7013 = vpop.f32.mrf.mxu0
        %7014 = vmatprep.mubr.f32.mxu0 0.0
        %7015 = vmatmul.mubr.f32.gmra.mxu0 %v6899
        %v7016 = vpop.f32.mrf.mxu0
        %v7017 = vadd.f32 %v6878, %v7016
        %v7018 = vpop.f32.mrf.mxu0
        %7019 = vmatprep.mubr.f32.mxu0 0.0
        %7020 = vmatmul.mubr.f32.gmra.mxu0 %v6902
        %v7021 = vpop.f32.mrf.mxu0
        %v7022 = vadd.f32 %v6879, %v7021
        %v7023 = vpop.f32.mrf.mxu0
        %7024 = vmatprep.mubr.f32.mxu0 0.0
        %7025 = vmatmul.mubr.f32.gmra.mxu0 %v6905
        %v7026 = vpop.f32.mrf.mxu0
        %v7027 = vadd.f32 %v6880, %v7026
        %v7028 = vpop.f32.mrf.mxu0
        %7029 = vmatprep.mubr.f32.mxu0 0.0
        %7030 = vmatmul.mubr.f32.gmra.mxu0 %v6908
        %v7031 = vpop.f32.mrf.mxu0
        %v7032 = vadd.f32 %v6881, %v7031
        %v7033 = vpop.f32.mrf.mxu0
        %7034 = vmatprep.mubr.f32.mxu0 0.0
        %7035 = vmatmul.mubr.f32.gmra.mxu0 %v6911
        %v7036 = vpop.f32.mrf.mxu0
        %v7037 = vadd.f32 %v6882, %v7036
        %v7038 = vpop.f32.mrf.mxu0
        %7039 = vmatprep.mubr.f32.mxu0 0.0
        %7040 = vmatmul.mubr.f32.gmra.mxu0 %v6914
        %v7041 = vpop.f32.mrf.mxu0
        %v7042 = vadd.f32 %v6883, %v7041
        %v7043 = vpop.f32.mrf.mxu0
        %7044 = vmatprep.mubr.f32.mxu0 0.0
        %7045 = vmatmul.mubr.f32.gmra.mxu0 %v6917
        %v7046 = vpop.f32.mrf.mxu0
        %v7047 = vadd.f32 %v6884, %v7046
        %v7048 = vpop.f32.mrf.mxu0
        %7049 = vmatprep.mubr.f32.mxu0 0.0
        %7050 = vmatmul.mubr.f32.gmra.mxu0 %v6920
        %v7051 = vpop.f32.mrf.mxu0
        %v7052 = vadd.f32 %v6885, %v7051
        %v7053 = vpop.f32.mrf.mxu0
        %7054 = vmatprep.mubr.f32.mxu0 0.0
        %7055 = vmatmul.mubr.f32.gmra.mxu0 %v6923
        %v7056 = vpop.f32.mrf.mxu0
        %v7057 = vadd.f32 %v6886, %v7056
        %v7058 = vpop.f32.mrf.mxu0
        %7059 = vmatprep.mubr.f32.mxu0 0.0
        %7060 = vmatmul.mubr.f32.gmra.mxu0 %v6926
        %v7061 = vpop.f32.mrf.mxu0
        %v7062 = vadd.f32 %v6887, %v7061
        %v7063 = vpop.f32.mrf.mxu0
        %7064 = vmatprep.mubr.f32.mxu0 0.0
        %7065 = vmatmul.mubr.f32.gmra.mxu0 %v6929
        %v7066 = vpop.f32.mrf.mxu0
        %v7067 = vadd.f32 %v6888, %v7066
        %v7068 = vpop.f32.mrf.mxu0
        %7069 = vmatprep.mubr.f32.mxu0 0.0
        %7070 = vmatmul.mubr.f32.gmra.mxu0 %v6932
        %v7071 = vpop.f32.mrf.mxu0
        %v7072 = vadd.f32 %v6889, %v7071
        %v7073 = vpop.f32.mrf.mxu0
        %7074 = vmatprep.mubr.f32.mxu0 0.0
        %7075 = vmatmul.mubr.f32.gmra.mxu0 %v6935
        %v7076 = vpop.f32.mrf.mxu0
        %v7077 = vadd.f32 %v6890, %v7076
        %v7078 = vpop.f32.mrf.mxu0
        %7079 = vmatprep.mubr.f32.mxu0 0.0
        %7080 = vmatmul.mubr.f32.gmra.mxu0 %v6938
        %v7081 = vpop.f32.mrf.mxu0
        %v7082 = vadd.f32 %v6891, %v7081
        %v7083 = vpop.f32.mrf.mxu0
        %7084 = vdwg.mxu0
        %7085 = vmax.xlane.f32.xlu0 %v7007
        %v7086 = vpop.xlane.xlu0 %7085
        %7087 = vmax.xlane.f32.xlu0 %v7012
        %v7088 = vpop.xlane.xlu0 %7087
        %7089 = vmax.xlane.f32.xlu0 %v7017
        %v7090 = vpop.xlane.xlu0 %7089
        %7091 = vmax.xlane.f32.xlu0 %v7022
        %v7092 = vpop.xlane.xlu0 %7091
        %7093 = vmax.xlane.f32.xlu0 %v7027
        %v7094 = vpop.xlane.xlu0 %7093
        %7095 = vmax.xlane.f32.xlu0 %v7032
        %v7096 = vpop.xlane.xlu0 %7095
        %7097 = vmax.xlane.f32.xlu0 %v7037
        %v7098 = vpop.xlane.xlu0 %7097
        %7099 = vmax.xlane.f32.xlu0 %v7042
        %v7100 = vpop.xlane.xlu0 %7099
        %7101 = vmax.xlane.f32.xlu0 %v7047
        %v7102 = vpop.xlane.xlu0 %7101
        %7103 = vmax.xlane.f32.xlu0 %v7052
        %v7104 = vpop.xlane.xlu0 %7103
        %7105 = vmax.xlane.f32.xlu0 %v7057
        %v7106 = vpop.xlane.xlu0 %7105
        %7107 = vmax.xlane.f32.xlu0 %v7062
        %v7108 = vpop.xlane.xlu0 %7107
        %7109 = vmax.xlane.f32.xlu0 %v7067
        %v7110 = vpop.xlane.xlu0 %7109
        %7111 = vmax.xlane.f32.xlu0 %v7072
        %v7112 = vpop.xlane.xlu0 %7111
        %7113 = vmax.xlane.f32.xlu0 %v7077
        %v7114 = vpop.xlane.xlu0 %7113
        %7115 = vmax.xlane.f32.xlu0 %v7082
        %v7116 = vpop.xlane.xlu0 %7115
        %v7117 = vsub.f32 %v7007, %v7086
        %v7118 = vsub.f32 %v7012, %v7088
        %v7119 = vsub.f32 %v7017, %v7090
        %v7120 = vsub.f32 %v7022, %v7092
        %v7121 = vsub.f32 %v7027, %v7094
        %v7122 = vsub.f32 %v7032, %v7096
        %v7123 = vsub.f32 %v7037, %v7098
        %v7124 = vsub.f32 %v7042, %v7100
        %v7125 = vsub.f32 %v7047, %v7102
        %v7126 = vsub.f32 %v7052, %v7104
        %v7127 = vsub.f32 %v7057, %v7106
        %v7128 = vsub.f32 %v7062, %v7108
        %v7129 = vsub.f32 %v7067, %v7110
        %v7130 = vsub.f32 %v7072, %v7112
        %v7131 = vsub.f32 %v7077, %v7114
        %v7132 = vsub.f32 %v7082, %v7116
        %v7133 = vmul.f32 %v7117, 1.442695
        %v7134 = vpow.pop %v7133
        %v7135 = vmul.f32 %v7118, 1.442695
        %v7136 = vpow.pop %v7135
        %v7137 = vmul.f32 %v7119, 1.442695
        %v7138 = vpow.pop %v7137
        %v7139 = vmul.f32 %v7120, 1.442695
        %v7140 = vpow.pop %v7139
        %v7141 = vmul.f32 %v7121, 1.442695
        %v7142 = vpow.pop %v7141
        %v7143 = vmul.f32 %v7122, 1.442695
        %v7144 = vpow.pop %v7143
        %v7145 = vmul.f32 %v7123, 1.442695
        %v7146 = vpow.pop %v7145
        %v7147 = vmul.f32 %v7124, 1.442695
        %v7148 = vpow.pop %v7147
        %v7149 = vmul.f32 %v7125, 1.442695
        %v7150 = vpow.pop %v7149
        %v7151 = vmul.f32 %v7126, 1.442695
        %v7152 = vpow.pop %v7151
        %v7153 = vmul.f32 %v7127, 1.442695
        %v7154 = vpow.pop %v7153
        %v7155 = vmul.f32 %v7128, 1.442695
        %v7156 = vpow.pop %v7155
        %v7157 = vmul.f32 %v7129, 1.442695
        %v7158 = vpow.pop %v7157
        %v7159 = vmul.f32 %v7130, 1.442695
        %v7160 = vpow.pop %v7159
        %v7161 = vmul.f32 %v7131, 1.442695
        %v7162 = vpow.pop %v7161
        %v7163 = vmul.f32 %v7132, 1.442695
        %v7164 = vpow.pop %v7163
        %7165 = vadd.xlane.f32.xlu0 %v7134
        %v7166 = vpop.xlane.xlu0 %7165
        %7167 = vadd.xlane.f32.xlu0 %v7136
        %v7168 = vpop.xlane.xlu0 %7167
        %7169 = vadd.xlane.f32.xlu0 %v7138
        %v7170 = vpop.xlane.xlu0 %7169
        %7171 = vadd.xlane.f32.xlu0 %v7140
        %v7172 = vpop.xlane.xlu0 %7171
        %7173 = vadd.xlane.f32.xlu0 %v7142
        %v7174 = vpop.xlane.xlu0 %7173
        %7175 = vadd.xlane.f32.xlu0 %v7144
        %v7176 = vpop.xlane.xlu0 %7175
        %7177 = vadd.xlane.f32.xlu0 %v7146
        %v7178 = vpop.xlane.xlu0 %7177
        %7179 = vadd.xlane.f32.xlu0 %v7148
        %v7180 = vpop.xlane.xlu0 %7179
        %7181 = vadd.xlane.f32.xlu0 %v7150
        %v7182 = vpop.xlane.xlu0 %7181
        %7183 = vadd.xlane.f32.xlu0 %v7152
        %v7184 = vpop.xlane.xlu0 %7183
        %7185 = vadd.xlane.f32.xlu0 %v7154
        %v7186 = vpop.xlane.xlu0 %7185
        %7187 = vadd.xlane.f32.xlu0 %v7156
        %v7188 = vpop.xlane.xlu0 %7187
        %7189 = vadd.xlane.f32.xlu0 %v7158
        %v7190 = vpop.xlane.xlu0 %7189
        %7191 = vadd.xlane.f32.xlu0 %v7160
        %v7192 = vpop.xlane.xlu0 %7191
        %7193 = vadd.xlane.f32.xlu0 %v7162
        %v7194 = vpop.xlane.xlu0 %7193
        %7195 = vadd.xlane.f32.xlu0 %v7164
        %v7196 = vpop.xlane.xlu0 %7195
        %v7197 = vrcp.pop %v7166
        %v7198 = vrcp.pop %v7168
        %v7199 = vrcp.pop %v7170
        %v7200 = vrcp.pop %v7172
        %v7201 = vrcp.pop %v7174
        %v7202 = vrcp.pop %v7176
        %v7203 = vrcp.pop %v7178
        %v7204 = vrcp.pop %v7180
        %v7205 = vrcp.pop %v7182
        %v7206 = vrcp.pop %v7184
        %v7207 = vrcp.pop %v7186
        %v7208 = vrcp.pop %v7188
        %v7209 = vrcp.pop %v7190
        %v7210 = vrcp.pop %v7192
        %v7211 = vrcp.pop %v7194
        %v7212 = vrcp.pop %v7196
        %v7213 = vmul.f32 %v7134, %v7197
        %v7214 = vmul.f32 %v7136, %v7198
        %v7215 = vmul.f32 %v7138, %v7199
        %v7216 = vmul.f32 %v7140, %v7200
        %v7217 = vmul.f32 %v7142, %v7201
        %v7218 = vmul.f32 %v7144, %v7202
        %v7219 = vmul.f32 %v7146, %v7203
        %v7220 = vmul.f32 %v7148, %v7204
        %v7221 = vmul.f32 %v7150, %v7205
        %v7222 = vmul.f32 %v7152, %v7206
        %v7223 = vmul.f32 %v7154, %v7207
        %v7224 = vmul.f32 %v7156, %v7208
        %v7225 = vmul.f32 %v7158, %v7209
        %v7226 = vmul.f32 %v7160, %v7210
        %v7227 = vmul.f32 %v7162, %v7211
        %v7228 = vmul.f32 %v7164, %v7212
        %v7229 = vmul.f32 %v5672, %v511
        %v7230 = vmul.f32 %v5677, %v511
        %v7231 = vmul.f32 %v5682, %v511
        %v7232 = vmul.f32 %v5687, %v511
        %v7233 = vmul.f32 %v5692, %v511
        %v7234 = vmul.f32 %v5697, %v511
        %v7235 = vmul.f32 %v5702, %v511
        %v7236 = vmul.f32 %v5707, %v511
        %v7237 = vmul.f32 %v5712, %v511
        %v7238 = vmul.f32 %v5717, %v511
        %v7239 = vmul.f32 %v5722, %v511
        %v7240 = vmul.f32 %v5727, %v511
        %v7241 = vmul.f32 %v5732, %v511
        %v7242 = vmul.f32 %v5737, %v511
        %v7243 = vmul.f32 %v5742, %v511
        %v7244 = vmul.f32 %v5747, %v511
        %7245 = vmatprep.subr.mxu0 0.0
        %7246 = vmatpush1.msra.mxu0 %v7244
        %7247 = vmatprep.subr.mxu0 0.0
        %7248 = vmatpush1.msra.mxu0 %v7243
        %7249 = vmatprep.subr.mxu0 0.0
        %7250 = vmatpush1.msra.mxu0 %v7242
        %7251 = vmatprep.subr.mxu0 0.0
        %7252 = vmatpush1.msra.mxu0 %v7241
        %7253 = vmatprep.subr.mxu0 0.0
        %7254 = vmatpush1.msra.mxu0 %v7240
        %7255 = vmatprep.subr.mxu0 0.0
        %7256 = vmatpush1.msra.mxu0 %v7239
        %7257 = vmatprep.subr.mxu0 0.0
        %7258 = vmatpush1.msra.mxu0 %v7238
        %7259 = vmatprep.subr.mxu0 0.0
        %7260 = vmatpush1.msra.mxu0 %v7237
        %7261 = vmatprep.subr.mxu0 0.0
        %7262 = vmatpush1.msra.mxu0 %v7236
        %7263 = vmatprep.subr.mxu0 0.0
        %7264 = vmatpush1.msra.mxu0 %v7235
        %7265 = vmatprep.subr.mxu0 0.0
        %7266 = vmatpush1.msra.mxu0 %v7234
        %7267 = vmatprep.subr.mxu0 0.0
        %7268 = vmatpush1.msra.mxu0 %v7233
        %7269 = vmatprep.subr.mxu0 0.0
        %7270 = vmatpush1.msra.mxu0 %v7232
        %7271 = vmatprep.subr.mxu0 0.0
        %7272 = vmatpush1.msra.mxu0 %v7231
        %7273 = vmatprep.subr.mxu0 0.0
        %7274 = vmatpush1.msra.mxu0 %v7230
        %7275 = vmatprep.subr.mxu0 0.0
        %7276 = vmatpush1.msra.mxu0 %v7229
        %7277 = vmatprep.subr.mxu0 0.0
        %7278 = vmatpush2.msra.mxu0 0.0
        %7279 = vmatprep.subr.mxu0 0.0
        %7280 = vmatpush2.msra.mxu0 0.0
        %7281 = vmatprep.subr.mxu0 0.0
        %7282 = vmatpush2.msra.mxu0 0.0
        %7283 = vmatprep.subr.mxu0 0.0
        %7284 = vmatpush2.msra.mxu0 0.0
        %7285 = vmatprep.subr.mxu0 0.0
        %7286 = vmatpush2.msra.mxu0 0.0
        %7287 = vmatprep.subr.mxu0 0.0
        %7288 = vmatpush2.msra.mxu0 0.0
        %7289 = vmatprep.subr.mxu0 0.0
        %7290 = vmatpush2.msra.mxu0 0.0
        %7291 = vmatprep.subr.mxu0 0.0
        %7292 = vmatpush2.msra.mxu0 0.0
        %7293 = vmatprep.subr.mxu0 0.0
        %7294 = vmatpush2.msra.mxu0 0.0
        %7295 = vmatprep.subr.mxu0 0.0
        %7296 = vmatpush2.msra.mxu0 0.0
        %7297 = vmatprep.subr.mxu0 0.0
        %7298 = vmatpush2.msra.mxu0 0.0
        %7299 = vmatprep.subr.mxu0 0.0
        %7300 = vmatpush2.msra.mxu0 0.0
        %7301 = vmatprep.subr.mxu0 0.0
        %7302 = vmatpush2.msra.mxu0 0.0
        %7303 = vmatprep.subr.mxu0 0.0
        %7304 = vmatpush2.msra.mxu0 0.0
        %7305 = vmatprep.subr.mxu0 0.0
        %7306 = vmatpush2.msra.mxu0 0.0
        %7307 = vmatprep.subr.mxu0 0.0
        %7308 = vmatpush2.msra.mxu0 0.0
        %7309 = vmatprep.mubr.f32.mxu0 0.0
        %7310 = vmatmul.mubr.f32.gmra.mxu0 %v7213
        %v7311 = vpop.f32.mrf.mxu0
        %v7312 = vadd.f32 0.0, %v7311
        %v7313 = vpop.f32.mrf.mxu0
        %7314 = vmatprep.mubr.f32.mxu0 0.0
        %7315 = vmatmul.mubr.f32.gmra.mxu0 %v7214
        %v7316 = vpop.f32.mrf.mxu0
        %v7317 = vadd.f32 0.0, %v7316
        %v7318 = vpop.f32.mrf.mxu0
        %7319 = vmatprep.mubr.f32.mxu0 0.0
        %7320 = vmatmul.mubr.f32.gmra.mxu0 %v7215
        %v7321 = vpop.f32.mrf.mxu0
        %v7322 = vadd.f32 0.0, %v7321
        %v7323 = vpop.f32.mrf.mxu0
        %7324 = vmatprep.mubr.f32.mxu0 0.0
        %7325 = vmatmul.mubr.f32.gmra.mxu0 %v7216
        %v7326 = vpop.f32.mrf.mxu0
        %v7327 = vadd.f32 0.0, %v7326
        %v7328 = vpop.f32.mrf.mxu0
        %7329 = vmatprep.mubr.f32.mxu0 0.0
        %7330 = vmatmul.mubr.f32.gmra.mxu0 %v7217
        %v7331 = vpop.f32.mrf.mxu0
        %v7332 = vadd.f32 0.0, %v7331
        %v7333 = vpop.f32.mrf.mxu0
        %7334 = vmatprep.mubr.f32.mxu0 0.0
        %7335 = vmatmul.mubr.f32.gmra.mxu0 %v7218
        %v7336 = vpop.f32.mrf.mxu0
        %v7337 = vadd.f32 0.0, %v7336
        %v7338 = vpop.f32.mrf.mxu0
        %7339 = vmatprep.mubr.f32.mxu0 0.0
        %7340 = vmatmul.mubr.f32.gmra.mxu0 %v7219
        %v7341 = vpop.f32.mrf.mxu0
        %v7342 = vadd.f32 0.0, %v7341
        %v7343 = vpop.f32.mrf.mxu0
        %7344 = vmatprep.mubr.f32.mxu0 0.0
        %7345 = vmatmul.mubr.f32.gmra.mxu0 %v7220
        %v7346 = vpop.f32.mrf.mxu0
        %v7347 = vadd.f32 0.0, %v7346
        %v7348 = vpop.f32.mrf.mxu0
        %7349 = vmatprep.mubr.f32.mxu0 0.0
        %7350 = vmatmul.mubr.f32.gmra.mxu0 %v7221
        %v7351 = vpop.f32.mrf.mxu0
        %v7352 = vadd.f32 0.0, %v7351
        %v7353 = vpop.f32.mrf.mxu0
        %7354 = vmatprep.mubr.f32.mxu0 0.0
        %7355 = vmatmul.mubr.f32.gmra.mxu0 %v7222
        %v7356 = vpop.f32.mrf.mxu0
        %v7357 = vadd.f32 0.0, %v7356
        %v7358 = vpop.f32.mrf.mxu0
        %7359 = vmatprep.mubr.f32.mxu0 0.0
        %7360 = vmatmul.mubr.f32.gmra.mxu0 %v7223
        %v7361 = vpop.f32.mrf.mxu0
        %v7362 = vadd.f32 0.0, %v7361
        %v7363 = vpop.f32.mrf.mxu0
        %7364 = vmatprep.mubr.f32.mxu0 0.0
        %7365 = vmatmul.mubr.f32.gmra.mxu0 %v7224
        %v7366 = vpop.f32.mrf.mxu0
        %v7367 = vadd.f32 0.0, %v7366
        %v7368 = vpop.f32.mrf.mxu0
        %7369 = vmatprep.mubr.f32.mxu0 0.0
        %7370 = vmatmul.mubr.f32.gmra.mxu0 %v7225
        %v7371 = vpop.f32.mrf.mxu0
        %v7372 = vadd.f32 0.0, %v7371
        %v7373 = vpop.f32.mrf.mxu0
        %7374 = vmatprep.mubr.f32.mxu0 0.0
        %7375 = vmatmul.mubr.f32.gmra.mxu0 %v7226
        %v7376 = vpop.f32.mrf.mxu0
        %v7377 = vadd.f32 0.0, %v7376
        %v7378 = vpop.f32.mrf.mxu0
        %7379 = vmatprep.mubr.f32.mxu0 0.0
        %7380 = vmatmul.mubr.f32.gmra.mxu0 %v7227
        %v7381 = vpop.f32.mrf.mxu0
        %v7382 = vadd.f32 0.0, %v7381
        %v7383 = vpop.f32.mrf.mxu0
        %7384 = vmatprep.mubr.f32.mxu0 0.0
        %7385 = vmatmul.mubr.f32.gmra.mxu0 %v7228
        %v7386 = vpop.f32.mrf.mxu0
        %v7387 = vadd.f32 0.0, %v7386
        %v7388 = vpop.f32.mrf.mxu0
        %7389 = vdwg.mxu0
        %v7390 = vadd.f32 %v6781, %v7312
        %v7391 = vadd.f32 %v6786, %v7317
        %v7392 = vadd.f32 %v6791, %v7322
        %v7393 = vadd.f32 %v6796, %v7327
        %v7394 = vadd.f32 %v6801, %v7332
        %v7395 = vadd.f32 %v6806, %v7337
        %v7396 = vadd.f32 %v6811, %v7342
        %v7397 = vadd.f32 %v6816, %v7347
        %v7398 = vadd.f32 %v6821, %v7352
        %v7399 = vadd.f32 %v6826, %v7357
        %v7400 = vadd.f32 %v6831, %v7362
        %v7401 = vadd.f32 %v6836, %v7367
        %v7402 = vadd.f32 %v6841, %v7372
        %v7403 = vadd.f32 %v6846, %v7377
        %v7404 = vadd.f32 %v6851, %v7382
        %v7405 = vadd.f32 %v6856, %v7387
        %v7406 = vmul.f32 %v5426, %v516
        %v7407 = vmul.f32 %v5427, %v516
        %v7408 = vmul.f32 %v5428, %v516
        %v7409 = vmul.f32 %v5429, %v516
        %v7410 = vmul.f32 %v5430, %v516
        %v7411 = vmul.f32 %v5431, %v516
        %v7412 = vmul.f32 %v5432, %v516
        %v7413 = vmul.f32 %v5433, %v516
        %v7414 = vmul.f32 %v5434, %v516
        %v7415 = vmul.f32 %v5435, %v516
        %v7416 = vmul.f32 %v5436, %v516
        %v7417 = vmul.f32 %v5437, %v516
        %v7418 = vmul.f32 %v5438, %v516
        %v7419 = vmul.f32 %v5439, %v516
        %v7420 = vmul.f32 %v5440, %v516
        %v7421 = vmul.f32 %v5441, %v516
        %s7422 = scalar_lea.vmem %s14, 384
        %v7423 = vld [vmem:[%s7422] sm:$0xff]
        %v7424 = vld [vmem:[%s7422 + $0x8] sm:$0xff]
        %v7425 = vld [vmem:[%s7422 + $0x10] sm:$0xff]
        %v7426 = vld [vmem:[%s7422 + $0x18] sm:$0xff]
        %v7427 = vld [vmem:[%s7422 + $0x20] sm:$0xff]
        %v7428 = vld [vmem:[%s7422 + $0x28] sm:$0xff]
        %v7429 = vld [vmem:[%s7422 + $0x30] sm:$0xff]
        %v7430 = vld [vmem:[%s7422 + $0x38] sm:$0xff]
        %v7431 = vld [vmem:[%s7422 + $0x40] sm:$0xff]
        %v7432 = vld [vmem:[%s7422 + $0x48] sm:$0xff]
        %v7433 = vld [vmem:[%s7422 + $0x50] sm:$0xff]
        %v7434 = vld [vmem:[%s7422 + $0x58] sm:$0xff]
        %v7435 = vld [vmem:[%s7422 + $0x60] sm:$0xff]
        %v7436 = vld [vmem:[%s7422 + $0x68] sm:$0xff]
        %v7437 = vld [vmem:[%s7422 + $0x70] sm:$0xff]
        %v7438 = vld [vmem:[%s7422 + $0x78] sm:$0xff]
        %v7440 = vsel %vm740, %v7406, 0
        %v7443 = vsel %vm740, %v7407, 0
        %v7446 = vsel %vm740, %v7408, 0
        %v7449 = vsel %vm740, %v7409, 0
        %v7452 = vsel %vm740, %v7410, 0
        %v7455 = vsel %vm740, %v7411, 0
        %v7458 = vsel %vm740, %v7412, 0
        %v7461 = vsel %vm740, %v7413, 0
        %v7464 = vsel %vm740, %v7414, 0
        %v7467 = vsel %vm740, %v7415, 0
        %v7470 = vsel %vm740, %v7416, 0
        %v7473 = vsel %vm740, %v7417, 0
        %v7476 = vsel %vm740, %v7418, 0
        %v7479 = vsel %vm740, %v7419, 0
        %v7482 = vsel %vm740, %v7420, 0
        %v7485 = vsel %vm740, %v7421, 0
        %7487 = vmatprep.subr.mxu0 0.0
        %7488 = vmatpush1.xpose.msra.mxu0 %v5876
        %7489 = vmatprep.subr.mxu0 0.0
        %7490 = vmatpush1.xpose.msra.mxu0 %v5873
        %7491 = vmatprep.subr.mxu0 0.0
        %7492 = vmatpush1.xpose.msra.mxu0 %v5870
        %7493 = vmatprep.subr.mxu0 0.0
        %7494 = vmatpush1.xpose.msra.mxu0 %v5867
        %7495 = vmatprep.subr.mxu0 0.0
        %7496 = vmatpush1.xpose.msra.mxu0 %v5864
        %7497 = vmatprep.subr.mxu0 0.0
        %7498 = vmatpush1.xpose.msra.mxu0 %v5861
        %7499 = vmatprep.subr.mxu0 0.0
        %7500 = vmatpush1.xpose.msra.mxu0 %v5858
        %7501 = vmatprep.subr.mxu0 0.0
        %7502 = vmatpush1.xpose.msra.mxu0 %v5855
        %7503 = vmatprep.subr.mxu0 0.0
        %7504 = vmatpush1.xpose.msra.mxu0 %v5852
        %7505 = vmatprep.subr.mxu0 0.0
        %7506 = vmatpush1.xpose.msra.mxu0 %v5849
        %7507 = vmatprep.subr.mxu0 0.0
        %7508 = vmatpush1.xpose.msra.mxu0 %v5846
        %7509 = vmatprep.subr.mxu0 0.0
        %7510 = vmatpush1.xpose.msra.mxu0 %v5843
        %7511 = vmatprep.subr.mxu0 0.0
        %7512 = vmatpush1.xpose.msra.mxu0 %v5840
        %7513 = vmatprep.subr.mxu0 0.0
        %7514 = vmatpush1.xpose.msra.mxu0 %v5837
        %7515 = vmatprep.subr.mxu0 0.0
        %7516 = vmatpush1.xpose.msra.mxu0 %v5834
        %7517 = vmatprep.subr.mxu0 0.0
        %7518 = vmatpush1.xpose.msra.mxu0 %v5831
        %7519 = vmatprep.subr.mxu0 0.0
        %7520 = vmatpush2.xpose.msra.mxu0 0.0
        %7521 = vmatprep.subr.mxu0 0.0
        %7522 = vmatpush2.xpose.msra.mxu0 0.0
        %7523 = vmatprep.subr.mxu0 0.0
        %7524 = vmatpush2.xpose.msra.mxu0 0.0
        %7525 = vmatprep.subr.mxu0 0.0
        %7526 = vmatpush2.xpose.msra.mxu0 0.0
        %7527 = vmatprep.subr.mxu0 0.0
        %7528 = vmatpush2.xpose.msra.mxu0 0.0
        %7529 = vmatprep.subr.mxu0 0.0
        %7530 = vmatpush2.xpose.msra.mxu0 0.0
        %7531 = vmatprep.subr.mxu0 0.0
        %7532 = vmatpush2.xpose.msra.mxu0 0.0
        %7533 = vmatprep.subr.mxu0 0.0
        %7534 = vmatpush2.xpose.msra.mxu0 0.0
        %7535 = vmatprep.subr.mxu0 0.0
        %7536 = vmatpush2.xpose.msra.mxu0 0.0
        %7537 = vmatprep.subr.mxu0 0.0
        %7538 = vmatpush2.xpose.msra.mxu0 0.0
        %7539 = vmatprep.subr.mxu0 0.0
        %7540 = vmatpush2.xpose.msra.mxu0 0.0
        %7541 = vmatprep.subr.mxu0 0.0
        %7542 = vmatpush2.xpose.msra.mxu0 0.0
        %7543 = vmatprep.subr.mxu0 0.0
        %7544 = vmatpush2.xpose.msra.mxu0 0.0
        %7545 = vmatprep.subr.mxu0 0.0
        %7546 = vmatpush2.xpose.msra.mxu0 0.0
        %7547 = vmatprep.subr.mxu0 0.0
        %7548 = vmatpush2.xpose.msra.mxu0 0.0
        %7549 = vmatprep.subr.mxu0 0.0
        %7550 = vmatpush2.xpose.msra.mxu0 0.0
        %7551 = vmatprep.mubr.f32.mxu0 0.0
        %7552 = vmatmul.mubr.f32.gmra.mxu0 %v7440
        %v7553 = vpop.f32.mrf.mxu0
        %v7554 = vadd.f32 %v7423, %v7553
        %v7555 = vpop.f32.mrf.mxu0
        %7556 = vmatprep.mubr.f32.mxu0 0.0
        %7557 = vmatmul.mubr.f32.gmra.mxu0 %v7443
        %v7558 = vpop.f32.mrf.mxu0
        %v7559 = vadd.f32 %v7424, %v7558
        %v7560 = vpop.f32.mrf.mxu0
        %7561 = vmatprep.mubr.f32.mxu0 0.0
        %7562 = vmatmul.mubr.f32.gmra.mxu0 %v7446
        %v7563 = vpop.f32.mrf.mxu0
        %v7564 = vadd.f32 %v7425, %v7563
        %v7565 = vpop.f32.mrf.mxu0
        %7566 = vmatprep.mubr.f32.mxu0 0.0
        %7567 = vmatmul.mubr.f32.gmra.mxu0 %v7449
        %v7568 = vpop.f32.mrf.mxu0
        %v7569 = vadd.f32 %v7426, %v7568
        %v7570 = vpop.f32.mrf.mxu0
        %7571 = vmatprep.mubr.f32.mxu0 0.0
        %7572 = vmatmul.mubr.f32.gmra.mxu0 %v7452
        %v7573 = vpop.f32.mrf.mxu0
        %v7574 = vadd.f32 %v7427, %v7573
        %v7575 = vpop.f32.mrf.mxu0
        %7576 = vmatprep.mubr.f32.mxu0 0.0
        %7577 = vmatmul.mubr.f32.gmra.mxu0 %v7455
        %v7578 = vpop.f32.mrf.mxu0
        %v7579 = vadd.f32 %v7428, %v7578
        %v7580 = vpop.f32.mrf.mxu0
        %7581 = vmatprep.mubr.f32.mxu0 0.0
        %7582 = vmatmul.mubr.f32.gmra.mxu0 %v7458
        %v7583 = vpop.f32.mrf.mxu0
        %v7584 = vadd.f32 %v7429, %v7583
        %v7585 = vpop.f32.mrf.mxu0
        %7586 = vmatprep.mubr.f32.mxu0 0.0
        %7587 = vmatmul.mubr.f32.gmra.mxu0 %v7461
        %v7588 = vpop.f32.mrf.mxu0
        %v7589 = vadd.f32 %v7430, %v7588
        %v7590 = vpop.f32.mrf.mxu0
        %7591 = vmatprep.mubr.f32.mxu0 0.0
        %7592 = vmatmul.mubr.f32.gmra.mxu0 %v7464
        %v7593 = vpop.f32.mrf.mxu0
        %v7594 = vadd.f32 %v7431, %v7593
        %v7595 = vpop.f32.mrf.mxu0
        %7596 = vmatprep.mubr.f32.mxu0 0.0
        %7597 = vmatmul.mubr.f32.gmra.mxu0 %v7467
        %v7598 = vpop.f32.mrf.mxu0
        %v7599 = vadd.f32 %v7432, %v7598
        %v7600 = vpop.f32.mrf.mxu0
        %7601 = vmatprep.mubr.f32.mxu0 0.0
        %7602 = vmatmul.mubr.f32.gmra.mxu0 %v7470
        %v7603 = vpop.f32.mrf.mxu0
        %v7604 = vadd.f32 %v7433, %v7603
        %v7605 = vpop.f32.mrf.mxu0
        %7606 = vmatprep.mubr.f32.mxu0 0.0
        %7607 = vmatmul.mubr.f32.gmra.mxu0 %v7473
        %v7608 = vpop.f32.mrf.mxu0
        %v7609 = vadd.f32 %v7434, %v7608
        %v7610 = vpop.f32.mrf.mxu0
        %7611 = vmatprep.mubr.f32.mxu0 0.0
        %7612 = vmatmul.mubr.f32.gmra.mxu0 %v7476
        %v7613 = vpop.f32.mrf.mxu0
        %v7614 = vadd.f32 %v7435, %v7613
        %v7615 = vpop.f32.mrf.mxu0
        %7616 = vmatprep.mubr.f32.mxu0 0.0
        %7617 = vmatmul.mubr.f32.gmra.mxu0 %v7479
        %v7618 = vpop.f32.mrf.mxu0
        %v7619 = vadd.f32 %v7436, %v7618
        %v7620 = vpop.f32.mrf.mxu0
        %7621 = vmatprep.mubr.f32.mxu0 0.0
        %7622 = vmatmul.mubr.f32.gmra.mxu0 %v7482
        %v7623 = vpop.f32.mrf.mxu0
        %v7624 = vadd.f32 %v7437, %v7623
        %v7625 = vpop.f32.mrf.mxu0
        %7626 = vmatprep.mubr.f32.mxu0 0.0
        %7627 = vmatmul.mubr.f32.gmra.mxu0 %v7485
        %v7628 = vpop.f32.mrf.mxu0
        %v7629 = vadd.f32 %v7438, %v7628
        %v7630 = vpop.f32.mrf.mxu0
        %7631 = vdwg.mxu0
        %7632 = vmax.xlane.f32.xlu0 %v7554
        %v7633 = vpop.xlane.xlu0 %7632
        %7634 = vmax.xlane.f32.xlu0 %v7559
        %v7635 = vpop.xlane.xlu0 %7634
        %7636 = vmax.xlane.f32.xlu0 %v7564
        %v7637 = vpop.xlane.xlu0 %7636
        %7638 = vmax.xlane.f32.xlu0 %v7569
        %v7639 = vpop.xlane.xlu0 %7638
        %7640 = vmax.xlane.f32.xlu0 %v7574
        %v7641 = vpop.xlane.xlu0 %7640
        %7642 = vmax.xlane.f32.xlu0 %v7579
        %v7643 = vpop.xlane.xlu0 %7642
        %7644 = vmax.xlane.f32.xlu0 %v7584
        %v7645 = vpop.xlane.xlu0 %7644
        %7646 = vmax.xlane.f32.xlu0 %v7589
        %v7647 = vpop.xlane.xlu0 %7646
        %7648 = vmax.xlane.f32.xlu0 %v7594
        %v7649 = vpop.xlane.xlu0 %7648
        %7650 = vmax.xlane.f32.xlu0 %v7599
        %v7651 = vpop.xlane.xlu0 %7650
        %7652 = vmax.xlane.f32.xlu0 %v7604
        %v7653 = vpop.xlane.xlu0 %7652
        %7654 = vmax.xlane.f32.xlu0 %v7609
        %v7655 = vpop.xlane.xlu0 %7654
        %7656 = vmax.xlane.f32.xlu0 %v7614
        %v7657 = vpop.xlane.xlu0 %7656
        %7658 = vmax.xlane.f32.xlu0 %v7619
        %v7659 = vpop.xlane.xlu0 %7658
        %7660 = vmax.xlane.f32.xlu0 %v7624
        %v7661 = vpop.xlane.xlu0 %7660
        %7662 = vmax.xlane.f32.xlu0 %v7629
        %v7663 = vpop.xlane.xlu0 %7662
        %v7664 = vsub.f32 %v7554, %v7633
        %v7665 = vsub.f32 %v7559, %v7635
        %v7666 = vsub.f32 %v7564, %v7637
        %v7667 = vsub.f32 %v7569, %v7639
        %v7668 = vsub.f32 %v7574, %v7641
        %v7669 = vsub.f32 %v7579, %v7643
        %v7670 = vsub.f32 %v7584, %v7645
        %v7671 = vsub.f32 %v7589, %v7647
        %v7672 = vsub.f32 %v7594, %v7649
        %v7673 = vsub.f32 %v7599, %v7651
        %v7674 = vsub.f32 %v7604, %v7653
        %v7675 = vsub.f32 %v7609, %v7655
        %v7676 = vsub.f32 %v7614, %v7657
        %v7677 = vsub.f32 %v7619, %v7659
        %v7678 = vsub.f32 %v7624, %v7661
        %v7679 = vsub.f32 %v7629, %v7663
        %v7680 = vmul.f32 %v7664, 1.442695
        %v7681 = vpow.pop %v7680
        %v7682 = vmul.f32 %v7665, 1.442695
        %v7683 = vpow.pop %v7682
        %v7684 = vmul.f32 %v7666, 1.442695
        %v7685 = vpow.pop %v7684
        %v7686 = vmul.f32 %v7667, 1.442695
        %v7687 = vpow.pop %v7686
        %v7688 = vmul.f32 %v7668, 1.442695
        %v7689 = vpow.pop %v7688
        %v7690 = vmul.f32 %v7669, 1.442695
        %v7691 = vpow.pop %v7690
        %v7692 = vmul.f32 %v7670, 1.442695
        %v7693 = vpow.pop %v7692
        %v7694 = vmul.f32 %v7671, 1.442695
        %v7695 = vpow.pop %v7694
        %v7696 = vmul.f32 %v7672, 1.442695
        %v7697 = vpow.pop %v7696
        %v7698 = vmul.f32 %v7673, 1.442695
        %v7699 = vpow.pop %v7698
        %v7700 = vmul.f32 %v7674, 1.442695
        %v7701 = vpow.pop %v7700
        %v7702 = vmul.f32 %v7675, 1.442695
        %v7703 = vpow.pop %v7702
        %v7704 = vmul.f32 %v7676, 1.442695
        %v7705 = vpow.pop %v7704
        %v7706 = vmul.f32 %v7677, 1.442695
        %v7707 = vpow.pop %v7706
        %v7708 = vmul.f32 %v7678, 1.442695
        %v7709 = vpow.pop %v7708
        %v7710 = vmul.f32 %v7679, 1.442695
        %v7711 = vpow.pop %v7710
        %7712 = vadd.xlane.f32.xlu0 %v7681
        %v7713 = vpop.xlane.xlu0 %7712
        %7714 = vadd.xlane.f32.xlu0 %v7683
        %v7715 = vpop.xlane.xlu0 %7714
        %7716 = vadd.xlane.f32.xlu0 %v7685
        %v7717 = vpop.xlane.xlu0 %7716
        %7718 = vadd.xlane.f32.xlu0 %v7687
        %v7719 = vpop.xlane.xlu0 %7718
        %7720 = vadd.xlane.f32.xlu0 %v7689
        %v7721 = vpop.xlane.xlu0 %7720
        %7722 = vadd.xlane.f32.xlu0 %v7691
        %v7723 = vpop.xlane.xlu0 %7722
        %7724 = vadd.xlane.f32.xlu0 %v7693
        %v7725 = vpop.xlane.xlu0 %7724
        %7726 = vadd.xlane.f32.xlu0 %v7695
        %v7727 = vpop.xlane.xlu0 %7726
        %7728 = vadd.xlane.f32.xlu0 %v7697
        %v7729 = vpop.xlane.xlu0 %7728
        %7730 = vadd.xlane.f32.xlu0 %v7699
        %v7731 = vpop.xlane.xlu0 %7730
        %7732 = vadd.xlane.f32.xlu0 %v7701
        %v7733 = vpop.xlane.xlu0 %7732
        %7734 = vadd.xlane.f32.xlu0 %v7703
        %v7735 = vpop.xlane.xlu0 %7734
        %7736 = vadd.xlane.f32.xlu0 %v7705
        %v7737 = vpop.xlane.xlu0 %7736
        %7738 = vadd.xlane.f32.xlu0 %v7707
        %v7739 = vpop.xlane.xlu0 %7738
        %7740 = vadd.xlane.f32.xlu0 %v7709
        %v7741 = vpop.xlane.xlu0 %7740
        %7742 = vadd.xlane.f32.xlu0 %v7711
        %v7743 = vpop.xlane.xlu0 %7742
        %v7744 = vrcp.pop %v7713
        %v7745 = vrcp.pop %v7715
        %v7746 = vrcp.pop %v7717
        %v7747 = vrcp.pop %v7719
        %v7748 = vrcp.pop %v7721
        %v7749 = vrcp.pop %v7723
        %v7750 = vrcp.pop %v7725
        %v7751 = vrcp.pop %v7727
        %v7752 = vrcp.pop %v7729
        %v7753 = vrcp.pop %v7731
        %v7754 = vrcp.pop %v7733
        %v7755 = vrcp.pop %v7735
        %v7756 = vrcp.pop %v7737
        %v7757 = vrcp.pop %v7739
        %v7758 = vrcp.pop %v7741
        %v7759 = vrcp.pop %v7743
        %v7760 = vmul.f32 %v7681, %v7744
        %v7761 = vmul.f32 %v7683, %v7745
        %v7762 = vmul.f32 %v7685, %v7746
        %v7763 = vmul.f32 %v7687, %v7747
        %v7764 = vmul.f32 %v7689, %v7748
        %v7765 = vmul.f32 %v7691, %v7749
        %v7766 = vmul.f32 %v7693, %v7750
        %v7767 = vmul.f32 %v7695, %v7751
        %v7768 = vmul.f32 %v7697, %v7752
        %v7769 = vmul.f32 %v7699, %v7753
        %v7770 = vmul.f32 %v7701, %v7754
        %v7771 = vmul.f32 %v7703, %v7755
        %v7772 = vmul.f32 %v7705, %v7756
        %v7773 = vmul.f32 %v7707, %v7757
        %v7774 = vmul.f32 %v7709, %v7758
        %v7775 = vmul.f32 %v7711, %v7759
        %v7776 = vmul.f32 %v5672, %v516
        %v7777 = vmul.f32 %v5677, %v516
        %v7778 = vmul.f32 %v5682, %v516
        %v7779 = vmul.f32 %v5687, %v516
        %v7780 = vmul.f32 %v5692, %v516
        %v7781 = vmul.f32 %v5697, %v516
        %v7782 = vmul.f32 %v5702, %v516
        %v7783 = vmul.f32 %v5707, %v516
        %v7784 = vmul.f32 %v5712, %v516
        %v7785 = vmul.f32 %v5717, %v516
        %v7786 = vmul.f32 %v5722, %v516
        %v7787 = vmul.f32 %v5727, %v516
        %v7788 = vmul.f32 %v5732, %v516
        %v7789 = vmul.f32 %v5737, %v516
        %v7790 = vmul.f32 %v5742, %v516
        %v7791 = vmul.f32 %v5747, %v516
        %7792 = vmatprep.subr.mxu0 0.0
        %7793 = vmatpush1.msra.mxu0 %v7791
        %7794 = vmatprep.subr.mxu0 0.0
        %7795 = vmatpush1.msra.mxu0 %v7790
        %7796 = vmatprep.subr.mxu0 0.0
        %7797 = vmatpush1.msra.mxu0 %v7789
        %7798 = vmatprep.subr.mxu0 0.0
        %7799 = vmatpush1.msra.mxu0 %v7788
        %7800 = vmatprep.subr.mxu0 0.0
        %7801 = vmatpush1.msra.mxu0 %v7787
        %7802 = vmatprep.subr.mxu0 0.0
        %7803 = vmatpush1.msra.mxu0 %v7786
        %7804 = vmatprep.subr.mxu0 0.0
        %7805 = vmatpush1.msra.mxu0 %v7785
        %7806 = vmatprep.subr.mxu0 0.0
        %7807 = vmatpush1.msra.mxu0 %v7784
        %7808 = vmatprep.subr.mxu0 0.0
        %7809 = vmatpush1.msra.mxu0 %v7783
        %7810 = vmatprep.subr.mxu0 0.0
        %7811 = vmatpush1.msra.mxu0 %v7782
        %7812 = vmatprep.subr.mxu0 0.0
        %7813 = vmatpush1.msra.mxu0 %v7781
        %7814 = vmatprep.subr.mxu0 0.0
        %7815 = vmatpush1.msra.mxu0 %v7780
        %7816 = vmatprep.subr.mxu0 0.0
        %7817 = vmatpush1.msra.mxu0 %v7779
        %7818 = vmatprep.subr.mxu0 0.0
        %7819 = vmatpush1.msra.mxu0 %v7778
        %7820 = vmatprep.subr.mxu0 0.0
        %7821 = vmatpush1.msra.mxu0 %v7777
        %7822 = vmatprep.subr.mxu0 0.0
        %7823 = vmatpush1.msra.mxu0 %v7776
        %7824 = vmatprep.subr.mxu0 0.0
        %7825 = vmatpush2.msra.mxu0 0.0
        %7826 = vmatprep.subr.mxu0 0.0
        %7827 = vmatpush2.msra.mxu0 0.0
        %7828 = vmatprep.subr.mxu0 0.0
        %7829 = vmatpush2.msra.mxu0 0.0
        %7830 = vmatprep.subr.mxu0 0.0
        %7831 = vmatpush2.msra.mxu0 0.0
        %7832 = vmatprep.subr.mxu0 0.0
        %7833 = vmatpush2.msra.mxu0 0.0
        %7834 = vmatprep.subr.mxu0 0.0
        %7835 = vmatpush2.msra.mxu0 0.0
        %7836 = vmatprep.subr.mxu0 0.0
        %7837 = vmatpush2.msra.mxu0 0.0
        %7838 = vmatprep.subr.mxu0 0.0
        %7839 = vmatpush2.msra.mxu0 0.0
        %7840 = vmatprep.subr.mxu0 0.0
        %7841 = vmatpush2.msra.mxu0 0.0
        %7842 = vmatprep.subr.mxu0 0.0
        %7843 = vmatpush2.msra.mxu0 0.0
        %7844 = vmatprep.subr.mxu0 0.0
        %7845 = vmatpush2.msra.mxu0 0.0
        %7846 = vmatprep.subr.mxu0 0.0
        %7847 = vmatpush2.msra.mxu0 0.0
        %7848 = vmatprep.subr.mxu0 0.0
        %7849 = vmatpush2.msra.mxu0 0.0
        %7850 = vmatprep.subr.mxu0 0.0
        %7851 = vmatpush2.msra.mxu0 0.0
        %7852 = vmatprep.subr.mxu0 0.0
        %7853 = vmatpush2.msra.mxu0 0.0
        %7854 = vmatprep.subr.mxu0 0.0
        %7855 = vmatpush2.msra.mxu0 0.0
        %7856 = vmatprep.mubr.f32.mxu0 0.0
        %7857 = vmatmul.mubr.f32.gmra.mxu0 %v7760
        %v7858 = vpop.f32.mrf.mxu0
        %v7859 = vadd.f32 0.0, %v7858
        %v7860 = vpop.f32.mrf.mxu0
        %7861 = vmatprep.mubr.f32.mxu0 0.0
        %7862 = vmatmul.mubr.f32.gmra.mxu0 %v7761
        %v7863 = vpop.f32.mrf.mxu0
        %v7864 = vadd.f32 0.0, %v7863
        %v7865 = vpop.f32.mrf.mxu0
        %7866 = vmatprep.mubr.f32.mxu0 0.0
        %7867 = vmatmul.mubr.f32.gmra.mxu0 %v7762
        %v7868 = vpop.f32.mrf.mxu0
        %v7869 = vadd.f32 0.0, %v7868
        %v7870 = vpop.f32.mrf.mxu0
        %7871 = vmatprep.mubr.f32.mxu0 0.0
        %7872 = vmatmul.mubr.f32.gmra.mxu0 %v7763
        %v7873 = vpop.f32.mrf.mxu0
        %v7874 = vadd.f32 0.0, %v7873
        %v7875 = vpop.f32.mrf.mxu0
        %7876 = vmatprep.mubr.f32.mxu0 0.0
        %7877 = vmatmul.mubr.f32.gmra.mxu0 %v7764
        %v7878 = vpop.f32.mrf.mxu0
        %v7879 = vadd.f32 0.0, %v7878
        %v7880 = vpop.f32.mrf.mxu0
        %7881 = vmatprep.mubr.f32.mxu0 0.0
        %7882 = vmatmul.mubr.f32.gmra.mxu0 %v7765
        %v7883 = vpop.f32.mrf.mxu0
        %v7884 = vadd.f32 0.0, %v7883
        %v7885 = vpop.f32.mrf.mxu0
        %7886 = vmatprep.mubr.f32.mxu0 0.0
        %7887 = vmatmul.mubr.f32.gmra.mxu0 %v7766
        %v7888 = vpop.f32.mrf.mxu0
        %v7889 = vadd.f32 0.0, %v7888
        %v7890 = vpop.f32.mrf.mxu0
        %7891 = vmatprep.mubr.f32.mxu0 0.0
        %7892 = vmatmul.mubr.f32.gmra.mxu0 %v7767
        %v7893 = vpop.f32.mrf.mxu0
        %v7894 = vadd.f32 0.0, %v7893
        %v7895 = vpop.f32.mrf.mxu0
        %7896 = vmatprep.mubr.f32.mxu0 0.0
        %7897 = vmatmul.mubr.f32.gmra.mxu0 %v7768
        %v7898 = vpop.f32.mrf.mxu0
        %v7899 = vadd.f32 0.0, %v7898
        %v7900 = vpop.f32.mrf.mxu0
        %7901 = vmatprep.mubr.f32.mxu0 0.0
        %7902 = vmatmul.mubr.f32.gmra.mxu0 %v7769
        %v7903 = vpop.f32.mrf.mxu0
        %v7904 = vadd.f32 0.0, %v7903
        %v7905 = vpop.f32.mrf.mxu0
        %7906 = vmatprep.mubr.f32.mxu0 0.0
        %7907 = vmatmul.mubr.f32.gmra.mxu0 %v7770
        %v7908 = vpop.f32.mrf.mxu0
        %v7909 = vadd.f32 0.0, %v7908
        %v7910 = vpop.f32.mrf.mxu0
        %7911 = vmatprep.mubr.f32.mxu0 0.0
        %7912 = vmatmul.mubr.f32.gmra.mxu0 %v7771
        %v7913 = vpop.f32.mrf.mxu0
        %v7914 = vadd.f32 0.0, %v7913
        %v7915 = vpop.f32.mrf.mxu0
        %7916 = vmatprep.mubr.f32.mxu0 0.0
        %7917 = vmatmul.mubr.f32.gmra.mxu0 %v7772
        %v7918 = vpop.f32.mrf.mxu0
        %v7919 = vadd.f32 0.0, %v7918
        %v7920 = vpop.f32.mrf.mxu0
        %7921 = vmatprep.mubr.f32.mxu0 0.0
        %7922 = vmatmul.mubr.f32.gmra.mxu0 %v7773
        %v7923 = vpop.f32.mrf.mxu0
        %v7924 = vadd.f32 0.0, %v7923
        %v7925 = vpop.f32.mrf.mxu0
        %7926 = vmatprep.mubr.f32.mxu0 0.0
        %7927 = vmatmul.mubr.f32.gmra.mxu0 %v7774
        %v7928 = vpop.f32.mrf.mxu0
        %v7929 = vadd.f32 0.0, %v7928
        %v7930 = vpop.f32.mrf.mxu0
        %7931 = vmatprep.mubr.f32.mxu0 0.0
        %7932 = vmatmul.mubr.f32.gmra.mxu0 %v7775
        %v7933 = vpop.f32.mrf.mxu0
        %v7934 = vadd.f32 0.0, %v7933
        %v7935 = vpop.f32.mrf.mxu0
        %7936 = vdwg.mxu0
        %v7937 = vadd.f32 %v7390, %v7859
        %v7938 = vadd.f32 %v7391, %v7864
        %v7939 = vadd.f32 %v7392, %v7869
        %v7940 = vadd.f32 %v7393, %v7874
        %v7941 = vadd.f32 %v7394, %v7879
        %v7942 = vadd.f32 %v7395, %v7884
        %v7943 = vadd.f32 %v7396, %v7889
        %v7944 = vadd.f32 %v7397, %v7894
        %v7945 = vadd.f32 %v7398, %v7899
        %v7946 = vadd.f32 %v7399, %v7904
        %v7947 = vadd.f32 %v7400, %v7909
        %v7948 = vadd.f32 %v7401, %v7914
        %v7949 = vadd.f32 %v7402, %v7919
        %v7950 = vadd.f32 %v7403, %v7924
        %v7951 = vadd.f32 %v7404, %v7929
        %v7952 = vadd.f32 %v7405, %v7934
        %v7953 = vld [vmem:[%s11] sm:$0xff]
        %v7954 = vld [vmem:[%s11 + $0x8] sm:$0xff]
        %v7955 = vld [vmem:[%s11 + $0x10] sm:$0xff]
        %v7956 = vld [vmem:[%s11 + $0x18] sm:$0xff]
        %v7957 = vlaneseq
        %v7958 = vshrl.u32 %v7957, 7
        %v7959 = vsub.s32 0, %v7958
        %v7960 = vrot.slane %v4972, %v7959
        %v7962 = vsel %vm740, %v7937, 0
        %v7965 = vsel %vm740, %v7938, 0
        %v7968 = vsel %vm740, %v7939, 0
        %v7971 = vsel %vm740, %v7940, 0
        %v7974 = vsel %vm740, %v7941, 0
        %v7977 = vsel %vm740, %v7942, 0
        %v7980 = vsel %vm740, %v7943, 0
        %v7983 = vsel %vm740, %v7944, 0
        %v7986 = vsel %vm740, %v7945, 0
        %v7989 = vsel %vm740, %v7946, 0
        %v7992 = vsel %vm740, %v7947, 0
        %v7995 = vsel %vm740, %v7948, 0
        %v7998 = vsel %vm740, %v7949, 0
        %v8001 = vsel %vm740, %v7950, 0
        %v8004 = vsel %vm740, %v7951, 0
        %v8007 = vsel %vm740, %v7952, 0
        %8009 = vmatprep.subr.mxu0 0.0
        %8010 = vmatpush1.msra.mxu0 0.0
        %8011 = vmatprep.subr.mxu0 0.0
        %8012 = vmatpush1.msra.mxu0 0.0
        %8013 = vmatprep.subr.mxu0 0.0
        %8014 = vmatpush1.msra.mxu0 0.0
        %8015 = vmatprep.subr.mxu0 0.0
        %8016 = vmatpush1.msra.mxu0 0.0
        %8017 = vmatprep.subr.mxu0 0.0
        %8018 = vmatpush1.msra.mxu0 0.0
        %8019 = vmatprep.subr.mxu0 0.0
        %8020 = vmatpush1.msra.mxu0 0.0
        %8021 = vmatprep.subr.mxu0 0.0
        %8022 = vmatpush1.msra.mxu0 0.0
        %8023 = vmatprep.subr.mxu0 0.0
        %8024 = vmatpush1.msra.mxu0 0.0
        %8025 = vmatprep.subr.mxu0 0.0
        %8026 = vmatpush1.msra.mxu0 0.0
        %8027 = vmatprep.subr.mxu0 0.0
        %8028 = vmatpush1.msra.mxu0 0.0
        %8029 = vmatprep.subr.mxu0 0.0
        %8030 = vmatpush1.msra.mxu0 0.0
        %8031 = vmatprep.subr.mxu0 0.0
        %8032 = vmatpush1.msra.mxu0 0.0
        %8033 = vmatprep.subr.mxu0 0.0
        %8034 = vmatpush1.msra.mxu0 %v7956
        %8035 = vmatprep.subr.mxu0 0.0
        %8036 = vmatpush1.msra.mxu0 %v7955
        %8037 = vmatprep.subr.mxu0 0.0
        %8038 = vmatpush1.msra.mxu0 %v7954
        %8039 = vmatprep.subr.mxu0 0.0
        %8040 = vmatpush1.msra.mxu0 %v7953
        %8041 = vmatprep.subr.mxu0 0.0
        %8042 = vmatpush2.msra.mxu0 0.0
        %8043 = vmatprep.subr.mxu0 0.0
        %8044 = vmatpush2.msra.mxu0 0.0
        %8045 = vmatprep.subr.mxu0 0.0
        %8046 = vmatpush2.msra.mxu0 0.0
        %8047 = vmatprep.subr.mxu0 0.0
        %8048 = vmatpush2.msra.mxu0 0.0
        %8049 = vmatprep.subr.mxu0 0.0
        %8050 = vmatpush2.msra.mxu0 0.0
        %8051 = vmatprep.subr.mxu0 0.0
        %8052 = vmatpush2.msra.mxu0 0.0
        %8053 = vmatprep.subr.mxu0 0.0
        %8054 = vmatpush2.msra.mxu0 0.0
        %8055 = vmatprep.subr.mxu0 0.0
        %8056 = vmatpush2.msra.mxu0 0.0
        %8057 = vmatprep.subr.mxu0 0.0
        %8058 = vmatpush2.msra.mxu0 0.0
        %8059 = vmatprep.subr.mxu0 0.0
        %8060 = vmatpush2.msra.mxu0 0.0
        %8061 = vmatprep.subr.mxu0 0.0
        %8062 = vmatpush2.msra.mxu0 0.0
        %8063 = vmatprep.subr.mxu0 0.0
        %8064 = vmatpush2.msra.mxu0 0.0
        %8065 = vmatprep.subr.mxu0 0.0
        %8066 = vmatpush2.msra.mxu0 0.0
        %8067 = vmatprep.subr.mxu0 0.0
        %8068 = vmatpush2.msra.mxu0 0.0
        %8069 = vmatprep.subr.mxu0 0.0
        %8070 = vmatpush2.msra.mxu0 0.0
        %8071 = vmatprep.subr.mxu0 0.0
        %8072 = vmatpush2.msra.mxu0 0.0
        %8073 = vmatprep.mubr.f32.mxu0 0.0
        %8074 = vmatmul.mubr.f32.gmra.mxu0 %v7962
        %v8075 = vpop.f32.mrf.mxu0
        %v8076 = vadd.f32 %v7960, %v8075
        %v8077 = vpop.f32.mrf.mxu0
        %8078 = vmatprep.mubr.f32.mxu0 0.0
        %8079 = vmatmul.mubr.f32.gmra.mxu0 %v7965
        %v8080 = vpop.f32.mrf.mxu0
        %v8081 = vadd.f32 %v7960, %v8080
        %v8082 = vpop.f32.mrf.mxu0
        %8083 = vmatprep.mubr.f32.mxu0 0.0
        %8084 = vmatmul.mubr.f32.gmra.mxu0 %v7968
        %v8085 = vpop.f32.mrf.mxu0
        %v8086 = vadd.f32 %v7960, %v8085
        %v8087 = vpop.f32.mrf.mxu0
        %8088 = vmatprep.mubr.f32.mxu0 0.0
        %8089 = vmatmul.mubr.f32.gmra.mxu0 %v7971
        %v8090 = vpop.f32.mrf.mxu0
        %v8091 = vadd.f32 %v7960, %v8090
        %v8092 = vpop.f32.mrf.mxu0
        %8093 = vmatprep.mubr.f32.mxu0 0.0
        %8094 = vmatmul.mubr.f32.gmra.mxu0 %v7974
        %v8095 = vpop.f32.mrf.mxu0
        %v8096 = vadd.f32 %v7960, %v8095
        %v8097 = vpop.f32.mrf.mxu0
        %8098 = vmatprep.mubr.f32.mxu0 0.0
        %8099 = vmatmul.mubr.f32.gmra.mxu0 %v7977
        %v8100 = vpop.f32.mrf.mxu0
        %v8101 = vadd.f32 %v7960, %v8100
        %v8102 = vpop.f32.mrf.mxu0
        %8103 = vmatprep.mubr.f32.mxu0 0.0
        %8104 = vmatmul.mubr.f32.gmra.mxu0 %v7980
        %v8105 = vpop.f32.mrf.mxu0
        %v8106 = vadd.f32 %v7960, %v8105
        %v8107 = vpop.f32.mrf.mxu0
        %8108 = vmatprep.mubr.f32.mxu0 0.0
        %8109 = vmatmul.mubr.f32.gmra.mxu0 %v7983
        %v8110 = vpop.f32.mrf.mxu0
        %v8111 = vadd.f32 %v7960, %v8110
        %v8112 = vpop.f32.mrf.mxu0
        %8113 = vmatprep.mubr.f32.mxu0 0.0
        %8114 = vmatmul.mubr.f32.gmra.mxu0 %v7986
        %v8115 = vpop.f32.mrf.mxu0
        %v8116 = vadd.f32 %v7960, %v8115
        %v8117 = vpop.f32.mrf.mxu0
        %8118 = vmatprep.mubr.f32.mxu0 0.0
        %8119 = vmatmul.mubr.f32.gmra.mxu0 %v7989
        %v8120 = vpop.f32.mrf.mxu0
        %v8121 = vadd.f32 %v7960, %v8120
        %v8122 = vpop.f32.mrf.mxu0
        %8123 = vmatprep.mubr.f32.mxu0 0.0
        %8124 = vmatmul.mubr.f32.gmra.mxu0 %v7992
        %v8125 = vpop.f32.mrf.mxu0
        %v8126 = vadd.f32 %v7960, %v8125
        %v8127 = vpop.f32.mrf.mxu0
        %8128 = vmatprep.mubr.f32.mxu0 0.0
        %8129 = vmatmul.mubr.f32.gmra.mxu0 %v7995
        %v8130 = vpop.f32.mrf.mxu0
        %v8131 = vadd.f32 %v7960, %v8130
        %v8132 = vpop.f32.mrf.mxu0
        %8133 = vmatprep.mubr.f32.mxu0 0.0
        %8134 = vmatmul.mubr.f32.gmra.mxu0 %v7998
        %v8135 = vpop.f32.mrf.mxu0
        %v8136 = vadd.f32 %v7960, %v8135
        %v8137 = vpop.f32.mrf.mxu0
        %8138 = vmatprep.mubr.f32.mxu0 0.0
        %8139 = vmatmul.mubr.f32.gmra.mxu0 %v8001
        %v8140 = vpop.f32.mrf.mxu0
        %v8141 = vadd.f32 %v7960, %v8140
        %v8142 = vpop.f32.mrf.mxu0
        %8143 = vmatprep.mubr.f32.mxu0 0.0
        %8144 = vmatmul.mubr.f32.gmra.mxu0 %v8004
        %v8145 = vpop.f32.mrf.mxu0
        %v8146 = vadd.f32 %v7960, %v8145
        %v8147 = vpop.f32.mrf.mxu0
        %8148 = vmatprep.mubr.f32.mxu0 0.0
        %8149 = vmatmul.mubr.f32.gmra.mxu0 %v8007
        %v8150 = vpop.f32.mrf.mxu0
        %v8151 = vadd.f32 %v7960, %v8150
        %v8152 = vpop.f32.mrf.mxu0
        %8153 = vdwg.mxu0
        %v8154 = vadd.f32 %v4951, %v8076
        %v8155 = vadd.f32 %v4952, %v8081
        %v8156 = vadd.f32 %v4953, %v8086
        %v8157 = vadd.f32 %v4954, %v8091
        %v8158 = vadd.f32 %v4955, %v8096
        %v8159 = vadd.f32 %v4956, %v8101
        %v8160 = vadd.f32 %v4957, %v8106
        %v8161 = vadd.f32 %v4958, %v8111
        %v8162 = vadd.f32 %v4959, %v8116
        %v8163 = vadd.f32 %v4960, %v8121
        %v8164 = vadd.f32 %v4961, %v8126
        %v8165 = vadd.f32 %v4962, %v8131
        %v8166 = vadd.f32 %v4963, %v8136
        %v8167 = vadd.f32 %v4964, %v8141
        %v8168 = vadd.f32 %v4965, %v8146
        %v8169 = vadd.f32 %v4966, %v8151
        %v8170 = vsel %vm740, %v8154, 0.0
        %8171 = vadd.xlane.f32.xlu0 %v8170
        %v8172 = vpop.xlane.xlu0 %8171
        %v8173 = vsel %vm740, %v8155, 0.0
        %8174 = vadd.xlane.f32.xlu0 %v8173
        %v8175 = vpop.xlane.xlu0 %8174
        %v8176 = vsel %vm740, %v8156, 0.0
        %8177 = vadd.xlane.f32.xlu0 %v8176
        %v8178 = vpop.xlane.xlu0 %8177
        %v8179 = vsel %vm740, %v8157, 0.0
        %8180 = vadd.xlane.f32.xlu0 %v8179
        %v8181 = vpop.xlane.xlu0 %8180
        %v8182 = vsel %vm740, %v8158, 0.0
        %8183 = vadd.xlane.f32.xlu0 %v8182
        %v8184 = vpop.xlane.xlu0 %8183
        %v8185 = vsel %vm740, %v8159, 0.0
        %8186 = vadd.xlane.f32.xlu0 %v8185
        %v8187 = vpop.xlane.xlu0 %8186
        %v8188 = vsel %vm740, %v8160, 0.0
        %8189 = vadd.xlane.f32.xlu0 %v8188
        %v8190 = vpop.xlane.xlu0 %8189
        %v8191 = vsel %vm740, %v8161, 0.0
        %8192 = vadd.xlane.f32.xlu0 %v8191
        %v8193 = vpop.xlane.xlu0 %8192
        %v8194 = vsel %vm740, %v8162, 0.0
        %8195 = vadd.xlane.f32.xlu0 %v8194
        %v8196 = vpop.xlane.xlu0 %8195
        %v8197 = vsel %vm740, %v8163, 0.0
        %8198 = vadd.xlane.f32.xlu0 %v8197
        %v8199 = vpop.xlane.xlu0 %8198
        %v8200 = vsel %vm740, %v8164, 0.0
        %8201 = vadd.xlane.f32.xlu0 %v8200
        %v8202 = vpop.xlane.xlu0 %8201
        %v8203 = vsel %vm740, %v8165, 0.0
        %8204 = vadd.xlane.f32.xlu0 %v8203
        %v8205 = vpop.xlane.xlu0 %8204
        %v8206 = vsel %vm740, %v8166, 0.0
        %8207 = vadd.xlane.f32.xlu0 %v8206
        %v8208 = vpop.xlane.xlu0 %8207
        %v8209 = vsel %vm740, %v8167, 0.0
        %8210 = vadd.xlane.f32.xlu0 %v8209
        %v8211 = vpop.xlane.xlu0 %8210
        %v8212 = vsel %vm740, %v8168, 0.0
        %8213 = vadd.xlane.f32.xlu0 %v8212
        %v8214 = vpop.xlane.xlu0 %8213
        %v8215 = vsel %vm740, %v8169, 0.0
        %8216 = vadd.xlane.f32.xlu0 %v8215
        %v8217 = vpop.xlane.xlu0 %8216
        %v8218 = vmul.f32 %v8172, %v789
        %v8219 = vmul.f32 %v8175, %v789
        %v8220 = vmul.f32 %v8178, %v789
        %v8221 = vmul.f32 %v8181, %v789
        %v8222 = vmul.f32 %v8184, %v789
        %v8223 = vmul.f32 %v8187, %v789
        %v8224 = vmul.f32 %v8190, %v789
        %v8225 = vmul.f32 %v8193, %v789
        %v8226 = vmul.f32 %v8196, %v789
        %v8227 = vmul.f32 %v8199, %v789
        %v8228 = vmul.f32 %v8202, %v789
        %v8229 = vmul.f32 %v8205, %v789
        %v8230 = vmul.f32 %v8208, %v789
        %v8231 = vmul.f32 %v8211, %v789
        %v8232 = vmul.f32 %v8214, %v789
        %v8233 = vmul.f32 %v8217, %v789
        %v8234 = vsub.f32 %v8154, %v8218
        %v8235 = vsub.f32 %v8155, %v8219
        %v8236 = vsub.f32 %v8156, %v8220
        %v8237 = vsub.f32 %v8157, %v8221
        %v8238 = vsub.f32 %v8158, %v8222
        %v8239 = vsub.f32 %v8159, %v8223
        %v8240 = vsub.f32 %v8160, %v8224
        %v8241 = vsub.f32 %v8161, %v8225
        %v8242 = vsub.f32 %v8162, %v8226
        %v8243 = vsub.f32 %v8163, %v8227
        %v8244 = vsub.f32 %v8164, %v8228
        %v8245 = vsub.f32 %v8165, %v8229
        %v8246 = vsub.f32 %v8166, %v8230
        %v8247 = vsub.f32 %v8167, %v8231
        %v8248 = vsub.f32 %v8168, %v8232
        %v8249 = vsub.f32 %v8169, %v8233
        %v8250 = vmul.f32 %v8234, %v8234
        %v8251 = vmul.f32 %v8235, %v8235
        %v8252 = vmul.f32 %v8236, %v8236
        %v8253 = vmul.f32 %v8237, %v8237
        %v8254 = vmul.f32 %v8238, %v8238
        %v8255 = vmul.f32 %v8239, %v8239
        %v8256 = vmul.f32 %v8240, %v8240
        %v8257 = vmul.f32 %v8241, %v8241
        %v8258 = vmul.f32 %v8242, %v8242
        %v8259 = vmul.f32 %v8243, %v8243
        %v8260 = vmul.f32 %v8244, %v8244
        %v8261 = vmul.f32 %v8245, %v8245
        %v8262 = vmul.f32 %v8246, %v8246
        %v8263 = vmul.f32 %v8247, %v8247
        %v8264 = vmul.f32 %v8248, %v8248
        %v8265 = vmul.f32 %v8249, %v8249
        %v8266 = vsel %vm740, %v8250, 0.0
        %8267 = vadd.xlane.f32.xlu0 %v8266
        %v8268 = vpop.xlane.xlu0 %8267
        %v8269 = vsel %vm740, %v8251, 0.0
        %8270 = vadd.xlane.f32.xlu0 %v8269
        %v8271 = vpop.xlane.xlu0 %8270
        %v8272 = vsel %vm740, %v8252, 0.0
        %8273 = vadd.xlane.f32.xlu0 %v8272
        %v8274 = vpop.xlane.xlu0 %8273
        %v8275 = vsel %vm740, %v8253, 0.0
        %8276 = vadd.xlane.f32.xlu0 %v8275
        %v8277 = vpop.xlane.xlu0 %8276
        %v8278 = vsel %vm740, %v8254, 0.0
        %8279 = vadd.xlane.f32.xlu0 %v8278
        %v8280 = vpop.xlane.xlu0 %8279
        %v8281 = vsel %vm740, %v8255, 0.0
        %8282 = vadd.xlane.f32.xlu0 %v8281
        %v8283 = vpop.xlane.xlu0 %8282
        %v8284 = vsel %vm740, %v8256, 0.0
        %8285 = vadd.xlane.f32.xlu0 %v8284
        %v8286 = vpop.xlane.xlu0 %8285
        %v8287 = vsel %vm740, %v8257, 0.0
        %8288 = vadd.xlane.f32.xlu0 %v8287
        %v8289 = vpop.xlane.xlu0 %8288
        %v8290 = vsel %vm740, %v8258, 0.0
        %8291 = vadd.xlane.f32.xlu0 %v8290
        %v8292 = vpop.xlane.xlu0 %8291
        %v8293 = vsel %vm740, %v8259, 0.0
        %8294 = vadd.xlane.f32.xlu0 %v8293
        %v8295 = vpop.xlane.xlu0 %8294
        %v8296 = vsel %vm740, %v8260, 0.0
        %8297 = vadd.xlane.f32.xlu0 %v8296
        %v8298 = vpop.xlane.xlu0 %8297
        %v8299 = vsel %vm740, %v8261, 0.0
        %8300 = vadd.xlane.f32.xlu0 %v8299
        %v8301 = vpop.xlane.xlu0 %8300
        %v8302 = vsel %vm740, %v8262, 0.0
        %8303 = vadd.xlane.f32.xlu0 %v8302
        %v8304 = vpop.xlane.xlu0 %8303
        %v8305 = vsel %vm740, %v8263, 0.0
        %8306 = vadd.xlane.f32.xlu0 %v8305
        %v8307 = vpop.xlane.xlu0 %8306
        %v8308 = vsel %vm740, %v8264, 0.0
        %8309 = vadd.xlane.f32.xlu0 %v8308
        %v8310 = vpop.xlane.xlu0 %8309
        %v8311 = vsel %vm740, %v8265, 0.0
        %8312 = vadd.xlane.f32.xlu0 %v8311
        %v8313 = vpop.xlane.xlu0 %8312
        %v8314 = vmul.f32 %v8268, %v789
        %v8315 = vmul.f32 %v8271, %v789
        %v8316 = vmul.f32 %v8274, %v789
        %v8317 = vmul.f32 %v8277, %v789
        %v8318 = vmul.f32 %v8280, %v789
        %v8319 = vmul.f32 %v8283, %v789
        %v8320 = vmul.f32 %v8286, %v789
        %v8321 = vmul.f32 %v8289, %v789
        %v8322 = vmul.f32 %v8292, %v789
        %v8323 = vmul.f32 %v8295, %v789
        %v8324 = vmul.f32 %v8298, %v789
        %v8325 = vmul.f32 %v8301, %v789
        %v8326 = vmul.f32 %v8304, %v789
        %v8327 = vmul.f32 %v8307, %v789
        %v8328 = vmul.f32 %v8310, %v789
        %v8329 = vmul.f32 %v8313, %v789
        %v8330 = vadd.f32 %v8314, 1e-05
        %v8331 = vadd.f32 %v8315, 1e-05
        %v8332 = vadd.f32 %v8316, 1e-05
        %v8333 = vadd.f32 %v8317, 1e-05
        %v8334 = vadd.f32 %v8318, 1e-05
        %v8335 = vadd.f32 %v8319, 1e-05
        %v8336 = vadd.f32 %v8320, 1e-05
        %v8337 = vadd.f32 %v8321, 1e-05
        %v8338 = vadd.f32 %v8322, 1e-05
        %v8339 = vadd.f32 %v8323, 1e-05
        %v8340 = vadd.f32 %v8324, 1e-05
        %v8341 = vadd.f32 %v8325, 1e-05
        %v8342 = vadd.f32 %v8326, 1e-05
        %v8343 = vadd.f32 %v8327, 1e-05
        %v8344 = vadd.f32 %v8328, 1e-05
        %v8345 = vadd.f32 %v8329, 1e-05
        %v8346 = vrsqrt.pop %v8330
        %v8347 = vrsqrt.pop %v8331
        %v8348 = vrsqrt.pop %v8332
        %v8349 = vrsqrt.pop %v8333
        %v8350 = vrsqrt.pop %v8334
        %v8351 = vrsqrt.pop %v8335
        %v8352 = vrsqrt.pop %v8336
        %v8353 = vrsqrt.pop %v8337
        %v8354 = vrsqrt.pop %v8338
        %v8355 = vrsqrt.pop %v8339
        %v8356 = vrsqrt.pop %v8340
        %v8357 = vrsqrt.pop %v8341
        %v8358 = vrsqrt.pop %v8342
        %v8359 = vrsqrt.pop %v8343
        %v8360 = vrsqrt.pop %v8344
        %v8361 = vrsqrt.pop %v8345
        %v8362 = vmul.f32 %v8234, %v8346
        %v8363 = vmul.f32 %v8235, %v8347
        %v8364 = vmul.f32 %v8236, %v8348
        %v8365 = vmul.f32 %v8237, %v8349
        %v8366 = vmul.f32 %v8238, %v8350
        %v8367 = vmul.f32 %v8239, %v8351
        %v8368 = vmul.f32 %v8240, %v8352
        %v8369 = vmul.f32 %v8241, %v8353
        %v8370 = vmul.f32 %v8242, %v8354
        %v8371 = vmul.f32 %v8243, %v8355
        %v8372 = vmul.f32 %v8244, %v8356
        %v8373 = vmul.f32 %v8245, %v8357
        %v8374 = vmul.f32 %v8246, %v8358
        %v8375 = vmul.f32 %v8247, %v8359
        %v8376 = vmul.f32 %v8248, %v8360
        %v8377 = vmul.f32 %v8249, %v8361
        %v8378 = vlaneseq
        %v8379 = vshrl.u32 %v8378, 7
        %v8380 = vsub.s32 0, %v8379
        %v8381 = vrot.slane %v4973, %v8380
        %v8382 = vmul.f32 %v8362, %v8381
        %v8383 = vmul.f32 %v8363, %v8381
        %v8384 = vmul.f32 %v8364, %v8381
        %v8385 = vmul.f32 %v8365, %v8381
        %v8386 = vmul.f32 %v8366, %v8381
        %v8387 = vmul.f32 %v8367, %v8381
        %v8388 = vmul.f32 %v8368, %v8381
        %v8389 = vmul.f32 %v8369, %v8381
        %v8390 = vmul.f32 %v8370, %v8381
        %v8391 = vmul.f32 %v8371, %v8381
        %v8392 = vmul.f32 %v8372, %v8381
        %v8393 = vmul.f32 %v8373, %v8381
        %v8394 = vmul.f32 %v8374, %v8381
        %v8395 = vmul.f32 %v8375, %v8381
        %v8396 = vmul.f32 %v8376, %v8381
        %v8397 = vmul.f32 %v8377, %v8381
        %v8398 = vlaneseq
        %v8399 = vshrl.u32 %v8398, 7
        %v8400 = vsub.s32 0, %v8399
        %v8401 = vrot.slane %v4974, %v8400
        %v8402 = vadd.f32 %v8382, %v8401
        %v8403 = vadd.f32 %v8383, %v8401
        %v8404 = vadd.f32 %v8384, %v8401
        %v8405 = vadd.f32 %v8385, %v8401
        %v8406 = vadd.f32 %v8386, %v8401
        %v8407 = vadd.f32 %v8387, %v8401
        %v8408 = vadd.f32 %v8388, %v8401
        %v8409 = vadd.f32 %v8389, %v8401
        %v8410 = vadd.f32 %v8390, %v8401
        %v8411 = vadd.f32 %v8391, %v8401
        %v8412 = vadd.f32 %v8392, %v8401
        %v8413 = vadd.f32 %v8393, %v8401
        %v8414 = vadd.f32 %v8394, %v8401
        %v8415 = vadd.f32 %v8395, %v8401
        %v8416 = vadd.f32 %v8396, %v8401
        %v8417 = vadd.f32 %v8397, %v8401
        %v8418 = vld [vmem:[%s12] sm:$0xff]
        %v8419 = vld [vmem:[%s12 + $0x8] sm:$0xff]
        %v8420 = vld [vmem:[%s12 + $0x10] sm:$0xff]
        %v8421 = vld [vmem:[%s12 + $0x18] sm:$0xff]
        %v8422 = vlaneseq
        %v8423 = vshrl.u32 %v8422, 7
        %v8424 = vsub.s32 0, %v8423
        %v8425 = vrot.slane %v4975, %v8424
        %v8427 = vsel %vm740, %v8402, 0
        %v8430 = vsel %vm740, %v8403, 0
        %v8433 = vsel %vm740, %v8404, 0
        %v8436 = vsel %vm740, %v8405, 0
        %v8439 = vsel %vm740, %v8406, 0
        %v8442 = vsel %vm740, %v8407, 0
        %v8445 = vsel %vm740, %v8408, 0
        %v8448 = vsel %vm740, %v8409, 0
        %v8451 = vsel %vm740, %v8410, 0
        %v8454 = vsel %vm740, %v8411, 0
        %v8457 = vsel %vm740, %v8412, 0
        %v8460 = vsel %vm740, %v8413, 0
        %v8463 = vsel %vm740, %v8414, 0
        %v8466 = vsel %vm740, %v8415, 0
        %v8469 = vsel %vm740, %v8416, 0
        %v8472 = vsel %vm740, %v8417, 0
        %8474 = vmatprep.subr.mxu0 0.0
        %8475 = vmatpush1.msra.mxu0 0.0
        %8476 = vmatprep.subr.mxu0 0.0
        %8477 = vmatpush1.msra.mxu0 0.0
        %8478 = vmatprep.subr.mxu0 0.0
        %8479 = vmatpush1.msra.mxu0 0.0
        %8480 = vmatprep.subr.mxu0 0.0
        %8481 = vmatpush1.msra.mxu0 0.0
        %8482 = vmatprep.subr.mxu0 0.0
        %8483 = vmatpush1.msra.mxu0 0.0
        %8484 = vmatprep.subr.mxu0 0.0
        %8485 = vmatpush1.msra.mxu0 0.0
        %8486 = vmatprep.subr.mxu0 0.0
        %8487 = vmatpush1.msra.mxu0 0.0
        %8488 = vmatprep.subr.mxu0 0.0
        %8489 = vmatpush1.msra.mxu0 0.0
        %8490 = vmatprep.subr.mxu0 0.0
        %8491 = vmatpush1.msra.mxu0 0.0
        %8492 = vmatprep.subr.mxu0 0.0
        %8493 = vmatpush1.msra.mxu0 0.0
        %8494 = vmatprep.subr.mxu0 0.0
        %8495 = vmatpush1.msra.mxu0 0.0
        %8496 = vmatprep.subr.mxu0 0.0
        %8497 = vmatpush1.msra.mxu0 0.0
        %8498 = vmatprep.subr.mxu0 0.0
        %8499 = vmatpush1.msra.mxu0 %v8421
        %8500 = vmatprep.subr.mxu0 0.0
        %8501 = vmatpush1.msra.mxu0 %v8420
        %8502 = vmatprep.subr.mxu0 0.0
        %8503 = vmatpush1.msra.mxu0 %v8419
        %8504 = vmatprep.subr.mxu0 0.0
        %8505 = vmatpush1.msra.mxu0 %v8418
        %8506 = vmatprep.subr.mxu0 0.0
        %8507 = vmatpush2.msra.mxu0 0.0
        %8508 = vmatprep.subr.mxu0 0.0
        %8509 = vmatpush2.msra.mxu0 0.0
        %8510 = vmatprep.subr.mxu0 0.0
        %8511 = vmatpush2.msra.mxu0 0.0
        %8512 = vmatprep.subr.mxu0 0.0
        %8513 = vmatpush2.msra.mxu0 0.0
        %8514 = vmatprep.subr.mxu0 0.0
        %8515 = vmatpush2.msra.mxu0 0.0
        %8516 = vmatprep.subr.mxu0 0.0
        %8517 = vmatpush2.msra.mxu0 0.0
        %8518 = vmatprep.subr.mxu0 0.0
        %8519 = vmatpush2.msra.mxu0 0.0
        %8520 = vmatprep.subr.mxu0 0.0
        %8521 = vmatpush2.msra.mxu0 0.0
        %8522 = vmatprep.subr.mxu0 0.0
        %8523 = vmatpush2.msra.mxu0 0.0
        %8524 = vmatprep.subr.mxu0 0.0
        %8525 = vmatpush2.msra.mxu0 0.0
        %8526 = vmatprep.subr.mxu0 0.0
        %8527 = vmatpush2.msra.mxu0 0.0
        %8528 = vmatprep.subr.mxu0 0.0
        %8529 = vmatpush2.msra.mxu0 0.0
        %8530 = vmatprep.subr.mxu0 0.0
        %8531 = vmatpush2.msra.mxu0 0.0
        %8532 = vmatprep.subr.mxu0 0.0
        %8533 = vmatpush2.msra.mxu0 0.0
        %8534 = vmatprep.subr.mxu0 0.0
        %8535 = vmatpush2.msra.mxu0 0.0
        %8536 = vmatprep.subr.mxu0 0.0
        %8537 = vmatpush2.msra.mxu0 0.0
        %8538 = vmatprep.mubr.f32.mxu0 0.0
        %8539 = vmatmul.mubr.f32.gmra.mxu0 %v8427
        %v8540 = vpop.f32.mrf.mxu0
        %v8541 = vadd.f32 %v8425, %v8540
        %v8542 = vpop.f32.mrf.mxu0
        %8543 = vmatprep.mubr.f32.mxu0 0.0
        %8544 = vmatmul.mubr.f32.gmra.mxu0 %v8430
        %v8545 = vpop.f32.mrf.mxu0
        %v8546 = vadd.f32 %v8425, %v8545
        %v8547 = vpop.f32.mrf.mxu0
        %8548 = vmatprep.mubr.f32.mxu0 0.0
        %8549 = vmatmul.mubr.f32.gmra.mxu0 %v8433
        %v8550 = vpop.f32.mrf.mxu0
        %v8551 = vadd.f32 %v8425, %v8550
        %v8552 = vpop.f32.mrf.mxu0
        %8553 = vmatprep.mubr.f32.mxu0 0.0
        %8554 = vmatmul.mubr.f32.gmra.mxu0 %v8436
        %v8555 = vpop.f32.mrf.mxu0
        %v8556 = vadd.f32 %v8425, %v8555
        %v8557 = vpop.f32.mrf.mxu0
        %8558 = vmatprep.mubr.f32.mxu0 0.0
        %8559 = vmatmul.mubr.f32.gmra.mxu0 %v8439
        %v8560 = vpop.f32.mrf.mxu0
        %v8561 = vadd.f32 %v8425, %v8560
        %v8562 = vpop.f32.mrf.mxu0
        %8563 = vmatprep.mubr.f32.mxu0 0.0
        %8564 = vmatmul.mubr.f32.gmra.mxu0 %v8442
        %v8565 = vpop.f32.mrf.mxu0
        %v8566 = vadd.f32 %v8425, %v8565
        %v8567 = vpop.f32.mrf.mxu0
        %8568 = vmatprep.mubr.f32.mxu0 0.0
        %8569 = vmatmul.mubr.f32.gmra.mxu0 %v8445
        %v8570 = vpop.f32.mrf.mxu0
        %v8571 = vadd.f32 %v8425, %v8570
        %v8572 = vpop.f32.mrf.mxu0
        %8573 = vmatprep.mubr.f32.mxu0 0.0
        %8574 = vmatmul.mubr.f32.gmra.mxu0 %v8448
        %v8575 = vpop.f32.mrf.mxu0
        %v8576 = vadd.f32 %v8425, %v8575
        %v8577 = vpop.f32.mrf.mxu0
        %8578 = vmatprep.mubr.f32.mxu0 0.0
        %8579 = vmatmul.mubr.f32.gmra.mxu0 %v8451
        %v8580 = vpop.f32.mrf.mxu0
        %v8581 = vadd.f32 %v8425, %v8580
        %v8582 = vpop.f32.mrf.mxu0
        %8583 = vmatprep.mubr.f32.mxu0 0.0
        %8584 = vmatmul.mubr.f32.gmra.mxu0 %v8454
        %v8585 = vpop.f32.mrf.mxu0
        %v8586 = vadd.f32 %v8425, %v8585
        %v8587 = vpop.f32.mrf.mxu0
        %8588 = vmatprep.mubr.f32.mxu0 0.0
        %8589 = vmatmul.mubr.f32.gmra.mxu0 %v8457
        %v8590 = vpop.f32.mrf.mxu0
        %v8591 = vadd.f32 %v8425, %v8590
        %v8592 = vpop.f32.mrf.mxu0
        %8593 = vmatprep.mubr.f32.mxu0 0.0
        %8594 = vmatmul.mubr.f32.gmra.mxu0 %v8460
        %v8595 = vpop.f32.mrf.mxu0
        %v8596 = vadd.f32 %v8425, %v8595
        %v8597 = vpop.f32.mrf.mxu0
        %8598 = vmatprep.mubr.f32.mxu0 0.0
        %8599 = vmatmul.mubr.f32.gmra.mxu0 %v8463
        %v8600 = vpop.f32.mrf.mxu0
        %v8601 = vadd.f32 %v8425, %v8600
        %v8602 = vpop.f32.mrf.mxu0
        %8603 = vmatprep.mubr.f32.mxu0 0.0
        %8604 = vmatmul.mubr.f32.gmra.mxu0 %v8466
        %v8605 = vpop.f32.mrf.mxu0
        %v8606 = vadd.f32 %v8425, %v8605
        %v8607 = vpop.f32.mrf.mxu0
        %8608 = vmatprep.mubr.f32.mxu0 0.0
        %8609 = vmatmul.mubr.f32.gmra.mxu0 %v8469
        %v8610 = vpop.f32.mrf.mxu0
        %v8611 = vadd.f32 %v8425, %v8610
        %v8612 = vpop.f32.mrf.mxu0
        %8613 = vmatprep.mubr.f32.mxu0 0.0
        %8614 = vmatmul.mubr.f32.gmra.mxu0 %v8472
        %v8615 = vpop.f32.mrf.mxu0
        %v8616 = vadd.f32 %v8425, %v8615
        %v8617 = vpop.f32.mrf.mxu0
        %8618 = vdwg.mxu0
        %v8619 = vmul.f32 %v8541, 0.5
        %v8620 = vmul.f32 %v8546, 0.5
        %v8621 = vmul.f32 %v8551, 0.5
        %v8622 = vmul.f32 %v8556, 0.5
        %v8623 = vmul.f32 %v8561, 0.5
        %v8624 = vmul.f32 %v8566, 0.5
        %v8625 = vmul.f32 %v8571, 0.5
        %v8626 = vmul.f32 %v8576, 0.5
        %v8627 = vmul.f32 %v8581, 0.5
        %v8628 = vmul.f32 %v8586, 0.5
        %v8629 = vmul.f32 %v8591, 0.5
        %v8630 = vmul.f32 %v8596, 0.5
        %v8631 = vmul.f32 %v8601, 0.5
        %v8632 = vmul.f32 %v8606, 0.5
        %v8633 = vmul.f32 %v8611, 0.5
        %v8634 = vmul.f32 %v8616, 0.5
        %v8635 = vmul.f32 %v8541, 0.044715
        %v8636 = vmul.f32 %v8546, 0.044715
        %v8637 = vmul.f32 %v8551, 0.044715
        %v8638 = vmul.f32 %v8556, 0.044715
        %v8639 = vmul.f32 %v8561, 0.044715
        %v8640 = vmul.f32 %v8566, 0.044715
        %v8641 = vmul.f32 %v8571, 0.044715
        %v8642 = vmul.f32 %v8576, 0.044715
        %v8643 = vmul.f32 %v8581, 0.044715
        %v8644 = vmul.f32 %v8586, 0.044715
        %v8645 = vmul.f32 %v8591, 0.044715
        %v8646 = vmul.f32 %v8596, 0.044715
        %v8647 = vmul.f32 %v8601, 0.044715
        %v8648 = vmul.f32 %v8606, 0.044715
        %v8649 = vmul.f32 %v8611, 0.044715
        %v8650 = vmul.f32 %v8616, 0.044715
        %v8651 = vmul.f32 %v8635, %v8541
        %v8652 = vmul.f32 %v8636, %v8546
        %v8653 = vmul.f32 %v8637, %v8551
        %v8654 = vmul.f32 %v8638, %v8556
        %v8655 = vmul.f32 %v8639, %v8561
        %v8656 = vmul.f32 %v8640, %v8566
        %v8657 = vmul.f32 %v8641, %v8571
        %v8658 = vmul.f32 %v8642, %v8576
        %v8659 = vmul.f32 %v8643, %v8581
        %v8660 = vmul.f32 %v8644, %v8586
        %v8661 = vmul.f32 %v8645, %v8591
        %v8662 = vmul.f32 %v8646, %v8596
        %v8663 = vmul.f32 %v8647, %v8601
        %v8664 = vmul.f32 %v8648, %v8606
        %v8665 = vmul.f32 %v8649, %v8611
        %v8666 = vmul.f32 %v8650, %v8616
        %v8667 = vmul.f32 %v8651, %v8541
        %v8668 = vmul.f32 %v8652, %v8546
        %v8669 = vmul.f32 %v8653, %v8551
        %v8670 = vmul.f32 %v8654, %v8556
        %v8671 = vmul.f32 %v8655, %v8561
        %v8672 = vmul.f32 %v8656, %v8566
        %v8673 = vmul.f32 %v8657, %v8571
        %v8674 = vmul.f32 %v8658, %v8576
        %v8675 = vmul.f32 %v8659, %v8581
        %v8676 = vmul.f32 %v8660, %v8586
        %v8677 = vmul.f32 %v8661, %v8591
        %v8678 = vmul.f32 %v8662, %v8596
        %v8679 = vmul.f32 %v8663, %v8601
        %v8680 = vmul.f32 %v8664, %v8606
        %v8681 = vmul.f32 %v8665, %v8611
        %v8682 = vmul.f32 %v8666, %v8616
        %v8683 = vadd.f32 %v8541, %v8667
        %v8684 = vadd.f32 %v8546, %v8668
        %v8685 = vadd.f32 %v8551, %v8669
        %v8686 = vadd.f32 %v8556, %v8670
        %v8687 = vadd.f32 %v8561, %v8671
        %v8688 = vadd.f32 %v8566, %v8672
        %v8689 = vadd.f32 %v8571, %v8673
        %v8690 = vadd.f32 %v8576, %v8674
        %v8691 = vadd.f32 %v8581, %v8675
        %v8692 = vadd.f32 %v8586, %v8676
        %v8693 = vadd.f32 %v8591, %v8677
        %v8694 = vadd.f32 %v8596, %v8678
        %v8695 = vadd.f32 %v8601, %v8679
        %v8696 = vadd.f32 %v8606, %v8680
        %v8697 = vadd.f32 %v8611, %v8681
        %v8698 = vadd.f32 %v8616, %v8682
        %v8699 = vmul.f32 %v8683, 0.7978846
        %v8700 = vmul.f32 %v8684, 0.7978846
        %v8701 = vmul.f32 %v8685, 0.7978846
        %v8702 = vmul.f32 %v8686, 0.7978846
        %v8703 = vmul.f32 %v8687, 0.7978846
        %v8704 = vmul.f32 %v8688, 0.7978846
        %v8705 = vmul.f32 %v8689, 0.7978846
        %v8706 = vmul.f32 %v8690, 0.7978846
        %v8707 = vmul.f32 %v8691, 0.7978846
        %v8708 = vmul.f32 %v8692, 0.7978846
        %v8709 = vmul.f32 %v8693, 0.7978846
        %v8710 = vmul.f32 %v8694, 0.7978846
        %v8711 = vmul.f32 %v8695, 0.7978846
        %v8712 = vmul.f32 %v8696, 0.7978846
        %v8713 = vmul.f32 %v8697, 0.7978846
        %v8714 = vmul.f32 %v8698, 0.7978846
        %v8715 = vtanh.pop %v8699
        %v8716 = vtanh.pop %v8700
        %v8717 = vtanh.pop %v8701
        %v8718 = vtanh.pop %v8702
        %v8719 = vtanh.pop %v8703
        %v8720 = vtanh.pop %v8704
        %v8721 = vtanh.pop %v8705
        %v8722 = vtanh.pop %v8706
        %v8723 = vtanh.pop %v8707
        %v8724 = vtanh.pop %v8708
        %v8725 = vtanh.pop %v8709
        %v8726 = vtanh.pop %v8710
        %v8727 = vtanh.pop %v8711
        %v8728 = vtanh.pop %v8712
        %v8729 = vtanh.pop %v8713
        %v8730 = vtanh.pop %v8714
        %v8731 = vadd.f32 %v8715, 1.0
        %v8732 = vadd.f32 %v8716, 1.0
        %v8733 = vadd.f32 %v8717, 1.0
        %v8734 = vadd.f32 %v8718, 1.0
        %v8735 = vadd.f32 %v8719, 1.0
        %v8736 = vadd.f32 %v8720, 1.0
        %v8737 = vadd.f32 %v8721, 1.0
        %v8738 = vadd.f32 %v8722, 1.0
        %v8739 = vadd.f32 %v8723, 1.0
        %v8740 = vadd.f32 %v8724, 1.0
        %v8741 = vadd.f32 %v8725, 1.0
        %v8742 = vadd.f32 %v8726, 1.0
        %v8743 = vadd.f32 %v8727, 1.0
        %v8744 = vadd.f32 %v8728, 1.0
        %v8745 = vadd.f32 %v8729, 1.0
        %v8746 = vadd.f32 %v8730, 1.0
        %v8747 = vmul.f32 %v8619, %v8731
        %v8748 = vmul.f32 %v8620, %v8732
        %v8749 = vmul.f32 %v8621, %v8733
        %v8750 = vmul.f32 %v8622, %v8734
        %v8751 = vmul.f32 %v8623, %v8735
        %v8752 = vmul.f32 %v8624, %v8736
        %v8753 = vmul.f32 %v8625, %v8737
        %v8754 = vmul.f32 %v8626, %v8738
        %v8755 = vmul.f32 %v8627, %v8739
        %v8756 = vmul.f32 %v8628, %v8740
        %v8757 = vmul.f32 %v8629, %v8741
        %v8758 = vmul.f32 %v8630, %v8742
        %v8759 = vmul.f32 %v8631, %v8743
        %v8760 = vmul.f32 %v8632, %v8744
        %v8761 = vmul.f32 %v8633, %v8745
        %v8762 = vmul.f32 %v8634, %v8746
        %v8763 = vld [vmem:[%s13] sm:$0xff]
        %v8764 = vld [vmem:[%s13 + $0x8] sm:$0xff]
        %v8765 = vld [vmem:[%s13 + $0x10] sm:$0xff]
        %v8766 = vld [vmem:[%s13 + $0x18] sm:$0xff]
        %v8767 = vld [vmem:[%s13 + $0x20] sm:$0xff]
        %v8768 = vld [vmem:[%s13 + $0x28] sm:$0xff]
        %v8769 = vld [vmem:[%s13 + $0x30] sm:$0xff]
        %v8770 = vld [vmem:[%s13 + $0x38] sm:$0xff]
        %v8771 = vld [vmem:[%s13 + $0x40] sm:$0xff]
        %v8772 = vld [vmem:[%s13 + $0x48] sm:$0xff]
        %v8773 = vld [vmem:[%s13 + $0x50] sm:$0xff]
        %v8774 = vld [vmem:[%s13 + $0x58] sm:$0xff]
        %v8775 = vld [vmem:[%s13 + $0x60] sm:$0xff]
        %v8776 = vld [vmem:[%s13 + $0x68] sm:$0xff]
        %v8777 = vld [vmem:[%s13 + $0x70] sm:$0xff]
        %v8778 = vld [vmem:[%s13 + $0x78] sm:$0xff]
        %v8779 = vlaneseq
        %v8780 = vshrl.u32 %v8779, 7
        %v8781 = vsub.s32 0, %v8780
        %v8782 = vrot.slane %v4976, %v8781
        %8783 = vmatprep.subr.mxu0 0.0
        %8784 = vmatpush1.msra.mxu0 %v8778
        %8785 = vmatprep.subr.mxu0 0.0
        %8786 = vmatpush1.msra.mxu0 %v8777
        %8787 = vmatprep.subr.mxu0 0.0
        %8788 = vmatpush1.msra.mxu0 %v8776
        %8789 = vmatprep.subr.mxu0 0.0
        %8790 = vmatpush1.msra.mxu0 %v8775
        %8791 = vmatprep.subr.mxu0 0.0
        %8792 = vmatpush1.msra.mxu0 %v8774
        %8793 = vmatprep.subr.mxu0 0.0
        %8794 = vmatpush1.msra.mxu0 %v8773
        %8795 = vmatprep.subr.mxu0 0.0
        %8796 = vmatpush1.msra.mxu0 %v8772
        %8797 = vmatprep.subr.mxu0 0.0
        %8798 = vmatpush1.msra.mxu0 %v8771
        %8799 = vmatprep.subr.mxu0 0.0
        %8800 = vmatpush1.msra.mxu0 %v8770
        %8801 = vmatprep.subr.mxu0 0.0
        %8802 = vmatpush1.msra.mxu0 %v8769
        %8803 = vmatprep.subr.mxu0 0.0
        %8804 = vmatpush1.msra.mxu0 %v8768
        %8805 = vmatprep.subr.mxu0 0.0
        %8806 = vmatpush1.msra.mxu0 %v8767
        %8807 = vmatprep.subr.mxu0 0.0
        %8808 = vmatpush1.msra.mxu0 %v8766
        %8809 = vmatprep.subr.mxu0 0.0
        %8810 = vmatpush1.msra.mxu0 %v8765
        %8811 = vmatprep.subr.mxu0 0.0
        %8812 = vmatpush1.msra.mxu0 %v8764
        %8813 = vmatprep.subr.mxu0 0.0
        %8814 = vmatpush1.msra.mxu0 %v8763
        %8815 = vmatprep.subr.mxu0 0.0
        %8816 = vmatpush2.msra.mxu0 0.0
        %8817 = vmatprep.subr.mxu0 0.0
        %8818 = vmatpush2.msra.mxu0 0.0
        %8819 = vmatprep.subr.mxu0 0.0
        %8820 = vmatpush2.msra.mxu0 0.0
        %8821 = vmatprep.subr.mxu0 0.0
        %8822 = vmatpush2.msra.mxu0 0.0
        %8823 = vmatprep.subr.mxu0 0.0
        %8824 = vmatpush2.msra.mxu0 0.0
        %8825 = vmatprep.subr.mxu0 0.0
        %8826 = vmatpush2.msra.mxu0 0.0
        %8827 = vmatprep.subr.mxu0 0.0
        %8828 = vmatpush2.msra.mxu0 0.0
        %8829 = vmatprep.subr.mxu0 0.0
        %8830 = vmatpush2.msra.mxu0 0.0
        %8831 = vmatprep.subr.mxu0 0.0
        %8832 = vmatpush2.msra.mxu0 0.0
        %8833 = vmatprep.subr.mxu0 0.0
        %8834 = vmatpush2.msra.mxu0 0.0
        %8835 = vmatprep.subr.mxu0 0.0
        %8836 = vmatpush2.msra.mxu0 0.0
        %8837 = vmatprep.subr.mxu0 0.0
        %8838 = vmatpush2.msra.mxu0 0.0
        %8839 = vmatprep.subr.mxu0 0.0
        %8840 = vmatpush2.msra.mxu0 0.0
        %8841 = vmatprep.subr.mxu0 0.0
        %8842 = vmatpush2.msra.mxu0 0.0
        %8843 = vmatprep.subr.mxu0 0.0
        %8844 = vmatpush2.msra.mxu0 0.0
        %8845 = vmatprep.subr.mxu0 0.0
        %8846 = vmatpush2.msra.mxu0 0.0
        %8847 = vmatprep.mubr.f32.mxu0 0.0
        %8848 = vmatmul.mubr.f32.gmra.mxu0 %v8747
        %v8849 = vpop.f32.mrf.mxu0
        %v8850 = vadd.f32 %v8782, %v8849
        %v8851 = vpop.f32.mrf.mxu0
        %8852 = vmatprep.mubr.f32.mxu0 0.0
        %8853 = vmatmul.mubr.f32.gmra.mxu0 %v8748
        %v8854 = vpop.f32.mrf.mxu0
        %v8855 = vadd.f32 %v8782, %v8854
        %v8856 = vpop.f32.mrf.mxu0
        %8857 = vmatprep.mubr.f32.mxu0 0.0
        %8858 = vmatmul.mubr.f32.gmra.mxu0 %v8749
        %v8859 = vpop.f32.mrf.mxu0
        %v8860 = vadd.f32 %v8782, %v8859
        %v8861 = vpop.f32.mrf.mxu0
        %8862 = vmatprep.mubr.f32.mxu0 0.0
        %8863 = vmatmul.mubr.f32.gmra.mxu0 %v8750
        %v8864 = vpop.f32.mrf.mxu0
        %v8865 = vadd.f32 %v8782, %v8864
        %v8866 = vpop.f32.mrf.mxu0
        %8867 = vmatprep.mubr.f32.mxu0 0.0
        %8868 = vmatmul.mubr.f32.gmra.mxu0 %v8751
        %v8869 = vpop.f32.mrf.mxu0
        %v8870 = vadd.f32 %v8782, %v8869
        %v8871 = vpop.f32.mrf.mxu0
        %8872 = vmatprep.mubr.f32.mxu0 0.0
        %8873 = vmatmul.mubr.f32.gmra.mxu0 %v8752
        %v8874 = vpop.f32.mrf.mxu0
        %v8875 = vadd.f32 %v8782, %v8874
        %v8876 = vpop.f32.mrf.mxu0
        %8877 = vmatprep.mubr.f32.mxu0 0.0
        %8878 = vmatmul.mubr.f32.gmra.mxu0 %v8753
        %v8879 = vpop.f32.mrf.mxu0
        %v8880 = vadd.f32 %v8782, %v8879
        %v8881 = vpop.f32.mrf.mxu0
        %8882 = vmatprep.mubr.f32.mxu0 0.0
        %8883 = vmatmul.mubr.f32.gmra.mxu0 %v8754
        %v8884 = vpop.f32.mrf.mxu0
        %v8885 = vadd.f32 %v8782, %v8884
        %v8886 = vpop.f32.mrf.mxu0
        %8887 = vmatprep.mubr.f32.mxu0 0.0
        %8888 = vmatmul.mubr.f32.gmra.mxu0 %v8755
        %v8889 = vpop.f32.mrf.mxu0
        %v8890 = vadd.f32 %v8782, %v8889
        %v8891 = vpop.f32.mrf.mxu0
        %8892 = vmatprep.mubr.f32.mxu0 0.0
        %8893 = vmatmul.mubr.f32.gmra.mxu0 %v8756
        %v8894 = vpop.f32.mrf.mxu0
        %v8895 = vadd.f32 %v8782, %v8894
        %v8896 = vpop.f32.mrf.mxu0
        %8897 = vmatprep.mubr.f32.mxu0 0.0
        %8898 = vmatmul.mubr.f32.gmra.mxu0 %v8757
        %v8899 = vpop.f32.mrf.mxu0
        %v8900 = vadd.f32 %v8782, %v8899
        %v8901 = vpop.f32.mrf.mxu0
        %8902 = vmatprep.mubr.f32.mxu0 0.0
        %8903 = vmatmul.mubr.f32.gmra.mxu0 %v8758
        %v8904 = vpop.f32.mrf.mxu0
        %v8905 = vadd.f32 %v8782, %v8904
        %v8906 = vpop.f32.mrf.mxu0
        %8907 = vmatprep.mubr.f32.mxu0 0.0
        %8908 = vmatmul.mubr.f32.gmra.mxu0 %v8759
        %v8909 = vpop.f32.mrf.mxu0
        %v8910 = vadd.f32 %v8782, %v8909
        %v8911 = vpop.f32.mrf.mxu0
        %8912 = vmatprep.mubr.f32.mxu0 0.0
        %8913 = vmatmul.mubr.f32.gmra.mxu0 %v8760
        %v8914 = vpop.f32.mrf.mxu0
        %v8915 = vadd.f32 %v8782, %v8914
        %v8916 = vpop.f32.mrf.mxu0
        %8917 = vmatprep.mubr.f32.mxu0 0.0
        %8918 = vmatmul.mubr.f32.gmra.mxu0 %v8761
        %v8919 = vpop.f32.mrf.mxu0
        %v8920 = vadd.f32 %v8782, %v8919
        %v8921 = vpop.f32.mrf.mxu0
        %8922 = vmatprep.mubr.f32.mxu0 0.0
        %8923 = vmatmul.mubr.f32.gmra.mxu0 %v8762
        %v8924 = vpop.f32.mrf.mxu0
        %v8925 = vadd.f32 %v8782, %v8924
        %v8926 = vpop.f32.mrf.mxu0
        %8927 = vdwg.mxu0
        %v8928 = vadd.f32 %v8154, %v8850
        %v8929 = vadd.f32 %v8155, %v8855
        %v8930 = vadd.f32 %v8156, %v8860
        %v8931 = vadd.f32 %v8157, %v8865
        %v8932 = vadd.f32 %v8158, %v8870
        %v8933 = vadd.f32 %v8159, %v8875
        %v8934 = vadd.f32 %v8160, %v8880
        %v8935 = vadd.f32 %v8161, %v8885
        %v8936 = vadd.f32 %v8162, %v8890
        %v8937 = vadd.f32 %v8163, %v8895
        %v8938 = vadd.f32 %v8164, %v8900
        %v8939 = vadd.f32 %v8165, %v8905
        %v8940 = vadd.f32 %v8166, %v8910
        %v8941 = vadd.f32 %v8167, %v8915
        %v8942 = vadd.f32 %v8168, %v8920
        %v8943 = vadd.f32 %v8169, %v8925
        %v8944 = vld [vmem:[%s2 + $0x3] sm:$0x1]
        %v8945 = vld [vmem:[%s2 + $0x4] sm:$0x1]
        %v8946 = vsel %vm740, %v8928, 0.0
        %8947 = vadd.xlane.f32.xlu0 %v8946
        %v8948 = vpop.xlane.xlu0 %8947
        %v8949 = vsel %vm740, %v8929, 0.0
        %8950 = vadd.xlane.f32.xlu0 %v8949
        %v8951 = vpop.xlane.xlu0 %8950
        %v8952 = vsel %vm740, %v8930, 0.0
        %8953 = vadd.xlane.f32.xlu0 %v8952
        %v8954 = vpop.xlane.xlu0 %8953
        %v8955 = vsel %vm740, %v8931, 0.0
        %8956 = vadd.xlane.f32.xlu0 %v8955
        %v8957 = vpop.xlane.xlu0 %8956
        %v8958 = vsel %vm740, %v8932, 0.0
        %8959 = vadd.xlane.f32.xlu0 %v8958
        %v8960 = vpop.xlane.xlu0 %8959
        %v8961 = vsel %vm740, %v8933, 0.0
        %8962 = vadd.xlane.f32.xlu0 %v8961
        %v8963 = vpop.xlane.xlu0 %8962
        %v8964 = vsel %vm740, %v8934, 0.0
        %8965 = vadd.xlane.f32.xlu0 %v8964
        %v8966 = vpop.xlane.xlu0 %8965
        %v8967 = vsel %vm740, %v8935, 0.0
        %8968 = vadd.xlane.f32.xlu0 %v8967
        %v8969 = vpop.xlane.xlu0 %8968
        %v8970 = vsel %vm740, %v8936, 0.0
        %8971 = vadd.xlane.f32.xlu0 %v8970
        %v8972 = vpop.xlane.xlu0 %8971
        %v8973 = vsel %vm740, %v8937, 0.0
        %8974 = vadd.xlane.f32.xlu0 %v8973
        %v8975 = vpop.xlane.xlu0 %8974
        %v8976 = vsel %vm740, %v8938, 0.0
        %8977 = vadd.xlane.f32.xlu0 %v8976
        %v8978 = vpop.xlane.xlu0 %8977
        %v8979 = vsel %vm740, %v8939, 0.0
        %8980 = vadd.xlane.f32.xlu0 %v8979
        %v8981 = vpop.xlane.xlu0 %8980
        %v8982 = vsel %vm740, %v8940, 0.0
        %8983 = vadd.xlane.f32.xlu0 %v8982
        %v8984 = vpop.xlane.xlu0 %8983
        %v8985 = vsel %vm740, %v8941, 0.0
        %8986 = vadd.xlane.f32.xlu0 %v8985
        %v8987 = vpop.xlane.xlu0 %8986
        %v8988 = vsel %vm740, %v8942, 0.0
        %8989 = vadd.xlane.f32.xlu0 %v8988
        %v8990 = vpop.xlane.xlu0 %8989
        %v8991 = vsel %vm740, %v8943, 0.0
        %8992 = vadd.xlane.f32.xlu0 %v8991
        %v8993 = vpop.xlane.xlu0 %8992
        %v8994 = vmul.f32 %v8948, %v789
        %v8995 = vmul.f32 %v8951, %v789
        %v8996 = vmul.f32 %v8954, %v789
        %v8997 = vmul.f32 %v8957, %v789
        %v8998 = vmul.f32 %v8960, %v789
        %v8999 = vmul.f32 %v8963, %v789
        %v9000 = vmul.f32 %v8966, %v789
        %v9001 = vmul.f32 %v8969, %v789
        %v9002 = vmul.f32 %v8972, %v789
        %v9003 = vmul.f32 %v8975, %v789
        %v9004 = vmul.f32 %v8978, %v789
        %v9005 = vmul.f32 %v8981, %v789
        %v9006 = vmul.f32 %v8984, %v789
        %v9007 = vmul.f32 %v8987, %v789
        %v9008 = vmul.f32 %v8990, %v789
        %v9009 = vmul.f32 %v8993, %v789
        %v9010 = vsub.f32 %v8928, %v8994
        %v9011 = vsub.f32 %v8929, %v8995
        %v9012 = vsub.f32 %v8930, %v8996
        %v9013 = vsub.f32 %v8931, %v8997
        %v9014 = vsub.f32 %v8932, %v8998
        %v9015 = vsub.f32 %v8933, %v8999
        %v9016 = vsub.f32 %v8934, %v9000
        %v9017 = vsub.f32 %v8935, %v9001
        %v9018 = vsub.f32 %v8936, %v9002
        %v9019 = vsub.f32 %v8937, %v9003
        %v9020 = vsub.f32 %v8938, %v9004
        %v9021 = vsub.f32 %v8939, %v9005
        %v9022 = vsub.f32 %v8940, %v9006
        %v9023 = vsub.f32 %v8941, %v9007
        %v9024 = vsub.f32 %v8942, %v9008
        %v9025 = vsub.f32 %v8943, %v9009
        %v9026 = vmul.f32 %v9010, %v9010
        %v9027 = vmul.f32 %v9011, %v9011
        %v9028 = vmul.f32 %v9012, %v9012
        %v9029 = vmul.f32 %v9013, %v9013
        %v9030 = vmul.f32 %v9014, %v9014
        %v9031 = vmul.f32 %v9015, %v9015
        %v9032 = vmul.f32 %v9016, %v9016
        %v9033 = vmul.f32 %v9017, %v9017
        %v9034 = vmul.f32 %v9018, %v9018
        %v9035 = vmul.f32 %v9019, %v9019
        %v9036 = vmul.f32 %v9020, %v9020
        %v9037 = vmul.f32 %v9021, %v9021
        %v9038 = vmul.f32 %v9022, %v9022
        %v9039 = vmul.f32 %v9023, %v9023
        %v9040 = vmul.f32 %v9024, %v9024
        %v9041 = vmul.f32 %v9025, %v9025
        %v9042 = vsel %vm740, %v9026, 0.0
        %9043 = vadd.xlane.f32.xlu0 %v9042
        %v9044 = vpop.xlane.xlu0 %9043
        %v9045 = vsel %vm740, %v9027, 0.0
        %9046 = vadd.xlane.f32.xlu0 %v9045
        %v9047 = vpop.xlane.xlu0 %9046
        %v9048 = vsel %vm740, %v9028, 0.0
        %9049 = vadd.xlane.f32.xlu0 %v9048
        %v9050 = vpop.xlane.xlu0 %9049
        %v9051 = vsel %vm740, %v9029, 0.0
        %9052 = vadd.xlane.f32.xlu0 %v9051
        %v9053 = vpop.xlane.xlu0 %9052
        %v9054 = vsel %vm740, %v9030, 0.0
        %9055 = vadd.xlane.f32.xlu0 %v9054
        %v9056 = vpop.xlane.xlu0 %9055
        %v9057 = vsel %vm740, %v9031, 0.0
        %9058 = vadd.xlane.f32.xlu0 %v9057
        %v9059 = vpop.xlane.xlu0 %9058
        %v9060 = vsel %vm740, %v9032, 0.0
        %9061 = vadd.xlane.f32.xlu0 %v9060
        %v9062 = vpop.xlane.xlu0 %9061
        %v9063 = vsel %vm740, %v9033, 0.0
        %9064 = vadd.xlane.f32.xlu0 %v9063
        %v9065 = vpop.xlane.xlu0 %9064
        %v9066 = vsel %vm740, %v9034, 0.0
        %9067 = vadd.xlane.f32.xlu0 %v9066
        %v9068 = vpop.xlane.xlu0 %9067
        %v9069 = vsel %vm740, %v9035, 0.0
        %9070 = vadd.xlane.f32.xlu0 %v9069
        %v9071 = vpop.xlane.xlu0 %9070
        %v9072 = vsel %vm740, %v9036, 0.0
        %9073 = vadd.xlane.f32.xlu0 %v9072
        %v9074 = vpop.xlane.xlu0 %9073
        %v9075 = vsel %vm740, %v9037, 0.0
        %9076 = vadd.xlane.f32.xlu0 %v9075
        %v9077 = vpop.xlane.xlu0 %9076
        %v9078 = vsel %vm740, %v9038, 0.0
        %9079 = vadd.xlane.f32.xlu0 %v9078
        %v9080 = vpop.xlane.xlu0 %9079
        %v9081 = vsel %vm740, %v9039, 0.0
        %9082 = vadd.xlane.f32.xlu0 %v9081
        %v9083 = vpop.xlane.xlu0 %9082
        %v9084 = vsel %vm740, %v9040, 0.0
        %9085 = vadd.xlane.f32.xlu0 %v9084
        %v9086 = vpop.xlane.xlu0 %9085
        %v9087 = vsel %vm740, %v9041, 0.0
        %9088 = vadd.xlane.f32.xlu0 %v9087
        %v9089 = vpop.xlane.xlu0 %9088
        %v9090 = vmul.f32 %v9044, %v789
        %v9091 = vmul.f32 %v9047, %v789
        %v9092 = vmul.f32 %v9050, %v789
        %v9093 = vmul.f32 %v9053, %v789
        %v9094 = vmul.f32 %v9056, %v789
        %v9095 = vmul.f32 %v9059, %v789
        %v9096 = vmul.f32 %v9062, %v789
        %v9097 = vmul.f32 %v9065, %v789
        %v9098 = vmul.f32 %v9068, %v789
        %v9099 = vmul.f32 %v9071, %v789
        %v9100 = vmul.f32 %v9074, %v789
        %v9101 = vmul.f32 %v9077, %v789
        %v9102 = vmul.f32 %v9080, %v789
        %v9103 = vmul.f32 %v9083, %v789
        %v9104 = vmul.f32 %v9086, %v789
        %v9105 = vmul.f32 %v9089, %v789
        %v9106 = vadd.f32 %v9090, 1e-05
        %v9107 = vadd.f32 %v9091, 1e-05
        %v9108 = vadd.f32 %v9092, 1e-05
        %v9109 = vadd.f32 %v9093, 1e-05
        %v9110 = vadd.f32 %v9094, 1e-05
        %v9111 = vadd.f32 %v9095, 1e-05
        %v9112 = vadd.f32 %v9096, 1e-05
        %v9113 = vadd.f32 %v9097, 1e-05
        %v9114 = vadd.f32 %v9098, 1e-05
        %v9115 = vadd.f32 %v9099, 1e-05
        %v9116 = vadd.f32 %v9100, 1e-05
        %v9117 = vadd.f32 %v9101, 1e-05
        %v9118 = vadd.f32 %v9102, 1e-05
        %v9119 = vadd.f32 %v9103, 1e-05
        %v9120 = vadd.f32 %v9104, 1e-05
        %v9121 = vadd.f32 %v9105, 1e-05
        %v9122 = vrsqrt.pop %v9106
        %v9123 = vrsqrt.pop %v9107
        %v9124 = vrsqrt.pop %v9108
        %v9125 = vrsqrt.pop %v9109
        %v9126 = vrsqrt.pop %v9110
        %v9127 = vrsqrt.pop %v9111
        %v9128 = vrsqrt.pop %v9112
        %v9129 = vrsqrt.pop %v9113
        %v9130 = vrsqrt.pop %v9114
        %v9131 = vrsqrt.pop %v9115
        %v9132 = vrsqrt.pop %v9116
        %v9133 = vrsqrt.pop %v9117
        %v9134 = vrsqrt.pop %v9118
        %v9135 = vrsqrt.pop %v9119
        %v9136 = vrsqrt.pop %v9120
        %v9137 = vrsqrt.pop %v9121
        %v9138 = vmul.f32 %v9010, %v9122
        %v9139 = vmul.f32 %v9011, %v9123
        %v9140 = vmul.f32 %v9012, %v9124
        %v9141 = vmul.f32 %v9013, %v9125
        %v9142 = vmul.f32 %v9014, %v9126
        %v9143 = vmul.f32 %v9015, %v9127
        %v9144 = vmul.f32 %v9016, %v9128
        %v9145 = vmul.f32 %v9017, %v9129
        %v9146 = vmul.f32 %v9018, %v9130
        %v9147 = vmul.f32 %v9019, %v9131
        %v9148 = vmul.f32 %v9020, %v9132
        %v9149 = vmul.f32 %v9021, %v9133
        %v9150 = vmul.f32 %v9022, %v9134
        %v9151 = vmul.f32 %v9023, %v9135
        %v9152 = vmul.f32 %v9024, %v9136
        %v9153 = vmul.f32 %v9025, %v9137
        %v9154 = vlaneseq
        %v9155 = vshrl.u32 %v9154, 7
        %v9156 = vsub.s32 0, %v9155
        %v9157 = vrot.slane %v8944, %v9156
        %v9158 = vmul.f32 %v9138, %v9157
        %v9159 = vmul.f32 %v9139, %v9157
        %v9160 = vmul.f32 %v9140, %v9157
        %v9161 = vmul.f32 %v9141, %v9157
        %v9162 = vmul.f32 %v9142, %v9157
        %v9163 = vmul.f32 %v9143, %v9157
        %v9164 = vmul.f32 %v9144, %v9157
        %v9165 = vmul.f32 %v9145, %v9157
        %v9166 = vmul.f32 %v9146, %v9157
        %v9167 = vmul.f32 %v9147, %v9157
        %v9168 = vmul.f32 %v9148, %v9157
        %v9169 = vmul.f32 %v9149, %v9157
        %v9170 = vmul.f32 %v9150, %v9157
        %v9171 = vmul.f32 %v9151, %v9157
        %v9172 = vmul.f32 %v9152, %v9157
        %v9173 = vmul.f32 %v9153, %v9157
        %v9174 = vlaneseq
        %v9175 = vshrl.u32 %v9174, 7
        %v9176 = vsub.s32 0, %v9175
        %v9177 = vrot.slane %v8945, %v9176
        %v9178 = vadd.f32 %v9158, %v9177
        %v9179 = vadd.f32 %v9159, %v9177
        %v9180 = vadd.f32 %v9160, %v9177
        %v9181 = vadd.f32 %v9161, %v9177
        %v9182 = vadd.f32 %v9162, %v9177
        %v9183 = vadd.f32 %v9163, %v9177
        %v9184 = vadd.f32 %v9164, %v9177
        %v9185 = vadd.f32 %v9165, %v9177
        %v9186 = vadd.f32 %v9166, %v9177
        %v9187 = vadd.f32 %v9167, %v9177
        %v9188 = vadd.f32 %v9168, %v9177
        %v9189 = vadd.f32 %v9169, %v9177
        %v9190 = vadd.f32 %v9170, %v9177
        %v9191 = vadd.f32 %v9171, %v9177
        %v9192 = vadd.f32 %v9172, %v9177
        %v9193 = vadd.f32 %v9173, %v9177
        %v9194 = vld [vmem:[%s3] sm:$0xff]
        %9195 = vmatprep.subr.mxu0 0.0
        %9196 = vmatpush1.msra.mxu0 %v9193
        %9197 = vmatprep.subr.mxu0 0.0
        %9198 = vmatpush1.msra.mxu0 %v9192
        %9199 = vmatprep.subr.mxu0 0.0
        %9200 = vmatpush1.msra.mxu0 %v9191
        %9201 = vmatprep.subr.mxu0 0.0
        %9202 = vmatpush1.msra.mxu0 %v9190
        %9203 = vmatprep.subr.mxu0 0.0
        %9204 = vmatpush1.msra.mxu0 %v9189
        %9205 = vmatprep.subr.mxu0 0.0
        %9206 = vmatpush1.msra.mxu0 %v9188
        %9207 = vmatprep.subr.mxu0 0.0
        %9208 = vmatpush1.msra.mxu0 %v9187
        %9209 = vmatprep.subr.mxu0 0.0
        %9210 = vmatpush1.msra.mxu0 %v9186
        %9211 = vmatprep.subr.mxu0 0.0
        %9212 = vmatpush1.msra.mxu0 %v9185
        %9213 = vmatprep.subr.mxu0 0.0
        %9214 = vmatpush1.msra.mxu0 %v9184
        %9215 = vmatprep.subr.mxu0 0.0
        %9216 = vmatpush1.msra.mxu0 %v9183
        %9217 = vmatprep.subr.mxu0 0.0
        %9218 = vmatpush1.msra.mxu0 %v9182
        %9219 = vmatprep.subr.mxu0 0.0
        %9220 = vmatpush1.msra.mxu0 %v9181
        %9221 = vmatprep.subr.mxu0 0.0
        %9222 = vmatpush1.msra.mxu0 %v9180
        %9223 = vmatprep.subr.mxu0 0.0
        %9224 = vmatpush1.msra.mxu0 %v9179
        %9225 = vmatprep.subr.mxu0 0.0
        %9226 = vmatpush1.msra.mxu0 %v9178
        %9227 = vmatprep.subr.mxu0 0.0
        %9228 = vmatpush2.msra.mxu0 0.0
        %9229 = vmatprep.subr.mxu0 0.0
        %9230 = vmatpush2.msra.mxu0 0.0
        %9231 = vmatprep.subr.mxu0 0.0
        %9232 = vmatpush2.msra.mxu0 0.0
        %9233 = vmatprep.subr.mxu0 0.0
        %9234 = vmatpush2.msra.mxu0 0.0
        %9235 = vmatprep.subr.mxu0 0.0
        %9236 = vmatpush2.msra.mxu0 0.0
        %9237 = vmatprep.subr.mxu0 0.0
        %9238 = vmatpush2.msra.mxu0 0.0
        %9239 = vmatprep.subr.mxu0 0.0
        %9240 = vmatpush2.msra.mxu0 0.0
        %9241 = vmatprep.subr.mxu0 0.0
        %9242 = vmatpush2.msra.mxu0 0.0
        %9243 = vmatprep.subr.mxu0 0.0
        %9244 = vmatpush2.msra.mxu0 0.0
        %9245 = vmatprep.subr.mxu0 0.0
        %9246 = vmatpush2.msra.mxu0 0.0
        %9247 = vmatprep.subr.mxu0 0.0
        %9248 = vmatpush2.msra.mxu0 0.0
        %9249 = vmatprep.subr.mxu0 0.0
        %9250 = vmatpush2.msra.mxu0 0.0
        %9251 = vmatprep.subr.mxu0 0.0
        %9252 = vmatpush2.msra.mxu0 0.0
        %9253 = vmatprep.subr.mxu0 0.0
        %9254 = vmatpush2.msra.mxu0 0.0
        %9255 = vmatprep.subr.mxu0 0.0
        %9256 = vmatpush2.msra.mxu0 0.0
        %9257 = vmatprep.subr.mxu0 0.0
        %9258 = vmatpush2.msra.mxu0 0.0
        %9259 = vmatprep.mubr.f32.mxu0 0.0
        %9260 = vmatmul.mubr.f32.gmra.mxu0 %v9194
        %v9261 = vpop.f32.mrf.mxu0
        %v9262 = vadd.f32 0.0, %v9261
        %v9263 = vpop.f32.mrf.mxu0
        %9264 = vdwg.mxu0
        %v9265 = vld [vmem:[%s4] sm:$0xff]
        %v9266 = vld [vmem:[%s4 + $0x8] sm:$0xff]
        %v9267 = vld [vmem:[%s4 + $0x10] sm:$0xff]
        %v9268 = vld [vmem:[%s4 + $0x18] sm:$0xff]
        %v9269 = vld [vmem:[%s2 + $0x5] sm:$0x1]
        %v9270 = vlaneseq
        %v9271 = vshrl.u32 %v9270, 7
        %v9272 = vsub.s32 0, %v9271
        %v9273 = vrot.slane %v9269, %v9272
        %v9275 = vsel %vm740, %v9262, 0
        %9277 = vmatprep.subr.mxu0 0.0
        %9278 = vmatpush1.msra.mxu0 0.0
        %9279 = vmatprep.subr.mxu0 0.0
        %9280 = vmatpush1.msra.mxu0 0.0
        %9281 = vmatprep.subr.mxu0 0.0
        %9282 = vmatpush1.msra.mxu0 0.0
        %9283 = vmatprep.subr.mxu0 0.0
        %9284 = vmatpush1.msra.mxu0 0.0
        %9285 = vmatprep.subr.mxu0 0.0
        %9286 = vmatpush1.msra.mxu0 0.0
        %9287 = vmatprep.subr.mxu0 0.0
        %9288 = vmatpush1.msra.mxu0 0.0
        %9289 = vmatprep.subr.mxu0 0.0
        %9290 = vmatpush1.msra.mxu0 0.0
        %9291 = vmatprep.subr.mxu0 0.0
        %9292 = vmatpush1.msra.mxu0 0.0
        %9293 = vmatprep.subr.mxu0 0.0
        %9294 = vmatpush1.msra.mxu0 0.0
        %9295 = vmatprep.subr.mxu0 0.0
        %9296 = vmatpush1.msra.mxu0 0.0
        %9297 = vmatprep.subr.mxu0 0.0
        %9298 = vmatpush1.msra.mxu0 0.0
        %9299 = vmatprep.subr.mxu0 0.0
        %9300 = vmatpush1.msra.mxu0 0.0
        %9301 = vmatprep.subr.mxu0 0.0
        %9302 = vmatpush1.msra.mxu0 %v9268
        %9303 = vmatprep.subr.mxu0 0.0
        %9304 = vmatpush1.msra.mxu0 %v9267
        %9305 = vmatprep.subr.mxu0 0.0
        %9306 = vmatpush1.msra.mxu0 %v9266
        %9307 = vmatprep.subr.mxu0 0.0
        %9308 = vmatpush1.msra.mxu0 %v9265
        %9309 = vmatprep.subr.mxu0 0.0
        %9310 = vmatpush2.msra.mxu0 0.0
        %9311 = vmatprep.subr.mxu0 0.0
        %9312 = vmatpush2.msra.mxu0 0.0
        %9313 = vmatprep.subr.mxu0 0.0
        %9314 = vmatpush2.msra.mxu0 0.0
        %9315 = vmatprep.subr.mxu0 0.0
        %9316 = vmatpush2.msra.mxu0 0.0
        %9317 = vmatprep.subr.mxu0 0.0
        %9318 = vmatpush2.msra.mxu0 0.0
        %9319 = vmatprep.subr.mxu0 0.0
        %9320 = vmatpush2.msra.mxu0 0.0
        %9321 = vmatprep.subr.mxu0 0.0
        %9322 = vmatpush2.msra.mxu0 0.0
        %9323 = vmatprep.subr.mxu0 0.0
        %9324 = vmatpush2.msra.mxu0 0.0
        %9325 = vmatprep.subr.mxu0 0.0
        %9326 = vmatpush2.msra.mxu0 0.0
        %9327 = vmatprep.subr.mxu0 0.0
        %9328 = vmatpush2.msra.mxu0 0.0
        %9329 = vmatprep.subr.mxu0 0.0
        %9330 = vmatpush2.msra.mxu0 0.0
        %9331 = vmatprep.subr.mxu0 0.0
        %9332 = vmatpush2.msra.mxu0 0.0
        %9333 = vmatprep.subr.mxu0 0.0
        %9334 = vmatpush2.msra.mxu0 0.0
        %9335 = vmatprep.subr.mxu0 0.0
        %9336 = vmatpush2.msra.mxu0 0.0
        %9337 = vmatprep.subr.mxu0 0.0
        %9338 = vmatpush2.msra.mxu0 0.0
        %9339 = vmatprep.subr.mxu0 0.0
        %9340 = vmatpush2.msra.mxu0 0.0
        %9341 = vmatprep.mubr.f32.mxu0 0.0
        %9342 = vmatmul.mubr.f32.gmra.mxu0 %v9275
        %v9343 = vpop.f32.mrf.mxu0
        %v9344 = vadd.f32 %v9273, %v9343
        %v9345 = vpop.f32.mrf.mxu0
        %9346 = vdwg.mxu0
        %9347 = vst [vmem:[%s488] sm:$0xff] %v9344
        %s9348 = sand.u32 %s357, 1
        %s9349 = scalar_lea.sflag [#allocation3], %s9348
        %s9350 = sand.u32 %s357, 1
        %s9351 = smul.addr %s9350, 8
        %s9352 = scalar_lea.vmem [#allocation2], %s9351
        // Predicated region
        $region81: #{_lambda_.1} parent=79 // pred_check
          %p9353 = pneg %p367
        $region82: #{_lambda_.1} parent=79 // pred_check_branch
          %9355 = sbr.rel (%p9353) target = $region84
        $region83: #{_lambda_.1} parent=79 // pred_region
          %s9357 = ssub.s32 128, 128
          %9358 = vsyncadd %s9349, %s9357
          %s9359 = smul.addr %s29, 128
          %s9360 = scalar_lea.hbm %s15, %s9359
          %s9362 = sshll.u32 %s9352, 4
          %s9363 = int_to_ptr.vmem [resolvable:$true] %s9362
          %9365 = dma.vmem_to_hbm [thread:$0]  %s9363, 128, %s9360, %s9349
        $region84: #{_lambda_.1} parent=79 // pred_fallthru
          _
      $region80: #{_lambda_.1} parent=5 // pred_fallthru
        _
      %p9366 = scmp.le.s32.totalorder 2, %s24
      // Predicated region
      $region85: #{_lambda_.1} parent=5 // pred_check
        %p9367 = pneg %p9366
      $region86: #{_lambda_.1} parent=5 // pred_check_branch
        %9369 = sbr.rel (%p9367) target = $region88
      $region87: #{_lambda_.1} parent=5 // pred_region
        %s9370 = ssub.s32 %s24, 2
        // Predicated region
        $region89: #{_lambda_.1} parent=87 // pred_check
          %p9371 = pneg %p373
        $region90: #{_lambda_.1} parent=87 // pred_check_branch
          %9373 = sbr.rel (%p9371) target = $region92
        $region91: #{_lambda_.1} parent=87 // pred_region
          %s9374 = sand.u32 %s358, 1
          %s9375 = scalar_lea.sflag [#allocation3], %s9374
          %s9376 = sand.u32 %s358, 1
          %s9377 = smul.addr %s9376, 8
          %s9378 = scalar_lea.vmem [#allocation2], %s9377
          %9379 = dma.done %s9375, 128
        $region92: #{_lambda_.1} parent=87 // pred_fallthru
          _
      $region88: #{_lambda_.1} parent=5 // pred_fallthru
        _
    $region6: #{_lambda_.1} parent=1 // loop_footer
      %s28 = sadd.s32 1, %s24
    $region7: #{_lambda_.1} parent=1 // loop_footer_branch
      %23 = sbr.rel target = $region3
    $region8: #{_lambda_.1} parent=1 // loop_exit
      _
    %9380 = vsyncpa [#allocation3], 1
    %s9381 = scalar_lea.sflag [#allocation3], 1
    %9382 = vsyncpa %s9381, 1

</llo_original>
